<compile_context>
chip_gen: v6e
topology: v6e:2x2x1
jax: 0.10.0
libtpu: 0.0.40
codegen_flags: <defaults>
</compile_context>

<pallas_src>
import functools
from math import sqrt

import jax
import jax.numpy as jnp
from jax.experimental import pallas as pl
from jax.experimental.pallas import tpu as pltpu


def _round_up(x, m):
    return (x + m - 1) // m * m


def _cdiv(a, b):
    return -(-a // b)


def _pick_v_tiles(v, tv_max, align=128):
    """Pick a vocab tile (multiple of 128) minimising padding of V."""
    v_al = _round_up(max(int(v), 1), align)
    nv = _cdiv(v_al, tv_max)
    tv = _round_up(_cdiv(v_al, nv), align)
    return tv, nv * tv


def _pick_b_tiles(b, tb_max, align=128):
    """Pick a batch tile; keep nb >= 2 when possible (v7x has 2 TensorCores)."""
    b_al = _round_up(max(int(b), 1), align)
    nb = _cdiv(b_al, tb_max)
    tb = _round_up(_cdiv(b_al, nb), align)
    if nb == 1 and tb >= 512:
        nb = 2
        tb = _round_up(_cdiv(b_al, 2), align)
    return tb, nb * tb


def _vmem_limit_bytes(tb, tv, d, e):
    """Derive a VMEM limit from the tile footprint; clamp for v7x (64 MiB phys)."""
    f = 0
    f += 2 * d * tb * 2          # hidden^T tile, double-buffered bf16
    f += 2 * e * d * 2           # proj^T (constant block; counted 2x to be safe)
    f += 2 * tv * e * 2          # weight tile, double-buffered bf16
    f += 2 * tv * 4              # bias tile
    f += 2 * 2 * tb * 4          # col + out tiles
    f += e * tb * 4              # hidden @ proj scratch (f32)
    f += 3 * tb * 4              # m / l / t scratch
    f += 4 * tv * tb * 4         # compiler temporaries (logit, exp, masks)
    limit = int(f * 1.5) + (4 << 20)
    return int(min(max(limit, 16 << 20), 48 << 20))


# ---------------------------------------------------------------------------
# Pallas kernel: one adaptive-softmax cluster, one (B-tile, V-tile) grid step.
# Everything is laid out transposed so the per-row results are lane-dense:
#   logit_T[v, b] = weight[v, :] @ (proj^T @ hidden^T)[:, b] + bias[v]
#   out[0, b]     = logit_T[col[b], b] - logsumexp_v(logit_T[:, b])
# Flash-style online logsumexp over the V grid axis; the target-column logit
# is accumulated with a sublane-iota mask (exactly one V tile hits per row).
# ---------------------------------------------------------------------------
def _cluster_nll_kernel(count_ref,                       # SMEM (nb,) int32  (scalar prefetch)
                        hidT_ref,                        # (D, TB)  bf16
                        projT_ref,                       # (E, D)   bf16
                        w_ref,                           # (TV, E)  bf16
                        bias_ref,                        # (TV, 1)  f32
                        col_ref,                         # (1, TB)  int32
                        out_ref,                         # (1, TB)  f32
                        ph_ref,                          # scratch (E, TB) f32
                        m_ref, l_ref, t_ref):            # scratch (1, TB) f32 each
    b = pl.program_id(0)
    v = pl.program_id(1)
    nv = pl.num_programs(1)
    tv = w_ref.shape[0]

    active = count_ref[b] > 0                            # any rows of this B tile in this cluster?

    @pl.when(active)
    def _compute():
        @pl.when(v == 0)
        def _init():
            # proj^T @ hidden^T is V-independent: compute once per B tile,
            # keep in f32 VMEM (single bf16 rounding at the MXU input only).
            ph_ref[...] = jnp.dot(projT_ref[...], hidT_ref[...],
                                  preferred_element_type=jnp.float32)
            m_ref[...] = jnp.full_like(m_ref, -jnp.inf)
            l_ref[...] = jnp.zeros_like(l_ref)
            t_ref[...] = jnp.zeros_like(t_ref)

        # (TV, TB) logits for this V tile; bf16 MXU inputs, f32 accumulation.
        logit = (jnp.dot(w_ref[...], ph_ref[...].astype(jnp.bfloat16),
                         preferred_element_type=jnp.float32)
                 + bias_ref[...])                         # bias broadcasts along lanes

        # Fused gather of the raw logit at the (global) target vocab row.
        vid = jax.lax.broadcasted_iota(jnp.int32, logit.shape, 0) + v * tv
        hit = vid == col_ref[...]                         # (TV,TB) vs (1,TB)
        t_ref[...] += jnp.sum(jnp.where(hit, logit, 0.0), axis=0, keepdims=True)

        # Online logsumexp update (all in f32; v5e has no bf16 EUP).
        m_prev = m_ref[...]
        m_new = jnp.maximum(m_prev, jnp.max(logit, axis=0, keepdims=True))
        l_ref[...] = (l_ref[...] * jnp.exp(m_prev - m_new)
                      + jnp.sum(jnp.exp(logit - m_new), axis=0, keepdims=True))
        m_ref[...] = m_new

        @pl.when(v == nv - 1)
        def _finalize():
            # logprob[col[b], b] = logit[col[b], b] - logsumexp_v(logit[:, b])
            out_ref[...] = t_ref[...] - (m_ref[...] + jnp.log(l_ref[...]))

    @pl.when(jnp.logical_and(jnp.logical_not(active), v == nv - 1))
    def _skipped():
        # Empty tile for this cluster: emit zeros (discarded by the wrapper mask).
        out_ref[...] = jnp.zeros_like(out_ref)


def _cluster_nll_call(hid_T, projT, w_pad, bias_pad, col, counts, *, tb, tv):
    """Per-row gathered log-prob for one cluster.

    hid_T    : (D, Bp)  bf16   lane-dense transposed hidden (shared by clusters)
    projT    : (E, D)   bf16
    w_pad    : (Vp, E)  bf16   natural nn.Linear layout, V padded to Vp
    bias_pad : (Vp, 1)  f32    padding rows = -1e30 (exp underflows to 0)
    col      : (1, Bp)  int32  target vocab row per column (row of hidden)
    counts   : (nb,)    int32  members of this cluster per B tile
    Returns (Bp,) f32 with g[b] = log_softmax(...)[b, col[b]] (0 for empty tiles).
    """
    D, Bp = hid_T.shape
    E = projT.shape[0]
    Vp = w_pad.shape[0]
    nb, nv = Bp // tb, Vp // tv

    grid_spec = pltpu.PrefetchScalarGridSpec(
        num_scalar_prefetch=1,                     # per-B-tile member counts -> SMEM
        grid=(nb, nv),                             # B parallel, V = reduction (last)
        in_specs=[
            pl.BlockSpec((D, tb), lambda b, v, cnt: (0, b)),        # hidden^T
            pl.BlockSpec((E, D), lambda b, v, cnt: (0, 0)),         # proj^T (whole array)
            # Weight/bias index freezes at 0 for empty B tiles, so their DMA is
            # elided (consecutive identical block indices are not re-fetched).
            pl.BlockSpec((tv, E), lambda b, v, cnt: (jnp.where(cnt[b] > 0, v, 0), 0)),
            pl.BlockSpec((tv, 1), lambda b, v, cnt: (jnp.where(cnt[b] > 0, v, 0), 0)),
            pl.BlockSpec((1, tb), lambda b, v, cnt: (0, b)),        # target vocab row
        ],
        out_specs=pl.BlockSpec((1, tb), lambda b, v, cnt: (0, b)),  # lane-dense gather
        scratch_shapes=[
            pltpu.VMEM((E, tb), jnp.float32),      # proj^T @ hidden^T (per B tile)
            pltpu.VMEM((1, tb), jnp.float32),      # running max
            pltpu.VMEM((1, tb), jnp.float32),      # running sum-exp
            pltpu.VMEM((1, tb), jnp.float32),      # raw logit at target row
        ],
    )
    out = pl.pallas_call(
        _cluster_nll_kernel,
        out_shape=jax.ShapeDtypeStruct((1, Bp), jnp.float32),
        grid_spec=grid_spec,
        compiler_params=pltpu.CompilerParams(
            dimension_semantics=("parallel", "arbitrary"),
            vmem_limit_bytes=_vmem_limit_bytes(tb, tv, D, E),
        ),
    )(counts, hid_T, projT, w_pad, bias_pad, col)
    return out[0]                                   # (Bp,)


# ---------------------------------------------------------------------------
# Module builder: pre-lays-out all cluster weights ONCE (padded, bf16) and
# returns (prepared_arrays, forward_fn).  Static tiling metadata lives in the
# forward closure so the jitted forward never re-transposes / re-pads weights.
# ---------------------------------------------------------------------------
def build_adaptive_logsoftmax(params, *, n_token, cutoffs, tb_max=1024, tv_max=512,
                              reduction="mean"):
    cutoffs_full = list(cutoffs) + [n_token]
    cutoff_values = [0] + cutoffs_full
    n_clusters = len(cutoffs_full) - 1
    shortlist = cutoffs_full[0]
    head_size = shortlist + n_clusters

    # head weight/bias = cat(out_layers[0], cluster params)
    head_weight = jnp.concatenate([params["out_weights"][0],
                                   params["cluster_weight"]], axis=0)   # (head_size, E0)
    head_bias = jnp.concatenate([params["out_biases"][0],
                                 params["cluster_bias"]], axis=0)       # (head_size,)

    prepared = {"projT": [], "w": [], "b": []}
    tvs = []
    for i in range(n_clusters + 1):
        w = head_weight if i == 0 else params["out_weights"][i]         # (V_i, E_i)
        bvec = head_bias if i == 0 else params["out_biases"][i]         # (V_i,)
        proj = params["out_projs"][i]                                   # (D, E_i)
        V, E = w.shape
        tv, Vp = _pick_v_tiles(V, tv_max)
        prepared["projT"].append(proj.T.astype(jnp.bfloat16))           # (E_i, D)
        prepared["w"].append(
            jnp.zeros((Vp, E), jnp.bfloat16).at[:V].set(w.astype(jnp.bfloat16)))
        prepared["b"].append(
            jnp.full((Vp, 1), -1e30, jnp.float32).at[:V, 0].set(bvec.astype(jnp.float32)))
        tvs.append(tv)

    def forward(prepared, hidden, target):
        B, D = hidden.shape
        tb, Bp = _pick_b_tiles(B, tb_max)
        nb = Bp // tb
        tgt = target.astype(jnp.int32)

        # hidden is cast / transposed / padded ONCE and shared by all clusters.
        hid_T = jnp.zeros((D, Bp), jnp.bfloat16).at[:, :B].set(
            hidden.astype(jnp.bfloat16).T)

        def pack_col(c):
            return jnp.zeros((1, Bp), jnp.int32).at[0, :B].set(c.astype(jnp.int32))

        def pack_counts(active_mask):
            act = jnp.zeros((Bp,), jnp.int32).at[:B].set(active_mask.astype(jnp.int32))
            return act.reshape(nb, tb).sum(axis=1).astype(jnp.int32)

        # Effective head column per row (fuses the head gather):
        #   shortlist rows      -> target
        #   tail-cluster-i rows -> head_size - i   (== head_logprob[:, -i], TXL convention)
        head_col = jnp.where((tgt >= 0) & (tgt < shortlist),
                             jnp.clip(tgt, 0, shortlist - 1), 0)
        for i in range(1, n_clusters + 1):
            l_idx, r_idx = cutoff_values[i], cutoff_values[i + 1]
            head_col = jnp.where((tgt >= l_idx) & (tgt < r_idx), head_size - i, head_col)

        head_gather = _cluster_nll_call(
            hid_T, prepared["projT"][0], prepared["w"][0], prepared["b"][0],
            pack_col(head_col), pack_counts(jnp.ones((B,), jnp.int32)),
            tb=tb, tv=tvs[0])[:B]                                       # (B,)

        mask0 = (tgt >= 0) & (tgt < shortlist)
        nll = jnp.where(mask0, -head_gather, 0.0)

        # Tail clusters.  Full dynamic row compaction (torch's index_select of
        # member rows) needs dynamic shapes; instead empty B tiles skip both
        # compute and their weight/bias DMA inside the kernel.
        for i in range(1, n_clusters + 1):
            l_idx, r_idx = cutoff_values[i], cutoff_values[i + 1]
            mask_i = (tgt >= l_idx) & (tgt < r_idx)
            tgt_rel = jnp.clip(tgt - l_idx, 0, r_idx - l_idx - 1)
            tail_gather = _cluster_nll_call(
                hid_T, prepared["projT"][i], prepared["w"][i], prepared["b"][i],
                pack_col(tgt_rel), pack_counts(mask_i),
                tb=tb, tv=tvs[i])[:B]
            nll = jnp.where(mask_i, -(head_gather + tail_gather), nll)

        # Matches the torch module exactly: plain mean/sum over ALL rows
        # (it only special-cases ignore_index when ignore_index >= 0).
        if reduction == "sum":
            return nll.sum()
        if reduction == "mean":
            return nll.mean()
        return nll

    return prepared, forward


# ---------------------------------------------------------------------------
# Parameter construction (mirrors ProjectedAdaptiveLogSoftmax.__init__ shapes,
# div_val != 1 branch, d_proj == d_embed).  Deterministic, no checkpoint load.
# ---------------------------------------------------------------------------
def init_params(key, n_token, d_embed, d_proj, cutoffs, div_val):
    cutoffs_full = list(cutoffs) + [n_token]
    cutoff_ends = [0] + cutoffs_full
    n_clusters = len(cutoffs_full) - 1
    keys = jax.random.split(key, 3 * len(cutoffs_full) + 2)
    params = {"out_projs": [], "out_weights": [], "out_biases": []}
    ki = 0
    for i in range(len(cutoffs_full)):
        l_idx, r_idx = cutoff_ends[i], cutoff_ends[i + 1]
        d_emb_i = d_embed // (div_val ** i)
        s = 1.0 / sqrt(d_emb_i)
        params["out_projs"].append(
            jax.random.uniform(keys[ki], (d_proj, d_emb_i), jnp.float32, -s, s)); ki += 1
        params["out_weights"].append(   # nn.Linear(d_emb_i, r-l).weight -> (V_i, E_i)
            jax.random.uniform(keys[ki], (r_idx - l_idx, d_emb_i), jnp.float32, -s, s)); ki += 1
        params["out_biases"].append(
            jax.random.uniform(keys[ki], (r_idx - l_idx,), jnp.float32, -s, s)); ki += 1
    # torch inits cluster params to zero; random here to avoid a degenerate test.
    params["cluster_weight"] = jax.random.uniform(
        keys[ki], (n_clusters, d_embed), jnp.float32, -0.1, 0.1); ki += 1
    params["cluster_bias"] = jax.random.uniform(
        keys[ki], (n_clusters,), jnp.float32, -0.1, 0.1); ki += 1
    return params


# ---------------------------------------------------------------------------
# Pure-JAX f32 reference (mirrors the torch module math directly).
# ---------------------------------------------------------------------------
def adaptive_logsoftmax_nll_ref(params, hidden, target, *, n_token, cutoffs,
                                reduction="mean"):
    cutoffs_full = list(cutoffs) + [n_token]
    cutoff_values = [0] + cutoffs_full
    n_clusters = len(cutoffs_full) - 1
    shortlist = cutoffs_full[0]
    head_size = shortlist + n_clusters
    tgt = target.astype(jnp.int32)

    head_weight = jnp.concatenate([params["out_weights"][0],
                                   params["cluster_weight"]], axis=0)
    head_bias = jnp.concatenate([params["out_biases"][0],
                                 params["cluster_bias"]], axis=0)
    head_logit = hidden @ params["out_projs"][0] @ head_weight.T + head_bias
    head_lp = jax.nn.log_softmax(head_logit, axis=-1)

    nll = jnp.zeros(tgt.shape, jnp.float32)
    mask0 = (tgt >= 0) & (tgt < shortlist)
    g0 = jnp.take_along_axis(head_lp, jnp.clip(tgt, 0, shortlist - 1)[:, None], axis=1)[:, 0]
    nll = jnp.where(mask0, -g0, nll)

    for i in range(1, n_clusters + 1):
        l_idx, r_idx = cutoff_values[i], cutoff_values[i + 1]
        mask_i = (tgt >= l_idx) & (tgt < r_idx)
        tail_logit = (hidden @ params["out_projs"][i] @ params["out_weights"][i].T
                      + params["out_biases"][i])
        tail_lp = jax.nn.log_softmax(tail_logit, axis=-1)
        tgt_rel = jnp.clip(tgt - l_idx, 0, r_idx - l_idx - 1)
        gi = jnp.take_along_axis(tail_lp, tgt_rel[:, None], axis=1)[:, 0]
        lp_i = head_lp[:, head_size - i] + gi
        nll = jnp.where(mask_i, -lp_i, nll)

    if reduction == "sum":
        return nll.sum()
    if reduction == "mean":
        return nll.mean()
    return nll


if __name__ == "__main__":
    # Small-but-tiled shapes: B tokens of dim d_embed, vocab split into a
    # shortlist + 2 tail clusters, div_val=2 projections.  Tile selection picks
    # tb=256, tv=512 here (head grid (1,2), tails (1,1)); on real workloads tb
    # grows to 1024 with nb>=2.
    B, d_embed, d_proj = 256, 128, 128
    n_token = 2000
    cutoffs = [1000, 1500]
    div_val = 2

    key = jax.random.PRNGKey(0)
    k_params, k_hidden, k_target = jax.random.split(key, 3)
    params = init_params(k_params, n_token, d_embed, d_proj, cutoffs, div_val)
    hidden = jax.random.normal(k_hidden, (B, d_proj), jnp.float32)
    target = jax.random.randint(k_target, (B,), 0, n_token, jnp.int32)

    prepared, forward = build_adaptive_logsoftmax(
        params, n_token=n_token, cutoffs=cutoffs)
    fwd = jax.jit(forward)
    loss = fwd(prepared, hidden, target)
    jax.block_until_ready(loss)

    # pure-JAX f32 reference check (kernel uses bf16 matmul inputs -> loose tol)
    ref_loss = adaptive_logsoftmax_nll_ref(params, hidden, target,
                                           n_token=n_token, cutoffs=cutoffs)
    assert jnp.allclose(loss, ref_loss, rtol=2e-2, atol=2e-2), (loss, ref_loss)
    print("KERNEL_OK")
</pallas_src>

<mosaic_0001>
module attributes {stable_mosaic.version = 11 : i64} {
  func.func @_cluster_nll_kernel(%arg0: i32, %arg1: i32, %arg2: memref<1xi32, #tpu.memory_space<smem>>, %arg3: memref<128x256xbf16, #tpu.memory_space<vmem>>, %arg4: memref<64x128xbf16, #tpu.memory_space<vmem>>, %arg5: memref<512x64xbf16, #tpu.memory_space<vmem>>, %arg6: memref<512x1xf32, #tpu.memory_space<vmem>>, %arg7: memref<1x256xi32, #tpu.memory_space<vmem>>, %arg8: memref<1x256xf32, #tpu.memory_space<vmem>>, %arg9: memref<64x256xf32, #tpu.memory_space<vmem>>, %arg10: memref<1x256xf32, #tpu.memory_space<vmem>>, %arg11: memref<1x256xf32, #tpu.memory_space<vmem>>, %arg12: memref<1x256xf32, #tpu.memory_space<vmem>>) attributes {dimension_semantics = [#tpu.dimension_semantics<parallel>, #tpu.dimension_semantics<arbitrary>], iteration_bounds = array<i64: 1, 1>, scalar_prefetch = 1 : i64, scratch_operands = 4 : i64, tpu.core_type = #tpu.core_type<tc>, window_params = [{transform_indices = @transform_0, window_bounds = array<i64: 128, 256>}, {pipeline_mode = #tpu.pipeline_mode<synchronous>, transform_indices = @transform_1, window_bounds = array<i64: 64, 128>}, {transform_indices = @transform_2, window_bounds = array<i64: 512, 64>}, {transform_indices = @transform_3, window_bounds = array<i64: 512, 1>}, {transform_indices = @transform_4, window_bounds = array<i64: 1, 256>}, {transform_indices = @transform_5, window_bounds = array<i64: 1, 256>}]} {
    %0 = arith.index_cast %arg0 : i32 to index
    %1 = memref.load %arg2[%0] : memref<1xi32, #tpu.memory_space<smem>>
    %c0_i32 = arith.constant 0 : i32
    %2 = arith.cmpi sgt, %1, %c0_i32 : i32
    %3 = arith.extui %2 : i1 to i32
    %c0_i32_0 = arith.constant 0 : i32
    %4 = arith.cmpi ne, %3, %c0_i32_0 : i32
    scf.if %4 {
      %c0_i32_3 = arith.constant 0 : i32
      %10 = arith.cmpi eq, %arg1, %c0_i32_3 : i32
      %11 = arith.extui %10 : i1 to i32
      %c0_i32_4 = arith.constant 0 : i32
      %12 = arith.cmpi ne, %11, %c0_i32_4 : i32
      scf.if %12 {
        %c0_30 = arith.constant 0 : index
        %c0_31 = arith.constant 0 : index
        %53 = vector.load %arg4[%c0_30, %c0_31] : memref<64x128xbf16, #tpu.memory_space<vmem>>, vector<64x128xbf16>
        %c0_32 = arith.constant 0 : index
        %c0_33 = arith.constant 0 : index
        %54 = vector.load %arg3[%c0_32, %c0_33] : memref<128x256xbf16, #tpu.memory_space<vmem>>, vector<128x256xbf16>
        %cst_34 = arith.constant dense<0.000000e+00> : vector<64x256xf32>
        %55 = tpu.matmul %53, %54, %cst_34 {dimension_numbers = #tpu.dot_dimension_numbers<[1], [0], [0], [1], [0, 0, 1, 1], [], []>} : vector<64x128xbf16>, vector<128x256xbf16>, vector<64x256xf32> -> vector<64x256xf32>
        %c0_35 = arith.constant 0 : index
        %c0_36 = arith.constant 0 : index
        %56 = vector.load %arg9[%c0_35, %c0_36] : memref<64x256xf32, #tpu.memory_space<vmem>>, vector<64x256xf32>
        tpu.vector_store %arg9[%c0_35, %c0_36], %55 {strides = array<i32>} : memref<64x256xf32, #tpu.memory_space<vmem>>, vector<64x256xf32>,
        %cst_37 = arith.constant 0xFF800000 : f32
        %57 = vector.broadcast %cst_37 : f32 to vector<1x256xf32>
        %c0_38 = arith.constant 0 : index
        %c0_39 = arith.constant 0 : index
        %58 = vector.load %arg10[%c0_38, %c0_39] : memref<1x256xf32, #tpu.memory_space<vmem>>, vector<1x256xf32>
        tpu.vector_store %arg10[%c0_38, %c0_39], %57 {strides = array<i32>} : memref<1x256xf32, #tpu.memory_space<vmem>>, vector<1x256xf32>,
        %cst_40 = arith.constant 0.000000e+00 : f32
        %59 = vector.broadcast %cst_40 : f32 to vector<1x256xf32>
        %c0_41 = arith.constant 0 : index
        %c0_42 = arith.constant 0 : index
        %60 = vector.load %arg11[%c0_41, %c0_42] : memref<1x256xf32, #tpu.memory_space<vmem>>, vector<1x256xf32>
        tpu.vector_store %arg11[%c0_41, %c0_42], %59 {strides = array<i32>} : memref<1x256xf32, #tpu.memory_space<vmem>>, vector<1x256xf32>,
        %cst_43 = arith.constant 0.000000e+00 : f32
        %61 = vector.broadcast %cst_43 : f32 to vector<1x256xf32>
        %c0_44 = arith.constant 0 : index
        %c0_45 = arith.constant 0 : index
        %62 = vector.load %arg12[%c0_44, %c0_45] : memref<1x256xf32, #tpu.memory_space<vmem>>, vector<1x256xf32>
        tpu.vector_store %arg12[%c0_44, %c0_45], %61 {strides = array<i32>} : memref<1x256xf32, #tpu.memory_space<vmem>>, vector<1x256xf32>,
      } else {
      }
      %c0 = arith.constant 0 : index
      %c0_5 = arith.constant 0 : index
      %13 = vector.load %arg5[%c0, %c0_5] : memref<512x64xbf16, #tpu.memory_space<vmem>>, vector<512x64xbf16>
      %c0_6 = arith.constant 0 : index
      %c0_7 = arith.constant 0 : index
      %14 = vector.load %arg9[%c0_6, %c0_7] : memref<64x256xf32, #tpu.memory_space<vmem>>, vector<64x256xf32>
      %15 = arith.truncf %14 : vector<64x256xf32> to vector<64x256xbf16>
      %cst = arith.constant dense<0.000000e+00> : vector<512x256xf32>
      %16 = tpu.matmul %13, %15, %cst {dimension_numbers = #tpu.dot_dimension_numbers<[1], [0], [0], [1], [0, 0, 1, 1], [], []>} : vector<512x64xbf16>, vector<64x256xbf16>, vector<512x256xf32> -> vector<512x256xf32>
      %c0_8 = arith.constant 0 : index
      %c0_9 = arith.constant 0 : index
      %17 = vector.load %arg6[%c0_8, %c0_9] : memref<512x1xf32, #tpu.memory_space<vmem>>, vector<512x1xf32>
      %18 = vector.broadcast %17 : vector<512x1xf32> to vector<512x256xf32>
      %19 = arith.addf %16, %18 : vector<512x256xf32>
      %20 = tpu.iota {dimensions = array<i32: 0>} : vector<512x256xi32>
      %c512_i32 = arith.constant 512 : i32
      %21 = arith.muli %arg1, %c512_i32 : i32
      %22 = vector.broadcast %21 : i32 to vector<512x256xi32>
      %23 = arith.addi %20, %22 : vector<512x256xi32>
      %c0_10 = arith.constant 0 : index
      %c0_11 = arith.constant 0 : index
      %24 = vector.load %arg7[%c0_10, %c0_11] : memref<1x256xi32, #tpu.memory_space<vmem>>, vector<1x256xi32>
      %25 = vector.broadcast %24 : vector<1x256xi32> to vector<512x256xi32>
      %26 = arith.cmpi eq, %23, %25 : vector<512x256xi32>
      %c0_12 = arith.constant 0 : index
      %c0_13 = arith.constant 0 : index
      %27 = vector.load %arg12[%c0_12, %c0_13] : memref<1x256xf32, #tpu.memory_space<vmem>>, vector<1x256xf32>
      %cst_14 = arith.constant 0.000000e+00 : f32
      %28 = vector.broadcast %cst_14 : f32 to vector<512x256xf32>
      %29 = arith.select %26, %19, %28 : vector<512x256xi1>, vector<512x256xf32>
      %cst_15 = arith.constant dense<0.000000e+00> : vector<256xf32>
      %30 = vector.multi_reduction <add>, %29, %cst_15 [0] : vector<512x256xf32> to vector<256xf32>
      %31 = vector.shape_cast %30 : vector<256xf32> to vector<1x256xf32>
      %32 = arith.addf %27, %31 : vector<1x256xf32>
      %c0_16 = arith.constant 0 : index
      %c0_17 = arith.constant 0 : index
      %33 = vector.load %arg12[%c0_16, %c0_17] : memref<1x256xf32, #tpu.memory_space<vmem>>, vector<1x256xf32>
      tpu.vector_store %arg12[%c0_16, %c0_17], %32 {strides = array<i32>} : memref<1x256xf32, #tpu.memory_space<vmem>>, vector<1x256xf32>,
      %c0_18 = arith.constant 0 : index
      %c0_19 = arith.constant 0 : index
      %34 = vector.load %arg10[%c0_18, %c0_19] : memref<1x256xf32, #tpu.memory_space<vmem>>, vector<1x256xf32>
      %cst_20 = arith.constant dense<0xFF800000> : vector<256xf32>
      %35 = vector.multi_reduction <maximumf>, %19, %cst_20 [0] : vector<512x256xf32> to vector<256xf32>
      %36 = vector.shape_cast %35 : vector<256xf32> to vector<1x256xf32>
      %37 = arith.maximumf %34, %36 : vector<1x256xf32>
      %c0_21 = arith.constant 0 : index
      %c0_22 = arith.constant 0 : index
      %38 = vector.load %arg11[%c0_21, %c0_22] : memref<1x256xf32, #tpu.memory_space<vmem>>, vector<1x256xf32>
      %39 = arith.subf %34, %37 : vector<1x256xf32>
      %40 = math.exp %39 : vector<1x256xf32>
      %41 = arith.mulf %38, %40 : vector<1x256xf32>
      %42 = vector.broadcast %37 : vector<1x256xf32> to vector<512x256xf32>
      %43 = arith.subf %19, %42 : vector<512x256xf32>
      %44 = math.exp %43 : vector<512x256xf32>
      %cst_23 = arith.constant dense<0.000000e+00> : vector<256xf32>
      %45 = vector.multi_reduction <add>, %44, %cst_23 [0] : vector<512x256xf32> to vector<256xf32>
      %46 = vector.shape_cast %45 : vector<256xf32> to vector<1x256xf32>
      %47 = arith.addf %41, %46 : vector<1x256xf32>
      %c0_24 = arith.constant 0 : index
      %c0_25 = arith.constant 0 : index
      %48 = vector.load %arg11[%c0_24, %c0_25] : memref<1x256xf32, #tpu.memory_space<vmem>>, vector<1x256xf32>
      tpu.vector_store %arg11[%c0_24, %c0_25], %47 {strides = array<i32>} : memref<1x256xf32, #tpu.memory_space<vmem>>, vector<1x256xf32>,
      %c0_26 = arith.constant 0 : index
      %c0_27 = arith.constant 0 : index
      %49 = vector.load %arg10[%c0_26, %c0_27] : memref<1x256xf32, #tpu.memory_space<vmem>>, vector<1x256xf32>
      tpu.vector_store %arg10[%c0_26, %c0_27], %37 {strides = array<i32>} : memref<1x256xf32, #tpu.memory_space<vmem>>, vector<1x256xf32>,
      %c0_i32_28 = arith.constant 0 : i32
      %50 = arith.cmpi eq, %arg1, %c0_i32_28 : i32
      %51 = arith.extui %50 : i1 to i32
      %c0_i32_29 = arith.constant 0 : i32
      %52 = arith.cmpi ne, %51, %c0_i32_29 : i32
      scf.if %52 {
        %c0_30 = arith.constant 0 : index
        %c0_31 = arith.constant 0 : index
        %53 = vector.load %arg12[%c0_30, %c0_31] : memref<1x256xf32, #tpu.memory_space<vmem>>, vector<1x256xf32>
        %c0_32 = arith.constant 0 : index
        %c0_33 = arith.constant 0 : index
        %54 = vector.load %arg10[%c0_32, %c0_33] : memref<1x256xf32, #tpu.memory_space<vmem>>, vector<1x256xf32>
        %c0_34 = arith.constant 0 : index
        %c0_35 = arith.constant 0 : index
        %55 = vector.load %arg11[%c0_34, %c0_35] : memref<1x256xf32, #tpu.memory_space<vmem>>, vector<1x256xf32>
        %56 = math.log %55 : vector<1x256xf32>
        %57 = arith.addf %54, %56 : vector<1x256xf32>
        %58 = arith.subf %53, %57 : vector<1x256xf32>
        %c0_36 = arith.constant 0 : index
        %c0_37 = arith.constant 0 : index
        %59 = vector.load %arg8[%c0_36, %c0_37] : memref<1x256xf32, #tpu.memory_space<vmem>>, vector<1x256xf32>
        tpu.vector_store %arg8[%c0_36, %c0_37], %58 {strides = array<i32>} : memref<1x256xf32, #tpu.memory_space<vmem>>, vector<1x256xf32>,
      } else {
      }
    } else {
    }
    %true = arith.constant true
    %5 = arith.xori %2, %true : i1
    %c0_i32_1 = arith.constant 0 : i32
    %6 = arith.cmpi eq, %arg1, %c0_i32_1 : i32
    %7 = arith.andi %5, %6 : i1
    %8 = arith.extui %7 : i1 to i32
    %c0_i32_2 = arith.constant 0 : i32
    %9 = arith.cmpi ne, %8, %c0_i32_2 : i32
    scf.if %9 {
      %cst = arith.constant 0.000000e+00 : f32
      %10 = vector.broadcast %cst : f32 to vector<1x256xf32>
      %c0 = arith.constant 0 : index
      %c0_3 = arith.constant 0 : index
      %11 = vector.load %arg8[%c0, %c0_3] : memref<1x256xf32, #tpu.memory_space<vmem>>, vector<1x256xf32>
      tpu.vector_store %arg8[%c0, %c0_3], %10 {strides = array<i32>} : memref<1x256xf32, #tpu.memory_space<vmem>>, vector<1x256xf32>,
    } else {
    }
    return
  }
  func.func @transform_0(%arg0: i32, %arg1: i32, %arg2: memref<1xi32, #tpu.memory_space<smem>>) -> (i32, i32) {
    %c0_i32 = arith.constant 0 : i32
    %c0_i32_0 = arith.constant 0 : i32
    return %c0_i32, %arg0 : i32, i32
  }
  func.func @transform_1(%arg0: i32, %arg1: i32, %arg2: memref<1xi32, #tpu.memory_space<smem>>) -> (i32, i32) {
    %c0_i32 = arith.constant 0 : i32
    %c0_i32_0 = arith.constant 0 : i32
    %c0_i32_1 = arith.constant 0 : i32
    return %c0_i32, %c0_i32_0 : i32, i32
  }
  func.func @transform_2(%arg0: i32, %arg1: i32, %arg2: memref<1xi32, #tpu.memory_space<smem>>) -> (i32, i32) {
    %0 = arith.index_cast %arg0 : i32 to index
    %1 = memref.load %arg2[%0] : memref<1xi32, #tpu.memory_space<smem>>
    %c0_i32 = arith.constant 0 : i32
    %2 = arith.cmpi sgt, %1, %c0_i32 : i32
    %c0_i32_0 = arith.constant 0 : i32
    %3 = arith.select %2, %arg1, %c0_i32_0 : i32
    %c0_i32_1 = arith.constant 0 : i32
    %c0_i32_2 = arith.constant 0 : i32
    return %3, %c0_i32_1 : i32, i32
  }
  func.func @transform_3(%arg0: i32, %arg1: i32, %arg2: memref<1xi32, #tpu.memory_space<smem>>) -> (i32, i32) {
    %0 = arith.index_cast %arg0 : i32 to index
    %1 = memref.load %arg2[%0] : memref<1xi32, #tpu.memory_space<smem>>
    %c0_i32 = arith.constant 0 : i32
    %2 = arith.cmpi sgt, %1, %c0_i32 : i32
    %c0_i32_0 = arith.constant 0 : i32
    %3 = arith.select %2, %arg1, %c0_i32_0 : i32
    %c0_i32_1 = arith.constant 0 : i32
    %c0_i32_2 = arith.constant 0 : i32
    return %3, %c0_i32_1 : i32, i32
  }
  func.func @transform_4(%arg0: i32, %arg1: i32, %arg2: memref<1xi32, #tpu.memory_space<smem>>) -> (i32, i32) {
    %c0_i32 = arith.constant 0 : i32
    %c0_i32_0 = arith.constant 0 : i32
    return %c0_i32, %arg0 : i32, i32
  }
  func.func @transform_5(%arg0: i32, %arg1: i32, %arg2: memref<1xi32, #tpu.memory_space<smem>>) -> (i32, i32) {
    %c0_i32 = arith.constant 0 : i32
    %c0_i32_0 = arith.constant 0 : i32
    return %c0_i32, %arg0 : i32, i32
  }
}

module attributes {stable_mosaic.version = 11 : i64} {
  func.func @_cluster_nll_kernel(%arg0: i32, %arg1: i32, %arg2: memref<1xi32, #tpu.memory_space<smem>>, %arg3: memref<128x256xbf16, #tpu.memory_space<vmem>>, %arg4: memref<32x128xbf16, #tpu.memory_space<vmem>>, %arg5: memref<512x32xbf16, #tpu.memory_space<vmem>>, %arg6: memref<512x1xf32, #tpu.memory_space<vmem>>, %arg7: memref<1x256xi32, #tpu.memory_space<vmem>>, %arg8: memref<1x256xf32, #tpu.memory_space<vmem>>, %arg9: memref<32x256xf32, #tpu.memory_space<vmem>>, %arg10: memref<1x256xf32, #tpu.memory_space<vmem>>, %arg11: memref<1x256xf32, #tpu.memory_space<vmem>>, %arg12: memref<1x256xf32, #tpu.memory_space<vmem>>) attributes {dimension_semantics = [#tpu.dimension_semantics<parallel>, #tpu.dimension_semantics<arbitrary>], iteration_bounds = array<i64: 1, 1>, scalar_prefetch = 1 : i64, scratch_operands = 4 : i64, tpu.core_type = #tpu.core_type<tc>, window_params = [{transform_indices = @transform_0, window_bounds = array<i64: 128, 256>}, {pipeline_mode = #tpu.pipeline_mode<synchronous>, transform_indices = @transform_1, window_bounds = array<i64: 32, 128>}, {transform_indices = @transform_2, window_bounds = array<i64: 512, 32>}, {transform_indices = @transform_3, window_bounds = array<i64: 512, 1>}, {transform_indices = @transform_4, window_bounds = array<i64: 1, 256>}, {transform_indices = @transform_5, window_bounds = array<i64: 1, 256>}]} {
    %0 = arith.index_cast %arg0 : i32 to index
    %1 = memref.load %arg2[%0] : memref<1xi32, #tpu.memory_space<smem>>
    %c0_i32 = arith.constant 0 : i32
    %2 = arith.cmpi sgt, %1, %c0_i32 : i32
    %3 = arith.extui %2 : i1 to i32
    %c0_i32_0 = arith.constant 0 : i32
    %4 = arith.cmpi ne, %3, %c0_i32_0 : i32
    scf.if %4 {
      %c0_i32_3 = arith.constant 0 : i32
      %10 = arith.cmpi eq, %arg1, %c0_i32_3 : i32
      %11 = arith.extui %10 : i1 to i32
      %c0_i32_4 = arith.constant 0 : i32
      %12 = arith.cmpi ne, %11, %c0_i32_4 : i32
      scf.if %12 {
        %c0_30 = arith.constant 0 : index
        %c0_31 = arith.constant 0 : index
        %53 = vector.load %arg4[%c0_30, %c0_31] : memref<32x128xbf16, #tpu.memory_space<vmem>>, vector<32x128xbf16>
        %c0_32 = arith.constant 0 : index
        %c0_33 = arith.constant 0 : index
        %54 = vector.load %arg3[%c0_32, %c0_33] : memref<128x256xbf16, #tpu.memory_space<vmem>>, vector<128x256xbf16>
        %cst_34 = arith.constant dense<0.000000e+00> : vector<32x256xf32>
        %55 = tpu.matmul %53, %54, %cst_34 {dimension_numbers = #tpu.dot_dimension_numbers<[1], [0], [0], [1], [0, 0, 1, 1], [], []>} : vector<32x128xbf16>, vector<128x256xbf16>, vector<32x256xf32> -> vector<32x256xf32>
        %c0_35 = arith.constant 0 : index
        %c0_36 = arith.constant 0 : index
        %56 = vector.load %arg9[%c0_35, %c0_36] : memref<32x256xf32, #tpu.memory_space<vmem>>, vector<32x256xf32>
        tpu.vector_store %arg9[%c0_35, %c0_36], %55 {strides = array<i32>} : memref<32x256xf32, #tpu.memory_space<vmem>>, vector<32x256xf32>,
        %cst_37 = arith.constant 0xFF800000 : f32
        %57 = vector.broadcast %cst_37 : f32 to vector<1x256xf32>
        %c0_38 = arith.constant 0 : index
        %c0_39 = arith.constant 0 : index
        %58 = vector.load %arg10[%c0_38, %c0_39] : memref<1x256xf32, #tpu.memory_space<vmem>>, vector<1x256xf32>
        tpu.vector_store %arg10[%c0_38, %c0_39], %57 {strides = array<i32>} : memref<1x256xf32, #tpu.memory_space<vmem>>, vector<1x256xf32>,
        %cst_40 = arith.constant 0.000000e+00 : f32
        %59 = vector.broadcast %cst_40 : f32 to vector<1x256xf32>
        %c0_41 = arith.constant 0 : index
        %c0_42 = arith.constant 0 : index
        %60 = vector.load %arg11[%c0_41, %c0_42] : memref<1x256xf32, #tpu.memory_space<vmem>>, vector<1x256xf32>
        tpu.vector_store %arg11[%c0_41, %c0_42], %59 {strides = array<i32>} : memref<1x256xf32, #tpu.memory_space<vmem>>, vector<1x256xf32>,
        %cst_43 = arith.constant 0.000000e+00 : f32
        %61 = vector.broadcast %cst_43 : f32 to vector<1x256xf32>
        %c0_44 = arith.constant 0 : index
        %c0_45 = arith.constant 0 : index
        %62 = vector.load %arg12[%c0_44, %c0_45] : memref<1x256xf32, #tpu.memory_space<vmem>>, vector<1x256xf32>
        tpu.vector_store %arg12[%c0_44, %c0_45], %61 {strides = array<i32>} : memref<1x256xf32, #tpu.memory_space<vmem>>, vector<1x256xf32>,
      } else {
      }
      %c0 = arith.constant 0 : index
      %c0_5 = arith.constant 0 : index
      %13 = vector.load %arg5[%c0, %c0_5] : memref<512x32xbf16, #tpu.memory_space<vmem>>, vector<512x32xbf16>
      %c0_6 = arith.constant 0 : index
      %c0_7 = arith.constant 0 : index
      %14 = vector.load %arg9[%c0_6, %c0_7] : memref<32x256xf32, #tpu.memory_space<vmem>>, vector<32x256xf32>
      %15 = arith.truncf %14 : vector<32x256xf32> to vector<32x256xbf16>
      %cst = arith.constant dense<0.000000e+00> : vector<512x256xf32>
      %16 = tpu.matmul %13, %15, %cst {dimension_numbers = #tpu.dot_dimension_numbers<[1], [0], [0], [1], [0, 0, 1, 1], [], []>} : vector<512x32xbf16>, vector<32x256xbf16>, vector<512x256xf32> -> vector<512x256xf32>
      %c0_8 = arith.constant 0 : index
      %c0_9 = arith.constant 0 : index
      %17 = vector.load %arg6[%c0_8, %c0_9] : memref<512x1xf32, #tpu.memory_space<vmem>>, vector<512x1xf32>
      %18 = vector.broadcast %17 : vector<512x1xf32> to vector<512x256xf32>
      %19 = arith.addf %16, %18 : vector<512x256xf32>
      %20 = tpu.iota {dimensions = array<i32: 0>} : vector<512x256xi32>
      %c512_i32 = arith.constant 512 : i32
      %21 = arith.muli %arg1, %c512_i32 : i32
      %22 = vector.broadcast %21 : i32 to vector<512x256xi32>
      %23 = arith.addi %20, %22 : vector<512x256xi32>
      %c0_10 = arith.constant 0 : index
      %c0_11 = arith.constant 0 : index
      %24 = vector.load %arg7[%c0_10, %c0_11] : memref<1x256xi32, #tpu.memory_space<vmem>>, vector<1x256xi32>
      %25 = vector.broadcast %24 : vector<1x256xi32> to vector<512x256xi32>
      %26 = arith.cmpi eq, %23, %25 : vector<512x256xi32>
      %c0_12 = arith.constant 0 : index
      %c0_13 = arith.constant 0 : index
      %27 = vector.load %arg12[%c0_12, %c0_13] : memref<1x256xf32, #tpu.memory_space<vmem>>, vector<1x256xf32>
      %cst_14 = arith.constant 0.000000e+00 : f32
      %28 = vector.broadcast %cst_14 : f32 to vector<512x256xf32>
      %29 = arith.select %26, %19, %28 : vector<512x256xi1>, vector<512x256xf32>
      %cst_15 = arith.constant dense<0.000000e+00> : vector<256xf32>
      %30 = vector.multi_reduction <add>, %29, %cst_15 [0] : vector<512x256xf32> to vector<256xf32>
      %31 = vector.shape_cast %30 : vector<256xf32> to vector<1x256xf32>
      %32 = arith.addf %27, %31 : vector<1x256xf32>
      %c0_16 = arith.constant 0 : index
      %c0_17 = arith.constant 0 : index
      %33 = vector.load %arg12[%c0_16, %c0_17] : memref<1x256xf32, #tpu.memory_space<vmem>>, vector<1x256xf32>
      tpu.vector_store %arg12[%c0_16, %c0_17], %32 {strides = array<i32>} : memref<1x256xf32, #tpu.memory_space<vmem>>, vector<1x256xf32>,
      %c0_18 = arith.constant 0 : index
      %c0_19 = arith.constant 0 : index
      %34 = vector.load %arg10[%c0_18, %c0_19] : memref<1x256xf32, #tpu.memory_space<vmem>>, vector<1x256xf32>
      %cst_20 = arith.constant dense<0xFF800000> : vector<256xf32>
      %35 = vector.multi_reduction <maximumf>, %19, %cst_20 [0] : vector<512x256xf32> to vector<256xf32>
      %36 = vector.shape_cast %35 : vector<256xf32> to vector<1x256xf32>
      %37 = arith.maximumf %34, %36 : vector<1x256xf32>
      %c0_21 = arith.constant 0 : index
      %c0_22 = arith.constant 0 : index
      %38 = vector.load %arg11[%c0_21, %c0_22] : memref<1x256xf32, #tpu.memory_space<vmem>>, vector<1x256xf32>
      %39 = arith.subf %34, %37 : vector<1x256xf32>
      %40 = math.exp %39 : vector<1x256xf32>
      %41 = arith.mulf %38, %40 : vector<1x256xf32>
      %42 = vector.broadcast %37 : vector<1x256xf32> to vector<512x256xf32>
      %43 = arith.subf %19, %42 : vector<512x256xf32>
      %44 = math.exp %43 : vector<512x256xf32>
      %cst_23 = arith.constant dense<0.000000e+00> : vector<256xf32>
      %45 = vector.multi_reduction <add>, %44, %cst_23 [0] : vector<512x256xf32> to vector<256xf32>
      %46 = vector.shape_cast %45 : vector<256xf32> to vector<1x256xf32>
      %47 = arith.addf %41, %46 : vector<1x256xf32>
      %c0_24 = arith.constant 0 : index
      %c0_25 = arith.constant 0 : index
      %48 = vector.load %arg11[%c0_24, %c0_25] : memref<1x256xf32, #tpu.memory_space<vmem>>, vector<1x256xf32>
      tpu.vector_store %arg11[%c0_24, %c0_25], %47 {strides = array<i32>} : memref<1x256xf32, #tpu.memory_space<vmem>>, vector<1x256xf32>,
      %c0_26 = arith.constant 0 : index
      %c0_27 = arith.constant 0 : index
      %49 = vector.load %arg10[%c0_26, %c0_27] : memref<1x256xf32, #tpu.memory_space<vmem>>, vector<1x256xf32>
      tpu.vector_store %arg10[%c0_26, %c0_27], %37 {strides = array<i32>} : memref<1x256xf32, #tpu.memory_space<vmem>>, vector<1x256xf32>,
      %c0_i32_28 = arith.constant 0 : i32
      %50 = arith.cmpi eq, %arg1, %c0_i32_28 : i32
      %51 = arith.extui %50 : i1 to i32
      %c0_i32_29 = arith.constant 0 : i32
      %52 = arith.cmpi ne, %51, %c0_i32_29 : i32
      scf.if %52 {
        %c0_30 = arith.constant 0 : index
        %c0_31 = arith.constant 0 : index
        %53 = vector.load %arg12[%c0_30, %c0_31] : memref<1x256xf32, #tpu.memory_space<vmem>>, vector<1x256xf32>
        %c0_32 = arith.constant 0 : index
        %c0_33 = arith.constant 0 : index
        %54 = vector.load %arg10[%c0_32, %c0_33] : memref<1x256xf32, #tpu.memory_space<vmem>>, vector<1x256xf32>
        %c0_34 = arith.constant 0 : index
        %c0_35 = arith.constant 0 : index
        %55 = vector.load %arg11[%c0_34, %c0_35] : memref<1x256xf32, #tpu.memory_space<vmem>>, vector<1x256xf32>
        %56 = math.log %55 : vector<1x256xf32>
        %57 = arith.addf %54, %56 : vector<1x256xf32>
        %58 = arith.subf %53, %57 : vector<1x256xf32>
        %c0_36 = arith.constant 0 : index
        %c0_37 = arith.constant 0 : index
        %59 = vector.load %arg8[%c0_36, %c0_37] : memref<1x256xf32, #tpu.memory_space<vmem>>, vector<1x256xf32>
        tpu.vector_store %arg8[%c0_36, %c0_37], %58 {strides = array<i32>} : memref<1x256xf32, #tpu.memory_space<vmem>>, vector<1x256xf32>,
      } else {
      }
    } else {
    }
    %true = arith.constant true
    %5 = arith.xori %2, %true : i1
    %c0_i32_1 = arith.constant 0 : i32
    %6 = arith.cmpi eq, %arg1, %c0_i32_1 : i32
    %7 = arith.andi %5, %6 : i1
    %8 = arith.extui %7 : i1 to i32
    %c0_i32_2 = arith.constant 0 : i32
    %9 = arith.cmpi ne, %8, %c0_i32_2 : i32
    scf.if %9 {
      %cst = arith.constant 0.000000e+00 : f32
      %10 = vector.broadcast %cst : f32 to vector<1x256xf32>
      %c0 = arith.constant 0 : index
      %c0_3 = arith.constant 0 : index
      %11 = vector.load %arg8[%c0, %c0_3] : memref<1x256xf32, #tpu.memory_space<vmem>>, vector<1x256xf32>
      tpu.vector_store %arg8[%c0, %c0_3], %10 {strides = array<i32>} : memref<1x256xf32, #tpu.memory_space<vmem>>, vector<1x256xf32>,
    } else {
    }
    return
  }
  func.func @transform_0(%arg0: i32, %arg1: i32, %arg2: memref<1xi32, #tpu.memory_space<smem>>) -> (i32, i32) {
    %c0_i32 = arith.constant 0 : i32
    %c0_i32_0 = arith.constant 0 : i32
    return %c0_i32, %arg0 : i32, i32
  }
  func.func @transform_1(%arg0: i32, %arg1: i32, %arg2: memref<1xi32, #tpu.memory_space<smem>>) -> (i32, i32) {
    %c0_i32 = arith.constant 0 : i32
    %c0_i32_0 = arith.constant 0 : i32
    %c0_i32_1 = arith.constant 0 : i32
    return %c0_i32, %c0_i32_0 : i32, i32
  }
  func.func @transform_2(%arg0: i32, %arg1: i32, %arg2: memref<1xi32, #tpu.memory_space<smem>>) -> (i32, i32) {
    %0 = arith.index_cast %arg0 : i32 to index
    %1 = memref.load %arg2[%0] : memref<1xi32, #tpu.memory_space<smem>>
    %c0_i32 = arith.constant 0 : i32
    %2 = arith.cmpi sgt, %1, %c0_i32 : i32
    %c0_i32_0 = arith.constant 0 : i32
    %3 = arith.select %2, %arg1, %c0_i32_0 : i32
    %c0_i32_1 = arith.constant 0 : i32
    %c0_i32_2 = arith.constant 0 : i32
    return %3, %c0_i32_1 : i32, i32
  }
  func.func @transform_3(%arg0: i32, %arg1: i32, %arg2: memref<1xi32, #tpu.memory_space<smem>>) -> (i32, i32) {
    %0 = arith.index_cast %arg0 : i32 to index
    %1 = memref.load %arg2[%0] : memref<1xi32, #tpu.memory_space<smem>>
    %c0_i32 = arith.constant 0 : i32
    %2 = arith.cmpi sgt, %1, %c0_i32 : i32
    %c0_i32_0 = arith.constant 0 : i32
    %3 = arith.select %2, %arg1, %c0_i32_0 : i32
    %c0_i32_1 = arith.constant 0 : i32
    %c0_i32_2 = arith.constant 0 : i32
    return %3, %c0_i32_1 : i32, i32
  }
  func.func @transform_4(%arg0: i32, %arg1: i32, %arg2: memref<1xi32, #tpu.memory_space<smem>>) -> (i32, i32) {
    %c0_i32 = arith.constant 0 : i32
    %c0_i32_0 = arith.constant 0 : i32
    return %c0_i32, %arg0 : i32, i32
  }
  func.func @transform_5(%arg0: i32, %arg1: i32, %arg2: memref<1xi32, #tpu.memory_space<smem>>) -> (i32, i32) {
    %c0_i32 = arith.constant 0 : i32
    %c0_i32_0 = arith.constant 0 : i32
    return %c0_i32, %arg0 : i32, i32
  }
}

module attributes {stable_mosaic.version = 11 : i64} {
  func.func @_cluster_nll_kernel(%arg0: i32, %arg1: i32, %arg2: memref<1xi32, #tpu.memory_space<smem>>, %arg3: memref<128x256xbf16, #tpu.memory_space<vmem>>, %arg4: memref<128x128xbf16, #tpu.memory_space<vmem>>, %arg5: memref<512x128xbf16, #tpu.memory_space<vmem>>, %arg6: memref<512x1xf32, #tpu.memory_space<vmem>>, %arg7: memref<1x256xi32, #tpu.memory_space<vmem>>, %arg8: memref<1x256xf32, #tpu.memory_space<vmem>>, %arg9: memref<128x256xf32, #tpu.memory_space<vmem>>, %arg10: memref<1x256xf32, #tpu.memory_space<vmem>>, %arg11: memref<1x256xf32, #tpu.memory_space<vmem>>, %arg12: memref<1x256xf32, #tpu.memory_space<vmem>>) attributes {dimension_semantics = [#tpu.dimension_semantics<parallel>, #tpu.dimension_semantics<arbitrary>], iteration_bounds = array<i64: 1, 2>, scalar_prefetch = 1 : i64, scratch_operands = 4 : i64, tpu.core_type = #tpu.core_type<tc>, window_params = [{transform_indices = @transform_0, window_bounds = array<i64: 128, 256>}, {pipeline_mode = #tpu.pipeline_mode<synchronous>, transform_indices = @transform_1, window_bounds = array<i64: 128, 128>}, {transform_indices = @transform_2, window_bounds = array<i64: 512, 128>}, {transform_indices = @transform_3, window_bounds = array<i64: 512, 1>}, {transform_indices = @transform_4, window_bounds = array<i64: 1, 256>}, {transform_indices = @transform_5, window_bounds = array<i64: 1, 256>}]} {
    %0 = arith.index_cast %arg0 : i32 to index
    %1 = memref.load %arg2[%0] : memref<1xi32, #tpu.memory_space<smem>>
    %c0_i32 = arith.constant 0 : i32
    %2 = arith.cmpi sgt, %1, %c0_i32 : i32
    %3 = arith.extui %2 : i1 to i32
    %c0_i32_0 = arith.constant 0 : i32
    %4 = arith.cmpi ne, %3, %c0_i32_0 : i32
    scf.if %4 {
      %c0_i32_2 = arith.constant 0 : i32
      %10 = arith.cmpi eq, %arg1, %c0_i32_2 : i32
      %11 = arith.extui %10 : i1 to i32
      %c0_i32_3 = arith.constant 0 : i32
      %12 = arith.cmpi ne, %11, %c0_i32_3 : i32
      scf.if %12 {
        %c0_29 = arith.constant 0 : index
        %c0_30 = arith.constant 0 : index
        %53 = vector.load %arg4[%c0_29, %c0_30] : memref<128x128xbf16, #tpu.memory_space<vmem>>, vector<128x128xbf16>
        %c0_31 = arith.constant 0 : index
        %c0_32 = arith.constant 0 : index
        %54 = vector.load %arg3[%c0_31, %c0_32] : memref<128x256xbf16, #tpu.memory_space<vmem>>, vector<128x256xbf16>
        %cst_33 = arith.constant dense<0.000000e+00> : vector<128x256xf32>
        %55 = tpu.matmul %53, %54, %cst_33 {dimension_numbers = #tpu.dot_dimension_numbers<[1], [0], [0], [1], [0, 0, 1, 1], [], []>} : vector<128x128xbf16>, vector<128x256xbf16>, vector<128x256xf32> -> vector<128x256xf32>
        %c0_34 = arith.constant 0 : index
        %c0_35 = arith.constant 0 : index
        %56 = vector.load %arg9[%c0_34, %c0_35] : memref<128x256xf32, #tpu.memory_space<vmem>>, vector<128x256xf32>
        tpu.vector_store %arg9[%c0_34, %c0_35], %55 {strides = array<i32>} : memref<128x256xf32, #tpu.memory_space<vmem>>, vector<128x256xf32>,
        %cst_36 = arith.constant 0xFF800000 : f32
        %57 = vector.broadcast %cst_36 : f32 to vector<1x256xf32>
        %c0_37 = arith.constant 0 : index
        %c0_38 = arith.constant 0 : index
        %58 = vector.load %arg10[%c0_37, %c0_38] : memref<1x256xf32, #tpu.memory_space<vmem>>, vector<1x256xf32>
        tpu.vector_store %arg10[%c0_37, %c0_38], %57 {strides = array<i32>} : memref<1x256xf32, #tpu.memory_space<vmem>>, vector<1x256xf32>,
        %cst_39 = arith.constant 0.000000e+00 : f32
        %59 = vector.broadcast %cst_39 : f32 to vector<1x256xf32>
        %c0_40 = arith.constant 0 : index
        %c0_41 = arith.constant 0 : index
        %60 = vector.load %arg11[%c0_40, %c0_41] : memref<1x256xf32, #tpu.memory_space<vmem>>, vector<1x256xf32>
        tpu.vector_store %arg11[%c0_40, %c0_41], %59 {strides = array<i32>} : memref<1x256xf32, #tpu.memory_space<vmem>>, vector<1x256xf32>,
        %cst_42 = arith.constant 0.000000e+00 : f32
        %61 = vector.broadcast %cst_42 : f32 to vector<1x256xf32>
        %c0_43 = arith.constant 0 : index
        %c0_44 = arith.constant 0 : index
        %62 = vector.load %arg12[%c0_43, %c0_44] : memref<1x256xf32, #tpu.memory_space<vmem>>, vector<1x256xf32>
        tpu.vector_store %arg12[%c0_43, %c0_44], %61 {strides = array<i32>} : memref<1x256xf32, #tpu.memory_space<vmem>>, vector<1x256xf32>,
      } else {
      }
      %c0 = arith.constant 0 : index
      %c0_4 = arith.constant 0 : index
      %13 = vector.load %arg5[%c0, %c0_4] : memref<512x128xbf16, #tpu.memory_space<vmem>>, vector<512x128xbf16>
      %c0_5 = arith.constant 0 : index
      %c0_6 = arith.constant 0 : index
      %14 = vector.load %arg9[%c0_5, %c0_6] : memref<128x256xf32, #tpu.memory_space<vmem>>, vector<128x256xf32>
      %15 = arith.truncf %14 : vector<128x256xf32> to vector<128x256xbf16>
      %cst = arith.constant dense<0.000000e+00> : vector<512x256xf32>
      %16 = tpu.matmul %13, %15, %cst {dimension_numbers = #tpu.dot_dimension_numbers<[1], [0], [0], [1], [0, 0, 1, 1], [], []>} : vector<512x128xbf16>, vector<128x256xbf16>, vector<512x256xf32> -> vector<512x256xf32>
      %c0_7 = arith.constant 0 : index
      %c0_8 = arith.constant 0 : index
      %17 = vector.load %arg6[%c0_7, %c0_8] : memref<512x1xf32, #tpu.memory_space<vmem>>, vector<512x1xf32>
      %18 = vector.broadcast %17 : vector<512x1xf32> to vector<512x256xf32>
      %19 = arith.addf %16, %18 : vector<512x256xf32>
      %20 = tpu.iota {dimensions = array<i32: 0>} : vector<512x256xi32>
      %c512_i32 = arith.constant 512 : i32
      %21 = arith.muli %arg1, %c512_i32 : i32
      %22 = vector.broadcast %21 : i32 to vector<512x256xi32>
      %23 = arith.addi %20, %22 : vector<512x256xi32>
      %c0_9 = arith.constant 0 : index
      %c0_10 = arith.constant 0 : index
      %24 = vector.load %arg7[%c0_9, %c0_10] : memref<1x256xi32, #tpu.memory_space<vmem>>, vector<1x256xi32>
      %25 = vector.broadcast %24 : vector<1x256xi32> to vector<512x256xi32>
      %26 = arith.cmpi eq, %23, %25 : vector<512x256xi32>
      %c0_11 = arith.constant 0 : index
      %c0_12 = arith.constant 0 : index
      %27 = vector.load %arg12[%c0_11, %c0_12] : memref<1x256xf32, #tpu.memory_space<vmem>>, vector<1x256xf32>
      %cst_13 = arith.constant 0.000000e+00 : f32
      %28 = vector.broadcast %cst_13 : f32 to vector<512x256xf32>
      %29 = arith.select %26, %19, %28 : vector<512x256xi1>, vector<512x256xf32>
      %cst_14 = arith.constant dense<0.000000e+00> : vector<256xf32>
      %30 = vector.multi_reduction <add>, %29, %cst_14 [0] : vector<512x256xf32> to vector<256xf32>
      %31 = vector.shape_cast %30 : vector<256xf32> to vector<1x256xf32>
      %32 = arith.addf %27, %31 : vector<1x256xf32>
      %c0_15 = arith.constant 0 : index
      %c0_16 = arith.constant 0 : index
      %33 = vector.load %arg12[%c0_15, %c0_16] : memref<1x256xf32, #tpu.memory_space<vmem>>, vector<1x256xf32>
      tpu.vector_store %arg12[%c0_15, %c0_16], %32 {strides = array<i32>} : memref<1x256xf32, #tpu.memory_space<vmem>>, vector<1x256xf32>,
      %c0_17 = arith.constant 0 : index
      %c0_18 = arith.constant 0 : index
      %34 = vector.load %arg10[%c0_17, %c0_18] : memref<1x256xf32, #tpu.memory_space<vmem>>, vector<1x256xf32>
      %cst_19 = arith.constant dense<0xFF800000> : vector<256xf32>
      %35 = vector.multi_reduction <maximumf>, %19, %cst_19 [0] : vector<512x256xf32> to vector<256xf32>
      %36 = vector.shape_cast %35 : vector<256xf32> to vector<1x256xf32>
      %37 = arith.maximumf %34, %36 : vector<1x256xf32>
      %c0_20 = arith.constant 0 : index
      %c0_21 = arith.constant 0 : index
      %38 = vector.load %arg11[%c0_20, %c0_21] : memref<1x256xf32, #tpu.memory_space<vmem>>, vector<1x256xf32>
      %39 = arith.subf %34, %37 : vector<1x256xf32>
      %40 = math.exp %39 : vector<1x256xf32>
      %41 = arith.mulf %38, %40 : vector<1x256xf32>
      %42 = vector.broadcast %37 : vector<1x256xf32> to vector<512x256xf32>
      %43 = arith.subf %19, %42 : vector<512x256xf32>
      %44 = math.exp %43 : vector<512x256xf32>
      %cst_22 = arith.constant dense<0.000000e+00> : vector<256xf32>
      %45 = vector.multi_reduction <add>, %44, %cst_22 [0] : vector<512x256xf32> to vector<256xf32>
      %46 = vector.shape_cast %45 : vector<256xf32> to vector<1x256xf32>
      %47 = arith.addf %41, %46 : vector<1x256xf32>
      %c0_23 = arith.constant 0 : index
      %c0_24 = arith.constant 0 : index
      %48 = vector.load %arg11[%c0_23, %c0_24] : memref<1x256xf32, #tpu.memory_space<vmem>>, vector<1x256xf32>
      tpu.vector_store %arg11[%c0_23, %c0_24], %47 {strides = array<i32>} : memref<1x256xf32, #tpu.memory_space<vmem>>, vector<1x256xf32>,
      %c0_25 = arith.constant 0 : index
      %c0_26 = arith.constant 0 : index
      %49 = vector.load %arg10[%c0_25, %c0_26] : memref<1x256xf32, #tpu.memory_space<vmem>>, vector<1x256xf32>
      tpu.vector_store %arg10[%c0_25, %c0_26], %37 {strides = array<i32>} : memref<1x256xf32, #tpu.memory_space<vmem>>, vector<1x256xf32>,
      %c1_i32_27 = arith.constant 1 : i32
      %50 = arith.cmpi eq, %arg1, %c1_i32_27 : i32
      %51 = arith.extui %50 : i1 to i32
      %c0_i32_28 = arith.constant 0 : i32
      %52 = arith.cmpi ne, %51, %c0_i32_28 : i32
      scf.if %52 {
        %c0_29 = arith.constant 0 : index
        %c0_30 = arith.constant 0 : index
        %53 = vector.load %arg12[%c0_29, %c0_30] : memref<1x256xf32, #tpu.memory_space<vmem>>, vector<1x256xf32>
        %c0_31 = arith.constant 0 : index
        %c0_32 = arith.constant 0 : index
        %54 = vector.load %arg10[%c0_31, %c0_32] : memref<1x256xf32, #tpu.memory_space<vmem>>, vector<1x256xf32>
        %c0_33 = arith.constant 0 : index
        %c0_34 = arith.constant 0 : index
        %55 = vector.load %arg11[%c0_33, %c0_34] : memref<1x256xf32, #tpu.memory_space<vmem>>, vector<1x256xf32>
        %56 = math.log %55 : vector<1x256xf32>
        %57 = arith.addf %54, %56 : vector<1x256xf32>
        %58 = arith.subf %53, %57 : vector<1x256xf32>
        %c0_35 = arith.constant 0 : index
        %c0_36 = arith.constant 0 : index
        %59 = vector.load %arg8[%c0_35, %c0_36] : memref<1x256xf32, #tpu.memory_space<vmem>>, vector<1x256xf32>
        tpu.vector_store %arg8[%c0_35, %c0_36], %58 {strides = array<i32>} : memref<1x256xf32, #tpu.memory_space<vmem>>, vector<1x256xf32>,
      } else {
      }
    } else {
    }
    %true = arith.constant true
    %5 = arith.xori %2, %true : i1
    %c1_i32 = arith.constant 1 : i32
    %6 = arith.cmpi eq, %arg1, %c1_i32 : i32
    %7 = arith.andi %5, %6 : i1
    %8 = arith.extui %7 : i1 to i32
    %c0_i32_1 = arith.constant 0 : i32
    %9 = arith.cmpi ne, %8, %c0_i32_1 : i32
    scf.if %9 {
      %cst = arith.constant 0.000000e+00 : f32
      %10 = vector.broadcast %cst : f32 to vector<1x256xf32>
      %c0 = arith.constant 0 : index
      %c0_2 = arith.constant 0 : index
      %11 = vector.load %arg8[%c0, %c0_2] : memref<1x256xf32, #tpu.memory_space<vmem>>, vector<1x256xf32>
      tpu.vector_store %arg8[%c0, %c0_2], %10 {strides = array<i32>} : memref<1x256xf32, #tpu.memory_space<vmem>>, vector<1x256xf32>,
    } else {
    }
    return
  }
  func.func @transform_0(%arg0: i32, %arg1: i32, %arg2: memref<1xi32, #tpu.memory_space<smem>>) -> (i32, i32) {
    %c0_i32 = arith.constant 0 : i32
    %c0_i32_0 = arith.constant 0 : i32
    return %c0_i32, %arg0 : i32, i32
  }
  func.func @transform_1(%arg0: i32, %arg1: i32, %arg2: memref<1xi32, #tpu.memory_space<smem>>) -> (i32, i32) {
    %c0_i32 = arith.constant 0 : i32
    %c0_i32_0 = arith.constant 0 : i32
    %c0_i32_1 = arith.constant 0 : i32
    return %c0_i32, %c0_i32_0 : i32, i32
  }
  func.func @transform_2(%arg0: i32, %arg1: i32, %arg2: memref<1xi32, #tpu.memory_space<smem>>) -> (i32, i32) {
    %0 = arith.index_cast %arg0 : i32 to index
    %1 = memref.load %arg2[%0] : memref<1xi32, #tpu.memory_space<smem>>
    %c0_i32 = arith.constant 0 : i32
    %2 = arith.cmpi sgt, %1, %c0_i32 : i32
    %c0_i32_0 = arith.constant 0 : i32
    %3 = arith.select %2, %arg1, %c0_i32_0 : i32
    %c0_i32_1 = arith.constant 0 : i32
    %c0_i32_2 = arith.constant 0 : i32
    return %3, %c0_i32_1 : i32, i32
  }
  func.func @transform_3(%arg0: i32, %arg1: i32, %arg2: memref<1xi32, #tpu.memory_space<smem>>) -> (i32, i32) {
    %0 = arith.index_cast %arg0 : i32 to index
    %1 = memref.load %arg2[%0] : memref<1xi32, #tpu.memory_space<smem>>
    %c0_i32 = arith.constant 0 : i32
    %2 = arith.cmpi sgt, %1, %c0_i32 : i32
    %c0_i32_0 = arith.constant 0 : i32
    %3 = arith.select %2, %arg1, %c0_i32_0 : i32
    %c0_i32_1 = arith.constant 0 : i32
    %c0_i32_2 = arith.constant 0 : i32
    return %3, %c0_i32_1 : i32, i32
  }
  func.func @transform_4(%arg0: i32, %arg1: i32, %arg2: memref<1xi32, #tpu.memory_space<smem>>) -> (i32, i32) {
    %c0_i32 = arith.constant 0 : i32
    %c0_i32_0 = arith.constant 0 : i32
    return %c0_i32, %arg0 : i32, i32
  }
  func.func @transform_5(%arg0: i32, %arg1: i32, %arg2: memref<1xi32, #tpu.memory_space<smem>>) -> (i32, i32) {
    %c0_i32 = arith.constant 0 : i32
    %c0_i32_0 = arith.constant 0 : i32
    return %c0_i32, %arg0 : i32, i32
  }
}

</mosaic_0001>

<llo_original>
// kernel: forward.5
$region0: #{forward.5}
  #allocation0 [shape = 'u32[]', space=smem, size = 0x4, offset = 0x4, fixed_abs, tag = 'smem constant byte address 0x4 - core index']
  #allocation1 [shape = 'u32[144,128]{1,0:T(1,128)}', space=vmem, size = 0x12000, scoped, tag = 'internal scratch']
  #allocation2 [shape = 'f32[32,256]{1,0:T(8,128)}', space=vmem, size = 0x8000, scoped, tag = 'scratch operand']
  #allocation3 [shape = 'f32[1,256]{1,0:T(1,128)}', space=vmem, size = 0x400, scoped, tag = 'scratch operand']
  #allocation4 [shape = 'f32[1,256]{1,0:T(1,128)}', space=vmem, size = 0x400, scoped, tag = 'scratch operand']
  #allocation5 [shape = 'f32[1,256]{1,0:T(1,128)}', space=vmem, size = 0x400, scoped, tag = 'scratch operand']
  #allocation6 [shape = 's32[1]{0}', space=sflag, size = 0x4, scoped, tag = 'scoped memory for forward.5']
  #allocation7 [shape = 's32[1]{0:T(128)S(6)}', space=smem, size = 0x200, scoped, tag = 'prefetched SMEM operand 0']
  %s0 = inlined_call_operand.<no memory space> [shape: s32[1], index: 0, kind: input, shape index: {}]
  %s1 = inlined_call_operand.vmem [shape: bf16[128,256], index: 1, kind: input, shape index: {}]
  %s2 = inlined_call_operand.vmem [shape: bf16[32,128], index: 2, kind: input, shape index: {}]
  %s3 = inlined_call_operand.vmem [shape: bf16[512,32], index: 3, kind: input, shape index: {}]
  %s4 = inlined_call_operand.vmem [shape: f32[512,1], index: 4, kind: input, shape index: {}]
  %s5 = inlined_call_operand.vmem [shape: s32[1,256], index: 5, kind: input, shape index: {}]
  %s6 = inlined_call_operand.vmem [shape: f32[1,256], index: 6, kind: output, shape index: {}]
  %s7 = sld [smem:[#allocation0]]
  $region46: #{forward.5} parent=0
    _
  %s9 = ssub.s32 1, %s7
  %s10 = scalar_select 0, %s9, %s7
  %11 = sst [smem:[#allocation7]] %s0
  // Predicated region
  $region2: #{forward.5} parent=0 // pred_check
    _
  $region3: #{forward.5} parent=0 // pred_check_branch
    %13 = sbr.rel (0) target = $region5
  $region4: #{forward.5} parent=0 // pred_region
    _
  $region5: #{forward.5} parent=0 // pred_fallthru
    _
  // Predicated region
  $region6: #{forward.5} parent=0 // pred_check
    _
  $region7: #{forward.5} parent=0 // pred_check_branch
    %15 = sbr.rel (0) target = $region9
  $region8: #{forward.5} parent=0 // pred_region
    _
  $region9: #{forward.5} parent=0 // pred_fallthru
    _
  // Predicated region
  $region10: #{forward.5} parent=0 // pred_check
    _
  $region11: #{forward.5} parent=0 // pred_check_branch
    %17 = sbr.rel (0) target = $region13
  $region12: #{forward.5} parent=0 // pred_region
    %s18 = sld [smem:[#allocation7]]
    %p19 = scmp.gt.s32.totalorder %s18, 0
    %s20 = scalar_select %p19, 0, 0
    %s21 = smul.u32 64, %s20
    %p22 = scmp.lt.s32.totalorder %s21, 63
    %s23 = scalar_select %p22, %s21, 63
    %s24 = smul.addr %s23, 4
    %s25 = scalar_lea.vmem %s3, %s24
    %s26 = sld [smem:[#allocation7]]
    %p27 = scmp.gt.s32.totalorder %s26, 0
    %s28 = scalar_select %p27, 0, 0
    %s29 = smul.u32 64, %s28
  $region13: #{forward.5} parent=0 // pred_fallthru
    _
  // Predicated region
  $region14: #{forward.5} parent=0 // pred_check
    _
  $region15: #{forward.5} parent=0 // pred_check_branch
    %31 = sbr.rel (0) target = $region17
  $region16: #{forward.5} parent=0 // pred_region
    %s32 = sld [smem:[#allocation7]]
    %p33 = scmp.gt.s32.totalorder %s32, 0
    %s34 = scalar_select %p33, 0, 0
    %s35 = smul.u32 64, %s34
    %p36 = scmp.lt.s32.totalorder %s35, 63
    %s37 = scalar_select %p36, %s35, 63
    %s38 = smul.addr %s37, 8
    %s39 = scalar_lea.vmem %s4, %s38
    %s40 = sld [smem:[#allocation7]]
    %p41 = scmp.gt.s32.totalorder %s40, 0
    %s42 = scalar_select %p41, 0, 0
    %s43 = smul.u32 64, %s42
  $region17: #{forward.5} parent=0 // pred_fallthru
    _
  // Predicated region
  $region18: #{forward.5} parent=0 // pred_check
    _
  $region19: #{forward.5} parent=0 // pred_check_branch
    %45 = sbr.rel (0) target = $region21
  $region20: #{forward.5} parent=0 // pred_region
    _
  $region21: #{forward.5} parent=0 // pred_fallthru
    _
  %s46 = sld [smem:[#allocation7]]
  %p47 = scmp.gt.s32.totalorder %s46, 0
  %s48 = scalar_select %p47, 0, 0
  %s49 = smul.u32 64, %s48
  %p50 = scmp.lt.s32.totalorder %s49, 63
  %s51 = scalar_select %p50, %s49, 63
  %s52 = smul.addr %s51, 4
  %s53 = scalar_lea.vmem %s3, %s52
  %s54 = sld [smem:[#allocation7]]
  %p55 = scmp.gt.s32.totalorder %s54, 0
  %s56 = scalar_select %p55, 0, 0
  %s57 = smul.u32 64, %s56
  %p58 = scmp.lt.s32.totalorder %s57, 63
  %s59 = scalar_select %p58, %s57, 63
  %s60 = smul.addr %s59, 8
  %s61 = scalar_lea.vmem %s4, %s60
  %s62 = sld [smem:[#allocation7]]
  %p63 = scmp.gt.s32.totalorder %s62, 0
  %s64 = scalar_select %p63, 0, 0
  %s65 = smul.u32 64, %s64
  %p66 = scmp.lt.s32.totalorder %s65, 63
  %s67 = scalar_select %p66, %s65, 63
  %s68 = smul.addr %s67, 4
  %s69 = scalar_lea.vmem %s3, %s68
  %s70 = sld [smem:[#allocation7]]
  %p71 = scmp.gt.s32.totalorder %s70, 0
  %s72 = scalar_select %p71, 0, 0
  %s73 = smul.u32 64, %s72
  %s74 = sld [smem:[#allocation7]]
  %p75 = scmp.gt.s32.totalorder %s74, 0
  %s76 = scalar_select %p75, 0, 0
  %s77 = smul.u32 64, %s76
  %p78 = scmp.lt.s32.totalorder %s77, 63
  %s79 = scalar_select %p78, %s77, 63
  %s80 = smul.addr %s79, 8
  %s81 = scalar_lea.vmem %s4, %s80
  %s82 = sld [smem:[#allocation7]]
  %p83 = scmp.gt.s32.totalorder %s82, 0
  %s84 = scalar_select %p83, 0, 0
  %s85 = smul.u32 64, %s84
  %s87 = sld [smem:[#allocation7]]
  %p88 = scmp.gt.s32.totalorder %s87, 0
  // Predicated region
  $region22: #{forward.5} parent=0 // pred_check
    %p89 = pneg %p88
  $region23: #{forward.5} parent=0 // pred_check_branch
    %91 = sbr.rel (%p89) target = $region25
  $region24: #{forward.5} parent=0 // pred_region
    %p92 = scmp.eq.s32.totalorder 0, 0
    // Predicated region
    $region26: #{forward.5} parent=24 // pred_check
      %p93 = pneg %p92
    $region27: #{forward.5} parent=24 // pred_check_branch
      %95 = sbr.rel (%p93) target = $region29
    $region28: #{forward.5} parent=24 // pred_region
      %v96 = vld [vmem:[%s2] sm:$0xf]
      %v97 = vld [vmem:[%s2 + $0x4] sm:$0xf]
      %v98 = vld [vmem:[%s2 + $0x8] sm:$0xf]
      %v99 = vld [vmem:[%s2 + $0xc] sm:$0xf]
      %v100 = vld [vmem:[%s1] sm:$0xff]
      %v101 = vld [vmem:[%s1 + $0x8] sm:$0xff]
      %v102 = vld [vmem:[%s1 + $0x10] sm:$0xff]
      %v103 = vld [vmem:[%s1 + $0x18] sm:$0xff]
      %v104 = vld [vmem:[%s1 + $0x20] sm:$0xff]
      %v105 = vld [vmem:[%s1 + $0x28] sm:$0xff]
      %v106 = vld [vmem:[%s1 + $0x30] sm:$0xff]
      %v107 = vld [vmem:[%s1 + $0x38] sm:$0xff]
      %v108 = vld [vmem:[%s1 + $0x40] sm:$0xff]
      %v109 = vld [vmem:[%s1 + $0x48] sm:$0xff]
      %v110 = vld [vmem:[%s1 + $0x50] sm:$0xff]
      %v111 = vld [vmem:[%s1 + $0x58] sm:$0xff]
      %v112 = vld [vmem:[%s1 + $0x60] sm:$0xff]
      %v113 = vld [vmem:[%s1 + $0x68] sm:$0xff]
      %v114 = vld [vmem:[%s1 + $0x70] sm:$0xff]
      %v115 = vld [vmem:[%s1 + $0x78] sm:$0xff]
      %v120 = vunpack.c.l.b16 %v96
      %v121 = vunpack.c.l.b16 %v97
      %v122 = vunpack.c.l.b16 %v98
      %v123 = vunpack.c.l.b16 %v99
      %v124 = vpack.c.b16 %v121, %v120
      %v125 = vpack.c.b16 %v123, %v122
      %v144 = vunpack.c.l.b16 %v100
      %v145 = vunpack.c.h.b16 %v100
      %v146 = vunpack.c.l.b16 %v101
      %v147 = vunpack.c.h.b16 %v101
      %v148 = vunpack.c.l.b16 %v102
      %v149 = vunpack.c.h.b16 %v102
      %v150 = vunpack.c.l.b16 %v103
      %v151 = vunpack.c.h.b16 %v103
      %v152 = vunpack.c.l.b16 %v104
      %v153 = vunpack.c.h.b16 %v104
      %v154 = vunpack.c.l.b16 %v105
      %v155 = vunpack.c.h.b16 %v105
      %v156 = vunpack.c.l.b16 %v106
      %v157 = vunpack.c.h.b16 %v106
      %v158 = vunpack.c.l.b16 %v107
      %v159 = vunpack.c.h.b16 %v107
      %v160 = vunpack.c.l.b16 %v108
      %v161 = vunpack.c.h.b16 %v108
      %v162 = vunpack.c.l.b16 %v109
      %v163 = vunpack.c.h.b16 %v109
      %v164 = vunpack.c.l.b16 %v110
      %v165 = vunpack.c.h.b16 %v110
      %v166 = vunpack.c.l.b16 %v111
      %v167 = vunpack.c.h.b16 %v111
      %v168 = vunpack.c.l.b16 %v112
      %v169 = vunpack.c.h.b16 %v112
      %v170 = vunpack.c.l.b16 %v113
      %v171 = vunpack.c.h.b16 %v113
      %v172 = vunpack.c.l.b16 %v114
      %v173 = vunpack.c.h.b16 %v114
      %v174 = vunpack.c.l.b16 %v115
      %v175 = vunpack.c.h.b16 %v115
      %v176 = vpack.c.b16 %v146, %v144
      %v177 = vpack.c.b16 %v147, %v145
      %v178 = vpack.c.b16 %v150, %v148
      %v179 = vpack.c.b16 %v151, %v149
      %v180 = vpack.c.b16 %v154, %v152
      %v181 = vpack.c.b16 %v155, %v153
      %v182 = vpack.c.b16 %v158, %v156
      %v183 = vpack.c.b16 %v159, %v157
      %v184 = vpack.c.b16 %v162, %v160
      %v185 = vpack.c.b16 %v163, %v161
      %v186 = vpack.c.b16 %v166, %v164
      %v187 = vpack.c.b16 %v167, %v165
      %v188 = vpack.c.b16 %v170, %v168
      %v189 = vpack.c.b16 %v171, %v169
      %v190 = vpack.c.b16 %v174, %v172
      %v191 = vpack.c.b16 %v175, %v173
      %208 = vmatprep.subr.bf16.mxu0 %v191
      %209 = vmatpush1.bf16.msra.mxu0 %v190
      %210 = vmatprep.subr.bf16.mxu0 %v189
      %211 = vmatpush1.bf16.msra.mxu0 %v188
      %212 = vmatprep.subr.bf16.mxu0 %v187
      %213 = vmatpush1.bf16.msra.mxu0 %v186
      %214 = vmatprep.subr.bf16.mxu0 %v185
      %215 = vmatpush1.bf16.msra.mxu0 %v184
      %216 = vmatprep.subr.bf16.mxu0 %v183
      %217 = vmatpush1.bf16.msra.mxu0 %v182
      %218 = vmatprep.subr.bf16.mxu0 %v181
      %219 = vmatpush1.bf16.msra.mxu0 %v180
      %220 = vmatprep.subr.bf16.mxu0 %v179
      %221 = vmatpush1.bf16.msra.mxu0 %v178
      %222 = vmatprep.subr.bf16.mxu0 %v177
      %223 = vmatpush1.bf16.msra.mxu0 %v176
      %224 = vmatprep.subr.bf16.mxu0 0
      %225 = vmatpush2.bf16.msra.mxu0 0
      %226 = vmatprep.subr.bf16.mxu0 0
      %227 = vmatpush2.bf16.msra.mxu0 0
      %228 = vmatprep.subr.bf16.mxu0 0
      %229 = vmatpush2.bf16.msra.mxu0 0
      %230 = vmatprep.subr.bf16.mxu0 0
      %231 = vmatpush2.bf16.msra.mxu0 0
      %232 = vmatprep.subr.bf16.mxu0 0
      %233 = vmatpush2.bf16.msra.mxu0 0
      %234 = vmatprep.subr.bf16.mxu0 0
      %235 = vmatpush2.bf16.msra.mxu0 0
      %236 = vmatprep.subr.bf16.mxu0 0
      %237 = vmatpush2.bf16.msra.mxu0 0
      %238 = vmatprep.subr.bf16.mxu0 0
      %239 = vmatpush2.bf16.msra.mxu0 0
      %240 = vmatprep.mubr.bf16.mxu0 0
      %241 = vmatmul.mubr.bf16.gmra.mxu0 %v124
      %v242 = vpop.f32.mrf.mxu0
      %v243 = vadd.f32 0.0, %v242
      %v244 = vpop.f32.mrf.mxu0
      %v245 = vadd.f32 0.0, %v244
      %v246 = vpop.f32.mrf.mxu0
      %v247 = vadd.f32 0.0, %v246
      %v248 = vpop.f32.mrf.mxu0
      %v249 = vadd.f32 0.0, %v248
      %250 = vmatprep.mubr.bf16.mxu0 0
      %251 = vmatmul.mubr.bf16.gmra.mxu0 %v125
      %v252 = vpop.f32.mrf.mxu0
      %v253 = vadd.f32 0.0, %v252
      %v254 = vpop.f32.mrf.mxu0
      %v255 = vadd.f32 0.0, %v254
      %v256 = vpop.f32.mrf.mxu0
      %v257 = vadd.f32 0.0, %v256
      %v258 = vpop.f32.mrf.mxu0
      %v259 = vadd.f32 0.0, %v258
      %260 = vdwg.mxu0
      %261 = vst [vmem:[#allocation2] sm:$0xff] %v243
      %262 = vst [vmem:[#allocation2 + $0x8] sm:$0xff] %v245
      %263 = vst [vmem:[#allocation2 + $0x10] sm:$0xff] %v247
      %264 = vst [vmem:[#allocation2 + $0x18] sm:$0xff] %v249
      %265 = vst [vmem:[#allocation2 + $0x20] sm:$0xff] %v253
      %266 = vst [vmem:[#allocation2 + $0x28] sm:$0xff] %v255
      %267 = vst [vmem:[#allocation2 + $0x30] sm:$0xff] %v257
      %268 = vst [vmem:[#allocation2 + $0x38] sm:$0xff] %v259
      %v269 = vlaneseq
      %vm270 = vcmp.ge.s32.totalorder %v269, 0
      %vm271 = vcmp.lt.s32.totalorder %v269, 256
      %vm272 = vmand %vm270, %vm271
      %273 = vst.msk [vmem:[#allocation3] sm:$0x3] %vm272, -inf
      %274 = vst.msk [vmem:[#allocation4] sm:$0x3] %vm272, 0.0
      %275 = vst.msk [vmem:[#allocation5] sm:$0x3] %vm272, 0.0
    $region29: #{forward.5} parent=24 // pred_fallthru
      _
    %v276 = vld [vmem:[%s69] sm:$0xf]
    %v277 = vld [vmem:[%s69 + $0x4] sm:$0xf]
    %v278 = vld [vmem:[%s69 + $0x8] sm:$0xf]
    %v279 = vld [vmem:[%s69 + $0xc] sm:$0xf]
    %v280 = vld [vmem:[%s69 + $0x10] sm:$0xf]
    %v281 = vld [vmem:[%s69 + $0x14] sm:$0xf]
    %v282 = vld [vmem:[%s69 + $0x18] sm:$0xf]
    %v283 = vld [vmem:[%s69 + $0x1c] sm:$0xf]
    %v284 = vld [vmem:[%s69 + $0x20] sm:$0xf]
    %v285 = vld [vmem:[%s69 + $0x24] sm:$0xf]
    %v286 = vld [vmem:[%s69 + $0x28] sm:$0xf]
    %v287 = vld [vmem:[%s69 + $0x2c] sm:$0xf]
    %v288 = vld [vmem:[%s69 + $0x30] sm:$0xf]
    %v289 = vld [vmem:[%s69 + $0x34] sm:$0xf]
    %v290 = vld [vmem:[%s69 + $0x38] sm:$0xf]
    %v291 = vld [vmem:[%s69 + $0x3c] sm:$0xf]
    %v292 = vld [vmem:[%s69 + $0x40] sm:$0xf]
    %v293 = vld [vmem:[%s69 + $0x44] sm:$0xf]
    %v294 = vld [vmem:[%s69 + $0x48] sm:$0xf]
    %v295 = vld [vmem:[%s69 + $0x4c] sm:$0xf]
    %v296 = vld [vmem:[%s69 + $0x50] sm:$0xf]
    %v297 = vld [vmem:[%s69 + $0x54] sm:$0xf]
    %v298 = vld [vmem:[%s69 + $0x58] sm:$0xf]
    %v299 = vld [vmem:[%s69 + $0x5c] sm:$0xf]
    %v300 = vld [vmem:[%s69 + $0x60] sm:$0xf]
    %v301 = vld [vmem:[%s69 + $0x64] sm:$0xf]
    %v302 = vld [vmem:[%s69 + $0x68] sm:$0xf]
    %v303 = vld [vmem:[%s69 + $0x6c] sm:$0xf]
    %v304 = vld [vmem:[%s69 + $0x70] sm:$0xf]
    %v305 = vld [vmem:[%s69 + $0x74] sm:$0xf]
    %v306 = vld [vmem:[%s69 + $0x78] sm:$0xf]
    %v307 = vld [vmem:[%s69 + $0x7c] sm:$0xf]
    %v308 = vld [vmem:[%s69 + $0x80] sm:$0xf]
    %v309 = vld [vmem:[%s69 + $0x84] sm:$0xf]
    %v310 = vld [vmem:[%s69 + $0x88] sm:$0xf]
    %v311 = vld [vmem:[%s69 + $0x8c] sm:$0xf]
    %v312 = vld [vmem:[%s69 + $0x90] sm:$0xf]
    %v313 = vld [vmem:[%s69 + $0x94] sm:$0xf]
    %v314 = vld [vmem:[%s69 + $0x98] sm:$0xf]
    %v315 = vld [vmem:[%s69 + $0x9c] sm:$0xf]
    %v316 = vld [vmem:[%s69 + $0xa0] sm:$0xf]
    %v317 = vld [vmem:[%s69 + $0xa4] sm:$0xf]
    %v318 = vld [vmem:[%s69 + $0xa8] sm:$0xf]
    %v319 = vld [vmem:[%s69 + $0xac] sm:$0xf]
    %v320 = vld [vmem:[%s69 + $0xb0] sm:$0xf]
    %v321 = vld [vmem:[%s69 + $0xb4] sm:$0xf]
    %v322 = vld [vmem:[%s69 + $0xb8] sm:$0xf]
    %v323 = vld [vmem:[%s69 + $0xbc] sm:$0xf]
    %v324 = vld [vmem:[%s69 + $0xc0] sm:$0xf]
    %v325 = vld [vmem:[%s69 + $0xc4] sm:$0xf]
    %v326 = vld [vmem:[%s69 + $0xc8] sm:$0xf]
    %v327 = vld [vmem:[%s69 + $0xcc] sm:$0xf]
    %v328 = vld [vmem:[%s69 + $0xd0] sm:$0xf]
    %v329 = vld [vmem:[%s69 + $0xd4] sm:$0xf]
    %v330 = vld [vmem:[%s69 + $0xd8] sm:$0xf]
    %v331 = vld [vmem:[%s69 + $0xdc] sm:$0xf]
    %v332 = vld [vmem:[%s69 + $0xe0] sm:$0xf]
    %v333 = vld [vmem:[%s69 + $0xe4] sm:$0xf]
    %v334 = vld [vmem:[%s69 + $0xe8] sm:$0xf]
    %v335 = vld [vmem:[%s69 + $0xec] sm:$0xf]
    %v336 = vld [vmem:[%s69 + $0xf0] sm:$0xf]
    %v337 = vld [vmem:[%s69 + $0xf4] sm:$0xf]
    %v338 = vld [vmem:[%s69 + $0xf8] sm:$0xf]
    %v339 = vld [vmem:[%s69 + $0xfc] sm:$0xf]
    %v340 = vld [vmem:[#allocation2] sm:$0xff]
    %v341 = vld [vmem:[#allocation2 + $0x8] sm:$0xff]
    %v342 = vld [vmem:[#allocation2 + $0x10] sm:$0xff]
    %v343 = vld [vmem:[#allocation2 + $0x18] sm:$0xff]
    %v344 = vld [vmem:[#allocation2 + $0x20] sm:$0xff]
    %v345 = vld [vmem:[#allocation2 + $0x28] sm:$0xff]
    %v346 = vld [vmem:[#allocation2 + $0x30] sm:$0xff]
    %v347 = vld [vmem:[#allocation2 + $0x38] sm:$0xff]
    %v348 = vpack.c.bf16 %v342, %v340
    %v349 = vpack.c.bf16 %v343, %v341
    %v350 = vpack.c.bf16 %v346, %v344
    %v351 = vpack.c.bf16 %v347, %v345
    %v352 = vld [vmem:[%s81] sm:$0xff]
    %v353 = vld [vmem:[%s81 + $0x8] sm:$0xff]
    %v354 = vld [vmem:[%s81 + $0x10] sm:$0xff]
    %v355 = vld [vmem:[%s81 + $0x18] sm:$0xff]
    %v356 = vld [vmem:[%s81 + $0x20] sm:$0xff]
    %v357 = vld [vmem:[%s81 + $0x28] sm:$0xff]
    %v358 = vld [vmem:[%s81 + $0x30] sm:$0xff]
    %v359 = vld [vmem:[%s81 + $0x38] sm:$0xff]
    %v360 = vld [vmem:[%s81 + $0x40] sm:$0xff]
    %v361 = vld [vmem:[%s81 + $0x48] sm:$0xff]
    %v362 = vld [vmem:[%s81 + $0x50] sm:$0xff]
    %v363 = vld [vmem:[%s81 + $0x58] sm:$0xff]
    %v364 = vld [vmem:[%s81 + $0x60] sm:$0xff]
    %v365 = vld [vmem:[%s81 + $0x68] sm:$0xff]
    %v366 = vld [vmem:[%s81 + $0x70] sm:$0xff]
    %v367 = vld [vmem:[%s81 + $0x78] sm:$0xff]
    %v368 = vld [vmem:[%s81 + $0x80] sm:$0xff]
    %v369 = vld [vmem:[%s81 + $0x88] sm:$0xff]
    %v370 = vld [vmem:[%s81 + $0x90] sm:$0xff]
    %v371 = vld [vmem:[%s81 + $0x98] sm:$0xff]
    %v372 = vld [vmem:[%s81 + $0xa0] sm:$0xff]
    %v373 = vld [vmem:[%s81 + $0xa8] sm:$0xff]
    %v374 = vld [vmem:[%s81 + $0xb0] sm:$0xff]
    %v375 = vld [vmem:[%s81 + $0xb8] sm:$0xff]
    %v376 = vld [vmem:[%s81 + $0xc0] sm:$0xff]
    %v377 = vld [vmem:[%s81 + $0xc8] sm:$0xff]
    %v378 = vld [vmem:[%s81 + $0xd0] sm:$0xff]
    %v379 = vld [vmem:[%s81 + $0xd8] sm:$0xff]
    %v380 = vld [vmem:[%s81 + $0xe0] sm:$0xff]
    %v381 = vld [vmem:[%s81 + $0xe8] sm:$0xff]
    %v382 = vld [vmem:[%s81 + $0xf0] sm:$0xff]
    %v383 = vld [vmem:[%s81 + $0xf8] sm:$0xff]
    %v384 = vld [vmem:[%s81 + $0x100] sm:$0xff]
    %v385 = vld [vmem:[%s81 + $0x108] sm:$0xff]
    %v386 = vld [vmem:[%s81 + $0x110] sm:$0xff]
    %v387 = vld [vmem:[%s81 + $0x118] sm:$0xff]
    %v388 = vld [vmem:[%s81 + $0x120] sm:$0xff]
    %v389 = vld [vmem:[%s81 + $0x128] sm:$0xff]
    %v390 = vld [vmem:[%s81 + $0x130] sm:$0xff]
    %v391 = vld [vmem:[%s81 + $0x138] sm:$0xff]
    %v392 = vld [vmem:[%s81 + $0x140] sm:$0xff]
    %v393 = vld [vmem:[%s81 + $0x148] sm:$0xff]
    %v394 = vld [vmem:[%s81 + $0x150] sm:$0xff]
    %v395 = vld [vmem:[%s81 + $0x158] sm:$0xff]
    %v396 = vld [vmem:[%s81 + $0x160] sm:$0xff]
    %v397 = vld [vmem:[%s81 + $0x168] sm:$0xff]
    %v398 = vld [vmem:[%s81 + $0x170] sm:$0xff]
    %v399 = vld [vmem:[%s81 + $0x178] sm:$0xff]
    %v400 = vld [vmem:[%s81 + $0x180] sm:$0xff]
    %v401 = vld [vmem:[%s81 + $0x188] sm:$0xff]
    %v402 = vld [vmem:[%s81 + $0x190] sm:$0xff]
    %v403 = vld [vmem:[%s81 + $0x198] sm:$0xff]
    %v404 = vld [vmem:[%s81 + $0x1a0] sm:$0xff]
    %v405 = vld [vmem:[%s81 + $0x1a8] sm:$0xff]
    %v406 = vld [vmem:[%s81 + $0x1b0] sm:$0xff]
    %v407 = vld [vmem:[%s81 + $0x1b8] sm:$0xff]
    %v408 = vld [vmem:[%s81 + $0x1c0] sm:$0xff]
    %v409 = vld [vmem:[%s81 + $0x1c8] sm:$0xff]
    %v410 = vld [vmem:[%s81 + $0x1d0] sm:$0xff]
    %v411 = vld [vmem:[%s81 + $0x1d8] sm:$0xff]
    %v412 = vld [vmem:[%s81 + $0x1e0] sm:$0xff]
    %v413 = vld [vmem:[%s81 + $0x1e8] sm:$0xff]
    %v414 = vld [vmem:[%s81 + $0x1f0] sm:$0xff]
    %v415 = vld [vmem:[%s81 + $0x1f8] sm:$0xff]
    %417 = vset.pattern.permute.xlu0 0
    %418 = vperm.xlu0 %417, %v352
    %v419 = vpop.permute.xlu0 %418
    %422 = vset.pattern.permute.xlu0 0
    %423 = vperm.xlu0 %422, %v353
    %v424 = vpop.permute.xlu0 %423
    %427 = vset.pattern.permute.xlu0 0
    %428 = vperm.xlu0 %427, %v354
    %v429 = vpop.permute.xlu0 %428
    %432 = vset.pattern.permute.xlu0 0
    %433 = vperm.xlu0 %432, %v355
    %v434 = vpop.permute.xlu0 %433
    %437 = vset.pattern.permute.xlu0 0
    %438 = vperm.xlu0 %437, %v356
    %v439 = vpop.permute.xlu0 %438
    %442 = vset.pattern.permute.xlu0 0
    %443 = vperm.xlu0 %442, %v357
    %v444 = vpop.permute.xlu0 %443
    %447 = vset.pattern.permute.xlu0 0
    %448 = vperm.xlu0 %447, %v358
    %v449 = vpop.permute.xlu0 %448
    %452 = vset.pattern.permute.xlu0 0
    %453 = vperm.xlu0 %452, %v359
    %v454 = vpop.permute.xlu0 %453
    %457 = vset.pattern.permute.xlu0 0
    %458 = vperm.xlu0 %457, %v360
    %v459 = vpop.permute.xlu0 %458
    %462 = vset.pattern.permute.xlu0 0
    %463 = vperm.xlu0 %462, %v361
    %v464 = vpop.permute.xlu0 %463
    %467 = vset.pattern.permute.xlu0 0
    %468 = vperm.xlu0 %467, %v362
    %v469 = vpop.permute.xlu0 %468
    %472 = vset.pattern.permute.xlu0 0
    %473 = vperm.xlu0 %472, %v363
    %v474 = vpop.permute.xlu0 %473
    %477 = vset.pattern.permute.xlu0 0
    %478 = vperm.xlu0 %477, %v364
    %v479 = vpop.permute.xlu0 %478
    %482 = vset.pattern.permute.xlu0 0
    %483 = vperm.xlu0 %482, %v365
    %v484 = vpop.permute.xlu0 %483
    %487 = vset.pattern.permute.xlu0 0
    %488 = vperm.xlu0 %487, %v366
    %v489 = vpop.permute.xlu0 %488
    %492 = vset.pattern.permute.xlu0 0
    %493 = vperm.xlu0 %492, %v367
    %v494 = vpop.permute.xlu0 %493
    %497 = vset.pattern.permute.xlu0 0
    %498 = vperm.xlu0 %497, %v368
    %v499 = vpop.permute.xlu0 %498
    %502 = vset.pattern.permute.xlu0 0
    %503 = vperm.xlu0 %502, %v369
    %v504 = vpop.permute.xlu0 %503
    %507 = vset.pattern.permute.xlu0 0
    %508 = vperm.xlu0 %507, %v370
    %v509 = vpop.permute.xlu0 %508
    %512 = vset.pattern.permute.xlu0 0
    %513 = vperm.xlu0 %512, %v371
    %v514 = vpop.permute.xlu0 %513
    %517 = vset.pattern.permute.xlu0 0
    %518 = vperm.xlu0 %517, %v372
    %v519 = vpop.permute.xlu0 %518
    %522 = vset.pattern.permute.xlu0 0
    %523 = vperm.xlu0 %522, %v373
    %v524 = vpop.permute.xlu0 %523
    %527 = vset.pattern.permute.xlu0 0
    %528 = vperm.xlu0 %527, %v374
    %v529 = vpop.permute.xlu0 %528
    %532 = vset.pattern.permute.xlu0 0
    %533 = vperm.xlu0 %532, %v375
    %v534 = vpop.permute.xlu0 %533
    %537 = vset.pattern.permute.xlu0 0
    %538 = vperm.xlu0 %537, %v376
    %v539 = vpop.permute.xlu0 %538
    %542 = vset.pattern.permute.xlu0 0
    %543 = vperm.xlu0 %542, %v377
    %v544 = vpop.permute.xlu0 %543
    %547 = vset.pattern.permute.xlu0 0
    %548 = vperm.xlu0 %547, %v378
    %v549 = vpop.permute.xlu0 %548
    %552 = vset.pattern.permute.xlu0 0
    %553 = vperm.xlu0 %552, %v379
    %v554 = vpop.permute.xlu0 %553
    %557 = vset.pattern.permute.xlu0 0
    %558 = vperm.xlu0 %557, %v380
    %v559 = vpop.permute.xlu0 %558
    %562 = vset.pattern.permute.xlu0 0
    %563 = vperm.xlu0 %562, %v381
    %v564 = vpop.permute.xlu0 %563
    %567 = vset.pattern.permute.xlu0 0
    %568 = vperm.xlu0 %567, %v382
    %v569 = vpop.permute.xlu0 %568
    %572 = vset.pattern.permute.xlu0 0
    %573 = vperm.xlu0 %572, %v383
    %v574 = vpop.permute.xlu0 %573
    %577 = vset.pattern.permute.xlu0 0
    %578 = vperm.xlu0 %577, %v384
    %v579 = vpop.permute.xlu0 %578
    %582 = vset.pattern.permute.xlu0 0
    %583 = vperm.xlu0 %582, %v385
    %v584 = vpop.permute.xlu0 %583
    %587 = vset.pattern.permute.xlu0 0
    %588 = vperm.xlu0 %587, %v386
    %v589 = vpop.permute.xlu0 %588
    %592 = vset.pattern.permute.xlu0 0
    %593 = vperm.xlu0 %592, %v387
    %v594 = vpop.permute.xlu0 %593
    %597 = vset.pattern.permute.xlu0 0
    %598 = vperm.xlu0 %597, %v388
    %v599 = vpop.permute.xlu0 %598
    %602 = vset.pattern.permute.xlu0 0
    %603 = vperm.xlu0 %602, %v389
    %v604 = vpop.permute.xlu0 %603
    %607 = vset.pattern.permute.xlu0 0
    %608 = vperm.xlu0 %607, %v390
    %v609 = vpop.permute.xlu0 %608
    %612 = vset.pattern.permute.xlu0 0
    %613 = vperm.xlu0 %612, %v391
    %v614 = vpop.permute.xlu0 %613
    %617 = vset.pattern.permute.xlu0 0
    %618 = vperm.xlu0 %617, %v392
    %v619 = vpop.permute.xlu0 %618
    %622 = vset.pattern.permute.xlu0 0
    %623 = vperm.xlu0 %622, %v393
    %v624 = vpop.permute.xlu0 %623
    %627 = vset.pattern.permute.xlu0 0
    %628 = vperm.xlu0 %627, %v394
    %v629 = vpop.permute.xlu0 %628
    %632 = vset.pattern.permute.xlu0 0
    %633 = vperm.xlu0 %632, %v395
    %v634 = vpop.permute.xlu0 %633
    %637 = vset.pattern.permute.xlu0 0
    %638 = vperm.xlu0 %637, %v396
    %v639 = vpop.permute.xlu0 %638
    %642 = vset.pattern.permute.xlu0 0
    %643 = vperm.xlu0 %642, %v397
    %v644 = vpop.permute.xlu0 %643
    %647 = vset.pattern.permute.xlu0 0
    %648 = vperm.xlu0 %647, %v398
    %v649 = vpop.permute.xlu0 %648
    %652 = vset.pattern.permute.xlu0 0
    %653 = vperm.xlu0 %652, %v399
    %v654 = vpop.permute.xlu0 %653
    %657 = vset.pattern.permute.xlu0 0
    %658 = vperm.xlu0 %657, %v400
    %v659 = vpop.permute.xlu0 %658
    %662 = vset.pattern.permute.xlu0 0
    %663 = vperm.xlu0 %662, %v401
    %v664 = vpop.permute.xlu0 %663
    %667 = vset.pattern.permute.xlu0 0
    %668 = vperm.xlu0 %667, %v402
    %v669 = vpop.permute.xlu0 %668
    %672 = vset.pattern.permute.xlu0 0
    %673 = vperm.xlu0 %672, %v403
    %v674 = vpop.permute.xlu0 %673
    %677 = vset.pattern.permute.xlu0 0
    %678 = vperm.xlu0 %677, %v404
    %v679 = vpop.permute.xlu0 %678
    %682 = vset.pattern.permute.xlu0 0
    %683 = vperm.xlu0 %682, %v405
    %v684 = vpop.permute.xlu0 %683
    %687 = vset.pattern.permute.xlu0 0
    %688 = vperm.xlu0 %687, %v406
    %v689 = vpop.permute.xlu0 %688
    %692 = vset.pattern.permute.xlu0 0
    %693 = vperm.xlu0 %692, %v407
    %v694 = vpop.permute.xlu0 %693
    %697 = vset.pattern.permute.xlu0 0
    %698 = vperm.xlu0 %697, %v408
    %v699 = vpop.permute.xlu0 %698
    %702 = vset.pattern.permute.xlu0 0
    %703 = vperm.xlu0 %702, %v409
    %v704 = vpop.permute.xlu0 %703
    %707 = vset.pattern.permute.xlu0 0
    %708 = vperm.xlu0 %707, %v410
    %v709 = vpop.permute.xlu0 %708
    %712 = vset.pattern.permute.xlu0 0
    %713 = vperm.xlu0 %712, %v411
    %v714 = vpop.permute.xlu0 %713
    %717 = vset.pattern.permute.xlu0 0
    %718 = vperm.xlu0 %717, %v412
    %v719 = vpop.permute.xlu0 %718
    %722 = vset.pattern.permute.xlu0 0
    %723 = vperm.xlu0 %722, %v413
    %v724 = vpop.permute.xlu0 %723
    %727 = vset.pattern.permute.xlu0 0
    %728 = vperm.xlu0 %727, %v414
    %v729 = vpop.permute.xlu0 %728
    %732 = vset.pattern.permute.xlu0 0
    %733 = vperm.xlu0 %732, %v415
    %v734 = vpop.permute.xlu0 %733
    %v800 = vunpack.c.l.b16 %v276
    %v801 = vunpack.c.l.b16 %v277
    %v802 = vunpack.c.l.b16 %v278
    %v803 = vunpack.c.l.b16 %v279
    %v804 = vunpack.c.l.b16 %v280
    %v805 = vunpack.c.l.b16 %v281
    %v806 = vunpack.c.l.b16 %v282
    %v807 = vunpack.c.l.b16 %v283
    %v808 = vunpack.c.l.b16 %v284
    %v809 = vunpack.c.l.b16 %v285
    %v810 = vunpack.c.l.b16 %v286
    %v811 = vunpack.c.l.b16 %v287
    %v812 = vunpack.c.l.b16 %v288
    %v813 = vunpack.c.l.b16 %v289
    %v814 = vunpack.c.l.b16 %v290
    %v815 = vunpack.c.l.b16 %v291
    %v816 = vunpack.c.l.b16 %v292
    %v817 = vunpack.c.l.b16 %v293
    %v818 = vunpack.c.l.b16 %v294
    %v819 = vunpack.c.l.b16 %v295
    %v820 = vunpack.c.l.b16 %v296
    %v821 = vunpack.c.l.b16 %v297
    %v822 = vunpack.c.l.b16 %v298
    %v823 = vunpack.c.l.b16 %v299
    %v824 = vunpack.c.l.b16 %v300
    %v825 = vunpack.c.l.b16 %v301
    %v826 = vunpack.c.l.b16 %v302
    %v827 = vunpack.c.l.b16 %v303
    %v828 = vunpack.c.l.b16 %v304
    %v829 = vunpack.c.l.b16 %v305
    %v830 = vunpack.c.l.b16 %v306
    %v831 = vunpack.c.l.b16 %v307
    %v832 = vunpack.c.l.b16 %v308
    %v833 = vunpack.c.l.b16 %v309
    %v834 = vunpack.c.l.b16 %v310
    %v835 = vunpack.c.l.b16 %v311
    %v836 = vunpack.c.l.b16 %v312
    %v837 = vunpack.c.l.b16 %v313
    %v838 = vunpack.c.l.b16 %v314
    %v839 = vunpack.c.l.b16 %v315
    %v840 = vunpack.c.l.b16 %v316
    %v841 = vunpack.c.l.b16 %v317
    %v842 = vunpack.c.l.b16 %v318
    %v843 = vunpack.c.l.b16 %v319
    %v844 = vunpack.c.l.b16 %v320
    %v845 = vunpack.c.l.b16 %v321
    %v846 = vunpack.c.l.b16 %v322
    %v847 = vunpack.c.l.b16 %v323
    %v848 = vunpack.c.l.b16 %v324
    %v849 = vunpack.c.l.b16 %v325
    %v850 = vunpack.c.l.b16 %v326
    %v851 = vunpack.c.l.b16 %v327
    %v852 = vunpack.c.l.b16 %v328
    %v853 = vunpack.c.l.b16 %v329
    %v854 = vunpack.c.l.b16 %v330
    %v855 = vunpack.c.l.b16 %v331
    %v856 = vunpack.c.l.b16 %v332
    %v857 = vunpack.c.l.b16 %v333
    %v858 = vunpack.c.l.b16 %v334
    %v859 = vunpack.c.l.b16 %v335
    %v860 = vunpack.c.l.b16 %v336
    %v861 = vunpack.c.l.b16 %v337
    %v862 = vunpack.c.l.b16 %v338
    %v863 = vunpack.c.l.b16 %v339
    %v864 = vpack.c.b16 %v801, %v800
    %v865 = vpack.c.b16 %v803, %v802
    %v866 = vpack.c.b16 %v805, %v804
    %v867 = vpack.c.b16 %v807, %v806
    %v868 = vpack.c.b16 %v809, %v808
    %v869 = vpack.c.b16 %v811, %v810
    %v870 = vpack.c.b16 %v813, %v812
    %v871 = vpack.c.b16 %v815, %v814
    %v872 = vpack.c.b16 %v817, %v816
    %v873 = vpack.c.b16 %v819, %v818
    %v874 = vpack.c.b16 %v821, %v820
    %v875 = vpack.c.b16 %v823, %v822
    %v876 = vpack.c.b16 %v825, %v824
    %v877 = vpack.c.b16 %v827, %v826
    %v878 = vpack.c.b16 %v829, %v828
    %v879 = vpack.c.b16 %v831, %v830
    %v880 = vpack.c.b16 %v833, %v832
    %v881 = vpack.c.b16 %v835, %v834
    %v882 = vpack.c.b16 %v837, %v836
    %v883 = vpack.c.b16 %v839, %v838
    %v884 = vpack.c.b16 %v841, %v840
    %v885 = vpack.c.b16 %v843, %v842
    %v886 = vpack.c.b16 %v845, %v844
    %v887 = vpack.c.b16 %v847, %v846
    %v888 = vpack.c.b16 %v849, %v848
    %v889 = vpack.c.b16 %v851, %v850
    %v890 = vpack.c.b16 %v853, %v852
    %v891 = vpack.c.b16 %v855, %v854
    %v892 = vpack.c.b16 %v857, %v856
    %v893 = vpack.c.b16 %v859, %v858
    %v894 = vpack.c.b16 %v861, %v860
    %v895 = vpack.c.b16 %v863, %v862
    %vm896 = vcmask 261120
    %v898 = vsel %vm896, %v864, 0
    %v901 = vsel %vm896, %v865, 0
    %v904 = vsel %vm896, %v866, 0
    %v907 = vsel %vm896, %v867, 0
    %v910 = vsel %vm896, %v868, 0
    %v913 = vsel %vm896, %v869, 0
    %v916 = vsel %vm896, %v870, 0
    %v919 = vsel %vm896, %v871, 0
    %v922 = vsel %vm896, %v872, 0
    %v925 = vsel %vm896, %v873, 0
    %v928 = vsel %vm896, %v874, 0
    %v931 = vsel %vm896, %v875, 0
    %v934 = vsel %vm896, %v876, 0
    %v937 = vsel %vm896, %v877, 0
    %v940 = vsel %vm896, %v878, 0
    %v943 = vsel %vm896, %v879, 0
    %v946 = vsel %vm896, %v880, 0
    %v949 = vsel %vm896, %v881, 0
    %v952 = vsel %vm896, %v882, 0
    %v955 = vsel %vm896, %v883, 0
    %v958 = vsel %vm896, %v884, 0
    %v961 = vsel %vm896, %v885, 0
    %v964 = vsel %vm896, %v886, 0
    %v967 = vsel %vm896, %v887, 0
    %v970 = vsel %vm896, %v888, 0
    %v973 = vsel %vm896, %v889, 0
    %v976 = vsel %vm896, %v890, 0
    %v979 = vsel %vm896, %v891, 0
    %v982 = vsel %vm896, %v892, 0
    %v985 = vsel %vm896, %v893, 0
    %v988 = vsel %vm896, %v894, 0
    %v991 = vsel %vm896, %v895, 0
    %993 = vmatprep.subr.bf16.mxu0 0
    %994 = vmatpush1.bf16.msra.mxu0 0
    %995 = vmatprep.subr.bf16.mxu0 0
    %996 = vmatpush1.bf16.msra.mxu0 0
    %997 = vmatprep.subr.bf16.mxu0 0
    %998 = vmatpush1.bf16.msra.mxu0 0
    %999 = vmatprep.subr.bf16.mxu0 0
    %1000 = vmatpush1.bf16.msra.mxu0 0
    %1001 = vmatprep.subr.bf16.mxu0 0
    %1002 = vmatpush1.bf16.msra.mxu0 0
    %1003 = vmatprep.subr.bf16.mxu0 0
    %1004 = vmatpush1.bf16.msra.mxu0 0
    %1005 = vmatprep.subr.bf16.mxu0 %v351
    %1006 = vmatpush1.bf16.msra.mxu0 %v350
    %1007 = vmatprep.subr.bf16.mxu0 %v349
    %1008 = vmatpush1.bf16.msra.mxu0 %v348
    %1009 = vmatprep.subr.bf16.mxu0 0
    %1010 = vmatpush2.bf16.msra.mxu0 0
    %1011 = vmatprep.subr.bf16.mxu0 0
    %1012 = vmatpush2.bf16.msra.mxu0 0
    %1013 = vmatprep.subr.bf16.mxu0 0
    %1014 = vmatpush2.bf16.msra.mxu0 0
    %1015 = vmatprep.subr.bf16.mxu0 0
    %1016 = vmatpush2.bf16.msra.mxu0 0
    %1017 = vmatprep.subr.bf16.mxu0 0
    %1018 = vmatpush2.bf16.msra.mxu0 0
    %1019 = vmatprep.subr.bf16.mxu0 0
    %1020 = vmatpush2.bf16.msra.mxu0 0
    %1021 = vmatprep.subr.bf16.mxu0 0
    %1022 = vmatpush2.bf16.msra.mxu0 0
    %1023 = vmatprep.subr.bf16.mxu0 0
    %1024 = vmatpush2.bf16.msra.mxu0 0
    %1025 = vmatprep.mubr.bf16.mxu0 0
    %1026 = vmatmul.mubr.bf16.gmra.mxu0 %v898
    %v1027 = vpop.f32.mrf.mxu0
    %v1028 = vadd.f32 %v419, %v1027
    %v1029 = vpop.f32.mrf.mxu0
    %v1030 = vadd.f32 %v419, %v1029
    %v1031 = vpop.f32.mrf.mxu0
    %v1032 = vadd.f32 %v424, %v1031
    %v1033 = vpop.f32.mrf.mxu0
    %v1034 = vadd.f32 %v424, %v1033
    %1035 = vmatprep.mubr.bf16.mxu0 0
    %1036 = vmatmul.mubr.bf16.gmra.mxu0 %v901
    %v1037 = vpop.f32.mrf.mxu0
    %v1038 = vadd.f32 %v429, %v1037
    %v1039 = vpop.f32.mrf.mxu0
    %v1040 = vadd.f32 %v429, %v1039
    %v1041 = vpop.f32.mrf.mxu0
    %v1042 = vadd.f32 %v434, %v1041
    %v1043 = vpop.f32.mrf.mxu0
    %v1044 = vadd.f32 %v434, %v1043
    %1045 = vmatprep.mubr.bf16.mxu0 0
    %1046 = vmatmul.mubr.bf16.gmra.mxu0 %v904
    %v1047 = vpop.f32.mrf.mxu0
    %v1048 = vadd.f32 %v439, %v1047
    %v1049 = vpop.f32.mrf.mxu0
    %v1050 = vadd.f32 %v439, %v1049
    %v1051 = vpop.f32.mrf.mxu0
    %v1052 = vadd.f32 %v444, %v1051
    %v1053 = vpop.f32.mrf.mxu0
    %v1054 = vadd.f32 %v444, %v1053
    %1055 = vmatprep.mubr.bf16.mxu0 0
    %1056 = vmatmul.mubr.bf16.gmra.mxu0 %v907
    %v1057 = vpop.f32.mrf.mxu0
    %v1058 = vadd.f32 %v449, %v1057
    %v1059 = vpop.f32.mrf.mxu0
    %v1060 = vadd.f32 %v449, %v1059
    %v1061 = vpop.f32.mrf.mxu0
    %v1062 = vadd.f32 %v454, %v1061
    %v1063 = vpop.f32.mrf.mxu0
    %v1064 = vadd.f32 %v454, %v1063
    %1065 = vmatprep.mubr.bf16.mxu0 0
    %1066 = vmatmul.mubr.bf16.gmra.mxu0 %v910
    %v1067 = vpop.f32.mrf.mxu0
    %v1068 = vadd.f32 %v459, %v1067
    %v1069 = vpop.f32.mrf.mxu0
    %v1070 = vadd.f32 %v459, %v1069
    %v1071 = vpop.f32.mrf.mxu0
    %v1072 = vadd.f32 %v464, %v1071
    %v1073 = vpop.f32.mrf.mxu0
    %v1074 = vadd.f32 %v464, %v1073
    %1075 = vmatprep.mubr.bf16.mxu0 0
    %1076 = vmatmul.mubr.bf16.gmra.mxu0 %v913
    %v1077 = vpop.f32.mrf.mxu0
    %v1078 = vadd.f32 %v469, %v1077
    %v1079 = vpop.f32.mrf.mxu0
    %v1080 = vadd.f32 %v469, %v1079
    %v1081 = vpop.f32.mrf.mxu0
    %v1082 = vadd.f32 %v474, %v1081
    %v1083 = vpop.f32.mrf.mxu0
    %v1084 = vadd.f32 %v474, %v1083
    %1085 = vmatprep.mubr.bf16.mxu0 0
    %1086 = vmatmul.mubr.bf16.gmra.mxu0 %v916
    %v1087 = vpop.f32.mrf.mxu0
    %v1088 = vadd.f32 %v479, %v1087
    %v1089 = vpop.f32.mrf.mxu0
    %v1090 = vadd.f32 %v479, %v1089
    %v1091 = vpop.f32.mrf.mxu0
    %v1092 = vadd.f32 %v484, %v1091
    %v1093 = vpop.f32.mrf.mxu0
    %v1094 = vadd.f32 %v484, %v1093
    %1095 = vmatprep.mubr.bf16.mxu0 0
    %1096 = vmatmul.mubr.bf16.gmra.mxu0 %v919
    %v1097 = vpop.f32.mrf.mxu0
    %v1098 = vadd.f32 %v489, %v1097
    %v1099 = vpop.f32.mrf.mxu0
    %v1100 = vadd.f32 %v489, %v1099
    %v1101 = vpop.f32.mrf.mxu0
    %v1102 = vadd.f32 %v494, %v1101
    %v1103 = vpop.f32.mrf.mxu0
    %v1104 = vadd.f32 %v494, %v1103
    %1105 = vmatprep.mubr.bf16.mxu0 0
    %1106 = vmatmul.mubr.bf16.gmra.mxu0 %v922
    %v1107 = vpop.f32.mrf.mxu0
    %v1108 = vadd.f32 %v499, %v1107
    %v1109 = vpop.f32.mrf.mxu0
    %v1110 = vadd.f32 %v499, %v1109
    %v1111 = vpop.f32.mrf.mxu0
    %v1112 = vadd.f32 %v504, %v1111
    %v1113 = vpop.f32.mrf.mxu0
    %v1114 = vadd.f32 %v504, %v1113
    %1115 = vmatprep.mubr.bf16.mxu0 0
    %1116 = vmatmul.mubr.bf16.gmra.mxu0 %v925
    %v1117 = vpop.f32.mrf.mxu0
    %v1118 = vadd.f32 %v509, %v1117
    %v1119 = vpop.f32.mrf.mxu0
    %v1120 = vadd.f32 %v509, %v1119
    %v1121 = vpop.f32.mrf.mxu0
    %v1122 = vadd.f32 %v514, %v1121
    %v1123 = vpop.f32.mrf.mxu0
    %v1124 = vadd.f32 %v514, %v1123
    %1125 = vmatprep.mubr.bf16.mxu0 0
    %1126 = vmatmul.mubr.bf16.gmra.mxu0 %v928
    %v1127 = vpop.f32.mrf.mxu0
    %v1128 = vadd.f32 %v519, %v1127
    %v1129 = vpop.f32.mrf.mxu0
    %v1130 = vadd.f32 %v519, %v1129
    %v1131 = vpop.f32.mrf.mxu0
    %v1132 = vadd.f32 %v524, %v1131
    %v1133 = vpop.f32.mrf.mxu0
    %v1134 = vadd.f32 %v524, %v1133
    %1135 = vmatprep.mubr.bf16.mxu0 0
    %1136 = vmatmul.mubr.bf16.gmra.mxu0 %v931
    %v1137 = vpop.f32.mrf.mxu0
    %v1138 = vadd.f32 %v529, %v1137
    %v1139 = vpop.f32.mrf.mxu0
    %v1140 = vadd.f32 %v529, %v1139
    %v1141 = vpop.f32.mrf.mxu0
    %v1142 = vadd.f32 %v534, %v1141
    %v1143 = vpop.f32.mrf.mxu0
    %v1144 = vadd.f32 %v534, %v1143
    %1145 = vmatprep.mubr.bf16.mxu0 0
    %1146 = vmatmul.mubr.bf16.gmra.mxu0 %v934
    %v1147 = vpop.f32.mrf.mxu0
    %v1148 = vadd.f32 %v539, %v1147
    %v1149 = vpop.f32.mrf.mxu0
    %v1150 = vadd.f32 %v539, %v1149
    %v1151 = vpop.f32.mrf.mxu0
    %v1152 = vadd.f32 %v544, %v1151
    %v1153 = vpop.f32.mrf.mxu0
    %v1154 = vadd.f32 %v544, %v1153
    %1155 = vmatprep.mubr.bf16.mxu0 0
    %1156 = vmatmul.mubr.bf16.gmra.mxu0 %v937
    %v1157 = vpop.f32.mrf.mxu0
    %v1158 = vadd.f32 %v549, %v1157
    %v1159 = vpop.f32.mrf.mxu0
    %v1160 = vadd.f32 %v549, %v1159
    %v1161 = vpop.f32.mrf.mxu0
    %v1162 = vadd.f32 %v554, %v1161
    %v1163 = vpop.f32.mrf.mxu0
    %v1164 = vadd.f32 %v554, %v1163
    %1165 = vmatprep.mubr.bf16.mxu0 0
    %1166 = vmatmul.mubr.bf16.gmra.mxu0 %v940
    %v1167 = vpop.f32.mrf.mxu0
    %v1168 = vadd.f32 %v559, %v1167
    %v1169 = vpop.f32.mrf.mxu0
    %v1170 = vadd.f32 %v559, %v1169
    %v1171 = vpop.f32.mrf.mxu0
    %v1172 = vadd.f32 %v564, %v1171
    %v1173 = vpop.f32.mrf.mxu0
    %v1174 = vadd.f32 %v564, %v1173
    %1175 = vmatprep.mubr.bf16.mxu0 0
    %1176 = vmatmul.mubr.bf16.gmra.mxu0 %v943
    %v1177 = vpop.f32.mrf.mxu0
    %v1178 = vadd.f32 %v569, %v1177
    %v1179 = vpop.f32.mrf.mxu0
    %v1180 = vadd.f32 %v569, %v1179
    %v1181 = vpop.f32.mrf.mxu0
    %v1182 = vadd.f32 %v574, %v1181
    %v1183 = vpop.f32.mrf.mxu0
    %v1184 = vadd.f32 %v574, %v1183
    %1185 = vmatprep.mubr.bf16.mxu0 0
    %1186 = vmatmul.mubr.bf16.gmra.mxu0 %v946
    %v1187 = vpop.f32.mrf.mxu0
    %v1188 = vadd.f32 %v579, %v1187
    %v1189 = vpop.f32.mrf.mxu0
    %v1190 = vadd.f32 %v579, %v1189
    %v1191 = vpop.f32.mrf.mxu0
    %v1192 = vadd.f32 %v584, %v1191
    %v1193 = vpop.f32.mrf.mxu0
    %v1194 = vadd.f32 %v584, %v1193
    %1195 = vmatprep.mubr.bf16.mxu0 0
    %1196 = vmatmul.mubr.bf16.gmra.mxu0 %v949
    %v1197 = vpop.f32.mrf.mxu0
    %v1198 = vadd.f32 %v589, %v1197
    %v1199 = vpop.f32.mrf.mxu0
    %v1200 = vadd.f32 %v589, %v1199
    %v1201 = vpop.f32.mrf.mxu0
    %v1202 = vadd.f32 %v594, %v1201
    %v1203 = vpop.f32.mrf.mxu0
    %v1204 = vadd.f32 %v594, %v1203
    %1205 = vmatprep.mubr.bf16.mxu0 0
    %1206 = vmatmul.mubr.bf16.gmra.mxu0 %v952
    %v1207 = vpop.f32.mrf.mxu0
    %v1208 = vadd.f32 %v599, %v1207
    %v1209 = vpop.f32.mrf.mxu0
    %v1210 = vadd.f32 %v599, %v1209
    %v1211 = vpop.f32.mrf.mxu0
    %v1212 = vadd.f32 %v604, %v1211
    %v1213 = vpop.f32.mrf.mxu0
    %v1214 = vadd.f32 %v604, %v1213
    %1215 = vmatprep.mubr.bf16.mxu0 0
    %1216 = vmatmul.mubr.bf16.gmra.mxu0 %v955
    %v1217 = vpop.f32.mrf.mxu0
    %v1218 = vadd.f32 %v609, %v1217
    %v1219 = vpop.f32.mrf.mxu0
    %v1220 = vadd.f32 %v609, %v1219
    %v1221 = vpop.f32.mrf.mxu0
    %v1222 = vadd.f32 %v614, %v1221
    %v1223 = vpop.f32.mrf.mxu0
    %v1224 = vadd.f32 %v614, %v1223
    %1225 = vmatprep.mubr.bf16.mxu0 0
    %1226 = vmatmul.mubr.bf16.gmra.mxu0 %v958
    %v1227 = vpop.f32.mrf.mxu0
    %v1228 = vadd.f32 %v619, %v1227
    %v1229 = vpop.f32.mrf.mxu0
    %v1230 = vadd.f32 %v619, %v1229
    %v1231 = vpop.f32.mrf.mxu0
    %v1232 = vadd.f32 %v624, %v1231
    %v1233 = vpop.f32.mrf.mxu0
    %v1234 = vadd.f32 %v624, %v1233
    %1235 = vmatprep.mubr.bf16.mxu0 0
    %1236 = vmatmul.mubr.bf16.gmra.mxu0 %v961
    %v1237 = vpop.f32.mrf.mxu0
    %v1238 = vadd.f32 %v629, %v1237
    %v1239 = vpop.f32.mrf.mxu0
    %v1240 = vadd.f32 %v629, %v1239
    %v1241 = vpop.f32.mrf.mxu0
    %v1242 = vadd.f32 %v634, %v1241
    %v1243 = vpop.f32.mrf.mxu0
    %v1244 = vadd.f32 %v634, %v1243
    %1245 = vmatprep.mubr.bf16.mxu0 0
    %1246 = vmatmul.mubr.bf16.gmra.mxu0 %v964
    %v1247 = vpop.f32.mrf.mxu0
    %v1248 = vadd.f32 %v639, %v1247
    %v1249 = vpop.f32.mrf.mxu0
    %v1250 = vadd.f32 %v639, %v1249
    %v1251 = vpop.f32.mrf.mxu0
    %v1252 = vadd.f32 %v644, %v1251
    %v1253 = vpop.f32.mrf.mxu0
    %v1254 = vadd.f32 %v644, %v1253
    %1255 = vmatprep.mubr.bf16.mxu0 0
    %1256 = vmatmul.mubr.bf16.gmra.mxu0 %v967
    %v1257 = vpop.f32.mrf.mxu0
    %v1258 = vadd.f32 %v649, %v1257
    %v1259 = vpop.f32.mrf.mxu0
    %v1260 = vadd.f32 %v649, %v1259
    %v1261 = vpop.f32.mrf.mxu0
    %v1262 = vadd.f32 %v654, %v1261
    %v1263 = vpop.f32.mrf.mxu0
    %v1264 = vadd.f32 %v654, %v1263
    %1265 = vmatprep.mubr.bf16.mxu0 0
    %1266 = vmatmul.mubr.bf16.gmra.mxu0 %v970
    %v1267 = vpop.f32.mrf.mxu0
    %v1268 = vadd.f32 %v659, %v1267
    %v1269 = vpop.f32.mrf.mxu0
    %v1270 = vadd.f32 %v659, %v1269
    %v1271 = vpop.f32.mrf.mxu0
    %v1272 = vadd.f32 %v664, %v1271
    %v1273 = vpop.f32.mrf.mxu0
    %v1274 = vadd.f32 %v664, %v1273
    %1275 = vmatprep.mubr.bf16.mxu0 0
    %1276 = vmatmul.mubr.bf16.gmra.mxu0 %v973
    %v1277 = vpop.f32.mrf.mxu0
    %v1278 = vadd.f32 %v669, %v1277
    %v1279 = vpop.f32.mrf.mxu0
    %v1280 = vadd.f32 %v669, %v1279
    %v1281 = vpop.f32.mrf.mxu0
    %v1282 = vadd.f32 %v674, %v1281
    %v1283 = vpop.f32.mrf.mxu0
    %v1284 = vadd.f32 %v674, %v1283
    %1285 = vmatprep.mubr.bf16.mxu0 0
    %1286 = vmatmul.mubr.bf16.gmra.mxu0 %v976
    %v1287 = vpop.f32.mrf.mxu0
    %v1288 = vadd.f32 %v679, %v1287
    %v1289 = vpop.f32.mrf.mxu0
    %v1290 = vadd.f32 %v679, %v1289
    %v1291 = vpop.f32.mrf.mxu0
    %v1292 = vadd.f32 %v684, %v1291
    %v1293 = vpop.f32.mrf.mxu0
    %v1294 = vadd.f32 %v684, %v1293
    %1295 = vmatprep.mubr.bf16.mxu0 0
    %1296 = vmatmul.mubr.bf16.gmra.mxu0 %v979
    %v1297 = vpop.f32.mrf.mxu0
    %v1298 = vadd.f32 %v689, %v1297
    %v1299 = vpop.f32.mrf.mxu0
    %v1300 = vadd.f32 %v689, %v1299
    %v1301 = vpop.f32.mrf.mxu0
    %v1302 = vadd.f32 %v694, %v1301
    %v1303 = vpop.f32.mrf.mxu0
    %v1304 = vadd.f32 %v694, %v1303
    %1305 = vmatprep.mubr.bf16.mxu0 0
    %1306 = vmatmul.mubr.bf16.gmra.mxu0 %v982
    %v1307 = vpop.f32.mrf.mxu0
    %v1308 = vadd.f32 %v699, %v1307
    %v1309 = vpop.f32.mrf.mxu0
    %v1310 = vadd.f32 %v699, %v1309
    %v1311 = vpop.f32.mrf.mxu0
    %v1312 = vadd.f32 %v704, %v1311
    %v1313 = vpop.f32.mrf.mxu0
    %v1314 = vadd.f32 %v704, %v1313
    %1315 = vmatprep.mubr.bf16.mxu0 0
    %1316 = vmatmul.mubr.bf16.gmra.mxu0 %v985
    %v1317 = vpop.f32.mrf.mxu0
    %v1318 = vadd.f32 %v709, %v1317
    %v1319 = vpop.f32.mrf.mxu0
    %v1320 = vadd.f32 %v709, %v1319
    %v1321 = vpop.f32.mrf.mxu0
    %v1322 = vadd.f32 %v714, %v1321
    %v1323 = vpop.f32.mrf.mxu0
    %v1324 = vadd.f32 %v714, %v1323
    %1325 = vmatprep.mubr.bf16.mxu0 0
    %1326 = vmatmul.mubr.bf16.gmra.mxu0 %v988
    %v1327 = vpop.f32.mrf.mxu0
    %v1328 = vadd.f32 %v719, %v1327
    %v1329 = vpop.f32.mrf.mxu0
    %v1330 = vadd.f32 %v719, %v1329
    %v1331 = vpop.f32.mrf.mxu0
    %v1332 = vadd.f32 %v724, %v1331
    %v1333 = vpop.f32.mrf.mxu0
    %v1334 = vadd.f32 %v724, %v1333
    %1335 = vmatprep.mubr.bf16.mxu0 0
    %1336 = vmatmul.mubr.bf16.gmra.mxu0 %v991
    %v1337 = vpop.f32.mrf.mxu0
    %v1338 = vadd.f32 %v729, %v1337
    %v1339 = vpop.f32.mrf.mxu0
    %v1340 = vadd.f32 %v729, %v1339
    %v1341 = vpop.f32.mrf.mxu0
    %v1342 = vadd.f32 %v734, %v1341
    %v1343 = vpop.f32.mrf.mxu0
    %v1344 = vadd.f32 %v734, %v1343
    %1345 = vdwg.mxu0
    %v1346 = vlaneseq
    %v1347 = vshrl.u32 %v1346, 7
    %v1348 = vadd.s32 %v1347, 8
    %v1349 = vadd.s32 %v1347, 16
    %v1350 = vadd.s32 %v1347, 24
    %v1351 = vadd.s32 %v1347, 32
    %v1352 = vadd.s32 %v1347, 40
    %v1353 = vadd.s32 %v1347, 48
    %v1354 = vadd.s32 %v1347, 56
    %v1355 = vadd.s32 %v1347, 64
    %v1356 = vadd.s32 %v1347, 72
    %v1357 = vadd.s32 %v1347, 80
    %v1358 = vadd.s32 %v1347, 88
    %v1359 = vadd.s32 %v1347, 96
    %v1360 = vadd.s32 %v1347, 104
    %v1361 = vadd.s32 %v1347, 112
    %v1362 = vadd.s32 %v1347, 120
    %v1363 = vadd.s32 %v1347, 128
    %v1364 = vadd.s32 %v1347, 136
    %v1365 = vadd.s32 %v1347, 144
    %v1366 = vadd.s32 %v1347, 152
    %v1367 = vadd.s32 %v1347, 160
    %v1368 = vadd.s32 %v1347, 168
    %v1369 = vadd.s32 %v1347, 176
    %v1370 = vadd.s32 %v1347, 184
    %v1371 = vadd.s32 %v1347, 192
    %v1372 = vadd.s32 %v1347, 200
    %v1373 = vadd.s32 %v1347, 208
    %v1374 = vadd.s32 %v1347, 216
    %v1375 = vadd.s32 %v1347, 224
    %v1376 = vadd.s32 %v1347, 232
    %v1377 = vadd.s32 %v1347, 240
    %v1378 = vadd.s32 %v1347, 248
    %v1379 = vadd.s32 %v1347, 256
    %v1380 = vadd.s32 %v1347, 264
    %v1381 = vadd.s32 %v1347, 272
    %v1382 = vadd.s32 %v1347, 280
    %v1383 = vadd.s32 %v1347, 288
    %v1384 = vadd.s32 %v1347, 296
    %v1385 = vadd.s32 %v1347, 304
    %v1386 = vadd.s32 %v1347, 312
    %v1387 = vadd.s32 %v1347, 320
    %v1388 = vadd.s32 %v1347, 328
    %v1389 = vadd.s32 %v1347, 336
    %v1390 = vadd.s32 %v1347, 344
    %v1391 = vadd.s32 %v1347, 352
    %v1392 = vadd.s32 %v1347, 360
    %v1393 = vadd.s32 %v1347, 368
    %v1394 = vadd.s32 %v1347, 376
    %v1395 = vadd.s32 %v1347, 384
    %v1396 = vadd.s32 %v1347, 392
    %v1397 = vadd.s32 %v1347, 400
    %v1398 = vadd.s32 %v1347, 408
    %v1399 = vadd.s32 %v1347, 416
    %v1400 = vadd.s32 %v1347, 424
    %v1401 = vadd.s32 %v1347, 432
    %v1402 = vadd.s32 %v1347, 440
    %v1403 = vadd.s32 %v1347, 448
    %v1404 = vadd.s32 %v1347, 456
    %v1405 = vadd.s32 %v1347, 464
    %v1406 = vadd.s32 %v1347, 472
    %v1407 = vadd.s32 %v1347, 480
    %v1408 = vadd.s32 %v1347, 488
    %v1409 = vadd.s32 %v1347, 496
    %v1410 = vadd.s32 %v1347, 504
    %s1411 = smul.u32 0, 512
    %v1412 = vstv %s1411
    %v1413 = vadd.s32 %v1347, %v1412
    %v1414 = vadd.s32 %v1348, %v1412
    %v1415 = vadd.s32 %v1349, %v1412
    %v1416 = vadd.s32 %v1350, %v1412
    %v1417 = vadd.s32 %v1351, %v1412
    %v1418 = vadd.s32 %v1352, %v1412
    %v1419 = vadd.s32 %v1353, %v1412
    %v1420 = vadd.s32 %v1354, %v1412
    %v1421 = vadd.s32 %v1355, %v1412
    %v1422 = vadd.s32 %v1356, %v1412
    %v1423 = vadd.s32 %v1357, %v1412
    %v1424 = vadd.s32 %v1358, %v1412
    %v1425 = vadd.s32 %v1359, %v1412
    %v1426 = vadd.s32 %v1360, %v1412
    %v1427 = vadd.s32 %v1361, %v1412
    %v1428 = vadd.s32 %v1362, %v1412
    %v1429 = vadd.s32 %v1363, %v1412
    %v1430 = vadd.s32 %v1364, %v1412
    %v1431 = vadd.s32 %v1365, %v1412
    %v1432 = vadd.s32 %v1366, %v1412
    %v1433 = vadd.s32 %v1367, %v1412
    %v1434 = vadd.s32 %v1368, %v1412
    %v1435 = vadd.s32 %v1369, %v1412
    %v1436 = vadd.s32 %v1370, %v1412
    %v1437 = vadd.s32 %v1371, %v1412
    %v1438 = vadd.s32 %v1372, %v1412
    %v1439 = vadd.s32 %v1373, %v1412
    %v1440 = vadd.s32 %v1374, %v1412
    %v1441 = vadd.s32 %v1375, %v1412
    %v1442 = vadd.s32 %v1376, %v1412
    %v1443 = vadd.s32 %v1377, %v1412
    %v1444 = vadd.s32 %v1378, %v1412
    %v1445 = vadd.s32 %v1379, %v1412
    %v1446 = vadd.s32 %v1380, %v1412
    %v1447 = vadd.s32 %v1381, %v1412
    %v1448 = vadd.s32 %v1382, %v1412
    %v1449 = vadd.s32 %v1383, %v1412
    %v1450 = vadd.s32 %v1384, %v1412
    %v1451 = vadd.s32 %v1385, %v1412
    %v1452 = vadd.s32 %v1386, %v1412
    %v1453 = vadd.s32 %v1387, %v1412
    %v1454 = vadd.s32 %v1388, %v1412
    %v1455 = vadd.s32 %v1389, %v1412
    %v1456 = vadd.s32 %v1390, %v1412
    %v1457 = vadd.s32 %v1391, %v1412
    %v1458 = vadd.s32 %v1392, %v1412
    %v1459 = vadd.s32 %v1393, %v1412
    %v1460 = vadd.s32 %v1394, %v1412
    %v1461 = vadd.s32 %v1395, %v1412
    %v1462 = vadd.s32 %v1396, %v1412
    %v1463 = vadd.s32 %v1397, %v1412
    %v1464 = vadd.s32 %v1398, %v1412
    %v1465 = vadd.s32 %v1399, %v1412
    %v1466 = vadd.s32 %v1400, %v1412
    %v1467 = vadd.s32 %v1401, %v1412
    %v1468 = vadd.s32 %v1402, %v1412
    %v1469 = vadd.s32 %v1403, %v1412
    %v1470 = vadd.s32 %v1404, %v1412
    %v1471 = vadd.s32 %v1405, %v1412
    %v1472 = vadd.s32 %v1406, %v1412
    %v1473 = vadd.s32 %v1407, %v1412
    %v1474 = vadd.s32 %v1408, %v1412
    %v1475 = vadd.s32 %v1409, %v1412
    %v1476 = vadd.s32 %v1410, %v1412
    %v1477 = vld [vmem:[%s5] sm:$0x3]
    %v1478 = vlaneseq
    %v1479 = vshrl.u32 %v1478, 7
    %v1480 = vsub.s32 0, %v1479
    %v1481 = vrot.slane %v1477, %v1480
    %v1482 = vlaneseq
    %v1483 = vshrl.u32 %v1482, 7
    %v1484 = vsub.s32 1, %v1483
    %v1485 = vrot.slane %v1477, %v1484
    %vm1486 = vcmp.eq.s32.totalorder %v1413, %v1481
    %vm1487 = vcmp.eq.s32.totalorder %v1413, %v1485
    %vm1488 = vcmp.eq.s32.totalorder %v1414, %v1481
    %vm1489 = vcmp.eq.s32.totalorder %v1414, %v1485
    %vm1490 = vcmp.eq.s32.totalorder %v1415, %v1481
    %vm1491 = vcmp.eq.s32.totalorder %v1415, %v1485
    %vm1492 = vcmp.eq.s32.totalorder %v1416, %v1481
    %vm1493 = vcmp.eq.s32.totalorder %v1416, %v1485
    %vm1494 = vcmp.eq.s32.totalorder %v1417, %v1481
    %vm1495 = vcmp.eq.s32.totalorder %v1417, %v1485
    %vm1496 = vcmp.eq.s32.totalorder %v1418, %v1481
    %vm1497 = vcmp.eq.s32.totalorder %v1418, %v1485
    %vm1498 = vcmp.eq.s32.totalorder %v1419, %v1481
    %vm1499 = vcmp.eq.s32.totalorder %v1419, %v1485
    %vm1500 = vcmp.eq.s32.totalorder %v1420, %v1481
    %vm1501 = vcmp.eq.s32.totalorder %v1420, %v1485
    %vm1502 = vcmp.eq.s32.totalorder %v1421, %v1481
    %vm1503 = vcmp.eq.s32.totalorder %v1421, %v1485
    %vm1504 = vcmp.eq.s32.totalorder %v1422, %v1481
    %vm1505 = vcmp.eq.s32.totalorder %v1422, %v1485
    %vm1506 = vcmp.eq.s32.totalorder %v1423, %v1481
    %vm1507 = vcmp.eq.s32.totalorder %v1423, %v1485
    %vm1508 = vcmp.eq.s32.totalorder %v1424, %v1481
    %vm1509 = vcmp.eq.s32.totalorder %v1424, %v1485
    %vm1510 = vcmp.eq.s32.totalorder %v1425, %v1481
    %vm1511 = vcmp.eq.s32.totalorder %v1425, %v1485
    %vm1512 = vcmp.eq.s32.totalorder %v1426, %v1481
    %vm1513 = vcmp.eq.s32.totalorder %v1426, %v1485
    %vm1514 = vcmp.eq.s32.totalorder %v1427, %v1481
    %vm1515 = vcmp.eq.s32.totalorder %v1427, %v1485
    %vm1516 = vcmp.eq.s32.totalorder %v1428, %v1481
    %vm1517 = vcmp.eq.s32.totalorder %v1428, %v1485
    %vm1518 = vcmp.eq.s32.totalorder %v1429, %v1481
    %vm1519 = vcmp.eq.s32.totalorder %v1429, %v1485
    %vm1520 = vcmp.eq.s32.totalorder %v1430, %v1481
    %vm1521 = vcmp.eq.s32.totalorder %v1430, %v1485
    %vm1522 = vcmp.eq.s32.totalorder %v1431, %v1481
    %vm1523 = vcmp.eq.s32.totalorder %v1431, %v1485
    %vm1524 = vcmp.eq.s32.totalorder %v1432, %v1481
    %vm1525 = vcmp.eq.s32.totalorder %v1432, %v1485
    %vm1526 = vcmp.eq.s32.totalorder %v1433, %v1481
    %vm1527 = vcmp.eq.s32.totalorder %v1433, %v1485
    %vm1528 = vcmp.eq.s32.totalorder %v1434, %v1481
    %vm1529 = vcmp.eq.s32.totalorder %v1434, %v1485
    %vm1530 = vcmp.eq.s32.totalorder %v1435, %v1481
    %vm1531 = vcmp.eq.s32.totalorder %v1435, %v1485
    %vm1532 = vcmp.eq.s32.totalorder %v1436, %v1481
    %vm1533 = vcmp.eq.s32.totalorder %v1436, %v1485
    %vm1534 = vcmp.eq.s32.totalorder %v1437, %v1481
    %vm1535 = vcmp.eq.s32.totalorder %v1437, %v1485
    %vm1536 = vcmp.eq.s32.totalorder %v1438, %v1481
    %vm1537 = vcmp.eq.s32.totalorder %v1438, %v1485
    %vm1538 = vcmp.eq.s32.totalorder %v1439, %v1481
    %vm1539 = vcmp.eq.s32.totalorder %v1439, %v1485
    %vm1540 = vcmp.eq.s32.totalorder %v1440, %v1481
    %vm1541 = vcmp.eq.s32.totalorder %v1440, %v1485
    %vm1542 = vcmp.eq.s32.totalorder %v1441, %v1481
    %vm1543 = vcmp.eq.s32.totalorder %v1441, %v1485
    %vm1544 = vcmp.eq.s32.totalorder %v1442, %v1481
    %vm1545 = vcmp.eq.s32.totalorder %v1442, %v1485
    %vm1546 = vcmp.eq.s32.totalorder %v1443, %v1481
    %vm1547 = vcmp.eq.s32.totalorder %v1443, %v1485
    %vm1548 = vcmp.eq.s32.totalorder %v1444, %v1481
    %vm1549 = vcmp.eq.s32.totalorder %v1444, %v1485
    %vm1550 = vcmp.eq.s32.totalorder %v1445, %v1481
    %vm1551 = vcmp.eq.s32.totalorder %v1445, %v1485
    %vm1552 = vcmp.eq.s32.totalorder %v1446, %v1481
    %vm1553 = vcmp.eq.s32.totalorder %v1446, %v1485
    %vm1554 = vcmp.eq.s32.totalorder %v1447, %v1481
    %vm1555 = vcmp.eq.s32.totalorder %v1447, %v1485
    %vm1556 = vcmp.eq.s32.totalorder %v1448, %v1481
    %vm1557 = vcmp.eq.s32.totalorder %v1448, %v1485
    %vm1558 = vcmp.eq.s32.totalorder %v1449, %v1481
    %vm1559 = vcmp.eq.s32.totalorder %v1449, %v1485
    %vm1560 = vcmp.eq.s32.totalorder %v1450, %v1481
    %vm1561 = vcmp.eq.s32.totalorder %v1450, %v1485
    %vm1562 = vcmp.eq.s32.totalorder %v1451, %v1481
    %vm1563 = vcmp.eq.s32.totalorder %v1451, %v1485
    %vm1564 = vcmp.eq.s32.totalorder %v1452, %v1481
    %vm1565 = vcmp.eq.s32.totalorder %v1452, %v1485
    %vm1566 = vcmp.eq.s32.totalorder %v1453, %v1481
    %vm1567 = vcmp.eq.s32.totalorder %v1453, %v1485
    %vm1568 = vcmp.eq.s32.totalorder %v1454, %v1481
    %vm1569 = vcmp.eq.s32.totalorder %v1454, %v1485
    %vm1570 = vcmp.eq.s32.totalorder %v1455, %v1481
    %vm1571 = vcmp.eq.s32.totalorder %v1455, %v1485
    %vm1572 = vcmp.eq.s32.totalorder %v1456, %v1481
    %vm1573 = vcmp.eq.s32.totalorder %v1456, %v1485
    %vm1574 = vcmp.eq.s32.totalorder %v1457, %v1481
    %vm1575 = vcmp.eq.s32.totalorder %v1457, %v1485
    %vm1576 = vcmp.eq.s32.totalorder %v1458, %v1481
    %vm1577 = vcmp.eq.s32.totalorder %v1458, %v1485
    %vm1578 = vcmp.eq.s32.totalorder %v1459, %v1481
    %vm1579 = vcmp.eq.s32.totalorder %v1459, %v1485
    %vm1580 = vcmp.eq.s32.totalorder %v1460, %v1481
    %vm1581 = vcmp.eq.s32.totalorder %v1460, %v1485
    %vm1582 = vcmp.eq.s32.totalorder %v1461, %v1481
    %vm1583 = vcmp.eq.s32.totalorder %v1461, %v1485
    %vm1584 = vcmp.eq.s32.totalorder %v1462, %v1481
    %vm1585 = vcmp.eq.s32.totalorder %v1462, %v1485
    %vm1586 = vcmp.eq.s32.totalorder %v1463, %v1481
    %vm1587 = vcmp.eq.s32.totalorder %v1463, %v1485
    %vm1588 = vcmp.eq.s32.totalorder %v1464, %v1481
    %vm1589 = vcmp.eq.s32.totalorder %v1464, %v1485
    %vm1590 = vcmp.eq.s32.totalorder %v1465, %v1481
    %vm1591 = vcmp.eq.s32.totalorder %v1465, %v1485
    %vm1592 = vcmp.eq.s32.totalorder %v1466, %v1481
    %vm1593 = vcmp.eq.s32.totalorder %v1466, %v1485
    %vm1594 = vcmp.eq.s32.totalorder %v1467, %v1481
    %vm1595 = vcmp.eq.s32.totalorder %v1467, %v1485
    %vm1596 = vcmp.eq.s32.totalorder %v1468, %v1481
    %vm1597 = vcmp.eq.s32.totalorder %v1468, %v1485
    %vm1598 = vcmp.eq.s32.totalorder %v1469, %v1481
    %vm1599 = vcmp.eq.s32.totalorder %v1469, %v1485
    %vm1600 = vcmp.eq.s32.totalorder %v1470, %v1481
    %vm1601 = vcmp.eq.s32.totalorder %v1470, %v1485
    %vm1602 = vcmp.eq.s32.totalorder %v1471, %v1481
    %vm1603 = vcmp.eq.s32.totalorder %v1471, %v1485
    %vm1604 = vcmp.eq.s32.totalorder %v1472, %v1481
    %vm1605 = vcmp.eq.s32.totalorder %v1472, %v1485
    %vm1606 = vcmp.eq.s32.totalorder %v1473, %v1481
    %vm1607 = vcmp.eq.s32.totalorder %v1473, %v1485
    %vm1608 = vcmp.eq.s32.totalorder %v1474, %v1481
    %vm1609 = vcmp.eq.s32.totalorder %v1474, %v1485
    %vm1610 = vcmp.eq.s32.totalorder %v1475, %v1481
    %vm1611 = vcmp.eq.s32.totalorder %v1475, %v1485
    %vm1612 = vcmp.eq.s32.totalorder %v1476, %v1481
    %vm1613 = vcmp.eq.s32.totalorder %v1476, %v1485
    %v1614 = vld [vmem:[#allocation5] sm:$0x3]
    %v1615 = vsel %vm1486, %v1028, 0.0
    %v1616 = vsel %vm1487, %v1030, 0.0
    %v1617 = vsel %vm1488, %v1032, 0.0
    %v1618 = vsel %vm1489, %v1034, 0.0
    %v1619 = vsel %vm1490, %v1038, 0.0
    %v1620 = vsel %vm1491, %v1040, 0.0
    %v1621 = vsel %vm1492, %v1042, 0.0
    %v1622 = vsel %vm1493, %v1044, 0.0
    %v1623 = vsel %vm1494, %v1048, 0.0
    %v1624 = vsel %vm1495, %v1050, 0.0
    %v1625 = vsel %vm1496, %v1052, 0.0
    %v1626 = vsel %vm1497, %v1054, 0.0
    %v1627 = vsel %vm1498, %v1058, 0.0
    %v1628 = vsel %vm1499, %v1060, 0.0
    %v1629 = vsel %vm1500, %v1062, 0.0
    %v1630 = vsel %vm1501, %v1064, 0.0
    %v1631 = vsel %vm1502, %v1068, 0.0
    %v1632 = vsel %vm1503, %v1070, 0.0
    %v1633 = vsel %vm1504, %v1072, 0.0
    %v1634 = vsel %vm1505, %v1074, 0.0
    %v1635 = vsel %vm1506, %v1078, 0.0
    %v1636 = vsel %vm1507, %v1080, 0.0
    %v1637 = vsel %vm1508, %v1082, 0.0
    %v1638 = vsel %vm1509, %v1084, 0.0
    %v1639 = vsel %vm1510, %v1088, 0.0
    %v1640 = vsel %vm1511, %v1090, 0.0
    %v1641 = vsel %vm1512, %v1092, 0.0
    %v1642 = vsel %vm1513, %v1094, 0.0
    %v1643 = vsel %vm1514, %v1098, 0.0
    %v1644 = vsel %vm1515, %v1100, 0.0
    %v1645 = vsel %vm1516, %v1102, 0.0
    %v1646 = vsel %vm1517, %v1104, 0.0
    %v1647 = vsel %vm1518, %v1108, 0.0
    %v1648 = vsel %vm1519, %v1110, 0.0
    %v1649 = vsel %vm1520, %v1112, 0.0
    %v1650 = vsel %vm1521, %v1114, 0.0
    %v1651 = vsel %vm1522, %v1118, 0.0
    %v1652 = vsel %vm1523, %v1120, 0.0
    %v1653 = vsel %vm1524, %v1122, 0.0
    %v1654 = vsel %vm1525, %v1124, 0.0
    %v1655 = vsel %vm1526, %v1128, 0.0
    %v1656 = vsel %vm1527, %v1130, 0.0
    %v1657 = vsel %vm1528, %v1132, 0.0
    %v1658 = vsel %vm1529, %v1134, 0.0
    %v1659 = vsel %vm1530, %v1138, 0.0
    %v1660 = vsel %vm1531, %v1140, 0.0
    %v1661 = vsel %vm1532, %v1142, 0.0
    %v1662 = vsel %vm1533, %v1144, 0.0
    %v1663 = vsel %vm1534, %v1148, 0.0
    %v1664 = vsel %vm1535, %v1150, 0.0
    %v1665 = vsel %vm1536, %v1152, 0.0
    %v1666 = vsel %vm1537, %v1154, 0.0
    %v1667 = vsel %vm1538, %v1158, 0.0
    %v1668 = vsel %vm1539, %v1160, 0.0
    %v1669 = vsel %vm1540, %v1162, 0.0
    %v1670 = vsel %vm1541, %v1164, 0.0
    %v1671 = vsel %vm1542, %v1168, 0.0
    %v1672 = vsel %vm1543, %v1170, 0.0
    %v1673 = vsel %vm1544, %v1172, 0.0
    %v1674 = vsel %vm1545, %v1174, 0.0
    %v1675 = vsel %vm1546, %v1178, 0.0
    %v1676 = vsel %vm1547, %v1180, 0.0
    %v1677 = vsel %vm1548, %v1182, 0.0
    %v1678 = vsel %vm1549, %v1184, 0.0
    %v1679 = vsel %vm1550, %v1188, 0.0
    %v1680 = vsel %vm1551, %v1190, 0.0
    %v1681 = vsel %vm1552, %v1192, 0.0
    %v1682 = vsel %vm1553, %v1194, 0.0
    %v1683 = vsel %vm1554, %v1198, 0.0
    %v1684 = vsel %vm1555, %v1200, 0.0
    %v1685 = vsel %vm1556, %v1202, 0.0
    %v1686 = vsel %vm1557, %v1204, 0.0
    %v1687 = vsel %vm1558, %v1208, 0.0
    %v1688 = vsel %vm1559, %v1210, 0.0
    %v1689 = vsel %vm1560, %v1212, 0.0
    %v1690 = vsel %vm1561, %v1214, 0.0
    %v1691 = vsel %vm1562, %v1218, 0.0
    %v1692 = vsel %vm1563, %v1220, 0.0
    %v1693 = vsel %vm1564, %v1222, 0.0
    %v1694 = vsel %vm1565, %v1224, 0.0
    %v1695 = vsel %vm1566, %v1228, 0.0
    %v1696 = vsel %vm1567, %v1230, 0.0
    %v1697 = vsel %vm1568, %v1232, 0.0
    %v1698 = vsel %vm1569, %v1234, 0.0
    %v1699 = vsel %vm1570, %v1238, 0.0
    %v1700 = vsel %vm1571, %v1240, 0.0
    %v1701 = vsel %vm1572, %v1242, 0.0
    %v1702 = vsel %vm1573, %v1244, 0.0
    %v1703 = vsel %vm1574, %v1248, 0.0
    %v1704 = vsel %vm1575, %v1250, 0.0
    %v1705 = vsel %vm1576, %v1252, 0.0
    %v1706 = vsel %vm1577, %v1254, 0.0
    %v1707 = vsel %vm1578, %v1258, 0.0
    %v1708 = vsel %vm1579, %v1260, 0.0
    %v1709 = vsel %vm1580, %v1262, 0.0
    %v1710 = vsel %vm1581, %v1264, 0.0
    %v1711 = vsel %vm1582, %v1268, 0.0
    %v1712 = vsel %vm1583, %v1270, 0.0
    %v1713 = vsel %vm1584, %v1272, 0.0
    %v1714 = vsel %vm1585, %v1274, 0.0
    %v1715 = vsel %vm1586, %v1278, 0.0
    %v1716 = vsel %vm1587, %v1280, 0.0
    %v1717 = vsel %vm1588, %v1282, 0.0
    %v1718 = vsel %vm1589, %v1284, 0.0
    %v1719 = vsel %vm1590, %v1288, 0.0
    %v1720 = vsel %vm1591, %v1290, 0.0
    %v1721 = vsel %vm1592, %v1292, 0.0
    %v1722 = vsel %vm1593, %v1294, 0.0
    %v1723 = vsel %vm1594, %v1298, 0.0
    %v1724 = vsel %vm1595, %v1300, 0.0
    %v1725 = vsel %vm1596, %v1302, 0.0
    %v1726 = vsel %vm1597, %v1304, 0.0
    %v1727 = vsel %vm1598, %v1308, 0.0
    %v1728 = vsel %vm1599, %v1310, 0.0
    %v1729 = vsel %vm1600, %v1312, 0.0
    %v1730 = vsel %vm1601, %v1314, 0.0
    %v1731 = vsel %vm1602, %v1318, 0.0
    %v1732 = vsel %vm1603, %v1320, 0.0
    %v1733 = vsel %vm1604, %v1322, 0.0
    %v1734 = vsel %vm1605, %v1324, 0.0
    %v1735 = vsel %vm1606, %v1328, 0.0
    %v1736 = vsel %vm1607, %v1330, 0.0
    %v1737 = vsel %vm1608, %v1332, 0.0
    %v1738 = vsel %vm1609, %v1334, 0.0
    %v1739 = vsel %vm1610, %v1338, 0.0
    %v1740 = vsel %vm1611, %v1340, 0.0
    %v1741 = vsel %vm1612, %v1342, 0.0
    %v1742 = vsel %vm1613, %v1344, 0.0
    %v1743 = vadd.f32 %v1615, %v1617
    %v1744 = vadd.f32 %v1743, %v1619
    %v1745 = vadd.f32 %v1744, %v1621
    %v1746 = vadd.f32 %v1745, %v1623
    %v1747 = vadd.f32 %v1746, %v1625
    %v1748 = vadd.f32 %v1747, %v1627
    %v1749 = vadd.f32 %v1748, %v1629
    %v1750 = vadd.f32 %v1749, %v1631
    %v1751 = vadd.f32 %v1750, %v1633
    %v1752 = vadd.f32 %v1751, %v1635
    %v1753 = vadd.f32 %v1752, %v1637
    %v1754 = vadd.f32 %v1753, %v1639
    %v1755 = vadd.f32 %v1754, %v1641
    %v1756 = vadd.f32 %v1755, %v1643
    %v1757 = vadd.f32 %v1756, %v1645
    %v1758 = vadd.f32 %v1757, %v1647
    %v1759 = vadd.f32 %v1758, %v1649
    %v1760 = vadd.f32 %v1759, %v1651
    %v1761 = vadd.f32 %v1760, %v1653
    %v1762 = vadd.f32 %v1761, %v1655
    %v1763 = vadd.f32 %v1762, %v1657
    %v1764 = vadd.f32 %v1763, %v1659
    %v1765 = vadd.f32 %v1764, %v1661
    %v1766 = vadd.f32 %v1765, %v1663
    %v1767 = vadd.f32 %v1766, %v1665
    %v1768 = vadd.f32 %v1767, %v1667
    %v1769 = vadd.f32 %v1768, %v1669
    %v1770 = vadd.f32 %v1769, %v1671
    %v1771 = vadd.f32 %v1770, %v1673
    %v1772 = vadd.f32 %v1771, %v1675
    %v1773 = vadd.f32 %v1772, %v1677
    %v1774 = vadd.f32 %v1773, %v1679
    %v1775 = vadd.f32 %v1774, %v1681
    %v1776 = vadd.f32 %v1775, %v1683
    %v1777 = vadd.f32 %v1776, %v1685
    %v1778 = vadd.f32 %v1777, %v1687
    %v1779 = vadd.f32 %v1778, %v1689
    %v1780 = vadd.f32 %v1779, %v1691
    %v1781 = vadd.f32 %v1780, %v1693
    %v1782 = vadd.f32 %v1781, %v1695
    %v1783 = vadd.f32 %v1782, %v1697
    %v1784 = vadd.f32 %v1783, %v1699
    %v1785 = vadd.f32 %v1784, %v1701
    %v1786 = vadd.f32 %v1785, %v1703
    %v1787 = vadd.f32 %v1786, %v1705
    %v1788 = vadd.f32 %v1787, %v1707
    %v1789 = vadd.f32 %v1788, %v1709
    %v1790 = vadd.f32 %v1789, %v1711
    %v1791 = vadd.f32 %v1790, %v1713
    %v1792 = vadd.f32 %v1791, %v1715
    %v1793 = vadd.f32 %v1792, %v1717
    %v1794 = vadd.f32 %v1793, %v1719
    %v1795 = vadd.f32 %v1794, %v1721
    %v1796 = vadd.f32 %v1795, %v1723
    %v1797 = vadd.f32 %v1796, %v1725
    %v1798 = vadd.f32 %v1797, %v1727
    %v1799 = vadd.f32 %v1798, %v1729
    %v1800 = vadd.f32 %v1799, %v1731
    %v1801 = vadd.f32 %v1800, %v1733
    %v1802 = vadd.f32 %v1801, %v1735
    %v1803 = vadd.f32 %v1802, %v1737
    %v1804 = vadd.f32 %v1803, %v1739
    %v1805 = vadd.f32 %v1804, %v1741
    %v1806 = vrot.slane %v1805, 4
    %v1807 = vadd.f32 %v1805, %v1806
    %v1808 = vrot.slane %v1807, 2
    %v1809 = vadd.f32 %v1807, %v1808
    %v1810 = vrot.slane %v1809, 1
    %v1811 = vadd.f32 %v1809, %v1810
    %v1812 = vadd.f32 %v1616, %v1618
    %v1813 = vadd.f32 %v1812, %v1620
    %v1814 = vadd.f32 %v1813, %v1622
    %v1815 = vadd.f32 %v1814, %v1624
    %v1816 = vadd.f32 %v1815, %v1626
    %v1817 = vadd.f32 %v1816, %v1628
    %v1818 = vadd.f32 %v1817, %v1630
    %v1819 = vadd.f32 %v1818, %v1632
    %v1820 = vadd.f32 %v1819, %v1634
    %v1821 = vadd.f32 %v1820, %v1636
    %v1822 = vadd.f32 %v1821, %v1638
    %v1823 = vadd.f32 %v1822, %v1640
    %v1824 = vadd.f32 %v1823, %v1642
    %v1825 = vadd.f32 %v1824, %v1644
    %v1826 = vadd.f32 %v1825, %v1646
    %v1827 = vadd.f32 %v1826, %v1648
    %v1828 = vadd.f32 %v1827, %v1650
    %v1829 = vadd.f32 %v1828, %v1652
    %v1830 = vadd.f32 %v1829, %v1654
    %v1831 = vadd.f32 %v1830, %v1656
    %v1832 = vadd.f32 %v1831, %v1658
    %v1833 = vadd.f32 %v1832, %v1660
    %v1834 = vadd.f32 %v1833, %v1662
    %v1835 = vadd.f32 %v1834, %v1664
    %v1836 = vadd.f32 %v1835, %v1666
    %v1837 = vadd.f32 %v1836, %v1668
    %v1838 = vadd.f32 %v1837, %v1670
    %v1839 = vadd.f32 %v1838, %v1672
    %v1840 = vadd.f32 %v1839, %v1674
    %v1841 = vadd.f32 %v1840, %v1676
    %v1842 = vadd.f32 %v1841, %v1678
    %v1843 = vadd.f32 %v1842, %v1680
    %v1844 = vadd.f32 %v1843, %v1682
    %v1845 = vadd.f32 %v1844, %v1684
    %v1846 = vadd.f32 %v1845, %v1686
    %v1847 = vadd.f32 %v1846, %v1688
    %v1848 = vadd.f32 %v1847, %v1690
    %v1849 = vadd.f32 %v1848, %v1692
    %v1850 = vadd.f32 %v1849, %v1694
    %v1851 = vadd.f32 %v1850, %v1696
    %v1852 = vadd.f32 %v1851, %v1698
    %v1853 = vadd.f32 %v1852, %v1700
    %v1854 = vadd.f32 %v1853, %v1702
    %v1855 = vadd.f32 %v1854, %v1704
    %v1856 = vadd.f32 %v1855, %v1706
    %v1857 = vadd.f32 %v1856, %v1708
    %v1858 = vadd.f32 %v1857, %v1710
    %v1859 = vadd.f32 %v1858, %v1712
    %v1860 = vadd.f32 %v1859, %v1714
    %v1861 = vadd.f32 %v1860, %v1716
    %v1862 = vadd.f32 %v1861, %v1718
    %v1863 = vadd.f32 %v1862, %v1720
    %v1864 = vadd.f32 %v1863, %v1722
    %v1865 = vadd.f32 %v1864, %v1724
    %v1866 = vadd.f32 %v1865, %v1726
    %v1867 = vadd.f32 %v1866, %v1728
    %v1868 = vadd.f32 %v1867, %v1730
    %v1869 = vadd.f32 %v1868, %v1732
    %v1870 = vadd.f32 %v1869, %v1734
    %v1871 = vadd.f32 %v1870, %v1736
    %v1872 = vadd.f32 %v1871, %v1738
    %v1873 = vadd.f32 %v1872, %v1740
    %v1874 = vadd.f32 %v1873, %v1742
    %v1875 = vrot.slane %v1874, 4
    %v1876 = vadd.f32 %v1874, %v1875
    %v1877 = vrot.slane %v1876, 2
    %v1878 = vadd.f32 %v1876, %v1877
    %v1879 = vrot.slane %v1878, 1
    %v1880 = vadd.f32 %v1878, %v1879
    %v1883 = vcombine.low %v1811, %v1880
    %v1885 = vunpack.c.l.s4 1966171168
    %v1886 = vunpack.c.0.s8 %v1885
    %v1887 = vlaneseq
    %v1888 = vshrl.u32 %v1887, 7
    %v1889 = vsub.s32 %v1886, %v1888
    %v1890 = vrot.slane %v1883, %v1889
    %v1892 = vunpack.c.l.s4 1966171168
    %v1893 = vunpack.c.0.s8 %v1892
    %v1894 = vlaneseq
    %v1895 = vshrl.u32 %v1894, 7
    %v1896 = vsub.s32 %v1893, %v1895
    %v1897 = vrot.slane %v1890, %v1896
    %v1899 = vadd.f32 %v1614, %v1897
    %v1900 = vlaneseq
    %vm1901 = vcmp.ge.s32.totalorder %v1900, 0
    %vm1902 = vcmp.lt.s32.totalorder %v1900, 256
    %vm1903 = vmand %vm1901, %vm1902
    %1904 = vst.msk [vmem:[#allocation5] sm:$0x3] %vm1903, %v1899
    %v1905 = vld [vmem:[#allocation3] sm:$0x3]
    %v1906 = vmax.f32 %v1028, %v1038
    %v1907 = vmax.f32 %v1032, %v1042
    %v1908 = vmax.f32 %v1906, %v1048
    %v1909 = vmax.f32 %v1907, %v1052
    %v1910 = vmax.f32 %v1908, %v1058
    %v1911 = vmax.f32 %v1909, %v1062
    %v1912 = vmax.f32 %v1910, %v1068
    %v1913 = vmax.f32 %v1911, %v1072
    %v1914 = vmax.f32 %v1912, %v1078
    %v1915 = vmax.f32 %v1913, %v1082
    %v1916 = vmax.f32 %v1914, %v1088
    %v1917 = vmax.f32 %v1915, %v1092
    %v1918 = vmax.f32 %v1916, %v1098
    %v1919 = vmax.f32 %v1917, %v1102
    %v1920 = vmax.f32 %v1918, %v1108
    %v1921 = vmax.f32 %v1919, %v1112
    %v1922 = vmax.f32 %v1920, %v1118
    %v1923 = vmax.f32 %v1921, %v1122
    %v1924 = vmax.f32 %v1922, %v1128
    %v1925 = vmax.f32 %v1923, %v1132
    %v1926 = vmax.f32 %v1924, %v1138
    %v1927 = vmax.f32 %v1925, %v1142
    %v1928 = vmax.f32 %v1926, %v1148
    %v1929 = vmax.f32 %v1927, %v1152
    %v1930 = vmax.f32 %v1928, %v1158
    %v1931 = vmax.f32 %v1929, %v1162
    %v1932 = vmax.f32 %v1930, %v1168
    %v1933 = vmax.f32 %v1931, %v1172
    %v1934 = vmax.f32 %v1932, %v1178
    %v1935 = vmax.f32 %v1933, %v1182
    %v1936 = vmax.f32 %v1934, %v1188
    %v1937 = vmax.f32 %v1935, %v1192
    %v1938 = vmax.f32 %v1936, %v1198
    %v1939 = vmax.f32 %v1937, %v1202
    %v1940 = vmax.f32 %v1938, %v1208
    %v1941 = vmax.f32 %v1939, %v1212
    %v1942 = vmax.f32 %v1940, %v1218
    %v1943 = vmax.f32 %v1941, %v1222
    %v1944 = vmax.f32 %v1942, %v1228
    %v1945 = vmax.f32 %v1943, %v1232
    %v1946 = vmax.f32 %v1944, %v1238
    %v1947 = vmax.f32 %v1945, %v1242
    %v1948 = vmax.f32 %v1946, %v1248
    %v1949 = vmax.f32 %v1947, %v1252
    %v1950 = vmax.f32 %v1948, %v1258
    %v1951 = vmax.f32 %v1949, %v1262
    %v1952 = vmax.f32 %v1950, %v1268
    %v1953 = vmax.f32 %v1951, %v1272
    %v1954 = vmax.f32 %v1952, %v1278
    %v1955 = vmax.f32 %v1953, %v1282
    %v1956 = vmax.f32 %v1954, %v1288
    %v1957 = vmax.f32 %v1955, %v1292
    %v1958 = vmax.f32 %v1956, %v1298
    %v1959 = vmax.f32 %v1957, %v1302
    %v1960 = vmax.f32 %v1958, %v1308
    %v1961 = vmax.f32 %v1959, %v1312
    %v1962 = vmax.f32 %v1960, %v1318
    %v1963 = vmax.f32 %v1961, %v1322
    %v1964 = vmax.f32 %v1962, %v1328
    %v1965 = vmax.f32 %v1963, %v1332
    %v1966 = vmax.f32 %v1964, %v1338
    %v1967 = vmax.f32 %v1965, %v1342
    %v1968 = vmax.f32 %v1966, %v1967
    %v1969 = vrot.slane %v1968, 4
    %v1970 = vmax.f32 %v1968, %v1969
    %v1971 = vrot.slane %v1970, 2
    %v1972 = vmax.f32 %v1970, %v1971
    %v1973 = vrot.slane %v1972, 1
    %v1974 = vmax.f32 %v1972, %v1973
    %v1975 = vmax.f32 %v1030, %v1040
    %v1976 = vmax.f32 %v1034, %v1044
    %v1977 = vmax.f32 %v1975, %v1050
    %v1978 = vmax.f32 %v1976, %v1054
    %v1979 = vmax.f32 %v1977, %v1060
    %v1980 = vmax.f32 %v1978, %v1064
    %v1981 = vmax.f32 %v1979, %v1070
    %v1982 = vmax.f32 %v1980, %v1074
    %v1983 = vmax.f32 %v1981, %v1080
    %v1984 = vmax.f32 %v1982, %v1084
    %v1985 = vmax.f32 %v1983, %v1090
    %v1986 = vmax.f32 %v1984, %v1094
    %v1987 = vmax.f32 %v1985, %v1100
    %v1988 = vmax.f32 %v1986, %v1104
    %v1989 = vmax.f32 %v1987, %v1110
    %v1990 = vmax.f32 %v1988, %v1114
    %v1991 = vmax.f32 %v1989, %v1120
    %v1992 = vmax.f32 %v1990, %v1124
    %v1993 = vmax.f32 %v1991, %v1130
    %v1994 = vmax.f32 %v1992, %v1134
    %v1995 = vmax.f32 %v1993, %v1140
    %v1996 = vmax.f32 %v1994, %v1144
    %v1997 = vmax.f32 %v1995, %v1150
    %v1998 = vmax.f32 %v1996, %v1154
    %v1999 = vmax.f32 %v1997, %v1160
    %v2000 = vmax.f32 %v1998, %v1164
    %v2001 = vmax.f32 %v1999, %v1170
    %v2002 = vmax.f32 %v2000, %v1174
    %v2003 = vmax.f32 %v2001, %v1180
    %v2004 = vmax.f32 %v2002, %v1184
    %v2005 = vmax.f32 %v2003, %v1190
    %v2006 = vmax.f32 %v2004, %v1194
    %v2007 = vmax.f32 %v2005, %v1200
    %v2008 = vmax.f32 %v2006, %v1204
    %v2009 = vmax.f32 %v2007, %v1210
    %v2010 = vmax.f32 %v2008, %v1214
    %v2011 = vmax.f32 %v2009, %v1220
    %v2012 = vmax.f32 %v2010, %v1224
    %v2013 = vmax.f32 %v2011, %v1230
    %v2014 = vmax.f32 %v2012, %v1234
    %v2015 = vmax.f32 %v2013, %v1240
    %v2016 = vmax.f32 %v2014, %v1244
    %v2017 = vmax.f32 %v2015, %v1250
    %v2018 = vmax.f32 %v2016, %v1254
    %v2019 = vmax.f32 %v2017, %v1260
    %v2020 = vmax.f32 %v2018, %v1264
    %v2021 = vmax.f32 %v2019, %v1270
    %v2022 = vmax.f32 %v2020, %v1274
    %v2023 = vmax.f32 %v2021, %v1280
    %v2024 = vmax.f32 %v2022, %v1284
    %v2025 = vmax.f32 %v2023, %v1290
    %v2026 = vmax.f32 %v2024, %v1294
    %v2027 = vmax.f32 %v2025, %v1300
    %v2028 = vmax.f32 %v2026, %v1304
    %v2029 = vmax.f32 %v2027, %v1310
    %v2030 = vmax.f32 %v2028, %v1314
    %v2031 = vmax.f32 %v2029, %v1320
    %v2032 = vmax.f32 %v2030, %v1324
    %v2033 = vmax.f32 %v2031, %v1330
    %v2034 = vmax.f32 %v2032, %v1334
    %v2035 = vmax.f32 %v2033, %v1340
    %v2036 = vmax.f32 %v2034, %v1344
    %v2037 = vmax.f32 %v2035, %v2036
    %v2038 = vrot.slane %v2037, 4
    %v2039 = vmax.f32 %v2037, %v2038
    %v2040 = vrot.slane %v2039, 2
    %v2041 = vmax.f32 %v2039, %v2040
    %v2042 = vrot.slane %v2041, 1
    %v2043 = vmax.f32 %v2041, %v2042
    %v2046 = vcombine.low %v1974, %v2043
    %v2048 = vunpack.c.l.s4 1966171168
    %v2049 = vunpack.c.0.s8 %v2048
    %v2050 = vlaneseq
    %v2051 = vshrl.u32 %v2050, 7
    %v2052 = vsub.s32 %v2049, %v2051
    %v2053 = vrot.slane %v2046, %v2052
    %v2055 = vunpack.c.l.s4 1966171168
    %v2056 = vunpack.c.0.s8 %v2055
    %v2057 = vlaneseq
    %v2058 = vshrl.u32 %v2057, 7
    %v2059 = vsub.s32 %v2056, %v2058
    %v2060 = vrot.slane %v2053, %v2059
    %v2062 = vmax.f32 %v1905, %v2060
    %v2063 = vld [vmem:[#allocation4] sm:$0x3]
    %v2064 = vsub.f32 %v1905, %v2062
    %v2065 = vmul.f32 %v2064, 1.442695
    %v2066 = vpow.pop %v2065
    %v2067 = vmul.f32 %v2063, %v2066
    %v2069 = vlaneseq
    %v2070 = vshrl.u32 %v2069, 7
    %v2071 = vsub.s32 0, %v2070
    %v2072 = vrot.slane %v2062, %v2071
    %v2073 = vlaneseq
    %v2074 = vshrl.u32 %v2073, 7
    %v2075 = vsub.s32 1, %v2074
    %v2076 = vrot.slane %v2062, %v2075
    %v2079 = vsub.f32 %v1028, %v2072
    %v2080 = vsub.f32 %v1030, %v2076
    %v2081 = vsub.f32 %v1032, %v2072
    %v2082 = vsub.f32 %v1034, %v2076
    %v2083 = vsub.f32 %v1038, %v2072
    %v2084 = vsub.f32 %v1040, %v2076
    %v2085 = vsub.f32 %v1042, %v2072
    %v2086 = vsub.f32 %v1044, %v2076
    %v2087 = vsub.f32 %v1048, %v2072
    %v2088 = vsub.f32 %v1050, %v2076
    %v2089 = vsub.f32 %v1052, %v2072
    %v2090 = vsub.f32 %v1054, %v2076
    %v2091 = vsub.f32 %v1058, %v2072
    %v2092 = vsub.f32 %v1060, %v2076
    %v2093 = vsub.f32 %v1062, %v2072
    %v2094 = vsub.f32 %v1064, %v2076
    %v2095 = vsub.f32 %v1068, %v2072
    %v2096 = vsub.f32 %v1070, %v2076
    %v2097 = vsub.f32 %v1072, %v2072
    %v2098 = vsub.f32 %v1074, %v2076
    %v2099 = vsub.f32 %v1078, %v2072
    %v2100 = vsub.f32 %v1080, %v2076
    %v2101 = vsub.f32 %v1082, %v2072
    %v2102 = vsub.f32 %v1084, %v2076
    %v2103 = vsub.f32 %v1088, %v2072
    %v2104 = vsub.f32 %v1090, %v2076
    %v2105 = vsub.f32 %v1092, %v2072
    %v2106 = vsub.f32 %v1094, %v2076
    %v2107 = vsub.f32 %v1098, %v2072
    %v2108 = vsub.f32 %v1100, %v2076
    %v2109 = vsub.f32 %v1102, %v2072
    %v2110 = vsub.f32 %v1104, %v2076
    %v2111 = vsub.f32 %v1108, %v2072
    %v2112 = vsub.f32 %v1110, %v2076
    %v2113 = vsub.f32 %v1112, %v2072
    %v2114 = vsub.f32 %v1114, %v2076
    %v2115 = vsub.f32 %v1118, %v2072
    %v2116 = vsub.f32 %v1120, %v2076
    %v2117 = vsub.f32 %v1122, %v2072
    %v2118 = vsub.f32 %v1124, %v2076
    %v2119 = vsub.f32 %v1128, %v2072
    %v2120 = vsub.f32 %v1130, %v2076
    %v2121 = vsub.f32 %v1132, %v2072
    %v2122 = vsub.f32 %v1134, %v2076
    %v2123 = vsub.f32 %v1138, %v2072
    %v2124 = vsub.f32 %v1140, %v2076
    %v2125 = vsub.f32 %v1142, %v2072
    %v2126 = vsub.f32 %v1144, %v2076
    %v2127 = vsub.f32 %v1148, %v2072
    %v2128 = vsub.f32 %v1150, %v2076
    %v2129 = vsub.f32 %v1152, %v2072
    %v2130 = vsub.f32 %v1154, %v2076
    %v2131 = vsub.f32 %v1158, %v2072
    %v2132 = vsub.f32 %v1160, %v2076
    %v2133 = vsub.f32 %v1162, %v2072
    %v2134 = vsub.f32 %v1164, %v2076
    %v2135 = vsub.f32 %v1168, %v2072
    %v2136 = vsub.f32 %v1170, %v2076
    %v2137 = vsub.f32 %v1172, %v2072
    %v2138 = vsub.f32 %v1174, %v2076
    %v2139 = vsub.f32 %v1178, %v2072
    %v2140 = vsub.f32 %v1180, %v2076
    %v2141 = vsub.f32 %v1182, %v2072
    %v2142 = vsub.f32 %v1184, %v2076
    %v2143 = vsub.f32 %v1188, %v2072
    %v2144 = vsub.f32 %v1190, %v2076
    %v2145 = vsub.f32 %v1192, %v2072
    %v2146 = vsub.f32 %v1194, %v2076
    %v2147 = vsub.f32 %v1198, %v2072
    %v2148 = vsub.f32 %v1200, %v2076
    %v2149 = vsub.f32 %v1202, %v2072
    %v2150 = vsub.f32 %v1204, %v2076
    %v2151 = vsub.f32 %v1208, %v2072
    %v2152 = vsub.f32 %v1210, %v2076
    %v2153 = vsub.f32 %v1212, %v2072
    %v2154 = vsub.f32 %v1214, %v2076
    %v2155 = vsub.f32 %v1218, %v2072
    %v2156 = vsub.f32 %v1220, %v2076
    %v2157 = vsub.f32 %v1222, %v2072
    %v2158 = vsub.f32 %v1224, %v2076
    %v2159 = vsub.f32 %v1228, %v2072
    %v2160 = vsub.f32 %v1230, %v2076
    %v2161 = vsub.f32 %v1232, %v2072
    %v2162 = vsub.f32 %v1234, %v2076
    %v2163 = vsub.f32 %v1238, %v2072
    %v2164 = vsub.f32 %v1240, %v2076
    %v2165 = vsub.f32 %v1242, %v2072
    %v2166 = vsub.f32 %v1244, %v2076
    %v2167 = vsub.f32 %v1248, %v2072
    %v2168 = vsub.f32 %v1250, %v2076
    %v2169 = vsub.f32 %v1252, %v2072
    %v2170 = vsub.f32 %v1254, %v2076
    %v2171 = vsub.f32 %v1258, %v2072
    %v2172 = vsub.f32 %v1260, %v2076
    %v2173 = vsub.f32 %v1262, %v2072
    %v2174 = vsub.f32 %v1264, %v2076
    %v2175 = vsub.f32 %v1268, %v2072
    %v2176 = vsub.f32 %v1270, %v2076
    %v2177 = vsub.f32 %v1272, %v2072
    %v2178 = vsub.f32 %v1274, %v2076
    %v2179 = vsub.f32 %v1278, %v2072
    %v2180 = vsub.f32 %v1280, %v2076
    %v2181 = vsub.f32 %v1282, %v2072
    %v2182 = vsub.f32 %v1284, %v2076
    %v2183 = vsub.f32 %v1288, %v2072
    %v2184 = vsub.f32 %v1290, %v2076
    %v2185 = vsub.f32 %v1292, %v2072
    %v2186 = vsub.f32 %v1294, %v2076
    %v2187 = vsub.f32 %v1298, %v2072
    %v2188 = vsub.f32 %v1300, %v2076
    %v2189 = vsub.f32 %v1302, %v2072
    %v2190 = vsub.f32 %v1304, %v2076
    %v2191 = vsub.f32 %v1308, %v2072
    %v2192 = vsub.f32 %v1310, %v2076
    %v2193 = vsub.f32 %v1312, %v2072
    %v2194 = vsub.f32 %v1314, %v2076
    %v2195 = vsub.f32 %v1318, %v2072
    %v2196 = vsub.f32 %v1320, %v2076
    %v2197 = vsub.f32 %v1322, %v2072
    %v2198 = vsub.f32 %v1324, %v2076
    %v2199 = vsub.f32 %v1328, %v2072
    %v2200 = vsub.f32 %v1330, %v2076
    %v2201 = vsub.f32 %v1332, %v2072
    %v2202 = vsub.f32 %v1334, %v2076
    %v2203 = vsub.f32 %v1338, %v2072
    %v2204 = vsub.f32 %v1340, %v2076
    %v2205 = vsub.f32 %v1342, %v2072
    %v2206 = vsub.f32 %v1344, %v2076
    %v2207 = vmul.f32 %v2079, 1.442695
    %v2208 = vpow.pop %v2207
    %v2209 = vmul.f32 %v2080, 1.442695
    %v2210 = vpow.pop %v2209
    %v2211 = vmul.f32 %v2081, 1.442695
    %v2212 = vpow.pop %v2211
    %v2213 = vmul.f32 %v2082, 1.442695
    %v2214 = vpow.pop %v2213
    %v2215 = vmul.f32 %v2083, 1.442695
    %v2216 = vpow.pop %v2215
    %v2217 = vmul.f32 %v2084, 1.442695
    %v2218 = vpow.pop %v2217
    %v2219 = vmul.f32 %v2085, 1.442695
    %v2220 = vpow.pop %v2219
    %v2221 = vmul.f32 %v2086, 1.442695
    %v2222 = vpow.pop %v2221
    %v2223 = vmul.f32 %v2087, 1.442695
    %v2224 = vpow.pop %v2223
    %v2225 = vmul.f32 %v2088, 1.442695
    %v2226 = vpow.pop %v2225
    %v2227 = vmul.f32 %v2089, 1.442695
    %v2228 = vpow.pop %v2227
    %v2229 = vmul.f32 %v2090, 1.442695
    %v2230 = vpow.pop %v2229
    %v2231 = vmul.f32 %v2091, 1.442695
    %v2232 = vpow.pop %v2231
    %v2233 = vmul.f32 %v2092, 1.442695
    %v2234 = vpow.pop %v2233
    %v2235 = vmul.f32 %v2093, 1.442695
    %v2236 = vpow.pop %v2235
    %v2237 = vmul.f32 %v2094, 1.442695
    %v2238 = vpow.pop %v2237
    %v2239 = vmul.f32 %v2095, 1.442695
    %v2240 = vpow.pop %v2239
    %v2241 = vmul.f32 %v2096, 1.442695
    %v2242 = vpow.pop %v2241
    %v2243 = vmul.f32 %v2097, 1.442695
    %v2244 = vpow.pop %v2243
    %v2245 = vmul.f32 %v2098, 1.442695
    %v2246 = vpow.pop %v2245
    %v2247 = vmul.f32 %v2099, 1.442695
    %v2248 = vpow.pop %v2247
    %v2249 = vmul.f32 %v2100, 1.442695
    %v2250 = vpow.pop %v2249
    %v2251 = vmul.f32 %v2101, 1.442695
    %v2252 = vpow.pop %v2251
    %v2253 = vmul.f32 %v2102, 1.442695
    %v2254 = vpow.pop %v2253
    %v2255 = vmul.f32 %v2103, 1.442695
    %v2256 = vpow.pop %v2255
    %v2257 = vmul.f32 %v2104, 1.442695
    %v2258 = vpow.pop %v2257
    %v2259 = vmul.f32 %v2105, 1.442695
    %v2260 = vpow.pop %v2259
    %v2261 = vmul.f32 %v2106, 1.442695
    %v2262 = vpow.pop %v2261
    %v2263 = vmul.f32 %v2107, 1.442695
    %v2264 = vpow.pop %v2263
    %v2265 = vmul.f32 %v2108, 1.442695
    %v2266 = vpow.pop %v2265
    %v2267 = vmul.f32 %v2109, 1.442695
    %v2268 = vpow.pop %v2267
    %v2269 = vmul.f32 %v2110, 1.442695
    %v2270 = vpow.pop %v2269
    %v2271 = vmul.f32 %v2111, 1.442695
    %v2272 = vpow.pop %v2271
    %v2273 = vmul.f32 %v2112, 1.442695
    %v2274 = vpow.pop %v2273
    %v2275 = vmul.f32 %v2113, 1.442695
    %v2276 = vpow.pop %v2275
    %v2277 = vmul.f32 %v2114, 1.442695
    %v2278 = vpow.pop %v2277
    %v2279 = vmul.f32 %v2115, 1.442695
    %v2280 = vpow.pop %v2279
    %v2281 = vmul.f32 %v2116, 1.442695
    %v2282 = vpow.pop %v2281
    %v2283 = vmul.f32 %v2117, 1.442695
    %v2284 = vpow.pop %v2283
    %v2285 = vmul.f32 %v2118, 1.442695
    %v2286 = vpow.pop %v2285
    %v2287 = vmul.f32 %v2119, 1.442695
    %v2288 = vpow.pop %v2287
    %v2289 = vmul.f32 %v2120, 1.442695
    %v2290 = vpow.pop %v2289
    %v2291 = vmul.f32 %v2121, 1.442695
    %v2292 = vpow.pop %v2291
    %v2293 = vmul.f32 %v2122, 1.442695
    %v2294 = vpow.pop %v2293
    %v2295 = vmul.f32 %v2123, 1.442695
    %v2296 = vpow.pop %v2295
    %v2297 = vmul.f32 %v2124, 1.442695
    %v2298 = vpow.pop %v2297
    %v2299 = vmul.f32 %v2125, 1.442695
    %v2300 = vpow.pop %v2299
    %v2301 = vmul.f32 %v2126, 1.442695
    %v2302 = vpow.pop %v2301
    %v2303 = vmul.f32 %v2127, 1.442695
    %v2304 = vpow.pop %v2303
    %v2305 = vmul.f32 %v2128, 1.442695
    %v2306 = vpow.pop %v2305
    %v2307 = vmul.f32 %v2129, 1.442695
    %v2308 = vpow.pop %v2307
    %v2309 = vmul.f32 %v2130, 1.442695
    %v2310 = vpow.pop %v2309
    %v2311 = vmul.f32 %v2131, 1.442695
    %v2312 = vpow.pop %v2311
    %v2313 = vmul.f32 %v2132, 1.442695
    %v2314 = vpow.pop %v2313
    %v2315 = vmul.f32 %v2133, 1.442695
    %v2316 = vpow.pop %v2315
    %v2317 = vmul.f32 %v2134, 1.442695
    %v2318 = vpow.pop %v2317
    %v2319 = vmul.f32 %v2135, 1.442695
    %v2320 = vpow.pop %v2319
    %v2321 = vmul.f32 %v2136, 1.442695
    %v2322 = vpow.pop %v2321
    %v2323 = vmul.f32 %v2137, 1.442695
    %v2324 = vpow.pop %v2323
    %v2325 = vmul.f32 %v2138, 1.442695
    %v2326 = vpow.pop %v2325
    %v2327 = vmul.f32 %v2139, 1.442695
    %v2328 = vpow.pop %v2327
    %v2329 = vmul.f32 %v2140, 1.442695
    %v2330 = vpow.pop %v2329
    %v2331 = vmul.f32 %v2141, 1.442695
    %v2332 = vpow.pop %v2331
    %v2333 = vmul.f32 %v2142, 1.442695
    %v2334 = vpow.pop %v2333
    %v2335 = vmul.f32 %v2143, 1.442695
    %v2336 = vpow.pop %v2335
    %v2337 = vmul.f32 %v2144, 1.442695
    %v2338 = vpow.pop %v2337
    %v2339 = vmul.f32 %v2145, 1.442695
    %v2340 = vpow.pop %v2339
    %v2341 = vmul.f32 %v2146, 1.442695
    %v2342 = vpow.pop %v2341
    %v2343 = vmul.f32 %v2147, 1.442695
    %v2344 = vpow.pop %v2343
    %v2345 = vmul.f32 %v2148, 1.442695
    %v2346 = vpow.pop %v2345
    %v2347 = vmul.f32 %v2149, 1.442695
    %v2348 = vpow.pop %v2347
    %v2349 = vmul.f32 %v2150, 1.442695
    %v2350 = vpow.pop %v2349
    %v2351 = vmul.f32 %v2151, 1.442695
    %v2352 = vpow.pop %v2351
    %v2353 = vmul.f32 %v2152, 1.442695
    %v2354 = vpow.pop %v2353
    %v2355 = vmul.f32 %v2153, 1.442695
    %v2356 = vpow.pop %v2355
    %v2357 = vmul.f32 %v2154, 1.442695
    %v2358 = vpow.pop %v2357
    %v2359 = vmul.f32 %v2155, 1.442695
    %v2360 = vpow.pop %v2359
    %v2361 = vmul.f32 %v2156, 1.442695
    %v2362 = vpow.pop %v2361
    %v2363 = vmul.f32 %v2157, 1.442695
    %v2364 = vpow.pop %v2363
    %v2365 = vmul.f32 %v2158, 1.442695
    %v2366 = vpow.pop %v2365
    %v2367 = vmul.f32 %v2159, 1.442695
    %v2368 = vpow.pop %v2367
    %v2369 = vmul.f32 %v2160, 1.442695
    %v2370 = vpow.pop %v2369
    %v2371 = vmul.f32 %v2161, 1.442695
    %v2372 = vpow.pop %v2371
    %v2373 = vmul.f32 %v2162, 1.442695
    %v2374 = vpow.pop %v2373
    %v2375 = vmul.f32 %v2163, 1.442695
    %v2376 = vpow.pop %v2375
    %v2377 = vmul.f32 %v2164, 1.442695
    %v2378 = vpow.pop %v2377
    %v2379 = vmul.f32 %v2165, 1.442695
    %v2380 = vpow.pop %v2379
    %v2381 = vmul.f32 %v2166, 1.442695
    %v2382 = vpow.pop %v2381
    %v2383 = vmul.f32 %v2167, 1.442695
    %v2384 = vpow.pop %v2383
    %v2385 = vmul.f32 %v2168, 1.442695
    %v2386 = vpow.pop %v2385
    %v2387 = vmul.f32 %v2169, 1.442695
    %v2388 = vpow.pop %v2387
    %v2389 = vmul.f32 %v2170, 1.442695
    %v2390 = vpow.pop %v2389
    %v2391 = vmul.f32 %v2171, 1.442695
    %v2392 = vpow.pop %v2391
    %v2393 = vmul.f32 %v2172, 1.442695
    %v2394 = vpow.pop %v2393
    %v2395 = vmul.f32 %v2173, 1.442695
    %v2396 = vpow.pop %v2395
    %v2397 = vmul.f32 %v2174, 1.442695
    %v2398 = vpow.pop %v2397
    %v2399 = vmul.f32 %v2175, 1.442695
    %v2400 = vpow.pop %v2399
    %v2401 = vmul.f32 %v2176, 1.442695
    %v2402 = vpow.pop %v2401
    %v2403 = vmul.f32 %v2177, 1.442695
    %v2404 = vpow.pop %v2403
    %v2405 = vmul.f32 %v2178, 1.442695
    %v2406 = vpow.pop %v2405
    %v2407 = vmul.f32 %v2179, 1.442695
    %v2408 = vpow.pop %v2407
    %v2409 = vmul.f32 %v2180, 1.442695
    %v2410 = vpow.pop %v2409
    %v2411 = vmul.f32 %v2181, 1.442695
    %v2412 = vpow.pop %v2411
    %v2413 = vmul.f32 %v2182, 1.442695
    %v2414 = vpow.pop %v2413
    %v2415 = vmul.f32 %v2183, 1.442695
    %v2416 = vpow.pop %v2415
    %v2417 = vmul.f32 %v2184, 1.442695
    %v2418 = vpow.pop %v2417
    %v2419 = vmul.f32 %v2185, 1.442695
    %v2420 = vpow.pop %v2419
    %v2421 = vmul.f32 %v2186, 1.442695
    %v2422 = vpow.pop %v2421
    %v2423 = vmul.f32 %v2187, 1.442695
    %v2424 = vpow.pop %v2423
    %v2425 = vmul.f32 %v2188, 1.442695
    %v2426 = vpow.pop %v2425
    %v2427 = vmul.f32 %v2189, 1.442695
    %v2428 = vpow.pop %v2427
    %v2429 = vmul.f32 %v2190, 1.442695
    %v2430 = vpow.pop %v2429
    %v2431 = vmul.f32 %v2191, 1.442695
    %v2432 = vpow.pop %v2431
    %v2433 = vmul.f32 %v2192, 1.442695
    %v2434 = vpow.pop %v2433
    %v2435 = vmul.f32 %v2193, 1.442695
    %v2436 = vpow.pop %v2435
    %v2437 = vmul.f32 %v2194, 1.442695
    %v2438 = vpow.pop %v2437
    %v2439 = vmul.f32 %v2195, 1.442695
    %v2440 = vpow.pop %v2439
    %v2441 = vmul.f32 %v2196, 1.442695
    %v2442 = vpow.pop %v2441
    %v2443 = vmul.f32 %v2197, 1.442695
    %v2444 = vpow.pop %v2443
    %v2445 = vmul.f32 %v2198, 1.442695
    %v2446 = vpow.pop %v2445
    %v2447 = vmul.f32 %v2199, 1.442695
    %v2448 = vpow.pop %v2447
    %v2449 = vmul.f32 %v2200, 1.442695
    %v2450 = vpow.pop %v2449
    %v2451 = vmul.f32 %v2201, 1.442695
    %v2452 = vpow.pop %v2451
    %v2453 = vmul.f32 %v2202, 1.442695
    %v2454 = vpow.pop %v2453
    %v2455 = vmul.f32 %v2203, 1.442695
    %v2456 = vpow.pop %v2455
    %v2457 = vmul.f32 %v2204, 1.442695
    %v2458 = vpow.pop %v2457
    %v2459 = vmul.f32 %v2205, 1.442695
    %v2460 = vpow.pop %v2459
    %v2461 = vmul.f32 %v2206, 1.442695
    %v2462 = vpow.pop %v2461
    %v2463 = vadd.f32 %v2208, %v2212
    %v2464 = vadd.f32 %v2463, %v2216
    %v2465 = vadd.f32 %v2464, %v2220
    %v2466 = vadd.f32 %v2465, %v2224
    %v2467 = vadd.f32 %v2466, %v2228
    %v2468 = vadd.f32 %v2467, %v2232
    %v2469 = vadd.f32 %v2468, %v2236
    %v2470 = vadd.f32 %v2469, %v2240
    %v2471 = vadd.f32 %v2470, %v2244
    %v2472 = vadd.f32 %v2471, %v2248
    %v2473 = vadd.f32 %v2472, %v2252
    %v2474 = vadd.f32 %v2473, %v2256
    %v2475 = vadd.f32 %v2474, %v2260
    %v2476 = vadd.f32 %v2475, %v2264
    %v2477 = vadd.f32 %v2476, %v2268
    %v2478 = vadd.f32 %v2477, %v2272
    %v2479 = vadd.f32 %v2478, %v2276
    %v2480 = vadd.f32 %v2479, %v2280
    %v2481 = vadd.f32 %v2480, %v2284
    %v2482 = vadd.f32 %v2481, %v2288
    %v2483 = vadd.f32 %v2482, %v2292
    %v2484 = vadd.f32 %v2483, %v2296
    %v2485 = vadd.f32 %v2484, %v2300
    %v2486 = vadd.f32 %v2485, %v2304
    %v2487 = vadd.f32 %v2486, %v2308
    %v2488 = vadd.f32 %v2487, %v2312
    %v2489 = vadd.f32 %v2488, %v2316
    %v2490 = vadd.f32 %v2489, %v2320
    %v2491 = vadd.f32 %v2490, %v2324
    %v2492 = vadd.f32 %v2491, %v2328
    %v2493 = vadd.f32 %v2492, %v2332
    %v2494 = vadd.f32 %v2493, %v2336
    %v2495 = vadd.f32 %v2494, %v2340
    %v2496 = vadd.f32 %v2495, %v2344
    %v2497 = vadd.f32 %v2496, %v2348
    %v2498 = vadd.f32 %v2497, %v2352
    %v2499 = vadd.f32 %v2498, %v2356
    %v2500 = vadd.f32 %v2499, %v2360
    %v2501 = vadd.f32 %v2500, %v2364
    %v2502 = vadd.f32 %v2501, %v2368
    %v2503 = vadd.f32 %v2502, %v2372
    %v2504 = vadd.f32 %v2503, %v2376
    %v2505 = vadd.f32 %v2504, %v2380
    %v2506 = vadd.f32 %v2505, %v2384
    %v2507 = vadd.f32 %v2506, %v2388
    %v2508 = vadd.f32 %v2507, %v2392
    %v2509 = vadd.f32 %v2508, %v2396
    %v2510 = vadd.f32 %v2509, %v2400
    %v2511 = vadd.f32 %v2510, %v2404
    %v2512 = vadd.f32 %v2511, %v2408
    %v2513 = vadd.f32 %v2512, %v2412
    %v2514 = vadd.f32 %v2513, %v2416
    %v2515 = vadd.f32 %v2514, %v2420
    %v2516 = vadd.f32 %v2515, %v2424
    %v2517 = vadd.f32 %v2516, %v2428
    %v2518 = vadd.f32 %v2517, %v2432
    %v2519 = vadd.f32 %v2518, %v2436
    %v2520 = vadd.f32 %v2519, %v2440
    %v2521 = vadd.f32 %v2520, %v2444
    %v2522 = vadd.f32 %v2521, %v2448
    %v2523 = vadd.f32 %v2522, %v2452
    %v2524 = vadd.f32 %v2523, %v2456
    %v2525 = vadd.f32 %v2524, %v2460
    %v2526 = vrot.slane %v2525, 4
    %v2527 = vadd.f32 %v2525, %v2526
    %v2528 = vrot.slane %v2527, 2
    %v2529 = vadd.f32 %v2527, %v2528
    %v2530 = vrot.slane %v2529, 1
    %v2531 = vadd.f32 %v2529, %v2530
    %v2532 = vadd.f32 %v2210, %v2214
    %v2533 = vadd.f32 %v2532, %v2218
    %v2534 = vadd.f32 %v2533, %v2222
    %v2535 = vadd.f32 %v2534, %v2226
    %v2536 = vadd.f32 %v2535, %v2230
    %v2537 = vadd.f32 %v2536, %v2234
    %v2538 = vadd.f32 %v2537, %v2238
    %v2539 = vadd.f32 %v2538, %v2242
    %v2540 = vadd.f32 %v2539, %v2246
    %v2541 = vadd.f32 %v2540, %v2250
    %v2542 = vadd.f32 %v2541, %v2254
    %v2543 = vadd.f32 %v2542, %v2258
    %v2544 = vadd.f32 %v2543, %v2262
    %v2545 = vadd.f32 %v2544, %v2266
    %v2546 = vadd.f32 %v2545, %v2270
    %v2547 = vadd.f32 %v2546, %v2274
    %v2548 = vadd.f32 %v2547, %v2278
    %v2549 = vadd.f32 %v2548, %v2282
    %v2550 = vadd.f32 %v2549, %v2286
    %v2551 = vadd.f32 %v2550, %v2290
    %v2552 = vadd.f32 %v2551, %v2294
    %v2553 = vadd.f32 %v2552, %v2298
    %v2554 = vadd.f32 %v2553, %v2302
    %v2555 = vadd.f32 %v2554, %v2306
    %v2556 = vadd.f32 %v2555, %v2310
    %v2557 = vadd.f32 %v2556, %v2314
    %v2558 = vadd.f32 %v2557, %v2318
    %v2559 = vadd.f32 %v2558, %v2322
    %v2560 = vadd.f32 %v2559, %v2326
    %v2561 = vadd.f32 %v2560, %v2330
    %v2562 = vadd.f32 %v2561, %v2334
    %v2563 = vadd.f32 %v2562, %v2338
    %v2564 = vadd.f32 %v2563, %v2342
    %v2565 = vadd.f32 %v2564, %v2346
    %v2566 = vadd.f32 %v2565, %v2350
    %v2567 = vadd.f32 %v2566, %v2354
    %v2568 = vadd.f32 %v2567, %v2358
    %v2569 = vadd.f32 %v2568, %v2362
    %v2570 = vadd.f32 %v2569, %v2366
    %v2571 = vadd.f32 %v2570, %v2370
    %v2572 = vadd.f32 %v2571, %v2374
    %v2573 = vadd.f32 %v2572, %v2378
    %v2574 = vadd.f32 %v2573, %v2382
    %v2575 = vadd.f32 %v2574, %v2386
    %v2576 = vadd.f32 %v2575, %v2390
    %v2577 = vadd.f32 %v2576, %v2394
    %v2578 = vadd.f32 %v2577, %v2398
    %v2579 = vadd.f32 %v2578, %v2402
    %v2580 = vadd.f32 %v2579, %v2406
    %v2581 = vadd.f32 %v2580, %v2410
    %v2582 = vadd.f32 %v2581, %v2414
    %v2583 = vadd.f32 %v2582, %v2418
    %v2584 = vadd.f32 %v2583, %v2422
    %v2585 = vadd.f32 %v2584, %v2426
    %v2586 = vadd.f32 %v2585, %v2430
    %v2587 = vadd.f32 %v2586, %v2434
    %v2588 = vadd.f32 %v2587, %v2438
    %v2589 = vadd.f32 %v2588, %v2442
    %v2590 = vadd.f32 %v2589, %v2446
    %v2591 = vadd.f32 %v2590, %v2450
    %v2592 = vadd.f32 %v2591, %v2454
    %v2593 = vadd.f32 %v2592, %v2458
    %v2594 = vadd.f32 %v2593, %v2462
    %v2595 = vrot.slane %v2594, 4
    %v2596 = vadd.f32 %v2594, %v2595
    %v2597 = vrot.slane %v2596, 2
    %v2598 = vadd.f32 %v2596, %v2597
    %v2599 = vrot.slane %v2598, 1
    %v2600 = vadd.f32 %v2598, %v2599
    %v2603 = vcombine.low %v2531, %v2600
    %v2605 = vunpack.c.l.s4 1966171168
    %v2606 = vunpack.c.0.s8 %v2605
    %v2607 = vlaneseq
    %v2608 = vshrl.u32 %v2607, 7
    %v2609 = vsub.s32 %v2606, %v2608
    %v2610 = vrot.slane %v2603, %v2609
    %v2612 = vunpack.c.l.s4 1966171168
    %v2613 = vunpack.c.0.s8 %v2612
    %v2614 = vlaneseq
    %v2615 = vshrl.u32 %v2614, 7
    %v2616 = vsub.s32 %v2613, %v2615
    %v2617 = vrot.slane %v2610, %v2616
    %v2619 = vadd.f32 %v2067, %v2617
    %2620 = vst.msk [vmem:[#allocation4] sm:$0x3] %vm1903, %v2619
    %2621 = vst.msk [vmem:[#allocation3] sm:$0x3] %vm1903, %v2062
    // Predicated region
    $region30: #{forward.5} parent=24 // pred_check
      %p2622 = pneg %p92
    $region31: #{forward.5} parent=24 // pred_check_branch
      %2624 = sbr.rel (%p2622) target = $region33
    $region32: #{forward.5} parent=24 // pred_region
      %v2625 = vld [vmem:[#allocation5] sm:$0x3]
      %v2626 = vld [vmem:[#allocation3] sm:$0x3]
      %v2627 = vld [vmem:[#allocation4] sm:$0x3]
      %v2628 = vlog2.pop %v2627
      %v2629 = vmul.f32 %v2628, 0.6931472
      %v2630 = vadd.f32 %v2626, %v2629
      %v2631 = vsub.f32 %v2625, %v2630
      %2632 = vst.msk [vmem:[%s6] sm:$0x3] %vm1903, %v2631
    $region33: #{forward.5} parent=24 // pred_fallthru
      _
  $region25: #{forward.5} parent=0 // pred_fallthru
    _
  %p2633 = scmp.le.s32.totalorder %s87, 0
  %p2634 = scmp.eq.s32.totalorder 0, 0
  %p2635 = pnand %p2633, %p2634
  %p2636 = pneg %p2635
  // Predicated region
  $region34: #{forward.5} parent=0 // pred_check
    _
  $region35: #{forward.5} parent=0 // pred_check_branch
    %2638 = sbr.rel (%p2635) target = $region37
  $region36: #{forward.5} parent=0 // pred_region
    %v2639 = vlaneseq
    %vm2640 = vcmp.ge.s32.totalorder %v2639, 0
    %vm2641 = vcmp.lt.s32.totalorder %v2639, 256
    %vm2642 = vmand %vm2640, %vm2641
    %2643 = vst.msk [vmem:[%s6] sm:$0x3] %vm2642, 0.0
  $region37: #{forward.5} parent=0 // pred_fallthru
    _
  // Predicated region
  $region38: #{forward.5} parent=0 // pred_check
    _
  $region39: #{forward.5} parent=0 // pred_check_branch
    %2645 = sbr.rel (0) target = $region41
  $region40: #{forward.5} parent=0 // pred_region
    _
  $region41: #{forward.5} parent=0 // pred_fallthru
    _
  // Predicated region
  $region42: #{forward.5} parent=0 // pred_check
    _
  $region43: #{forward.5} parent=0 // pred_check_branch
    %2647 = sbr.rel (0) target = $region45
  $region44: #{forward.5} parent=0 // pred_region
    _
  $region45: #{forward.5} parent=0 // pred_fallthru
    _

// kernel: forward.4
$region0: #{forward.4}
  #allocation0 [shape = 'u32[]', space=smem, size = 0x4, offset = 0x4, fixed_abs, tag = 'smem constant byte address 0x4 - core index']
  #allocation1 [shape = 'u32[144,128]{1,0:T(1,128)}', space=vmem, size = 0x12000, scoped, tag = 'internal scratch']
  #allocation2 [shape = 'f32[64,256]{1,0:T(8,128)}', space=vmem, size = 0x10000, scoped, tag = 'scratch operand']
  #allocation3 [shape = 'f32[1,256]{1,0:T(1,128)}', space=vmem, size = 0x400, scoped, tag = 'scratch operand']
  #allocation4 [shape = 'f32[1,256]{1,0:T(1,128)}', space=vmem, size = 0x400, scoped, tag = 'scratch operand']
  #allocation5 [shape = 'f32[1,256]{1,0:T(1,128)}', space=vmem, size = 0x400, scoped, tag = 'scratch operand']
  #allocation6 [shape = 's32[1]{0}', space=sflag, size = 0x4, scoped, tag = 'scoped memory for forward.4']
  #allocation7 [shape = 's32[1]{0:T(128)S(6)}', space=smem, size = 0x200, scoped, tag = 'prefetched SMEM operand 0']
  %s0 = inlined_call_operand.<no memory space> [shape: s32[1], index: 0, kind: input, shape index: {}]
  %s1 = inlined_call_operand.vmem [shape: bf16[128,256], index: 1, kind: input, shape index: {}]
  %s2 = inlined_call_operand.vmem [shape: bf16[64,128], index: 2, kind: input, shape index: {}]
  %s3 = inlined_call_operand.vmem [shape: bf16[512,64], index: 3, kind: input, shape index: {}]
  %s4 = inlined_call_operand.vmem [shape: f32[512,1], index: 4, kind: input, shape index: {}]
  %s5 = inlined_call_operand.vmem [shape: s32[1,256], index: 5, kind: input, shape index: {}]
  %s6 = inlined_call_operand.vmem [shape: f32[1,256], index: 6, kind: output, shape index: {}]
  %s7 = sld [smem:[#allocation0]]
  $region46: #{forward.4} parent=0
    _
  %s9 = ssub.s32 1, %s7
  %s10 = scalar_select 0, %s9, %s7
  %11 = sst [smem:[#allocation7]] %s0
  // Predicated region
  $region2: #{forward.4} parent=0 // pred_check
    _
  $region3: #{forward.4} parent=0 // pred_check_branch
    %13 = sbr.rel (0) target = $region5
  $region4: #{forward.4} parent=0 // pred_region
    _
  $region5: #{forward.4} parent=0 // pred_fallthru
    _
  // Predicated region
  $region6: #{forward.4} parent=0 // pred_check
    _
  $region7: #{forward.4} parent=0 // pred_check_branch
    %15 = sbr.rel (0) target = $region9
  $region8: #{forward.4} parent=0 // pred_region
    _
  $region9: #{forward.4} parent=0 // pred_fallthru
    _
  // Predicated region
  $region10: #{forward.4} parent=0 // pred_check
    _
  $region11: #{forward.4} parent=0 // pred_check_branch
    %17 = sbr.rel (0) target = $region13
  $region12: #{forward.4} parent=0 // pred_region
    %s18 = sld [smem:[#allocation7]]
    %p19 = scmp.gt.s32.totalorder %s18, 0
    %s20 = scalar_select %p19, 0, 0
    %s21 = smul.u32 64, %s20
    %p22 = scmp.lt.s32.totalorder %s21, 63
    %s23 = scalar_select %p22, %s21, 63
    %s24 = smul.addr %s23, 4
    %s25 = scalar_lea.vmem %s3, %s24
    %s26 = sld [smem:[#allocation7]]
    %p27 = scmp.gt.s32.totalorder %s26, 0
    %s28 = scalar_select %p27, 0, 0
    %s29 = smul.u32 64, %s28
  $region13: #{forward.4} parent=0 // pred_fallthru
    _
  // Predicated region
  $region14: #{forward.4} parent=0 // pred_check
    _
  $region15: #{forward.4} parent=0 // pred_check_branch
    %31 = sbr.rel (0) target = $region17
  $region16: #{forward.4} parent=0 // pred_region
    %s32 = sld [smem:[#allocation7]]
    %p33 = scmp.gt.s32.totalorder %s32, 0
    %s34 = scalar_select %p33, 0, 0
    %s35 = smul.u32 64, %s34
    %p36 = scmp.lt.s32.totalorder %s35, 63
    %s37 = scalar_select %p36, %s35, 63
    %s38 = smul.addr %s37, 8
    %s39 = scalar_lea.vmem %s4, %s38
    %s40 = sld [smem:[#allocation7]]
    %p41 = scmp.gt.s32.totalorder %s40, 0
    %s42 = scalar_select %p41, 0, 0
    %s43 = smul.u32 64, %s42
  $region17: #{forward.4} parent=0 // pred_fallthru
    _
  // Predicated region
  $region18: #{forward.4} parent=0 // pred_check
    _
  $region19: #{forward.4} parent=0 // pred_check_branch
    %45 = sbr.rel (0) target = $region21
  $region20: #{forward.4} parent=0 // pred_region
    _
  $region21: #{forward.4} parent=0 // pred_fallthru
    _
  %s46 = sld [smem:[#allocation7]]
  %p47 = scmp.gt.s32.totalorder %s46, 0
  %s48 = scalar_select %p47, 0, 0
  %s49 = smul.u32 64, %s48
  %p50 = scmp.lt.s32.totalorder %s49, 63
  %s51 = scalar_select %p50, %s49, 63
  %s52 = smul.addr %s51, 4
  %s53 = scalar_lea.vmem %s3, %s52
  %s54 = sld [smem:[#allocation7]]
  %p55 = scmp.gt.s32.totalorder %s54, 0
  %s56 = scalar_select %p55, 0, 0
  %s57 = smul.u32 64, %s56
  %p58 = scmp.lt.s32.totalorder %s57, 63
  %s59 = scalar_select %p58, %s57, 63
  %s60 = smul.addr %s59, 8
  %s61 = scalar_lea.vmem %s4, %s60
  %s62 = sld [smem:[#allocation7]]
  %p63 = scmp.gt.s32.totalorder %s62, 0
  %s64 = scalar_select %p63, 0, 0
  %s65 = smul.u32 64, %s64
  %p66 = scmp.lt.s32.totalorder %s65, 63
  %s67 = scalar_select %p66, %s65, 63
  %s68 = smul.addr %s67, 4
  %s69 = scalar_lea.vmem %s3, %s68
  %s70 = sld [smem:[#allocation7]]
  %p71 = scmp.gt.s32.totalorder %s70, 0
  %s72 = scalar_select %p71, 0, 0
  %s73 = smul.u32 64, %s72
  %s74 = sld [smem:[#allocation7]]
  %p75 = scmp.gt.s32.totalorder %s74, 0
  %s76 = scalar_select %p75, 0, 0
  %s77 = smul.u32 64, %s76
  %p78 = scmp.lt.s32.totalorder %s77, 63
  %s79 = scalar_select %p78, %s77, 63
  %s80 = smul.addr %s79, 8
  %s81 = scalar_lea.vmem %s4, %s80
  %s82 = sld [smem:[#allocation7]]
  %p83 = scmp.gt.s32.totalorder %s82, 0
  %s84 = scalar_select %p83, 0, 0
  %s85 = smul.u32 64, %s84
  %s87 = sld [smem:[#allocation7]]
  %p88 = scmp.gt.s32.totalorder %s87, 0
  // Predicated region
  $region22: #{forward.4} parent=0 // pred_check
    %p89 = pneg %p88
  $region23: #{forward.4} parent=0 // pred_check_branch
    %91 = sbr.rel (%p89) target = $region25
  $region24: #{forward.4} parent=0 // pred_region
    %p92 = scmp.eq.s32.totalorder 0, 0
    // Predicated region
    $region26: #{forward.4} parent=24 // pred_check
      %p93 = pneg %p92
    $region27: #{forward.4} parent=24 // pred_check_branch
      %95 = sbr.rel (%p93) target = $region29
    $region28: #{forward.4} parent=24 // pred_region
      %v96 = vld [vmem:[%s2] sm:$0xf]
      %v97 = vld [vmem:[%s2 + $0x4] sm:$0xf]
      %v98 = vld [vmem:[%s2 + $0x8] sm:$0xf]
      %v99 = vld [vmem:[%s2 + $0xc] sm:$0xf]
      %v100 = vld [vmem:[%s2 + $0x10] sm:$0xf]
      %v101 = vld [vmem:[%s2 + $0x14] sm:$0xf]
      %v102 = vld [vmem:[%s2 + $0x18] sm:$0xf]
      %v103 = vld [vmem:[%s2 + $0x1c] sm:$0xf]
      %v104 = vld [vmem:[%s1] sm:$0xff]
      %v105 = vld [vmem:[%s1 + $0x8] sm:$0xff]
      %v106 = vld [vmem:[%s1 + $0x10] sm:$0xff]
      %v107 = vld [vmem:[%s1 + $0x18] sm:$0xff]
      %v108 = vld [vmem:[%s1 + $0x20] sm:$0xff]
      %v109 = vld [vmem:[%s1 + $0x28] sm:$0xff]
      %v110 = vld [vmem:[%s1 + $0x30] sm:$0xff]
      %v111 = vld [vmem:[%s1 + $0x38] sm:$0xff]
      %v112 = vld [vmem:[%s1 + $0x40] sm:$0xff]
      %v113 = vld [vmem:[%s1 + $0x48] sm:$0xff]
      %v114 = vld [vmem:[%s1 + $0x50] sm:$0xff]
      %v115 = vld [vmem:[%s1 + $0x58] sm:$0xff]
      %v116 = vld [vmem:[%s1 + $0x60] sm:$0xff]
      %v117 = vld [vmem:[%s1 + $0x68] sm:$0xff]
      %v118 = vld [vmem:[%s1 + $0x70] sm:$0xff]
      %v119 = vld [vmem:[%s1 + $0x78] sm:$0xff]
      %v128 = vunpack.c.l.b16 %v96
      %v129 = vunpack.c.l.b16 %v97
      %v130 = vunpack.c.l.b16 %v98
      %v131 = vunpack.c.l.b16 %v99
      %v132 = vunpack.c.l.b16 %v100
      %v133 = vunpack.c.l.b16 %v101
      %v134 = vunpack.c.l.b16 %v102
      %v135 = vunpack.c.l.b16 %v103
      %v136 = vpack.c.b16 %v129, %v128
      %v137 = vpack.c.b16 %v131, %v130
      %v138 = vpack.c.b16 %v133, %v132
      %v139 = vpack.c.b16 %v135, %v134
      %v160 = vunpack.c.l.b16 %v104
      %v161 = vunpack.c.h.b16 %v104
      %v162 = vunpack.c.l.b16 %v105
      %v163 = vunpack.c.h.b16 %v105
      %v164 = vunpack.c.l.b16 %v106
      %v165 = vunpack.c.h.b16 %v106
      %v166 = vunpack.c.l.b16 %v107
      %v167 = vunpack.c.h.b16 %v107
      %v168 = vunpack.c.l.b16 %v108
      %v169 = vunpack.c.h.b16 %v108
      %v170 = vunpack.c.l.b16 %v109
      %v171 = vunpack.c.h.b16 %v109
      %v172 = vunpack.c.l.b16 %v110
      %v173 = vunpack.c.h.b16 %v110
      %v174 = vunpack.c.l.b16 %v111
      %v175 = vunpack.c.h.b16 %v111
      %v176 = vunpack.c.l.b16 %v112
      %v177 = vunpack.c.h.b16 %v112
      %v178 = vunpack.c.l.b16 %v113
      %v179 = vunpack.c.h.b16 %v113
      %v180 = vunpack.c.l.b16 %v114
      %v181 = vunpack.c.h.b16 %v114
      %v182 = vunpack.c.l.b16 %v115
      %v183 = vunpack.c.h.b16 %v115
      %v184 = vunpack.c.l.b16 %v116
      %v185 = vunpack.c.h.b16 %v116
      %v186 = vunpack.c.l.b16 %v117
      %v187 = vunpack.c.h.b16 %v117
      %v188 = vunpack.c.l.b16 %v118
      %v189 = vunpack.c.h.b16 %v118
      %v190 = vunpack.c.l.b16 %v119
      %v191 = vunpack.c.h.b16 %v119
      %v192 = vpack.c.b16 %v162, %v160
      %v193 = vpack.c.b16 %v163, %v161
      %v194 = vpack.c.b16 %v166, %v164
      %v195 = vpack.c.b16 %v167, %v165
      %v196 = vpack.c.b16 %v170, %v168
      %v197 = vpack.c.b16 %v171, %v169
      %v198 = vpack.c.b16 %v174, %v172
      %v199 = vpack.c.b16 %v175, %v173
      %v200 = vpack.c.b16 %v178, %v176
      %v201 = vpack.c.b16 %v179, %v177
      %v202 = vpack.c.b16 %v182, %v180
      %v203 = vpack.c.b16 %v183, %v181
      %v204 = vpack.c.b16 %v186, %v184
      %v205 = vpack.c.b16 %v187, %v185
      %v206 = vpack.c.b16 %v190, %v188
      %v207 = vpack.c.b16 %v191, %v189
      %224 = vmatprep.subr.bf16.mxu0 %v207
      %225 = vmatpush1.bf16.msra.mxu0 %v206
      %226 = vmatprep.subr.bf16.mxu0 %v205
      %227 = vmatpush1.bf16.msra.mxu0 %v204
      %228 = vmatprep.subr.bf16.mxu0 %v203
      %229 = vmatpush1.bf16.msra.mxu0 %v202
      %230 = vmatprep.subr.bf16.mxu0 %v201
      %231 = vmatpush1.bf16.msra.mxu0 %v200
      %232 = vmatprep.subr.bf16.mxu0 %v199
      %233 = vmatpush1.bf16.msra.mxu0 %v198
      %234 = vmatprep.subr.bf16.mxu0 %v197
      %235 = vmatpush1.bf16.msra.mxu0 %v196
      %236 = vmatprep.subr.bf16.mxu0 %v195
      %237 = vmatpush1.bf16.msra.mxu0 %v194
      %238 = vmatprep.subr.bf16.mxu0 %v193
      %239 = vmatpush1.bf16.msra.mxu0 %v192
      %240 = vmatprep.subr.bf16.mxu0 0
      %241 = vmatpush2.bf16.msra.mxu0 0
      %242 = vmatprep.subr.bf16.mxu0 0
      %243 = vmatpush2.bf16.msra.mxu0 0
      %244 = vmatprep.subr.bf16.mxu0 0
      %245 = vmatpush2.bf16.msra.mxu0 0
      %246 = vmatprep.subr.bf16.mxu0 0
      %247 = vmatpush2.bf16.msra.mxu0 0
      %248 = vmatprep.subr.bf16.mxu0 0
      %249 = vmatpush2.bf16.msra.mxu0 0
      %250 = vmatprep.subr.bf16.mxu0 0
      %251 = vmatpush2.bf16.msra.mxu0 0
      %252 = vmatprep.subr.bf16.mxu0 0
      %253 = vmatpush2.bf16.msra.mxu0 0
      %254 = vmatprep.subr.bf16.mxu0 0
      %255 = vmatpush2.bf16.msra.mxu0 0
      %256 = vmatprep.mubr.bf16.mxu0 0
      %257 = vmatmul.mubr.bf16.gmra.mxu0 %v136
      %v258 = vpop.f32.mrf.mxu0
      %v259 = vadd.f32 0.0, %v258
      %v260 = vpop.f32.mrf.mxu0
      %v261 = vadd.f32 0.0, %v260
      %v262 = vpop.f32.mrf.mxu0
      %v263 = vadd.f32 0.0, %v262
      %v264 = vpop.f32.mrf.mxu0
      %v265 = vadd.f32 0.0, %v264
      %266 = vmatprep.mubr.bf16.mxu0 0
      %267 = vmatmul.mubr.bf16.gmra.mxu0 %v137
      %v268 = vpop.f32.mrf.mxu0
      %v269 = vadd.f32 0.0, %v268
      %v270 = vpop.f32.mrf.mxu0
      %v271 = vadd.f32 0.0, %v270
      %v272 = vpop.f32.mrf.mxu0
      %v273 = vadd.f32 0.0, %v272
      %v274 = vpop.f32.mrf.mxu0
      %v275 = vadd.f32 0.0, %v274
      %276 = vmatprep.mubr.bf16.mxu0 0
      %277 = vmatmul.mubr.bf16.gmra.mxu0 %v138
      %v278 = vpop.f32.mrf.mxu0
      %v279 = vadd.f32 0.0, %v278
      %v280 = vpop.f32.mrf.mxu0
      %v281 = vadd.f32 0.0, %v280
      %v282 = vpop.f32.mrf.mxu0
      %v283 = vadd.f32 0.0, %v282
      %v284 = vpop.f32.mrf.mxu0
      %v285 = vadd.f32 0.0, %v284
      %286 = vmatprep.mubr.bf16.mxu0 0
      %287 = vmatmul.mubr.bf16.gmra.mxu0 %v139
      %v288 = vpop.f32.mrf.mxu0
      %v289 = vadd.f32 0.0, %v288
      %v290 = vpop.f32.mrf.mxu0
      %v291 = vadd.f32 0.0, %v290
      %v292 = vpop.f32.mrf.mxu0
      %v293 = vadd.f32 0.0, %v292
      %v294 = vpop.f32.mrf.mxu0
      %v295 = vadd.f32 0.0, %v294
      %296 = vdwg.mxu0
      %297 = vst [vmem:[#allocation2] sm:$0xff] %v259
      %298 = vst [vmem:[#allocation2 + $0x8] sm:$0xff] %v261
      %299 = vst [vmem:[#allocation2 + $0x10] sm:$0xff] %v263
      %300 = vst [vmem:[#allocation2 + $0x18] sm:$0xff] %v265
      %301 = vst [vmem:[#allocation2 + $0x20] sm:$0xff] %v269
      %302 = vst [vmem:[#allocation2 + $0x28] sm:$0xff] %v271
      %303 = vst [vmem:[#allocation2 + $0x30] sm:$0xff] %v273
      %304 = vst [vmem:[#allocation2 + $0x38] sm:$0xff] %v275
      %305 = vst [vmem:[#allocation2 + $0x40] sm:$0xff] %v279
      %306 = vst [vmem:[#allocation2 + $0x48] sm:$0xff] %v281
      %307 = vst [vmem:[#allocation2 + $0x50] sm:$0xff] %v283
      %308 = vst [vmem:[#allocation2 + $0x58] sm:$0xff] %v285
      %309 = vst [vmem:[#allocation2 + $0x60] sm:$0xff] %v289
      %310 = vst [vmem:[#allocation2 + $0x68] sm:$0xff] %v291
      %311 = vst [vmem:[#allocation2 + $0x70] sm:$0xff] %v293
      %312 = vst [vmem:[#allocation2 + $0x78] sm:$0xff] %v295
      %v313 = vlaneseq
      %vm314 = vcmp.ge.s32.totalorder %v313, 0
      %vm315 = vcmp.lt.s32.totalorder %v313, 256
      %vm316 = vmand %vm314, %vm315
      %317 = vst.msk [vmem:[#allocation3] sm:$0x3] %vm316, -inf
      %318 = vst.msk [vmem:[#allocation4] sm:$0x3] %vm316, 0.0
      %319 = vst.msk [vmem:[#allocation5] sm:$0x3] %vm316, 0.0
    $region29: #{forward.4} parent=24 // pred_fallthru
      _
    %v320 = vld [vmem:[%s69] sm:$0xf]
    %v321 = vld [vmem:[%s69 + $0x4] sm:$0xf]
    %v322 = vld [vmem:[%s69 + $0x8] sm:$0xf]
    %v323 = vld [vmem:[%s69 + $0xc] sm:$0xf]
    %v324 = vld [vmem:[%s69 + $0x10] sm:$0xf]
    %v325 = vld [vmem:[%s69 + $0x14] sm:$0xf]
    %v326 = vld [vmem:[%s69 + $0x18] sm:$0xf]
    %v327 = vld [vmem:[%s69 + $0x1c] sm:$0xf]
    %v328 = vld [vmem:[%s69 + $0x20] sm:$0xf]
    %v329 = vld [vmem:[%s69 + $0x24] sm:$0xf]
    %v330 = vld [vmem:[%s69 + $0x28] sm:$0xf]
    %v331 = vld [vmem:[%s69 + $0x2c] sm:$0xf]
    %v332 = vld [vmem:[%s69 + $0x30] sm:$0xf]
    %v333 = vld [vmem:[%s69 + $0x34] sm:$0xf]
    %v334 = vld [vmem:[%s69 + $0x38] sm:$0xf]
    %v335 = vld [vmem:[%s69 + $0x3c] sm:$0xf]
    %v336 = vld [vmem:[%s69 + $0x40] sm:$0xf]
    %v337 = vld [vmem:[%s69 + $0x44] sm:$0xf]
    %v338 = vld [vmem:[%s69 + $0x48] sm:$0xf]
    %v339 = vld [vmem:[%s69 + $0x4c] sm:$0xf]
    %v340 = vld [vmem:[%s69 + $0x50] sm:$0xf]
    %v341 = vld [vmem:[%s69 + $0x54] sm:$0xf]
    %v342 = vld [vmem:[%s69 + $0x58] sm:$0xf]
    %v343 = vld [vmem:[%s69 + $0x5c] sm:$0xf]
    %v344 = vld [vmem:[%s69 + $0x60] sm:$0xf]
    %v345 = vld [vmem:[%s69 + $0x64] sm:$0xf]
    %v346 = vld [vmem:[%s69 + $0x68] sm:$0xf]
    %v347 = vld [vmem:[%s69 + $0x6c] sm:$0xf]
    %v348 = vld [vmem:[%s69 + $0x70] sm:$0xf]
    %v349 = vld [vmem:[%s69 + $0x74] sm:$0xf]
    %v350 = vld [vmem:[%s69 + $0x78] sm:$0xf]
    %v351 = vld [vmem:[%s69 + $0x7c] sm:$0xf]
    %v352 = vld [vmem:[%s69 + $0x80] sm:$0xf]
    %v353 = vld [vmem:[%s69 + $0x84] sm:$0xf]
    %v354 = vld [vmem:[%s69 + $0x88] sm:$0xf]
    %v355 = vld [vmem:[%s69 + $0x8c] sm:$0xf]
    %v356 = vld [vmem:[%s69 + $0x90] sm:$0xf]
    %v357 = vld [vmem:[%s69 + $0x94] sm:$0xf]
    %v358 = vld [vmem:[%s69 + $0x98] sm:$0xf]
    %v359 = vld [vmem:[%s69 + $0x9c] sm:$0xf]
    %v360 = vld [vmem:[%s69 + $0xa0] sm:$0xf]
    %v361 = vld [vmem:[%s69 + $0xa4] sm:$0xf]
    %v362 = vld [vmem:[%s69 + $0xa8] sm:$0xf]
    %v363 = vld [vmem:[%s69 + $0xac] sm:$0xf]
    %v364 = vld [vmem:[%s69 + $0xb0] sm:$0xf]
    %v365 = vld [vmem:[%s69 + $0xb4] sm:$0xf]
    %v366 = vld [vmem:[%s69 + $0xb8] sm:$0xf]
    %v367 = vld [vmem:[%s69 + $0xbc] sm:$0xf]
    %v368 = vld [vmem:[%s69 + $0xc0] sm:$0xf]
    %v369 = vld [vmem:[%s69 + $0xc4] sm:$0xf]
    %v370 = vld [vmem:[%s69 + $0xc8] sm:$0xf]
    %v371 = vld [vmem:[%s69 + $0xcc] sm:$0xf]
    %v372 = vld [vmem:[%s69 + $0xd0] sm:$0xf]
    %v373 = vld [vmem:[%s69 + $0xd4] sm:$0xf]
    %v374 = vld [vmem:[%s69 + $0xd8] sm:$0xf]
    %v375 = vld [vmem:[%s69 + $0xdc] sm:$0xf]
    %v376 = vld [vmem:[%s69 + $0xe0] sm:$0xf]
    %v377 = vld [vmem:[%s69 + $0xe4] sm:$0xf]
    %v378 = vld [vmem:[%s69 + $0xe8] sm:$0xf]
    %v379 = vld [vmem:[%s69 + $0xec] sm:$0xf]
    %v380 = vld [vmem:[%s69 + $0xf0] sm:$0xf]
    %v381 = vld [vmem:[%s69 + $0xf4] sm:$0xf]
    %v382 = vld [vmem:[%s69 + $0xf8] sm:$0xf]
    %v383 = vld [vmem:[%s69 + $0xfc] sm:$0xf]
    %v384 = vld [vmem:[#allocation2] sm:$0xff]
    %v385 = vld [vmem:[#allocation2 + $0x8] sm:$0xff]
    %v386 = vld [vmem:[#allocation2 + $0x10] sm:$0xff]
    %v387 = vld [vmem:[#allocation2 + $0x18] sm:$0xff]
    %v388 = vld [vmem:[#allocation2 + $0x20] sm:$0xff]
    %v389 = vld [vmem:[#allocation2 + $0x28] sm:$0xff]
    %v390 = vld [vmem:[#allocation2 + $0x30] sm:$0xff]
    %v391 = vld [vmem:[#allocation2 + $0x38] sm:$0xff]
    %v392 = vld [vmem:[#allocation2 + $0x40] sm:$0xff]
    %v393 = vld [vmem:[#allocation2 + $0x48] sm:$0xff]
    %v394 = vld [vmem:[#allocation2 + $0x50] sm:$0xff]
    %v395 = vld [vmem:[#allocation2 + $0x58] sm:$0xff]
    %v396 = vld [vmem:[#allocation2 + $0x60] sm:$0xff]
    %v397 = vld [vmem:[#allocation2 + $0x68] sm:$0xff]
    %v398 = vld [vmem:[#allocation2 + $0x70] sm:$0xff]
    %v399 = vld [vmem:[#allocation2 + $0x78] sm:$0xff]
    %v400 = vpack.c.bf16 %v386, %v384
    %v401 = vpack.c.bf16 %v387, %v385
    %v402 = vpack.c.bf16 %v390, %v388
    %v403 = vpack.c.bf16 %v391, %v389
    %v404 = vpack.c.bf16 %v394, %v392
    %v405 = vpack.c.bf16 %v395, %v393
    %v406 = vpack.c.bf16 %v398, %v396
    %v407 = vpack.c.bf16 %v399, %v397
    %v408 = vld [vmem:[%s81] sm:$0xff]
    %v409 = vld [vmem:[%s81 + $0x8] sm:$0xff]
    %v410 = vld [vmem:[%s81 + $0x10] sm:$0xff]
    %v411 = vld [vmem:[%s81 + $0x18] sm:$0xff]
    %v412 = vld [vmem:[%s81 + $0x20] sm:$0xff]
    %v413 = vld [vmem:[%s81 + $0x28] sm:$0xff]
    %v414 = vld [vmem:[%s81 + $0x30] sm:$0xff]
    %v415 = vld [vmem:[%s81 + $0x38] sm:$0xff]
    %v416 = vld [vmem:[%s81 + $0x40] sm:$0xff]
    %v417 = vld [vmem:[%s81 + $0x48] sm:$0xff]
    %v418 = vld [vmem:[%s81 + $0x50] sm:$0xff]
    %v419 = vld [vmem:[%s81 + $0x58] sm:$0xff]
    %v420 = vld [vmem:[%s81 + $0x60] sm:$0xff]
    %v421 = vld [vmem:[%s81 + $0x68] sm:$0xff]
    %v422 = vld [vmem:[%s81 + $0x70] sm:$0xff]
    %v423 = vld [vmem:[%s81 + $0x78] sm:$0xff]
    %v424 = vld [vmem:[%s81 + $0x80] sm:$0xff]
    %v425 = vld [vmem:[%s81 + $0x88] sm:$0xff]
    %v426 = vld [vmem:[%s81 + $0x90] sm:$0xff]
    %v427 = vld [vmem:[%s81 + $0x98] sm:$0xff]
    %v428 = vld [vmem:[%s81 + $0xa0] sm:$0xff]
    %v429 = vld [vmem:[%s81 + $0xa8] sm:$0xff]
    %v430 = vld [vmem:[%s81 + $0xb0] sm:$0xff]
    %v431 = vld [vmem:[%s81 + $0xb8] sm:$0xff]
    %v432 = vld [vmem:[%s81 + $0xc0] sm:$0xff]
    %v433 = vld [vmem:[%s81 + $0xc8] sm:$0xff]
    %v434 = vld [vmem:[%s81 + $0xd0] sm:$0xff]
    %v435 = vld [vmem:[%s81 + $0xd8] sm:$0xff]
    %v436 = vld [vmem:[%s81 + $0xe0] sm:$0xff]
    %v437 = vld [vmem:[%s81 + $0xe8] sm:$0xff]
    %v438 = vld [vmem:[%s81 + $0xf0] sm:$0xff]
    %v439 = vld [vmem:[%s81 + $0xf8] sm:$0xff]
    %v440 = vld [vmem:[%s81 + $0x100] sm:$0xff]
    %v441 = vld [vmem:[%s81 + $0x108] sm:$0xff]
    %v442 = vld [vmem:[%s81 + $0x110] sm:$0xff]
    %v443 = vld [vmem:[%s81 + $0x118] sm:$0xff]
    %v444 = vld [vmem:[%s81 + $0x120] sm:$0xff]
    %v445 = vld [vmem:[%s81 + $0x128] sm:$0xff]
    %v446 = vld [vmem:[%s81 + $0x130] sm:$0xff]
    %v447 = vld [vmem:[%s81 + $0x138] sm:$0xff]
    %v448 = vld [vmem:[%s81 + $0x140] sm:$0xff]
    %v449 = vld [vmem:[%s81 + $0x148] sm:$0xff]
    %v450 = vld [vmem:[%s81 + $0x150] sm:$0xff]
    %v451 = vld [vmem:[%s81 + $0x158] sm:$0xff]
    %v452 = vld [vmem:[%s81 + $0x160] sm:$0xff]
    %v453 = vld [vmem:[%s81 + $0x168] sm:$0xff]
    %v454 = vld [vmem:[%s81 + $0x170] sm:$0xff]
    %v455 = vld [vmem:[%s81 + $0x178] sm:$0xff]
    %v456 = vld [vmem:[%s81 + $0x180] sm:$0xff]
    %v457 = vld [vmem:[%s81 + $0x188] sm:$0xff]
    %v458 = vld [vmem:[%s81 + $0x190] sm:$0xff]
    %v459 = vld [vmem:[%s81 + $0x198] sm:$0xff]
    %v460 = vld [vmem:[%s81 + $0x1a0] sm:$0xff]
    %v461 = vld [vmem:[%s81 + $0x1a8] sm:$0xff]
    %v462 = vld [vmem:[%s81 + $0x1b0] sm:$0xff]
    %v463 = vld [vmem:[%s81 + $0x1b8] sm:$0xff]
    %v464 = vld [vmem:[%s81 + $0x1c0] sm:$0xff]
    %v465 = vld [vmem:[%s81 + $0x1c8] sm:$0xff]
    %v466 = vld [vmem:[%s81 + $0x1d0] sm:$0xff]
    %v467 = vld [vmem:[%s81 + $0x1d8] sm:$0xff]
    %v468 = vld [vmem:[%s81 + $0x1e0] sm:$0xff]
    %v469 = vld [vmem:[%s81 + $0x1e8] sm:$0xff]
    %v470 = vld [vmem:[%s81 + $0x1f0] sm:$0xff]
    %v471 = vld [vmem:[%s81 + $0x1f8] sm:$0xff]
    %473 = vset.pattern.permute.xlu0 0
    %474 = vperm.xlu0 %473, %v408
    %v475 = vpop.permute.xlu0 %474
    %478 = vset.pattern.permute.xlu0 0
    %479 = vperm.xlu0 %478, %v409
    %v480 = vpop.permute.xlu0 %479
    %483 = vset.pattern.permute.xlu0 0
    %484 = vperm.xlu0 %483, %v410
    %v485 = vpop.permute.xlu0 %484
    %488 = vset.pattern.permute.xlu0 0
    %489 = vperm.xlu0 %488, %v411
    %v490 = vpop.permute.xlu0 %489
    %493 = vset.pattern.permute.xlu0 0
    %494 = vperm.xlu0 %493, %v412
    %v495 = vpop.permute.xlu0 %494
    %498 = vset.pattern.permute.xlu0 0
    %499 = vperm.xlu0 %498, %v413
    %v500 = vpop.permute.xlu0 %499
    %503 = vset.pattern.permute.xlu0 0
    %504 = vperm.xlu0 %503, %v414
    %v505 = vpop.permute.xlu0 %504
    %508 = vset.pattern.permute.xlu0 0
    %509 = vperm.xlu0 %508, %v415
    %v510 = vpop.permute.xlu0 %509
    %513 = vset.pattern.permute.xlu0 0
    %514 = vperm.xlu0 %513, %v416
    %v515 = vpop.permute.xlu0 %514
    %518 = vset.pattern.permute.xlu0 0
    %519 = vperm.xlu0 %518, %v417
    %v520 = vpop.permute.xlu0 %519
    %523 = vset.pattern.permute.xlu0 0
    %524 = vperm.xlu0 %523, %v418
    %v525 = vpop.permute.xlu0 %524
    %528 = vset.pattern.permute.xlu0 0
    %529 = vperm.xlu0 %528, %v419
    %v530 = vpop.permute.xlu0 %529
    %533 = vset.pattern.permute.xlu0 0
    %534 = vperm.xlu0 %533, %v420
    %v535 = vpop.permute.xlu0 %534
    %538 = vset.pattern.permute.xlu0 0
    %539 = vperm.xlu0 %538, %v421
    %v540 = vpop.permute.xlu0 %539
    %543 = vset.pattern.permute.xlu0 0
    %544 = vperm.xlu0 %543, %v422
    %v545 = vpop.permute.xlu0 %544
    %548 = vset.pattern.permute.xlu0 0
    %549 = vperm.xlu0 %548, %v423
    %v550 = vpop.permute.xlu0 %549
    %553 = vset.pattern.permute.xlu0 0
    %554 = vperm.xlu0 %553, %v424
    %v555 = vpop.permute.xlu0 %554
    %558 = vset.pattern.permute.xlu0 0
    %559 = vperm.xlu0 %558, %v425
    %v560 = vpop.permute.xlu0 %559
    %563 = vset.pattern.permute.xlu0 0
    %564 = vperm.xlu0 %563, %v426
    %v565 = vpop.permute.xlu0 %564
    %568 = vset.pattern.permute.xlu0 0
    %569 = vperm.xlu0 %568, %v427
    %v570 = vpop.permute.xlu0 %569
    %573 = vset.pattern.permute.xlu0 0
    %574 = vperm.xlu0 %573, %v428
    %v575 = vpop.permute.xlu0 %574
    %578 = vset.pattern.permute.xlu0 0
    %579 = vperm.xlu0 %578, %v429
    %v580 = vpop.permute.xlu0 %579
    %583 = vset.pattern.permute.xlu0 0
    %584 = vperm.xlu0 %583, %v430
    %v585 = vpop.permute.xlu0 %584
    %588 = vset.pattern.permute.xlu0 0
    %589 = vperm.xlu0 %588, %v431
    %v590 = vpop.permute.xlu0 %589
    %593 = vset.pattern.permute.xlu0 0
    %594 = vperm.xlu0 %593, %v432
    %v595 = vpop.permute.xlu0 %594
    %598 = vset.pattern.permute.xlu0 0
    %599 = vperm.xlu0 %598, %v433
    %v600 = vpop.permute.xlu0 %599
    %603 = vset.pattern.permute.xlu0 0
    %604 = vperm.xlu0 %603, %v434
    %v605 = vpop.permute.xlu0 %604
    %608 = vset.pattern.permute.xlu0 0
    %609 = vperm.xlu0 %608, %v435
    %v610 = vpop.permute.xlu0 %609
    %613 = vset.pattern.permute.xlu0 0
    %614 = vperm.xlu0 %613, %v436
    %v615 = vpop.permute.xlu0 %614
    %618 = vset.pattern.permute.xlu0 0
    %619 = vperm.xlu0 %618, %v437
    %v620 = vpop.permute.xlu0 %619
    %623 = vset.pattern.permute.xlu0 0
    %624 = vperm.xlu0 %623, %v438
    %v625 = vpop.permute.xlu0 %624
    %628 = vset.pattern.permute.xlu0 0
    %629 = vperm.xlu0 %628, %v439
    %v630 = vpop.permute.xlu0 %629
    %633 = vset.pattern.permute.xlu0 0
    %634 = vperm.xlu0 %633, %v440
    %v635 = vpop.permute.xlu0 %634
    %638 = vset.pattern.permute.xlu0 0
    %639 = vperm.xlu0 %638, %v441
    %v640 = vpop.permute.xlu0 %639
    %643 = vset.pattern.permute.xlu0 0
    %644 = vperm.xlu0 %643, %v442
    %v645 = vpop.permute.xlu0 %644
    %648 = vset.pattern.permute.xlu0 0
    %649 = vperm.xlu0 %648, %v443
    %v650 = vpop.permute.xlu0 %649
    %653 = vset.pattern.permute.xlu0 0
    %654 = vperm.xlu0 %653, %v444
    %v655 = vpop.permute.xlu0 %654
    %658 = vset.pattern.permute.xlu0 0
    %659 = vperm.xlu0 %658, %v445
    %v660 = vpop.permute.xlu0 %659
    %663 = vset.pattern.permute.xlu0 0
    %664 = vperm.xlu0 %663, %v446
    %v665 = vpop.permute.xlu0 %664
    %668 = vset.pattern.permute.xlu0 0
    %669 = vperm.xlu0 %668, %v447
    %v670 = vpop.permute.xlu0 %669
    %673 = vset.pattern.permute.xlu0 0
    %674 = vperm.xlu0 %673, %v448
    %v675 = vpop.permute.xlu0 %674
    %678 = vset.pattern.permute.xlu0 0
    %679 = vperm.xlu0 %678, %v449
    %v680 = vpop.permute.xlu0 %679
    %683 = vset.pattern.permute.xlu0 0
    %684 = vperm.xlu0 %683, %v450
    %v685 = vpop.permute.xlu0 %684
    %688 = vset.pattern.permute.xlu0 0
    %689 = vperm.xlu0 %688, %v451
    %v690 = vpop.permute.xlu0 %689
    %693 = vset.pattern.permute.xlu0 0
    %694 = vperm.xlu0 %693, %v452
    %v695 = vpop.permute.xlu0 %694
    %698 = vset.pattern.permute.xlu0 0
    %699 = vperm.xlu0 %698, %v453
    %v700 = vpop.permute.xlu0 %699
    %703 = vset.pattern.permute.xlu0 0
    %704 = vperm.xlu0 %703, %v454
    %v705 = vpop.permute.xlu0 %704
    %708 = vset.pattern.permute.xlu0 0
    %709 = vperm.xlu0 %708, %v455
    %v710 = vpop.permute.xlu0 %709
    %713 = vset.pattern.permute.xlu0 0
    %714 = vperm.xlu0 %713, %v456
    %v715 = vpop.permute.xlu0 %714
    %718 = vset.pattern.permute.xlu0 0
    %719 = vperm.xlu0 %718, %v457
    %v720 = vpop.permute.xlu0 %719
    %723 = vset.pattern.permute.xlu0 0
    %724 = vperm.xlu0 %723, %v458
    %v725 = vpop.permute.xlu0 %724
    %728 = vset.pattern.permute.xlu0 0
    %729 = vperm.xlu0 %728, %v459
    %v730 = vpop.permute.xlu0 %729
    %733 = vset.pattern.permute.xlu0 0
    %734 = vperm.xlu0 %733, %v460
    %v735 = vpop.permute.xlu0 %734
    %738 = vset.pattern.permute.xlu0 0
    %739 = vperm.xlu0 %738, %v461
    %v740 = vpop.permute.xlu0 %739
    %743 = vset.pattern.permute.xlu0 0
    %744 = vperm.xlu0 %743, %v462
    %v745 = vpop.permute.xlu0 %744
    %748 = vset.pattern.permute.xlu0 0
    %749 = vperm.xlu0 %748, %v463
    %v750 = vpop.permute.xlu0 %749
    %753 = vset.pattern.permute.xlu0 0
    %754 = vperm.xlu0 %753, %v464
    %v755 = vpop.permute.xlu0 %754
    %758 = vset.pattern.permute.xlu0 0
    %759 = vperm.xlu0 %758, %v465
    %v760 = vpop.permute.xlu0 %759
    %763 = vset.pattern.permute.xlu0 0
    %764 = vperm.xlu0 %763, %v466
    %v765 = vpop.permute.xlu0 %764
    %768 = vset.pattern.permute.xlu0 0
    %769 = vperm.xlu0 %768, %v467
    %v770 = vpop.permute.xlu0 %769
    %773 = vset.pattern.permute.xlu0 0
    %774 = vperm.xlu0 %773, %v468
    %v775 = vpop.permute.xlu0 %774
    %778 = vset.pattern.permute.xlu0 0
    %779 = vperm.xlu0 %778, %v469
    %v780 = vpop.permute.xlu0 %779
    %783 = vset.pattern.permute.xlu0 0
    %784 = vperm.xlu0 %783, %v470
    %v785 = vpop.permute.xlu0 %784
    %788 = vset.pattern.permute.xlu0 0
    %789 = vperm.xlu0 %788, %v471
    %v790 = vpop.permute.xlu0 %789
    %v856 = vunpack.c.l.b16 %v320
    %v857 = vunpack.c.l.b16 %v321
    %v858 = vunpack.c.l.b16 %v322
    %v859 = vunpack.c.l.b16 %v323
    %v860 = vunpack.c.l.b16 %v324
    %v861 = vunpack.c.l.b16 %v325
    %v862 = vunpack.c.l.b16 %v326
    %v863 = vunpack.c.l.b16 %v327
    %v864 = vunpack.c.l.b16 %v328
    %v865 = vunpack.c.l.b16 %v329
    %v866 = vunpack.c.l.b16 %v330
    %v867 = vunpack.c.l.b16 %v331
    %v868 = vunpack.c.l.b16 %v332
    %v869 = vunpack.c.l.b16 %v333
    %v870 = vunpack.c.l.b16 %v334
    %v871 = vunpack.c.l.b16 %v335
    %v872 = vunpack.c.l.b16 %v336
    %v873 = vunpack.c.l.b16 %v337
    %v874 = vunpack.c.l.b16 %v338
    %v875 = vunpack.c.l.b16 %v339
    %v876 = vunpack.c.l.b16 %v340
    %v877 = vunpack.c.l.b16 %v341
    %v878 = vunpack.c.l.b16 %v342
    %v879 = vunpack.c.l.b16 %v343
    %v880 = vunpack.c.l.b16 %v344
    %v881 = vunpack.c.l.b16 %v345
    %v882 = vunpack.c.l.b16 %v346
    %v883 = vunpack.c.l.b16 %v347
    %v884 = vunpack.c.l.b16 %v348
    %v885 = vunpack.c.l.b16 %v349
    %v886 = vunpack.c.l.b16 %v350
    %v887 = vunpack.c.l.b16 %v351
    %v888 = vunpack.c.l.b16 %v352
    %v889 = vunpack.c.l.b16 %v353
    %v890 = vunpack.c.l.b16 %v354
    %v891 = vunpack.c.l.b16 %v355
    %v892 = vunpack.c.l.b16 %v356
    %v893 = vunpack.c.l.b16 %v357
    %v894 = vunpack.c.l.b16 %v358
    %v895 = vunpack.c.l.b16 %v359
    %v896 = vunpack.c.l.b16 %v360
    %v897 = vunpack.c.l.b16 %v361
    %v898 = vunpack.c.l.b16 %v362
    %v899 = vunpack.c.l.b16 %v363
    %v900 = vunpack.c.l.b16 %v364
    %v901 = vunpack.c.l.b16 %v365
    %v902 = vunpack.c.l.b16 %v366
    %v903 = vunpack.c.l.b16 %v367
    %v904 = vunpack.c.l.b16 %v368
    %v905 = vunpack.c.l.b16 %v369
    %v906 = vunpack.c.l.b16 %v370
    %v907 = vunpack.c.l.b16 %v371
    %v908 = vunpack.c.l.b16 %v372
    %v909 = vunpack.c.l.b16 %v373
    %v910 = vunpack.c.l.b16 %v374
    %v911 = vunpack.c.l.b16 %v375
    %v912 = vunpack.c.l.b16 %v376
    %v913 = vunpack.c.l.b16 %v377
    %v914 = vunpack.c.l.b16 %v378
    %v915 = vunpack.c.l.b16 %v379
    %v916 = vunpack.c.l.b16 %v380
    %v917 = vunpack.c.l.b16 %v381
    %v918 = vunpack.c.l.b16 %v382
    %v919 = vunpack.c.l.b16 %v383
    %v920 = vpack.c.b16 %v857, %v856
    %v921 = vpack.c.b16 %v859, %v858
    %v922 = vpack.c.b16 %v861, %v860
    %v923 = vpack.c.b16 %v863, %v862
    %v924 = vpack.c.b16 %v865, %v864
    %v925 = vpack.c.b16 %v867, %v866
    %v926 = vpack.c.b16 %v869, %v868
    %v927 = vpack.c.b16 %v871, %v870
    %v928 = vpack.c.b16 %v873, %v872
    %v929 = vpack.c.b16 %v875, %v874
    %v930 = vpack.c.b16 %v877, %v876
    %v931 = vpack.c.b16 %v879, %v878
    %v932 = vpack.c.b16 %v881, %v880
    %v933 = vpack.c.b16 %v883, %v882
    %v934 = vpack.c.b16 %v885, %v884
    %v935 = vpack.c.b16 %v887, %v886
    %v936 = vpack.c.b16 %v889, %v888
    %v937 = vpack.c.b16 %v891, %v890
    %v938 = vpack.c.b16 %v893, %v892
    %v939 = vpack.c.b16 %v895, %v894
    %v940 = vpack.c.b16 %v897, %v896
    %v941 = vpack.c.b16 %v899, %v898
    %v942 = vpack.c.b16 %v901, %v900
    %v943 = vpack.c.b16 %v903, %v902
    %v944 = vpack.c.b16 %v905, %v904
    %v945 = vpack.c.b16 %v907, %v906
    %v946 = vpack.c.b16 %v909, %v908
    %v947 = vpack.c.b16 %v911, %v910
    %v948 = vpack.c.b16 %v913, %v912
    %v949 = vpack.c.b16 %v915, %v914
    %v950 = vpack.c.b16 %v917, %v916
    %v951 = vpack.c.b16 %v919, %v918
    %vm952 = vcmask 523264
    %v954 = vsel %vm952, %v920, 0
    %v957 = vsel %vm952, %v921, 0
    %v960 = vsel %vm952, %v922, 0
    %v963 = vsel %vm952, %v923, 0
    %v966 = vsel %vm952, %v924, 0
    %v969 = vsel %vm952, %v925, 0
    %v972 = vsel %vm952, %v926, 0
    %v975 = vsel %vm952, %v927, 0
    %v978 = vsel %vm952, %v928, 0
    %v981 = vsel %vm952, %v929, 0
    %v984 = vsel %vm952, %v930, 0
    %v987 = vsel %vm952, %v931, 0
    %v990 = vsel %vm952, %v932, 0
    %v993 = vsel %vm952, %v933, 0
    %v996 = vsel %vm952, %v934, 0
    %v999 = vsel %vm952, %v935, 0
    %v1002 = vsel %vm952, %v936, 0
    %v1005 = vsel %vm952, %v937, 0
    %v1008 = vsel %vm952, %v938, 0
    %v1011 = vsel %vm952, %v939, 0
    %v1014 = vsel %vm952, %v940, 0
    %v1017 = vsel %vm952, %v941, 0
    %v1020 = vsel %vm952, %v942, 0
    %v1023 = vsel %vm952, %v943, 0
    %v1026 = vsel %vm952, %v944, 0
    %v1029 = vsel %vm952, %v945, 0
    %v1032 = vsel %vm952, %v946, 0
    %v1035 = vsel %vm952, %v947, 0
    %v1038 = vsel %vm952, %v948, 0
    %v1041 = vsel %vm952, %v949, 0
    %v1044 = vsel %vm952, %v950, 0
    %v1047 = vsel %vm952, %v951, 0
    %1049 = vmatprep.subr.bf16.mxu0 0
    %1050 = vmatpush1.bf16.msra.mxu0 0
    %1051 = vmatprep.subr.bf16.mxu0 0
    %1052 = vmatpush1.bf16.msra.mxu0 0
    %1053 = vmatprep.subr.bf16.mxu0 0
    %1054 = vmatpush1.bf16.msra.mxu0 0
    %1055 = vmatprep.subr.bf16.mxu0 0
    %1056 = vmatpush1.bf16.msra.mxu0 0
    %1057 = vmatprep.subr.bf16.mxu0 %v407
    %1058 = vmatpush1.bf16.msra.mxu0 %v406
    %1059 = vmatprep.subr.bf16.mxu0 %v405
    %1060 = vmatpush1.bf16.msra.mxu0 %v404
    %1061 = vmatprep.subr.bf16.mxu0 %v403
    %1062 = vmatpush1.bf16.msra.mxu0 %v402
    %1063 = vmatprep.subr.bf16.mxu0 %v401
    %1064 = vmatpush1.bf16.msra.mxu0 %v400
    %1065 = vmatprep.subr.bf16.mxu0 0
    %1066 = vmatpush2.bf16.msra.mxu0 0
    %1067 = vmatprep.subr.bf16.mxu0 0
    %1068 = vmatpush2.bf16.msra.mxu0 0
    %1069 = vmatprep.subr.bf16.mxu0 0
    %1070 = vmatpush2.bf16.msra.mxu0 0
    %1071 = vmatprep.subr.bf16.mxu0 0
    %1072 = vmatpush2.bf16.msra.mxu0 0
    %1073 = vmatprep.subr.bf16.mxu0 0
    %1074 = vmatpush2.bf16.msra.mxu0 0
    %1075 = vmatprep.subr.bf16.mxu0 0
    %1076 = vmatpush2.bf16.msra.mxu0 0
    %1077 = vmatprep.subr.bf16.mxu0 0
    %1078 = vmatpush2.bf16.msra.mxu0 0
    %1079 = vmatprep.subr.bf16.mxu0 0
    %1080 = vmatpush2.bf16.msra.mxu0 0
    %1081 = vmatprep.mubr.bf16.mxu0 0
    %1082 = vmatmul.mubr.bf16.gmra.mxu0 %v954
    %v1083 = vpop.f32.mrf.mxu0
    %v1084 = vadd.f32 %v475, %v1083
    %v1085 = vpop.f32.mrf.mxu0
    %v1086 = vadd.f32 %v475, %v1085
    %v1087 = vpop.f32.mrf.mxu0
    %v1088 = vadd.f32 %v480, %v1087
    %v1089 = vpop.f32.mrf.mxu0
    %v1090 = vadd.f32 %v480, %v1089
    %1091 = vmatprep.mubr.bf16.mxu0 0
    %1092 = vmatmul.mubr.bf16.gmra.mxu0 %v957
    %v1093 = vpop.f32.mrf.mxu0
    %v1094 = vadd.f32 %v485, %v1093
    %v1095 = vpop.f32.mrf.mxu0
    %v1096 = vadd.f32 %v485, %v1095
    %v1097 = vpop.f32.mrf.mxu0
    %v1098 = vadd.f32 %v490, %v1097
    %v1099 = vpop.f32.mrf.mxu0
    %v1100 = vadd.f32 %v490, %v1099
    %1101 = vmatprep.mubr.bf16.mxu0 0
    %1102 = vmatmul.mubr.bf16.gmra.mxu0 %v960
    %v1103 = vpop.f32.mrf.mxu0
    %v1104 = vadd.f32 %v495, %v1103
    %v1105 = vpop.f32.mrf.mxu0
    %v1106 = vadd.f32 %v495, %v1105
    %v1107 = vpop.f32.mrf.mxu0
    %v1108 = vadd.f32 %v500, %v1107
    %v1109 = vpop.f32.mrf.mxu0
    %v1110 = vadd.f32 %v500, %v1109
    %1111 = vmatprep.mubr.bf16.mxu0 0
    %1112 = vmatmul.mubr.bf16.gmra.mxu0 %v963
    %v1113 = vpop.f32.mrf.mxu0
    %v1114 = vadd.f32 %v505, %v1113
    %v1115 = vpop.f32.mrf.mxu0
    %v1116 = vadd.f32 %v505, %v1115
    %v1117 = vpop.f32.mrf.mxu0
    %v1118 = vadd.f32 %v510, %v1117
    %v1119 = vpop.f32.mrf.mxu0
    %v1120 = vadd.f32 %v510, %v1119
    %1121 = vmatprep.mubr.bf16.mxu0 0
    %1122 = vmatmul.mubr.bf16.gmra.mxu0 %v966
    %v1123 = vpop.f32.mrf.mxu0
    %v1124 = vadd.f32 %v515, %v1123
    %v1125 = vpop.f32.mrf.mxu0
    %v1126 = vadd.f32 %v515, %v1125
    %v1127 = vpop.f32.mrf.mxu0
    %v1128 = vadd.f32 %v520, %v1127
    %v1129 = vpop.f32.mrf.mxu0
    %v1130 = vadd.f32 %v520, %v1129
    %1131 = vmatprep.mubr.bf16.mxu0 0
    %1132 = vmatmul.mubr.bf16.gmra.mxu0 %v969
    %v1133 = vpop.f32.mrf.mxu0
    %v1134 = vadd.f32 %v525, %v1133
    %v1135 = vpop.f32.mrf.mxu0
    %v1136 = vadd.f32 %v525, %v1135
    %v1137 = vpop.f32.mrf.mxu0
    %v1138 = vadd.f32 %v530, %v1137
    %v1139 = vpop.f32.mrf.mxu0
    %v1140 = vadd.f32 %v530, %v1139
    %1141 = vmatprep.mubr.bf16.mxu0 0
    %1142 = vmatmul.mubr.bf16.gmra.mxu0 %v972
    %v1143 = vpop.f32.mrf.mxu0
    %v1144 = vadd.f32 %v535, %v1143
    %v1145 = vpop.f32.mrf.mxu0
    %v1146 = vadd.f32 %v535, %v1145
    %v1147 = vpop.f32.mrf.mxu0
    %v1148 = vadd.f32 %v540, %v1147
    %v1149 = vpop.f32.mrf.mxu0
    %v1150 = vadd.f32 %v540, %v1149
    %1151 = vmatprep.mubr.bf16.mxu0 0
    %1152 = vmatmul.mubr.bf16.gmra.mxu0 %v975
    %v1153 = vpop.f32.mrf.mxu0
    %v1154 = vadd.f32 %v545, %v1153
    %v1155 = vpop.f32.mrf.mxu0
    %v1156 = vadd.f32 %v545, %v1155
    %v1157 = vpop.f32.mrf.mxu0
    %v1158 = vadd.f32 %v550, %v1157
    %v1159 = vpop.f32.mrf.mxu0
    %v1160 = vadd.f32 %v550, %v1159
    %1161 = vmatprep.mubr.bf16.mxu0 0
    %1162 = vmatmul.mubr.bf16.gmra.mxu0 %v978
    %v1163 = vpop.f32.mrf.mxu0
    %v1164 = vadd.f32 %v555, %v1163
    %v1165 = vpop.f32.mrf.mxu0
    %v1166 = vadd.f32 %v555, %v1165
    %v1167 = vpop.f32.mrf.mxu0
    %v1168 = vadd.f32 %v560, %v1167
    %v1169 = vpop.f32.mrf.mxu0
    %v1170 = vadd.f32 %v560, %v1169
    %1171 = vmatprep.mubr.bf16.mxu0 0
    %1172 = vmatmul.mubr.bf16.gmra.mxu0 %v981
    %v1173 = vpop.f32.mrf.mxu0
    %v1174 = vadd.f32 %v565, %v1173
    %v1175 = vpop.f32.mrf.mxu0
    %v1176 = vadd.f32 %v565, %v1175
    %v1177 = vpop.f32.mrf.mxu0
    %v1178 = vadd.f32 %v570, %v1177
    %v1179 = vpop.f32.mrf.mxu0
    %v1180 = vadd.f32 %v570, %v1179
    %1181 = vmatprep.mubr.bf16.mxu0 0
    %1182 = vmatmul.mubr.bf16.gmra.mxu0 %v984
    %v1183 = vpop.f32.mrf.mxu0
    %v1184 = vadd.f32 %v575, %v1183
    %v1185 = vpop.f32.mrf.mxu0
    %v1186 = vadd.f32 %v575, %v1185
    %v1187 = vpop.f32.mrf.mxu0
    %v1188 = vadd.f32 %v580, %v1187
    %v1189 = vpop.f32.mrf.mxu0
    %v1190 = vadd.f32 %v580, %v1189
    %1191 = vmatprep.mubr.bf16.mxu0 0
    %1192 = vmatmul.mubr.bf16.gmra.mxu0 %v987
    %v1193 = vpop.f32.mrf.mxu0
    %v1194 = vadd.f32 %v585, %v1193
    %v1195 = vpop.f32.mrf.mxu0
    %v1196 = vadd.f32 %v585, %v1195
    %v1197 = vpop.f32.mrf.mxu0
    %v1198 = vadd.f32 %v590, %v1197
    %v1199 = vpop.f32.mrf.mxu0
    %v1200 = vadd.f32 %v590, %v1199
    %1201 = vmatprep.mubr.bf16.mxu0 0
    %1202 = vmatmul.mubr.bf16.gmra.mxu0 %v990
    %v1203 = vpop.f32.mrf.mxu0
    %v1204 = vadd.f32 %v595, %v1203
    %v1205 = vpop.f32.mrf.mxu0
    %v1206 = vadd.f32 %v595, %v1205
    %v1207 = vpop.f32.mrf.mxu0
    %v1208 = vadd.f32 %v600, %v1207
    %v1209 = vpop.f32.mrf.mxu0
    %v1210 = vadd.f32 %v600, %v1209
    %1211 = vmatprep.mubr.bf16.mxu0 0
    %1212 = vmatmul.mubr.bf16.gmra.mxu0 %v993
    %v1213 = vpop.f32.mrf.mxu0
    %v1214 = vadd.f32 %v605, %v1213
    %v1215 = vpop.f32.mrf.mxu0
    %v1216 = vadd.f32 %v605, %v1215
    %v1217 = vpop.f32.mrf.mxu0
    %v1218 = vadd.f32 %v610, %v1217
    %v1219 = vpop.f32.mrf.mxu0
    %v1220 = vadd.f32 %v610, %v1219
    %1221 = vmatprep.mubr.bf16.mxu0 0
    %1222 = vmatmul.mubr.bf16.gmra.mxu0 %v996
    %v1223 = vpop.f32.mrf.mxu0
    %v1224 = vadd.f32 %v615, %v1223
    %v1225 = vpop.f32.mrf.mxu0
    %v1226 = vadd.f32 %v615, %v1225
    %v1227 = vpop.f32.mrf.mxu0
    %v1228 = vadd.f32 %v620, %v1227
    %v1229 = vpop.f32.mrf.mxu0
    %v1230 = vadd.f32 %v620, %v1229
    %1231 = vmatprep.mubr.bf16.mxu0 0
    %1232 = vmatmul.mubr.bf16.gmra.mxu0 %v999
    %v1233 = vpop.f32.mrf.mxu0
    %v1234 = vadd.f32 %v625, %v1233
    %v1235 = vpop.f32.mrf.mxu0
    %v1236 = vadd.f32 %v625, %v1235
    %v1237 = vpop.f32.mrf.mxu0
    %v1238 = vadd.f32 %v630, %v1237
    %v1239 = vpop.f32.mrf.mxu0
    %v1240 = vadd.f32 %v630, %v1239
    %1241 = vmatprep.mubr.bf16.mxu0 0
    %1242 = vmatmul.mubr.bf16.gmra.mxu0 %v1002
    %v1243 = vpop.f32.mrf.mxu0
    %v1244 = vadd.f32 %v635, %v1243
    %v1245 = vpop.f32.mrf.mxu0
    %v1246 = vadd.f32 %v635, %v1245
    %v1247 = vpop.f32.mrf.mxu0
    %v1248 = vadd.f32 %v640, %v1247
    %v1249 = vpop.f32.mrf.mxu0
    %v1250 = vadd.f32 %v640, %v1249
    %1251 = vmatprep.mubr.bf16.mxu0 0
    %1252 = vmatmul.mubr.bf16.gmra.mxu0 %v1005
    %v1253 = vpop.f32.mrf.mxu0
    %v1254 = vadd.f32 %v645, %v1253
    %v1255 = vpop.f32.mrf.mxu0
    %v1256 = vadd.f32 %v645, %v1255
    %v1257 = vpop.f32.mrf.mxu0
    %v1258 = vadd.f32 %v650, %v1257
    %v1259 = vpop.f32.mrf.mxu0
    %v1260 = vadd.f32 %v650, %v1259
    %1261 = vmatprep.mubr.bf16.mxu0 0
    %1262 = vmatmul.mubr.bf16.gmra.mxu0 %v1008
    %v1263 = vpop.f32.mrf.mxu0
    %v1264 = vadd.f32 %v655, %v1263
    %v1265 = vpop.f32.mrf.mxu0
    %v1266 = vadd.f32 %v655, %v1265
    %v1267 = vpop.f32.mrf.mxu0
    %v1268 = vadd.f32 %v660, %v1267
    %v1269 = vpop.f32.mrf.mxu0
    %v1270 = vadd.f32 %v660, %v1269
    %1271 = vmatprep.mubr.bf16.mxu0 0
    %1272 = vmatmul.mubr.bf16.gmra.mxu0 %v1011
    %v1273 = vpop.f32.mrf.mxu0
    %v1274 = vadd.f32 %v665, %v1273
    %v1275 = vpop.f32.mrf.mxu0
    %v1276 = vadd.f32 %v665, %v1275
    %v1277 = vpop.f32.mrf.mxu0
    %v1278 = vadd.f32 %v670, %v1277
    %v1279 = vpop.f32.mrf.mxu0
    %v1280 = vadd.f32 %v670, %v1279
    %1281 = vmatprep.mubr.bf16.mxu0 0
    %1282 = vmatmul.mubr.bf16.gmra.mxu0 %v1014
    %v1283 = vpop.f32.mrf.mxu0
    %v1284 = vadd.f32 %v675, %v1283
    %v1285 = vpop.f32.mrf.mxu0
    %v1286 = vadd.f32 %v675, %v1285
    %v1287 = vpop.f32.mrf.mxu0
    %v1288 = vadd.f32 %v680, %v1287
    %v1289 = vpop.f32.mrf.mxu0
    %v1290 = vadd.f32 %v680, %v1289
    %1291 = vmatprep.mubr.bf16.mxu0 0
    %1292 = vmatmul.mubr.bf16.gmra.mxu0 %v1017
    %v1293 = vpop.f32.mrf.mxu0
    %v1294 = vadd.f32 %v685, %v1293
    %v1295 = vpop.f32.mrf.mxu0
    %v1296 = vadd.f32 %v685, %v1295
    %v1297 = vpop.f32.mrf.mxu0
    %v1298 = vadd.f32 %v690, %v1297
    %v1299 = vpop.f32.mrf.mxu0
    %v1300 = vadd.f32 %v690, %v1299
    %1301 = vmatprep.mubr.bf16.mxu0 0
    %1302 = vmatmul.mubr.bf16.gmra.mxu0 %v1020
    %v1303 = vpop.f32.mrf.mxu0
    %v1304 = vadd.f32 %v695, %v1303
    %v1305 = vpop.f32.mrf.mxu0
    %v1306 = vadd.f32 %v695, %v1305
    %v1307 = vpop.f32.mrf.mxu0
    %v1308 = vadd.f32 %v700, %v1307
    %v1309 = vpop.f32.mrf.mxu0
    %v1310 = vadd.f32 %v700, %v1309
    %1311 = vmatprep.mubr.bf16.mxu0 0
    %1312 = vmatmul.mubr.bf16.gmra.mxu0 %v1023
    %v1313 = vpop.f32.mrf.mxu0
    %v1314 = vadd.f32 %v705, %v1313
    %v1315 = vpop.f32.mrf.mxu0
    %v1316 = vadd.f32 %v705, %v1315
    %v1317 = vpop.f32.mrf.mxu0
    %v1318 = vadd.f32 %v710, %v1317
    %v1319 = vpop.f32.mrf.mxu0
    %v1320 = vadd.f32 %v710, %v1319
    %1321 = vmatprep.mubr.bf16.mxu0 0
    %1322 = vmatmul.mubr.bf16.gmra.mxu0 %v1026
    %v1323 = vpop.f32.mrf.mxu0
    %v1324 = vadd.f32 %v715, %v1323
    %v1325 = vpop.f32.mrf.mxu0
    %v1326 = vadd.f32 %v715, %v1325
    %v1327 = vpop.f32.mrf.mxu0
    %v1328 = vadd.f32 %v720, %v1327
    %v1329 = vpop.f32.mrf.mxu0
    %v1330 = vadd.f32 %v720, %v1329
    %1331 = vmatprep.mubr.bf16.mxu0 0
    %1332 = vmatmul.mubr.bf16.gmra.mxu0 %v1029
    %v1333 = vpop.f32.mrf.mxu0
    %v1334 = vadd.f32 %v725, %v1333
    %v1335 = vpop.f32.mrf.mxu0
    %v1336 = vadd.f32 %v725, %v1335
    %v1337 = vpop.f32.mrf.mxu0
    %v1338 = vadd.f32 %v730, %v1337
    %v1339 = vpop.f32.mrf.mxu0
    %v1340 = vadd.f32 %v730, %v1339
    %1341 = vmatprep.mubr.bf16.mxu0 0
    %1342 = vmatmul.mubr.bf16.gmra.mxu0 %v1032
    %v1343 = vpop.f32.mrf.mxu0
    %v1344 = vadd.f32 %v735, %v1343
    %v1345 = vpop.f32.mrf.mxu0
    %v1346 = vadd.f32 %v735, %v1345
    %v1347 = vpop.f32.mrf.mxu0
    %v1348 = vadd.f32 %v740, %v1347
    %v1349 = vpop.f32.mrf.mxu0
    %v1350 = vadd.f32 %v740, %v1349
    %1351 = vmatprep.mubr.bf16.mxu0 0
    %1352 = vmatmul.mubr.bf16.gmra.mxu0 %v1035
    %v1353 = vpop.f32.mrf.mxu0
    %v1354 = vadd.f32 %v745, %v1353
    %v1355 = vpop.f32.mrf.mxu0
    %v1356 = vadd.f32 %v745, %v1355
    %v1357 = vpop.f32.mrf.mxu0
    %v1358 = vadd.f32 %v750, %v1357
    %v1359 = vpop.f32.mrf.mxu0
    %v1360 = vadd.f32 %v750, %v1359
    %1361 = vmatprep.mubr.bf16.mxu0 0
    %1362 = vmatmul.mubr.bf16.gmra.mxu0 %v1038
    %v1363 = vpop.f32.mrf.mxu0
    %v1364 = vadd.f32 %v755, %v1363
    %v1365 = vpop.f32.mrf.mxu0
    %v1366 = vadd.f32 %v755, %v1365
    %v1367 = vpop.f32.mrf.mxu0
    %v1368 = vadd.f32 %v760, %v1367
    %v1369 = vpop.f32.mrf.mxu0
    %v1370 = vadd.f32 %v760, %v1369
    %1371 = vmatprep.mubr.bf16.mxu0 0
    %1372 = vmatmul.mubr.bf16.gmra.mxu0 %v1041
    %v1373 = vpop.f32.mrf.mxu0
    %v1374 = vadd.f32 %v765, %v1373
    %v1375 = vpop.f32.mrf.mxu0
    %v1376 = vadd.f32 %v765, %v1375
    %v1377 = vpop.f32.mrf.mxu0
    %v1378 = vadd.f32 %v770, %v1377
    %v1379 = vpop.f32.mrf.mxu0
    %v1380 = vadd.f32 %v770, %v1379
    %1381 = vmatprep.mubr.bf16.mxu0 0
    %1382 = vmatmul.mubr.bf16.gmra.mxu0 %v1044
    %v1383 = vpop.f32.mrf.mxu0
    %v1384 = vadd.f32 %v775, %v1383
    %v1385 = vpop.f32.mrf.mxu0
    %v1386 = vadd.f32 %v775, %v1385
    %v1387 = vpop.f32.mrf.mxu0
    %v1388 = vadd.f32 %v780, %v1387
    %v1389 = vpop.f32.mrf.mxu0
    %v1390 = vadd.f32 %v780, %v1389
    %1391 = vmatprep.mubr.bf16.mxu0 0
    %1392 = vmatmul.mubr.bf16.gmra.mxu0 %v1047
    %v1393 = vpop.f32.mrf.mxu0
    %v1394 = vadd.f32 %v785, %v1393
    %v1395 = vpop.f32.mrf.mxu0
    %v1396 = vadd.f32 %v785, %v1395
    %v1397 = vpop.f32.mrf.mxu0
    %v1398 = vadd.f32 %v790, %v1397
    %v1399 = vpop.f32.mrf.mxu0
    %v1400 = vadd.f32 %v790, %v1399
    %1401 = vdwg.mxu0
    %v1402 = vlaneseq
    %v1403 = vshrl.u32 %v1402, 7
    %v1404 = vadd.s32 %v1403, 8
    %v1405 = vadd.s32 %v1403, 16
    %v1406 = vadd.s32 %v1403, 24
    %v1407 = vadd.s32 %v1403, 32
    %v1408 = vadd.s32 %v1403, 40
    %v1409 = vadd.s32 %v1403, 48
    %v1410 = vadd.s32 %v1403, 56
    %v1411 = vadd.s32 %v1403, 64
    %v1412 = vadd.s32 %v1403, 72
    %v1413 = vadd.s32 %v1403, 80
    %v1414 = vadd.s32 %v1403, 88
    %v1415 = vadd.s32 %v1403, 96
    %v1416 = vadd.s32 %v1403, 104
    %v1417 = vadd.s32 %v1403, 112
    %v1418 = vadd.s32 %v1403, 120
    %v1419 = vadd.s32 %v1403, 128
    %v1420 = vadd.s32 %v1403, 136
    %v1421 = vadd.s32 %v1403, 144
    %v1422 = vadd.s32 %v1403, 152
    %v1423 = vadd.s32 %v1403, 160
    %v1424 = vadd.s32 %v1403, 168
    %v1425 = vadd.s32 %v1403, 176
    %v1426 = vadd.s32 %v1403, 184
    %v1427 = vadd.s32 %v1403, 192
    %v1428 = vadd.s32 %v1403, 200
    %v1429 = vadd.s32 %v1403, 208
    %v1430 = vadd.s32 %v1403, 216
    %v1431 = vadd.s32 %v1403, 224
    %v1432 = vadd.s32 %v1403, 232
    %v1433 = vadd.s32 %v1403, 240
    %v1434 = vadd.s32 %v1403, 248
    %v1435 = vadd.s32 %v1403, 256
    %v1436 = vadd.s32 %v1403, 264
    %v1437 = vadd.s32 %v1403, 272
    %v1438 = vadd.s32 %v1403, 280
    %v1439 = vadd.s32 %v1403, 288
    %v1440 = vadd.s32 %v1403, 296
    %v1441 = vadd.s32 %v1403, 304
    %v1442 = vadd.s32 %v1403, 312
    %v1443 = vadd.s32 %v1403, 320
    %v1444 = vadd.s32 %v1403, 328
    %v1445 = vadd.s32 %v1403, 336
    %v1446 = vadd.s32 %v1403, 344
    %v1447 = vadd.s32 %v1403, 352
    %v1448 = vadd.s32 %v1403, 360
    %v1449 = vadd.s32 %v1403, 368
    %v1450 = vadd.s32 %v1403, 376
    %v1451 = vadd.s32 %v1403, 384
    %v1452 = vadd.s32 %v1403, 392
    %v1453 = vadd.s32 %v1403, 400
    %v1454 = vadd.s32 %v1403, 408
    %v1455 = vadd.s32 %v1403, 416
    %v1456 = vadd.s32 %v1403, 424
    %v1457 = vadd.s32 %v1403, 432
    %v1458 = vadd.s32 %v1403, 440
    %v1459 = vadd.s32 %v1403, 448
    %v1460 = vadd.s32 %v1403, 456
    %v1461 = vadd.s32 %v1403, 464
    %v1462 = vadd.s32 %v1403, 472
    %v1463 = vadd.s32 %v1403, 480
    %v1464 = vadd.s32 %v1403, 488
    %v1465 = vadd.s32 %v1403, 496
    %v1466 = vadd.s32 %v1403, 504
    %s1467 = smul.u32 0, 512
    %v1468 = vstv %s1467
    %v1469 = vadd.s32 %v1403, %v1468
    %v1470 = vadd.s32 %v1404, %v1468
    %v1471 = vadd.s32 %v1405, %v1468
    %v1472 = vadd.s32 %v1406, %v1468
    %v1473 = vadd.s32 %v1407, %v1468
    %v1474 = vadd.s32 %v1408, %v1468
    %v1475 = vadd.s32 %v1409, %v1468
    %v1476 = vadd.s32 %v1410, %v1468
    %v1477 = vadd.s32 %v1411, %v1468
    %v1478 = vadd.s32 %v1412, %v1468
    %v1479 = vadd.s32 %v1413, %v1468
    %v1480 = vadd.s32 %v1414, %v1468
    %v1481 = vadd.s32 %v1415, %v1468
    %v1482 = vadd.s32 %v1416, %v1468
    %v1483 = vadd.s32 %v1417, %v1468
    %v1484 = vadd.s32 %v1418, %v1468
    %v1485 = vadd.s32 %v1419, %v1468
    %v1486 = vadd.s32 %v1420, %v1468
    %v1487 = vadd.s32 %v1421, %v1468
    %v1488 = vadd.s32 %v1422, %v1468
    %v1489 = vadd.s32 %v1423, %v1468
    %v1490 = vadd.s32 %v1424, %v1468
    %v1491 = vadd.s32 %v1425, %v1468
    %v1492 = vadd.s32 %v1426, %v1468
    %v1493 = vadd.s32 %v1427, %v1468
    %v1494 = vadd.s32 %v1428, %v1468
    %v1495 = vadd.s32 %v1429, %v1468
    %v1496 = vadd.s32 %v1430, %v1468
    %v1497 = vadd.s32 %v1431, %v1468
    %v1498 = vadd.s32 %v1432, %v1468
    %v1499 = vadd.s32 %v1433, %v1468
    %v1500 = vadd.s32 %v1434, %v1468
    %v1501 = vadd.s32 %v1435, %v1468
    %v1502 = vadd.s32 %v1436, %v1468
    %v1503 = vadd.s32 %v1437, %v1468
    %v1504 = vadd.s32 %v1438, %v1468
    %v1505 = vadd.s32 %v1439, %v1468
    %v1506 = vadd.s32 %v1440, %v1468
    %v1507 = vadd.s32 %v1441, %v1468
    %v1508 = vadd.s32 %v1442, %v1468
    %v1509 = vadd.s32 %v1443, %v1468
    %v1510 = vadd.s32 %v1444, %v1468
    %v1511 = vadd.s32 %v1445, %v1468
    %v1512 = vadd.s32 %v1446, %v1468
    %v1513 = vadd.s32 %v1447, %v1468
    %v1514 = vadd.s32 %v1448, %v1468
    %v1515 = vadd.s32 %v1449, %v1468
    %v1516 = vadd.s32 %v1450, %v1468
    %v1517 = vadd.s32 %v1451, %v1468
    %v1518 = vadd.s32 %v1452, %v1468
    %v1519 = vadd.s32 %v1453, %v1468
    %v1520 = vadd.s32 %v1454, %v1468
    %v1521 = vadd.s32 %v1455, %v1468
    %v1522 = vadd.s32 %v1456, %v1468
    %v1523 = vadd.s32 %v1457, %v1468
    %v1524 = vadd.s32 %v1458, %v1468
    %v1525 = vadd.s32 %v1459, %v1468
    %v1526 = vadd.s32 %v1460, %v1468
    %v1527 = vadd.s32 %v1461, %v1468
    %v1528 = vadd.s32 %v1462, %v1468
    %v1529 = vadd.s32 %v1463, %v1468
    %v1530 = vadd.s32 %v1464, %v1468
    %v1531 = vadd.s32 %v1465, %v1468
    %v1532 = vadd.s32 %v1466, %v1468
    %v1533 = vld [vmem:[%s5] sm:$0x3]
    %v1534 = vlaneseq
    %v1535 = vshrl.u32 %v1534, 7
    %v1536 = vsub.s32 0, %v1535
    %v1537 = vrot.slane %v1533, %v1536
    %v1538 = vlaneseq
    %v1539 = vshrl.u32 %v1538, 7
    %v1540 = vsub.s32 1, %v1539
    %v1541 = vrot.slane %v1533, %v1540
    %vm1542 = vcmp.eq.s32.totalorder %v1469, %v1537
    %vm1543 = vcmp.eq.s32.totalorder %v1469, %v1541
    %vm1544 = vcmp.eq.s32.totalorder %v1470, %v1537
    %vm1545 = vcmp.eq.s32.totalorder %v1470, %v1541
    %vm1546 = vcmp.eq.s32.totalorder %v1471, %v1537
    %vm1547 = vcmp.eq.s32.totalorder %v1471, %v1541
    %vm1548 = vcmp.eq.s32.totalorder %v1472, %v1537
    %vm1549 = vcmp.eq.s32.totalorder %v1472, %v1541
    %vm1550 = vcmp.eq.s32.totalorder %v1473, %v1537
    %vm1551 = vcmp.eq.s32.totalorder %v1473, %v1541
    %vm1552 = vcmp.eq.s32.totalorder %v1474, %v1537
    %vm1553 = vcmp.eq.s32.totalorder %v1474, %v1541
    %vm1554 = vcmp.eq.s32.totalorder %v1475, %v1537
    %vm1555 = vcmp.eq.s32.totalorder %v1475, %v1541
    %vm1556 = vcmp.eq.s32.totalorder %v1476, %v1537
    %vm1557 = vcmp.eq.s32.totalorder %v1476, %v1541
    %vm1558 = vcmp.eq.s32.totalorder %v1477, %v1537
    %vm1559 = vcmp.eq.s32.totalorder %v1477, %v1541
    %vm1560 = vcmp.eq.s32.totalorder %v1478, %v1537
    %vm1561 = vcmp.eq.s32.totalorder %v1478, %v1541
    %vm1562 = vcmp.eq.s32.totalorder %v1479, %v1537
    %vm1563 = vcmp.eq.s32.totalorder %v1479, %v1541
    %vm1564 = vcmp.eq.s32.totalorder %v1480, %v1537
    %vm1565 = vcmp.eq.s32.totalorder %v1480, %v1541
    %vm1566 = vcmp.eq.s32.totalorder %v1481, %v1537
    %vm1567 = vcmp.eq.s32.totalorder %v1481, %v1541
    %vm1568 = vcmp.eq.s32.totalorder %v1482, %v1537
    %vm1569 = vcmp.eq.s32.totalorder %v1482, %v1541
    %vm1570 = vcmp.eq.s32.totalorder %v1483, %v1537
    %vm1571 = vcmp.eq.s32.totalorder %v1483, %v1541
    %vm1572 = vcmp.eq.s32.totalorder %v1484, %v1537
    %vm1573 = vcmp.eq.s32.totalorder %v1484, %v1541
    %vm1574 = vcmp.eq.s32.totalorder %v1485, %v1537
    %vm1575 = vcmp.eq.s32.totalorder %v1485, %v1541
    %vm1576 = vcmp.eq.s32.totalorder %v1486, %v1537
    %vm1577 = vcmp.eq.s32.totalorder %v1486, %v1541
    %vm1578 = vcmp.eq.s32.totalorder %v1487, %v1537
    %vm1579 = vcmp.eq.s32.totalorder %v1487, %v1541
    %vm1580 = vcmp.eq.s32.totalorder %v1488, %v1537
    %vm1581 = vcmp.eq.s32.totalorder %v1488, %v1541
    %vm1582 = vcmp.eq.s32.totalorder %v1489, %v1537
    %vm1583 = vcmp.eq.s32.totalorder %v1489, %v1541
    %vm1584 = vcmp.eq.s32.totalorder %v1490, %v1537
    %vm1585 = vcmp.eq.s32.totalorder %v1490, %v1541
    %vm1586 = vcmp.eq.s32.totalorder %v1491, %v1537
    %vm1587 = vcmp.eq.s32.totalorder %v1491, %v1541
    %vm1588 = vcmp.eq.s32.totalorder %v1492, %v1537
    %vm1589 = vcmp.eq.s32.totalorder %v1492, %v1541
    %vm1590 = vcmp.eq.s32.totalorder %v1493, %v1537
    %vm1591 = vcmp.eq.s32.totalorder %v1493, %v1541
    %vm1592 = vcmp.eq.s32.totalorder %v1494, %v1537
    %vm1593 = vcmp.eq.s32.totalorder %v1494, %v1541
    %vm1594 = vcmp.eq.s32.totalorder %v1495, %v1537
    %vm1595 = vcmp.eq.s32.totalorder %v1495, %v1541
    %vm1596 = vcmp.eq.s32.totalorder %v1496, %v1537
    %vm1597 = vcmp.eq.s32.totalorder %v1496, %v1541
    %vm1598 = vcmp.eq.s32.totalorder %v1497, %v1537
    %vm1599 = vcmp.eq.s32.totalorder %v1497, %v1541
    %vm1600 = vcmp.eq.s32.totalorder %v1498, %v1537
    %vm1601 = vcmp.eq.s32.totalorder %v1498, %v1541
    %vm1602 = vcmp.eq.s32.totalorder %v1499, %v1537
    %vm1603 = vcmp.eq.s32.totalorder %v1499, %v1541
    %vm1604 = vcmp.eq.s32.totalorder %v1500, %v1537
    %vm1605 = vcmp.eq.s32.totalorder %v1500, %v1541
    %vm1606 = vcmp.eq.s32.totalorder %v1501, %v1537
    %vm1607 = vcmp.eq.s32.totalorder %v1501, %v1541
    %vm1608 = vcmp.eq.s32.totalorder %v1502, %v1537
    %vm1609 = vcmp.eq.s32.totalorder %v1502, %v1541
    %vm1610 = vcmp.eq.s32.totalorder %v1503, %v1537
    %vm1611 = vcmp.eq.s32.totalorder %v1503, %v1541
    %vm1612 = vcmp.eq.s32.totalorder %v1504, %v1537
    %vm1613 = vcmp.eq.s32.totalorder %v1504, %v1541
    %vm1614 = vcmp.eq.s32.totalorder %v1505, %v1537
    %vm1615 = vcmp.eq.s32.totalorder %v1505, %v1541
    %vm1616 = vcmp.eq.s32.totalorder %v1506, %v1537
    %vm1617 = vcmp.eq.s32.totalorder %v1506, %v1541
    %vm1618 = vcmp.eq.s32.totalorder %v1507, %v1537
    %vm1619 = vcmp.eq.s32.totalorder %v1507, %v1541
    %vm1620 = vcmp.eq.s32.totalorder %v1508, %v1537
    %vm1621 = vcmp.eq.s32.totalorder %v1508, %v1541
    %vm1622 = vcmp.eq.s32.totalorder %v1509, %v1537
    %vm1623 = vcmp.eq.s32.totalorder %v1509, %v1541
    %vm1624 = vcmp.eq.s32.totalorder %v1510, %v1537
    %vm1625 = vcmp.eq.s32.totalorder %v1510, %v1541
    %vm1626 = vcmp.eq.s32.totalorder %v1511, %v1537
    %vm1627 = vcmp.eq.s32.totalorder %v1511, %v1541
    %vm1628 = vcmp.eq.s32.totalorder %v1512, %v1537
    %vm1629 = vcmp.eq.s32.totalorder %v1512, %v1541
    %vm1630 = vcmp.eq.s32.totalorder %v1513, %v1537
    %vm1631 = vcmp.eq.s32.totalorder %v1513, %v1541
    %vm1632 = vcmp.eq.s32.totalorder %v1514, %v1537
    %vm1633 = vcmp.eq.s32.totalorder %v1514, %v1541
    %vm1634 = vcmp.eq.s32.totalorder %v1515, %v1537
    %vm1635 = vcmp.eq.s32.totalorder %v1515, %v1541
    %vm1636 = vcmp.eq.s32.totalorder %v1516, %v1537
    %vm1637 = vcmp.eq.s32.totalorder %v1516, %v1541
    %vm1638 = vcmp.eq.s32.totalorder %v1517, %v1537
    %vm1639 = vcmp.eq.s32.totalorder %v1517, %v1541
    %vm1640 = vcmp.eq.s32.totalorder %v1518, %v1537
    %vm1641 = vcmp.eq.s32.totalorder %v1518, %v1541
    %vm1642 = vcmp.eq.s32.totalorder %v1519, %v1537
    %vm1643 = vcmp.eq.s32.totalorder %v1519, %v1541
    %vm1644 = vcmp.eq.s32.totalorder %v1520, %v1537
    %vm1645 = vcmp.eq.s32.totalorder %v1520, %v1541
    %vm1646 = vcmp.eq.s32.totalorder %v1521, %v1537
    %vm1647 = vcmp.eq.s32.totalorder %v1521, %v1541
    %vm1648 = vcmp.eq.s32.totalorder %v1522, %v1537
    %vm1649 = vcmp.eq.s32.totalorder %v1522, %v1541
    %vm1650 = vcmp.eq.s32.totalorder %v1523, %v1537
    %vm1651 = vcmp.eq.s32.totalorder %v1523, %v1541
    %vm1652 = vcmp.eq.s32.totalorder %v1524, %v1537
    %vm1653 = vcmp.eq.s32.totalorder %v1524, %v1541
    %vm1654 = vcmp.eq.s32.totalorder %v1525, %v1537
    %vm1655 = vcmp.eq.s32.totalorder %v1525, %v1541
    %vm1656 = vcmp.eq.s32.totalorder %v1526, %v1537
    %vm1657 = vcmp.eq.s32.totalorder %v1526, %v1541
    %vm1658 = vcmp.eq.s32.totalorder %v1527, %v1537
    %vm1659 = vcmp.eq.s32.totalorder %v1527, %v1541
    %vm1660 = vcmp.eq.s32.totalorder %v1528, %v1537
    %vm1661 = vcmp.eq.s32.totalorder %v1528, %v1541
    %vm1662 = vcmp.eq.s32.totalorder %v1529, %v1537
    %vm1663 = vcmp.eq.s32.totalorder %v1529, %v1541
    %vm1664 = vcmp.eq.s32.totalorder %v1530, %v1537
    %vm1665 = vcmp.eq.s32.totalorder %v1530, %v1541
    %vm1666 = vcmp.eq.s32.totalorder %v1531, %v1537
    %vm1667 = vcmp.eq.s32.totalorder %v1531, %v1541
    %vm1668 = vcmp.eq.s32.totalorder %v1532, %v1537
    %vm1669 = vcmp.eq.s32.totalorder %v1532, %v1541
    %v1670 = vld [vmem:[#allocation5] sm:$0x3]
    %v1671 = vsel %vm1542, %v1084, 0.0
    %v1672 = vsel %vm1543, %v1086, 0.0
    %v1673 = vsel %vm1544, %v1088, 0.0
    %v1674 = vsel %vm1545, %v1090, 0.0
    %v1675 = vsel %vm1546, %v1094, 0.0
    %v1676 = vsel %vm1547, %v1096, 0.0
    %v1677 = vsel %vm1548, %v1098, 0.0
    %v1678 = vsel %vm1549, %v1100, 0.0
    %v1679 = vsel %vm1550, %v1104, 0.0
    %v1680 = vsel %vm1551, %v1106, 0.0
    %v1681 = vsel %vm1552, %v1108, 0.0
    %v1682 = vsel %vm1553, %v1110, 0.0
    %v1683 = vsel %vm1554, %v1114, 0.0
    %v1684 = vsel %vm1555, %v1116, 0.0
    %v1685 = vsel %vm1556, %v1118, 0.0
    %v1686 = vsel %vm1557, %v1120, 0.0
    %v1687 = vsel %vm1558, %v1124, 0.0
    %v1688 = vsel %vm1559, %v1126, 0.0
    %v1689 = vsel %vm1560, %v1128, 0.0
    %v1690 = vsel %vm1561, %v1130, 0.0
    %v1691 = vsel %vm1562, %v1134, 0.0
    %v1692 = vsel %vm1563, %v1136, 0.0
    %v1693 = vsel %vm1564, %v1138, 0.0
    %v1694 = vsel %vm1565, %v1140, 0.0
    %v1695 = vsel %vm1566, %v1144, 0.0
    %v1696 = vsel %vm1567, %v1146, 0.0
    %v1697 = vsel %vm1568, %v1148, 0.0
    %v1698 = vsel %vm1569, %v1150, 0.0
    %v1699 = vsel %vm1570, %v1154, 0.0
    %v1700 = vsel %vm1571, %v1156, 0.0
    %v1701 = vsel %vm1572, %v1158, 0.0
    %v1702 = vsel %vm1573, %v1160, 0.0
    %v1703 = vsel %vm1574, %v1164, 0.0
    %v1704 = vsel %vm1575, %v1166, 0.0
    %v1705 = vsel %vm1576, %v1168, 0.0
    %v1706 = vsel %vm1577, %v1170, 0.0
    %v1707 = vsel %vm1578, %v1174, 0.0
    %v1708 = vsel %vm1579, %v1176, 0.0
    %v1709 = vsel %vm1580, %v1178, 0.0
    %v1710 = vsel %vm1581, %v1180, 0.0
    %v1711 = vsel %vm1582, %v1184, 0.0
    %v1712 = vsel %vm1583, %v1186, 0.0
    %v1713 = vsel %vm1584, %v1188, 0.0
    %v1714 = vsel %vm1585, %v1190, 0.0
    %v1715 = vsel %vm1586, %v1194, 0.0
    %v1716 = vsel %vm1587, %v1196, 0.0
    %v1717 = vsel %vm1588, %v1198, 0.0
    %v1718 = vsel %vm1589, %v1200, 0.0
    %v1719 = vsel %vm1590, %v1204, 0.0
    %v1720 = vsel %vm1591, %v1206, 0.0
    %v1721 = vsel %vm1592, %v1208, 0.0
    %v1722 = vsel %vm1593, %v1210, 0.0
    %v1723 = vsel %vm1594, %v1214, 0.0
    %v1724 = vsel %vm1595, %v1216, 0.0
    %v1725 = vsel %vm1596, %v1218, 0.0
    %v1726 = vsel %vm1597, %v1220, 0.0
    %v1727 = vsel %vm1598, %v1224, 0.0
    %v1728 = vsel %vm1599, %v1226, 0.0
    %v1729 = vsel %vm1600, %v1228, 0.0
    %v1730 = vsel %vm1601, %v1230, 0.0
    %v1731 = vsel %vm1602, %v1234, 0.0
    %v1732 = vsel %vm1603, %v1236, 0.0
    %v1733 = vsel %vm1604, %v1238, 0.0
    %v1734 = vsel %vm1605, %v1240, 0.0
    %v1735 = vsel %vm1606, %v1244, 0.0
    %v1736 = vsel %vm1607, %v1246, 0.0
    %v1737 = vsel %vm1608, %v1248, 0.0
    %v1738 = vsel %vm1609, %v1250, 0.0
    %v1739 = vsel %vm1610, %v1254, 0.0
    %v1740 = vsel %vm1611, %v1256, 0.0
    %v1741 = vsel %vm1612, %v1258, 0.0
    %v1742 = vsel %vm1613, %v1260, 0.0
    %v1743 = vsel %vm1614, %v1264, 0.0
    %v1744 = vsel %vm1615, %v1266, 0.0
    %v1745 = vsel %vm1616, %v1268, 0.0
    %v1746 = vsel %vm1617, %v1270, 0.0
    %v1747 = vsel %vm1618, %v1274, 0.0
    %v1748 = vsel %vm1619, %v1276, 0.0
    %v1749 = vsel %vm1620, %v1278, 0.0
    %v1750 = vsel %vm1621, %v1280, 0.0
    %v1751 = vsel %vm1622, %v1284, 0.0
    %v1752 = vsel %vm1623, %v1286, 0.0
    %v1753 = vsel %vm1624, %v1288, 0.0
    %v1754 = vsel %vm1625, %v1290, 0.0
    %v1755 = vsel %vm1626, %v1294, 0.0
    %v1756 = vsel %vm1627, %v1296, 0.0
    %v1757 = vsel %vm1628, %v1298, 0.0
    %v1758 = vsel %vm1629, %v1300, 0.0
    %v1759 = vsel %vm1630, %v1304, 0.0
    %v1760 = vsel %vm1631, %v1306, 0.0
    %v1761 = vsel %vm1632, %v1308, 0.0
    %v1762 = vsel %vm1633, %v1310, 0.0
    %v1763 = vsel %vm1634, %v1314, 0.0
    %v1764 = vsel %vm1635, %v1316, 0.0
    %v1765 = vsel %vm1636, %v1318, 0.0
    %v1766 = vsel %vm1637, %v1320, 0.0
    %v1767 = vsel %vm1638, %v1324, 0.0
    %v1768 = vsel %vm1639, %v1326, 0.0
    %v1769 = vsel %vm1640, %v1328, 0.0
    %v1770 = vsel %vm1641, %v1330, 0.0
    %v1771 = vsel %vm1642, %v1334, 0.0
    %v1772 = vsel %vm1643, %v1336, 0.0
    %v1773 = vsel %vm1644, %v1338, 0.0
    %v1774 = vsel %vm1645, %v1340, 0.0
    %v1775 = vsel %vm1646, %v1344, 0.0
    %v1776 = vsel %vm1647, %v1346, 0.0
    %v1777 = vsel %vm1648, %v1348, 0.0
    %v1778 = vsel %vm1649, %v1350, 0.0
    %v1779 = vsel %vm1650, %v1354, 0.0
    %v1780 = vsel %vm1651, %v1356, 0.0
    %v1781 = vsel %vm1652, %v1358, 0.0
    %v1782 = vsel %vm1653, %v1360, 0.0
    %v1783 = vsel %vm1654, %v1364, 0.0
    %v1784 = vsel %vm1655, %v1366, 0.0
    %v1785 = vsel %vm1656, %v1368, 0.0
    %v1786 = vsel %vm1657, %v1370, 0.0
    %v1787 = vsel %vm1658, %v1374, 0.0
    %v1788 = vsel %vm1659, %v1376, 0.0
    %v1789 = vsel %vm1660, %v1378, 0.0
    %v1790 = vsel %vm1661, %v1380, 0.0
    %v1791 = vsel %vm1662, %v1384, 0.0
    %v1792 = vsel %vm1663, %v1386, 0.0
    %v1793 = vsel %vm1664, %v1388, 0.0
    %v1794 = vsel %vm1665, %v1390, 0.0
    %v1795 = vsel %vm1666, %v1394, 0.0
    %v1796 = vsel %vm1667, %v1396, 0.0
    %v1797 = vsel %vm1668, %v1398, 0.0
    %v1798 = vsel %vm1669, %v1400, 0.0
    %v1799 = vadd.f32 %v1671, %v1673
    %v1800 = vadd.f32 %v1799, %v1675
    %v1801 = vadd.f32 %v1800, %v1677
    %v1802 = vadd.f32 %v1801, %v1679
    %v1803 = vadd.f32 %v1802, %v1681
    %v1804 = vadd.f32 %v1803, %v1683
    %v1805 = vadd.f32 %v1804, %v1685
    %v1806 = vadd.f32 %v1805, %v1687
    %v1807 = vadd.f32 %v1806, %v1689
    %v1808 = vadd.f32 %v1807, %v1691
    %v1809 = vadd.f32 %v1808, %v1693
    %v1810 = vadd.f32 %v1809, %v1695
    %v1811 = vadd.f32 %v1810, %v1697
    %v1812 = vadd.f32 %v1811, %v1699
    %v1813 = vadd.f32 %v1812, %v1701
    %v1814 = vadd.f32 %v1813, %v1703
    %v1815 = vadd.f32 %v1814, %v1705
    %v1816 = vadd.f32 %v1815, %v1707
    %v1817 = vadd.f32 %v1816, %v1709
    %v1818 = vadd.f32 %v1817, %v1711
    %v1819 = vadd.f32 %v1818, %v1713
    %v1820 = vadd.f32 %v1819, %v1715
    %v1821 = vadd.f32 %v1820, %v1717
    %v1822 = vadd.f32 %v1821, %v1719
    %v1823 = vadd.f32 %v1822, %v1721
    %v1824 = vadd.f32 %v1823, %v1723
    %v1825 = vadd.f32 %v1824, %v1725
    %v1826 = vadd.f32 %v1825, %v1727
    %v1827 = vadd.f32 %v1826, %v1729
    %v1828 = vadd.f32 %v1827, %v1731
    %v1829 = vadd.f32 %v1828, %v1733
    %v1830 = vadd.f32 %v1829, %v1735
    %v1831 = vadd.f32 %v1830, %v1737
    %v1832 = vadd.f32 %v1831, %v1739
    %v1833 = vadd.f32 %v1832, %v1741
    %v1834 = vadd.f32 %v1833, %v1743
    %v1835 = vadd.f32 %v1834, %v1745
    %v1836 = vadd.f32 %v1835, %v1747
    %v1837 = vadd.f32 %v1836, %v1749
    %v1838 = vadd.f32 %v1837, %v1751
    %v1839 = vadd.f32 %v1838, %v1753
    %v1840 = vadd.f32 %v1839, %v1755
    %v1841 = vadd.f32 %v1840, %v1757
    %v1842 = vadd.f32 %v1841, %v1759
    %v1843 = vadd.f32 %v1842, %v1761
    %v1844 = vadd.f32 %v1843, %v1763
    %v1845 = vadd.f32 %v1844, %v1765
    %v1846 = vadd.f32 %v1845, %v1767
    %v1847 = vadd.f32 %v1846, %v1769
    %v1848 = vadd.f32 %v1847, %v1771
    %v1849 = vadd.f32 %v1848, %v1773
    %v1850 = vadd.f32 %v1849, %v1775
    %v1851 = vadd.f32 %v1850, %v1777
    %v1852 = vadd.f32 %v1851, %v1779
    %v1853 = vadd.f32 %v1852, %v1781
    %v1854 = vadd.f32 %v1853, %v1783
    %v1855 = vadd.f32 %v1854, %v1785
    %v1856 = vadd.f32 %v1855, %v1787
    %v1857 = vadd.f32 %v1856, %v1789
    %v1858 = vadd.f32 %v1857, %v1791
    %v1859 = vadd.f32 %v1858, %v1793
    %v1860 = vadd.f32 %v1859, %v1795
    %v1861 = vadd.f32 %v1860, %v1797
    %v1862 = vrot.slane %v1861, 4
    %v1863 = vadd.f32 %v1861, %v1862
    %v1864 = vrot.slane %v1863, 2
    %v1865 = vadd.f32 %v1863, %v1864
    %v1866 = vrot.slane %v1865, 1
    %v1867 = vadd.f32 %v1865, %v1866
    %v1868 = vadd.f32 %v1672, %v1674
    %v1869 = vadd.f32 %v1868, %v1676
    %v1870 = vadd.f32 %v1869, %v1678
    %v1871 = vadd.f32 %v1870, %v1680
    %v1872 = vadd.f32 %v1871, %v1682
    %v1873 = vadd.f32 %v1872, %v1684
    %v1874 = vadd.f32 %v1873, %v1686
    %v1875 = vadd.f32 %v1874, %v1688
    %v1876 = vadd.f32 %v1875, %v1690
    %v1877 = vadd.f32 %v1876, %v1692
    %v1878 = vadd.f32 %v1877, %v1694
    %v1879 = vadd.f32 %v1878, %v1696
    %v1880 = vadd.f32 %v1879, %v1698
    %v1881 = vadd.f32 %v1880, %v1700
    %v1882 = vadd.f32 %v1881, %v1702
    %v1883 = vadd.f32 %v1882, %v1704
    %v1884 = vadd.f32 %v1883, %v1706
    %v1885 = vadd.f32 %v1884, %v1708
    %v1886 = vadd.f32 %v1885, %v1710
    %v1887 = vadd.f32 %v1886, %v1712
    %v1888 = vadd.f32 %v1887, %v1714
    %v1889 = vadd.f32 %v1888, %v1716
    %v1890 = vadd.f32 %v1889, %v1718
    %v1891 = vadd.f32 %v1890, %v1720
    %v1892 = vadd.f32 %v1891, %v1722
    %v1893 = vadd.f32 %v1892, %v1724
    %v1894 = vadd.f32 %v1893, %v1726
    %v1895 = vadd.f32 %v1894, %v1728
    %v1896 = vadd.f32 %v1895, %v1730
    %v1897 = vadd.f32 %v1896, %v1732
    %v1898 = vadd.f32 %v1897, %v1734
    %v1899 = vadd.f32 %v1898, %v1736
    %v1900 = vadd.f32 %v1899, %v1738
    %v1901 = vadd.f32 %v1900, %v1740
    %v1902 = vadd.f32 %v1901, %v1742
    %v1903 = vadd.f32 %v1902, %v1744
    %v1904 = vadd.f32 %v1903, %v1746
    %v1905 = vadd.f32 %v1904, %v1748
    %v1906 = vadd.f32 %v1905, %v1750
    %v1907 = vadd.f32 %v1906, %v1752
    %v1908 = vadd.f32 %v1907, %v1754
    %v1909 = vadd.f32 %v1908, %v1756
    %v1910 = vadd.f32 %v1909, %v1758
    %v1911 = vadd.f32 %v1910, %v1760
    %v1912 = vadd.f32 %v1911, %v1762
    %v1913 = vadd.f32 %v1912, %v1764
    %v1914 = vadd.f32 %v1913, %v1766
    %v1915 = vadd.f32 %v1914, %v1768
    %v1916 = vadd.f32 %v1915, %v1770
    %v1917 = vadd.f32 %v1916, %v1772
    %v1918 = vadd.f32 %v1917, %v1774
    %v1919 = vadd.f32 %v1918, %v1776
    %v1920 = vadd.f32 %v1919, %v1778
    %v1921 = vadd.f32 %v1920, %v1780
    %v1922 = vadd.f32 %v1921, %v1782
    %v1923 = vadd.f32 %v1922, %v1784
    %v1924 = vadd.f32 %v1923, %v1786
    %v1925 = vadd.f32 %v1924, %v1788
    %v1926 = vadd.f32 %v1925, %v1790
    %v1927 = vadd.f32 %v1926, %v1792
    %v1928 = vadd.f32 %v1927, %v1794
    %v1929 = vadd.f32 %v1928, %v1796
    %v1930 = vadd.f32 %v1929, %v1798
    %v1931 = vrot.slane %v1930, 4
    %v1932 = vadd.f32 %v1930, %v1931
    %v1933 = vrot.slane %v1932, 2
    %v1934 = vadd.f32 %v1932, %v1933
    %v1935 = vrot.slane %v1934, 1
    %v1936 = vadd.f32 %v1934, %v1935
    %v1939 = vcombine.low %v1867, %v1936
    %v1941 = vunpack.c.l.s4 1966171168
    %v1942 = vunpack.c.0.s8 %v1941
    %v1943 = vlaneseq
    %v1944 = vshrl.u32 %v1943, 7
    %v1945 = vsub.s32 %v1942, %v1944
    %v1946 = vrot.slane %v1939, %v1945
    %v1948 = vunpack.c.l.s4 1966171168
    %v1949 = vunpack.c.0.s8 %v1948
    %v1950 = vlaneseq
    %v1951 = vshrl.u32 %v1950, 7
    %v1952 = vsub.s32 %v1949, %v1951
    %v1953 = vrot.slane %v1946, %v1952
    %v1955 = vadd.f32 %v1670, %v1953
    %v1956 = vlaneseq
    %vm1957 = vcmp.ge.s32.totalorder %v1956, 0
    %vm1958 = vcmp.lt.s32.totalorder %v1956, 256
    %vm1959 = vmand %vm1957, %vm1958
    %1960 = vst.msk [vmem:[#allocation5] sm:$0x3] %vm1959, %v1955
    %v1961 = vld [vmem:[#allocation3] sm:$0x3]
    %v1962 = vmax.f32 %v1084, %v1094
    %v1963 = vmax.f32 %v1088, %v1098
    %v1964 = vmax.f32 %v1962, %v1104
    %v1965 = vmax.f32 %v1963, %v1108
    %v1966 = vmax.f32 %v1964, %v1114
    %v1967 = vmax.f32 %v1965, %v1118
    %v1968 = vmax.f32 %v1966, %v1124
    %v1969 = vmax.f32 %v1967, %v1128
    %v1970 = vmax.f32 %v1968, %v1134
    %v1971 = vmax.f32 %v1969, %v1138
    %v1972 = vmax.f32 %v1970, %v1144
    %v1973 = vmax.f32 %v1971, %v1148
    %v1974 = vmax.f32 %v1972, %v1154
    %v1975 = vmax.f32 %v1973, %v1158
    %v1976 = vmax.f32 %v1974, %v1164
    %v1977 = vmax.f32 %v1975, %v1168
    %v1978 = vmax.f32 %v1976, %v1174
    %v1979 = vmax.f32 %v1977, %v1178
    %v1980 = vmax.f32 %v1978, %v1184
    %v1981 = vmax.f32 %v1979, %v1188
    %v1982 = vmax.f32 %v1980, %v1194
    %v1983 = vmax.f32 %v1981, %v1198
    %v1984 = vmax.f32 %v1982, %v1204
    %v1985 = vmax.f32 %v1983, %v1208
    %v1986 = vmax.f32 %v1984, %v1214
    %v1987 = vmax.f32 %v1985, %v1218
    %v1988 = vmax.f32 %v1986, %v1224
    %v1989 = vmax.f32 %v1987, %v1228
    %v1990 = vmax.f32 %v1988, %v1234
    %v1991 = vmax.f32 %v1989, %v1238
    %v1992 = vmax.f32 %v1990, %v1244
    %v1993 = vmax.f32 %v1991, %v1248
    %v1994 = vmax.f32 %v1992, %v1254
    %v1995 = vmax.f32 %v1993, %v1258
    %v1996 = vmax.f32 %v1994, %v1264
    %v1997 = vmax.f32 %v1995, %v1268
    %v1998 = vmax.f32 %v1996, %v1274
    %v1999 = vmax.f32 %v1997, %v1278
    %v2000 = vmax.f32 %v1998, %v1284
    %v2001 = vmax.f32 %v1999, %v1288
    %v2002 = vmax.f32 %v2000, %v1294
    %v2003 = vmax.f32 %v2001, %v1298
    %v2004 = vmax.f32 %v2002, %v1304
    %v2005 = vmax.f32 %v2003, %v1308
    %v2006 = vmax.f32 %v2004, %v1314
    %v2007 = vmax.f32 %v2005, %v1318
    %v2008 = vmax.f32 %v2006, %v1324
    %v2009 = vmax.f32 %v2007, %v1328
    %v2010 = vmax.f32 %v2008, %v1334
    %v2011 = vmax.f32 %v2009, %v1338
    %v2012 = vmax.f32 %v2010, %v1344
    %v2013 = vmax.f32 %v2011, %v1348
    %v2014 = vmax.f32 %v2012, %v1354
    %v2015 = vmax.f32 %v2013, %v1358
    %v2016 = vmax.f32 %v2014, %v1364
    %v2017 = vmax.f32 %v2015, %v1368
    %v2018 = vmax.f32 %v2016, %v1374
    %v2019 = vmax.f32 %v2017, %v1378
    %v2020 = vmax.f32 %v2018, %v1384
    %v2021 = vmax.f32 %v2019, %v1388
    %v2022 = vmax.f32 %v2020, %v1394
    %v2023 = vmax.f32 %v2021, %v1398
    %v2024 = vmax.f32 %v2022, %v2023
    %v2025 = vrot.slane %v2024, 4
    %v2026 = vmax.f32 %v2024, %v2025
    %v2027 = vrot.slane %v2026, 2
    %v2028 = vmax.f32 %v2026, %v2027
    %v2029 = vrot.slane %v2028, 1
    %v2030 = vmax.f32 %v2028, %v2029
    %v2031 = vmax.f32 %v1086, %v1096
    %v2032 = vmax.f32 %v1090, %v1100
    %v2033 = vmax.f32 %v2031, %v1106
    %v2034 = vmax.f32 %v2032, %v1110
    %v2035 = vmax.f32 %v2033, %v1116
    %v2036 = vmax.f32 %v2034, %v1120
    %v2037 = vmax.f32 %v2035, %v1126
    %v2038 = vmax.f32 %v2036, %v1130
    %v2039 = vmax.f32 %v2037, %v1136
    %v2040 = vmax.f32 %v2038, %v1140
    %v2041 = vmax.f32 %v2039, %v1146
    %v2042 = vmax.f32 %v2040, %v1150
    %v2043 = vmax.f32 %v2041, %v1156
    %v2044 = vmax.f32 %v2042, %v1160
    %v2045 = vmax.f32 %v2043, %v1166
    %v2046 = vmax.f32 %v2044, %v1170
    %v2047 = vmax.f32 %v2045, %v1176
    %v2048 = vmax.f32 %v2046, %v1180
    %v2049 = vmax.f32 %v2047, %v1186
    %v2050 = vmax.f32 %v2048, %v1190
    %v2051 = vmax.f32 %v2049, %v1196
    %v2052 = vmax.f32 %v2050, %v1200
    %v2053 = vmax.f32 %v2051, %v1206
    %v2054 = vmax.f32 %v2052, %v1210
    %v2055 = vmax.f32 %v2053, %v1216
    %v2056 = vmax.f32 %v2054, %v1220
    %v2057 = vmax.f32 %v2055, %v1226
    %v2058 = vmax.f32 %v2056, %v1230
    %v2059 = vmax.f32 %v2057, %v1236
    %v2060 = vmax.f32 %v2058, %v1240
    %v2061 = vmax.f32 %v2059, %v1246
    %v2062 = vmax.f32 %v2060, %v1250
    %v2063 = vmax.f32 %v2061, %v1256
    %v2064 = vmax.f32 %v2062, %v1260
    %v2065 = vmax.f32 %v2063, %v1266
    %v2066 = vmax.f32 %v2064, %v1270
    %v2067 = vmax.f32 %v2065, %v1276
    %v2068 = vmax.f32 %v2066, %v1280
    %v2069 = vmax.f32 %v2067, %v1286
    %v2070 = vmax.f32 %v2068, %v1290
    %v2071 = vmax.f32 %v2069, %v1296
    %v2072 = vmax.f32 %v2070, %v1300
    %v2073 = vmax.f32 %v2071, %v1306
    %v2074 = vmax.f32 %v2072, %v1310
    %v2075 = vmax.f32 %v2073, %v1316
    %v2076 = vmax.f32 %v2074, %v1320
    %v2077 = vmax.f32 %v2075, %v1326
    %v2078 = vmax.f32 %v2076, %v1330
    %v2079 = vmax.f32 %v2077, %v1336
    %v2080 = vmax.f32 %v2078, %v1340
    %v2081 = vmax.f32 %v2079, %v1346
    %v2082 = vmax.f32 %v2080, %v1350
    %v2083 = vmax.f32 %v2081, %v1356
    %v2084 = vmax.f32 %v2082, %v1360
    %v2085 = vmax.f32 %v2083, %v1366
    %v2086 = vmax.f32 %v2084, %v1370
    %v2087 = vmax.f32 %v2085, %v1376
    %v2088 = vmax.f32 %v2086, %v1380
    %v2089 = vmax.f32 %v2087, %v1386
    %v2090 = vmax.f32 %v2088, %v1390
    %v2091 = vmax.f32 %v2089, %v1396
    %v2092 = vmax.f32 %v2090, %v1400
    %v2093 = vmax.f32 %v2091, %v2092
    %v2094 = vrot.slane %v2093, 4
    %v2095 = vmax.f32 %v2093, %v2094
    %v2096 = vrot.slane %v2095, 2
    %v2097 = vmax.f32 %v2095, %v2096
    %v2098 = vrot.slane %v2097, 1
    %v2099 = vmax.f32 %v2097, %v2098
    %v2102 = vcombine.low %v2030, %v2099
    %v2104 = vunpack.c.l.s4 1966171168
    %v2105 = vunpack.c.0.s8 %v2104
    %v2106 = vlaneseq
    %v2107 = vshrl.u32 %v2106, 7
    %v2108 = vsub.s32 %v2105, %v2107
    %v2109 = vrot.slane %v2102, %v2108
    %v2111 = vunpack.c.l.s4 1966171168
    %v2112 = vunpack.c.0.s8 %v2111
    %v2113 = vlaneseq
    %v2114 = vshrl.u32 %v2113, 7
    %v2115 = vsub.s32 %v2112, %v2114
    %v2116 = vrot.slane %v2109, %v2115
    %v2118 = vmax.f32 %v1961, %v2116
    %v2119 = vld [vmem:[#allocation4] sm:$0x3]
    %v2120 = vsub.f32 %v1961, %v2118
    %v2121 = vmul.f32 %v2120, 1.442695
    %v2122 = vpow.pop %v2121
    %v2123 = vmul.f32 %v2119, %v2122
    %v2125 = vlaneseq
    %v2126 = vshrl.u32 %v2125, 7
    %v2127 = vsub.s32 0, %v2126
    %v2128 = vrot.slane %v2118, %v2127
    %v2129 = vlaneseq
    %v2130 = vshrl.u32 %v2129, 7
    %v2131 = vsub.s32 1, %v2130
    %v2132 = vrot.slane %v2118, %v2131
    %v2135 = vsub.f32 %v1084, %v2128
    %v2136 = vsub.f32 %v1086, %v2132
    %v2137 = vsub.f32 %v1088, %v2128
    %v2138 = vsub.f32 %v1090, %v2132
    %v2139 = vsub.f32 %v1094, %v2128
    %v2140 = vsub.f32 %v1096, %v2132
    %v2141 = vsub.f32 %v1098, %v2128
    %v2142 = vsub.f32 %v1100, %v2132
    %v2143 = vsub.f32 %v1104, %v2128
    %v2144 = vsub.f32 %v1106, %v2132
    %v2145 = vsub.f32 %v1108, %v2128
    %v2146 = vsub.f32 %v1110, %v2132
    %v2147 = vsub.f32 %v1114, %v2128
    %v2148 = vsub.f32 %v1116, %v2132
    %v2149 = vsub.f32 %v1118, %v2128
    %v2150 = vsub.f32 %v1120, %v2132
    %v2151 = vsub.f32 %v1124, %v2128
    %v2152 = vsub.f32 %v1126, %v2132
    %v2153 = vsub.f32 %v1128, %v2128
    %v2154 = vsub.f32 %v1130, %v2132
    %v2155 = vsub.f32 %v1134, %v2128
    %v2156 = vsub.f32 %v1136, %v2132
    %v2157 = vsub.f32 %v1138, %v2128
    %v2158 = vsub.f32 %v1140, %v2132
    %v2159 = vsub.f32 %v1144, %v2128
    %v2160 = vsub.f32 %v1146, %v2132
    %v2161 = vsub.f32 %v1148, %v2128
    %v2162 = vsub.f32 %v1150, %v2132
    %v2163 = vsub.f32 %v1154, %v2128
    %v2164 = vsub.f32 %v1156, %v2132
    %v2165 = vsub.f32 %v1158, %v2128
    %v2166 = vsub.f32 %v1160, %v2132
    %v2167 = vsub.f32 %v1164, %v2128
    %v2168 = vsub.f32 %v1166, %v2132
    %v2169 = vsub.f32 %v1168, %v2128
    %v2170 = vsub.f32 %v1170, %v2132
    %v2171 = vsub.f32 %v1174, %v2128
    %v2172 = vsub.f32 %v1176, %v2132
    %v2173 = vsub.f32 %v1178, %v2128
    %v2174 = vsub.f32 %v1180, %v2132
    %v2175 = vsub.f32 %v1184, %v2128
    %v2176 = vsub.f32 %v1186, %v2132
    %v2177 = vsub.f32 %v1188, %v2128
    %v2178 = vsub.f32 %v1190, %v2132
    %v2179 = vsub.f32 %v1194, %v2128
    %v2180 = vsub.f32 %v1196, %v2132
    %v2181 = vsub.f32 %v1198, %v2128
    %v2182 = vsub.f32 %v1200, %v2132
    %v2183 = vsub.f32 %v1204, %v2128
    %v2184 = vsub.f32 %v1206, %v2132
    %v2185 = vsub.f32 %v1208, %v2128
    %v2186 = vsub.f32 %v1210, %v2132
    %v2187 = vsub.f32 %v1214, %v2128
    %v2188 = vsub.f32 %v1216, %v2132
    %v2189 = vsub.f32 %v1218, %v2128
    %v2190 = vsub.f32 %v1220, %v2132
    %v2191 = vsub.f32 %v1224, %v2128
    %v2192 = vsub.f32 %v1226, %v2132
    %v2193 = vsub.f32 %v1228, %v2128
    %v2194 = vsub.f32 %v1230, %v2132
    %v2195 = vsub.f32 %v1234, %v2128
    %v2196 = vsub.f32 %v1236, %v2132
    %v2197 = vsub.f32 %v1238, %v2128
    %v2198 = vsub.f32 %v1240, %v2132
    %v2199 = vsub.f32 %v1244, %v2128
    %v2200 = vsub.f32 %v1246, %v2132
    %v2201 = vsub.f32 %v1248, %v2128
    %v2202 = vsub.f32 %v1250, %v2132
    %v2203 = vsub.f32 %v1254, %v2128
    %v2204 = vsub.f32 %v1256, %v2132
    %v2205 = vsub.f32 %v1258, %v2128
    %v2206 = vsub.f32 %v1260, %v2132
    %v2207 = vsub.f32 %v1264, %v2128
    %v2208 = vsub.f32 %v1266, %v2132
    %v2209 = vsub.f32 %v1268, %v2128
    %v2210 = vsub.f32 %v1270, %v2132
    %v2211 = vsub.f32 %v1274, %v2128
    %v2212 = vsub.f32 %v1276, %v2132
    %v2213 = vsub.f32 %v1278, %v2128
    %v2214 = vsub.f32 %v1280, %v2132
    %v2215 = vsub.f32 %v1284, %v2128
    %v2216 = vsub.f32 %v1286, %v2132
    %v2217 = vsub.f32 %v1288, %v2128
    %v2218 = vsub.f32 %v1290, %v2132
    %v2219 = vsub.f32 %v1294, %v2128
    %v2220 = vsub.f32 %v1296, %v2132
    %v2221 = vsub.f32 %v1298, %v2128
    %v2222 = vsub.f32 %v1300, %v2132
    %v2223 = vsub.f32 %v1304, %v2128
    %v2224 = vsub.f32 %v1306, %v2132
    %v2225 = vsub.f32 %v1308, %v2128
    %v2226 = vsub.f32 %v1310, %v2132
    %v2227 = vsub.f32 %v1314, %v2128
    %v2228 = vsub.f32 %v1316, %v2132
    %v2229 = vsub.f32 %v1318, %v2128
    %v2230 = vsub.f32 %v1320, %v2132
    %v2231 = vsub.f32 %v1324, %v2128
    %v2232 = vsub.f32 %v1326, %v2132
    %v2233 = vsub.f32 %v1328, %v2128
    %v2234 = vsub.f32 %v1330, %v2132
    %v2235 = vsub.f32 %v1334, %v2128
    %v2236 = vsub.f32 %v1336, %v2132
    %v2237 = vsub.f32 %v1338, %v2128
    %v2238 = vsub.f32 %v1340, %v2132
    %v2239 = vsub.f32 %v1344, %v2128
    %v2240 = vsub.f32 %v1346, %v2132
    %v2241 = vsub.f32 %v1348, %v2128
    %v2242 = vsub.f32 %v1350, %v2132
    %v2243 = vsub.f32 %v1354, %v2128
    %v2244 = vsub.f32 %v1356, %v2132
    %v2245 = vsub.f32 %v1358, %v2128
    %v2246 = vsub.f32 %v1360, %v2132
    %v2247 = vsub.f32 %v1364, %v2128
    %v2248 = vsub.f32 %v1366, %v2132
    %v2249 = vsub.f32 %v1368, %v2128
    %v2250 = vsub.f32 %v1370, %v2132
    %v2251 = vsub.f32 %v1374, %v2128
    %v2252 = vsub.f32 %v1376, %v2132
    %v2253 = vsub.f32 %v1378, %v2128
    %v2254 = vsub.f32 %v1380, %v2132
    %v2255 = vsub.f32 %v1384, %v2128
    %v2256 = vsub.f32 %v1386, %v2132
    %v2257 = vsub.f32 %v1388, %v2128
    %v2258 = vsub.f32 %v1390, %v2132
    %v2259 = vsub.f32 %v1394, %v2128
    %v2260 = vsub.f32 %v1396, %v2132
    %v2261 = vsub.f32 %v1398, %v2128
    %v2262 = vsub.f32 %v1400, %v2132
    %v2263 = vmul.f32 %v2135, 1.442695
    %v2264 = vpow.pop %v2263
    %v2265 = vmul.f32 %v2136, 1.442695
    %v2266 = vpow.pop %v2265
    %v2267 = vmul.f32 %v2137, 1.442695
    %v2268 = vpow.pop %v2267
    %v2269 = vmul.f32 %v2138, 1.442695
    %v2270 = vpow.pop %v2269
    %v2271 = vmul.f32 %v2139, 1.442695
    %v2272 = vpow.pop %v2271
    %v2273 = vmul.f32 %v2140, 1.442695
    %v2274 = vpow.pop %v2273
    %v2275 = vmul.f32 %v2141, 1.442695
    %v2276 = vpow.pop %v2275
    %v2277 = vmul.f32 %v2142, 1.442695
    %v2278 = vpow.pop %v2277
    %v2279 = vmul.f32 %v2143, 1.442695
    %v2280 = vpow.pop %v2279
    %v2281 = vmul.f32 %v2144, 1.442695
    %v2282 = vpow.pop %v2281
    %v2283 = vmul.f32 %v2145, 1.442695
    %v2284 = vpow.pop %v2283
    %v2285 = vmul.f32 %v2146, 1.442695
    %v2286 = vpow.pop %v2285
    %v2287 = vmul.f32 %v2147, 1.442695
    %v2288 = vpow.pop %v2287
    %v2289 = vmul.f32 %v2148, 1.442695
    %v2290 = vpow.pop %v2289
    %v2291 = vmul.f32 %v2149, 1.442695
    %v2292 = vpow.pop %v2291
    %v2293 = vmul.f32 %v2150, 1.442695
    %v2294 = vpow.pop %v2293
    %v2295 = vmul.f32 %v2151, 1.442695
    %v2296 = vpow.pop %v2295
    %v2297 = vmul.f32 %v2152, 1.442695
    %v2298 = vpow.pop %v2297
    %v2299 = vmul.f32 %v2153, 1.442695
    %v2300 = vpow.pop %v2299
    %v2301 = vmul.f32 %v2154, 1.442695
    %v2302 = vpow.pop %v2301
    %v2303 = vmul.f32 %v2155, 1.442695
    %v2304 = vpow.pop %v2303
    %v2305 = vmul.f32 %v2156, 1.442695
    %v2306 = vpow.pop %v2305
    %v2307 = vmul.f32 %v2157, 1.442695
    %v2308 = vpow.pop %v2307
    %v2309 = vmul.f32 %v2158, 1.442695
    %v2310 = vpow.pop %v2309
    %v2311 = vmul.f32 %v2159, 1.442695
    %v2312 = vpow.pop %v2311
    %v2313 = vmul.f32 %v2160, 1.442695
    %v2314 = vpow.pop %v2313
    %v2315 = vmul.f32 %v2161, 1.442695
    %v2316 = vpow.pop %v2315
    %v2317 = vmul.f32 %v2162, 1.442695
    %v2318 = vpow.pop %v2317
    %v2319 = vmul.f32 %v2163, 1.442695
    %v2320 = vpow.pop %v2319
    %v2321 = vmul.f32 %v2164, 1.442695
    %v2322 = vpow.pop %v2321
    %v2323 = vmul.f32 %v2165, 1.442695
    %v2324 = vpow.pop %v2323
    %v2325 = vmul.f32 %v2166, 1.442695
    %v2326 = vpow.pop %v2325
    %v2327 = vmul.f32 %v2167, 1.442695
    %v2328 = vpow.pop %v2327
    %v2329 = vmul.f32 %v2168, 1.442695
    %v2330 = vpow.pop %v2329
    %v2331 = vmul.f32 %v2169, 1.442695
    %v2332 = vpow.pop %v2331
    %v2333 = vmul.f32 %v2170, 1.442695
    %v2334 = vpow.pop %v2333
    %v2335 = vmul.f32 %v2171, 1.442695
    %v2336 = vpow.pop %v2335
    %v2337 = vmul.f32 %v2172, 1.442695
    %v2338 = vpow.pop %v2337
    %v2339 = vmul.f32 %v2173, 1.442695
    %v2340 = vpow.pop %v2339
    %v2341 = vmul.f32 %v2174, 1.442695
    %v2342 = vpow.pop %v2341
    %v2343 = vmul.f32 %v2175, 1.442695
    %v2344 = vpow.pop %v2343
    %v2345 = vmul.f32 %v2176, 1.442695
    %v2346 = vpow.pop %v2345
    %v2347 = vmul.f32 %v2177, 1.442695
    %v2348 = vpow.pop %v2347
    %v2349 = vmul.f32 %v2178, 1.442695
    %v2350 = vpow.pop %v2349
    %v2351 = vmul.f32 %v2179, 1.442695
    %v2352 = vpow.pop %v2351
    %v2353 = vmul.f32 %v2180, 1.442695
    %v2354 = vpow.pop %v2353
    %v2355 = vmul.f32 %v2181, 1.442695
    %v2356 = vpow.pop %v2355
    %v2357 = vmul.f32 %v2182, 1.442695
    %v2358 = vpow.pop %v2357
    %v2359 = vmul.f32 %v2183, 1.442695
    %v2360 = vpow.pop %v2359
    %v2361 = vmul.f32 %v2184, 1.442695
    %v2362 = vpow.pop %v2361
    %v2363 = vmul.f32 %v2185, 1.442695
    %v2364 = vpow.pop %v2363
    %v2365 = vmul.f32 %v2186, 1.442695
    %v2366 = vpow.pop %v2365
    %v2367 = vmul.f32 %v2187, 1.442695
    %v2368 = vpow.pop %v2367
    %v2369 = vmul.f32 %v2188, 1.442695
    %v2370 = vpow.pop %v2369
    %v2371 = vmul.f32 %v2189, 1.442695
    %v2372 = vpow.pop %v2371
    %v2373 = vmul.f32 %v2190, 1.442695
    %v2374 = vpow.pop %v2373
    %v2375 = vmul.f32 %v2191, 1.442695
    %v2376 = vpow.pop %v2375
    %v2377 = vmul.f32 %v2192, 1.442695
    %v2378 = vpow.pop %v2377
    %v2379 = vmul.f32 %v2193, 1.442695
    %v2380 = vpow.pop %v2379
    %v2381 = vmul.f32 %v2194, 1.442695
    %v2382 = vpow.pop %v2381
    %v2383 = vmul.f32 %v2195, 1.442695
    %v2384 = vpow.pop %v2383
    %v2385 = vmul.f32 %v2196, 1.442695
    %v2386 = vpow.pop %v2385
    %v2387 = vmul.f32 %v2197, 1.442695
    %v2388 = vpow.pop %v2387
    %v2389 = vmul.f32 %v2198, 1.442695
    %v2390 = vpow.pop %v2389
    %v2391 = vmul.f32 %v2199, 1.442695
    %v2392 = vpow.pop %v2391
    %v2393 = vmul.f32 %v2200, 1.442695
    %v2394 = vpow.pop %v2393
    %v2395 = vmul.f32 %v2201, 1.442695
    %v2396 = vpow.pop %v2395
    %v2397 = vmul.f32 %v2202, 1.442695
    %v2398 = vpow.pop %v2397
    %v2399 = vmul.f32 %v2203, 1.442695
    %v2400 = vpow.pop %v2399
    %v2401 = vmul.f32 %v2204, 1.442695
    %v2402 = vpow.pop %v2401
    %v2403 = vmul.f32 %v2205, 1.442695
    %v2404 = vpow.pop %v2403
    %v2405 = vmul.f32 %v2206, 1.442695
    %v2406 = vpow.pop %v2405
    %v2407 = vmul.f32 %v2207, 1.442695
    %v2408 = vpow.pop %v2407
    %v2409 = vmul.f32 %v2208, 1.442695
    %v2410 = vpow.pop %v2409
    %v2411 = vmul.f32 %v2209, 1.442695
    %v2412 = vpow.pop %v2411
    %v2413 = vmul.f32 %v2210, 1.442695
    %v2414 = vpow.pop %v2413
    %v2415 = vmul.f32 %v2211, 1.442695
    %v2416 = vpow.pop %v2415
    %v2417 = vmul.f32 %v2212, 1.442695
    %v2418 = vpow.pop %v2417
    %v2419 = vmul.f32 %v2213, 1.442695
    %v2420 = vpow.pop %v2419
    %v2421 = vmul.f32 %v2214, 1.442695
    %v2422 = vpow.pop %v2421
    %v2423 = vmul.f32 %v2215, 1.442695
    %v2424 = vpow.pop %v2423
    %v2425 = vmul.f32 %v2216, 1.442695
    %v2426 = vpow.pop %v2425
    %v2427 = vmul.f32 %v2217, 1.442695
    %v2428 = vpow.pop %v2427
    %v2429 = vmul.f32 %v2218, 1.442695
    %v2430 = vpow.pop %v2429
    %v2431 = vmul.f32 %v2219, 1.442695
    %v2432 = vpow.pop %v2431
    %v2433 = vmul.f32 %v2220, 1.442695
    %v2434 = vpow.pop %v2433
    %v2435 = vmul.f32 %v2221, 1.442695
    %v2436 = vpow.pop %v2435
    %v2437 = vmul.f32 %v2222, 1.442695
    %v2438 = vpow.pop %v2437
    %v2439 = vmul.f32 %v2223, 1.442695
    %v2440 = vpow.pop %v2439
    %v2441 = vmul.f32 %v2224, 1.442695
    %v2442 = vpow.pop %v2441
    %v2443 = vmul.f32 %v2225, 1.442695
    %v2444 = vpow.pop %v2443
    %v2445 = vmul.f32 %v2226, 1.442695
    %v2446 = vpow.pop %v2445
    %v2447 = vmul.f32 %v2227, 1.442695
    %v2448 = vpow.pop %v2447
    %v2449 = vmul.f32 %v2228, 1.442695
    %v2450 = vpow.pop %v2449
    %v2451 = vmul.f32 %v2229, 1.442695
    %v2452 = vpow.pop %v2451
    %v2453 = vmul.f32 %v2230, 1.442695
    %v2454 = vpow.pop %v2453
    %v2455 = vmul.f32 %v2231, 1.442695
    %v2456 = vpow.pop %v2455
    %v2457 = vmul.f32 %v2232, 1.442695
    %v2458 = vpow.pop %v2457
    %v2459 = vmul.f32 %v2233, 1.442695
    %v2460 = vpow.pop %v2459
    %v2461 = vmul.f32 %v2234, 1.442695
    %v2462 = vpow.pop %v2461
    %v2463 = vmul.f32 %v2235, 1.442695
    %v2464 = vpow.pop %v2463
    %v2465 = vmul.f32 %v2236, 1.442695
    %v2466 = vpow.pop %v2465
    %v2467 = vmul.f32 %v2237, 1.442695
    %v2468 = vpow.pop %v2467
    %v2469 = vmul.f32 %v2238, 1.442695
    %v2470 = vpow.pop %v2469
    %v2471 = vmul.f32 %v2239, 1.442695
    %v2472 = vpow.pop %v2471
    %v2473 = vmul.f32 %v2240, 1.442695
    %v2474 = vpow.pop %v2473
    %v2475 = vmul.f32 %v2241, 1.442695
    %v2476 = vpow.pop %v2475
    %v2477 = vmul.f32 %v2242, 1.442695
    %v2478 = vpow.pop %v2477
    %v2479 = vmul.f32 %v2243, 1.442695
    %v2480 = vpow.pop %v2479
    %v2481 = vmul.f32 %v2244, 1.442695
    %v2482 = vpow.pop %v2481
    %v2483 = vmul.f32 %v2245, 1.442695
    %v2484 = vpow.pop %v2483
    %v2485 = vmul.f32 %v2246, 1.442695
    %v2486 = vpow.pop %v2485
    %v2487 = vmul.f32 %v2247, 1.442695
    %v2488 = vpow.pop %v2487
    %v2489 = vmul.f32 %v2248, 1.442695
    %v2490 = vpow.pop %v2489
    %v2491 = vmul.f32 %v2249, 1.442695
    %v2492 = vpow.pop %v2491
    %v2493 = vmul.f32 %v2250, 1.442695
    %v2494 = vpow.pop %v2493
    %v2495 = vmul.f32 %v2251, 1.442695
    %v2496 = vpow.pop %v2495
    %v2497 = vmul.f32 %v2252, 1.442695
    %v2498 = vpow.pop %v2497
    %v2499 = vmul.f32 %v2253, 1.442695
    %v2500 = vpow.pop %v2499
    %v2501 = vmul.f32 %v2254, 1.442695
    %v2502 = vpow.pop %v2501
    %v2503 = vmul.f32 %v2255, 1.442695
    %v2504 = vpow.pop %v2503
    %v2505 = vmul.f32 %v2256, 1.442695
    %v2506 = vpow.pop %v2505
    %v2507 = vmul.f32 %v2257, 1.442695
    %v2508 = vpow.pop %v2507
    %v2509 = vmul.f32 %v2258, 1.442695
    %v2510 = vpow.pop %v2509
    %v2511 = vmul.f32 %v2259, 1.442695
    %v2512 = vpow.pop %v2511
    %v2513 = vmul.f32 %v2260, 1.442695
    %v2514 = vpow.pop %v2513
    %v2515 = vmul.f32 %v2261, 1.442695
    %v2516 = vpow.pop %v2515
    %v2517 = vmul.f32 %v2262, 1.442695
    %v2518 = vpow.pop %v2517
    %v2519 = vadd.f32 %v2264, %v2268
    %v2520 = vadd.f32 %v2519, %v2272
    %v2521 = vadd.f32 %v2520, %v2276
    %v2522 = vadd.f32 %v2521, %v2280
    %v2523 = vadd.f32 %v2522, %v2284
    %v2524 = vadd.f32 %v2523, %v2288
    %v2525 = vadd.f32 %v2524, %v2292
    %v2526 = vadd.f32 %v2525, %v2296
    %v2527 = vadd.f32 %v2526, %v2300
    %v2528 = vadd.f32 %v2527, %v2304
    %v2529 = vadd.f32 %v2528, %v2308
    %v2530 = vadd.f32 %v2529, %v2312
    %v2531 = vadd.f32 %v2530, %v2316
    %v2532 = vadd.f32 %v2531, %v2320
    %v2533 = vadd.f32 %v2532, %v2324
    %v2534 = vadd.f32 %v2533, %v2328
    %v2535 = vadd.f32 %v2534, %v2332
    %v2536 = vadd.f32 %v2535, %v2336
    %v2537 = vadd.f32 %v2536, %v2340
    %v2538 = vadd.f32 %v2537, %v2344
    %v2539 = vadd.f32 %v2538, %v2348
    %v2540 = vadd.f32 %v2539, %v2352
    %v2541 = vadd.f32 %v2540, %v2356
    %v2542 = vadd.f32 %v2541, %v2360
    %v2543 = vadd.f32 %v2542, %v2364
    %v2544 = vadd.f32 %v2543, %v2368
    %v2545 = vadd.f32 %v2544, %v2372
    %v2546 = vadd.f32 %v2545, %v2376
    %v2547 = vadd.f32 %v2546, %v2380
    %v2548 = vadd.f32 %v2547, %v2384
    %v2549 = vadd.f32 %v2548, %v2388
    %v2550 = vadd.f32 %v2549, %v2392
    %v2551 = vadd.f32 %v2550, %v2396
    %v2552 = vadd.f32 %v2551, %v2400
    %v2553 = vadd.f32 %v2552, %v2404
    %v2554 = vadd.f32 %v2553, %v2408
    %v2555 = vadd.f32 %v2554, %v2412
    %v2556 = vadd.f32 %v2555, %v2416
    %v2557 = vadd.f32 %v2556, %v2420
    %v2558 = vadd.f32 %v2557, %v2424
    %v2559 = vadd.f32 %v2558, %v2428
    %v2560 = vadd.f32 %v2559, %v2432
    %v2561 = vadd.f32 %v2560, %v2436
    %v2562 = vadd.f32 %v2561, %v2440
    %v2563 = vadd.f32 %v2562, %v2444
    %v2564 = vadd.f32 %v2563, %v2448
    %v2565 = vadd.f32 %v2564, %v2452
    %v2566 = vadd.f32 %v2565, %v2456
    %v2567 = vadd.f32 %v2566, %v2460
    %v2568 = vadd.f32 %v2567, %v2464
    %v2569 = vadd.f32 %v2568, %v2468
    %v2570 = vadd.f32 %v2569, %v2472
    %v2571 = vadd.f32 %v2570, %v2476
    %v2572 = vadd.f32 %v2571, %v2480
    %v2573 = vadd.f32 %v2572, %v2484
    %v2574 = vadd.f32 %v2573, %v2488
    %v2575 = vadd.f32 %v2574, %v2492
    %v2576 = vadd.f32 %v2575, %v2496
    %v2577 = vadd.f32 %v2576, %v2500
    %v2578 = vadd.f32 %v2577, %v2504
    %v2579 = vadd.f32 %v2578, %v2508
    %v2580 = vadd.f32 %v2579, %v2512
    %v2581 = vadd.f32 %v2580, %v2516
    %v2582 = vrot.slane %v2581, 4
    %v2583 = vadd.f32 %v2581, %v2582
    %v2584 = vrot.slane %v2583, 2
    %v2585 = vadd.f32 %v2583, %v2584
    %v2586 = vrot.slane %v2585, 1
    %v2587 = vadd.f32 %v2585, %v2586
    %v2588 = vadd.f32 %v2266, %v2270
    %v2589 = vadd.f32 %v2588, %v2274
    %v2590 = vadd.f32 %v2589, %v2278
    %v2591 = vadd.f32 %v2590, %v2282
    %v2592 = vadd.f32 %v2591, %v2286
    %v2593 = vadd.f32 %v2592, %v2290
    %v2594 = vadd.f32 %v2593, %v2294
    %v2595 = vadd.f32 %v2594, %v2298
    %v2596 = vadd.f32 %v2595, %v2302
    %v2597 = vadd.f32 %v2596, %v2306
    %v2598 = vadd.f32 %v2597, %v2310
    %v2599 = vadd.f32 %v2598, %v2314
    %v2600 = vadd.f32 %v2599, %v2318
    %v2601 = vadd.f32 %v2600, %v2322
    %v2602 = vadd.f32 %v2601, %v2326
    %v2603 = vadd.f32 %v2602, %v2330
    %v2604 = vadd.f32 %v2603, %v2334
    %v2605 = vadd.f32 %v2604, %v2338
    %v2606 = vadd.f32 %v2605, %v2342
    %v2607 = vadd.f32 %v2606, %v2346
    %v2608 = vadd.f32 %v2607, %v2350
    %v2609 = vadd.f32 %v2608, %v2354
    %v2610 = vadd.f32 %v2609, %v2358
    %v2611 = vadd.f32 %v2610, %v2362
    %v2612 = vadd.f32 %v2611, %v2366
    %v2613 = vadd.f32 %v2612, %v2370
    %v2614 = vadd.f32 %v2613, %v2374
    %v2615 = vadd.f32 %v2614, %v2378
    %v2616 = vadd.f32 %v2615, %v2382
    %v2617 = vadd.f32 %v2616, %v2386
    %v2618 = vadd.f32 %v2617, %v2390
    %v2619 = vadd.f32 %v2618, %v2394
    %v2620 = vadd.f32 %v2619, %v2398
    %v2621 = vadd.f32 %v2620, %v2402
    %v2622 = vadd.f32 %v2621, %v2406
    %v2623 = vadd.f32 %v2622, %v2410
    %v2624 = vadd.f32 %v2623, %v2414
    %v2625 = vadd.f32 %v2624, %v2418
    %v2626 = vadd.f32 %v2625, %v2422
    %v2627 = vadd.f32 %v2626, %v2426
    %v2628 = vadd.f32 %v2627, %v2430
    %v2629 = vadd.f32 %v2628, %v2434
    %v2630 = vadd.f32 %v2629, %v2438
    %v2631 = vadd.f32 %v2630, %v2442
    %v2632 = vadd.f32 %v2631, %v2446
    %v2633 = vadd.f32 %v2632, %v2450
    %v2634 = vadd.f32 %v2633, %v2454
    %v2635 = vadd.f32 %v2634, %v2458
    %v2636 = vadd.f32 %v2635, %v2462
    %v2637 = vadd.f32 %v2636, %v2466
    %v2638 = vadd.f32 %v2637, %v2470
    %v2639 = vadd.f32 %v2638, %v2474
    %v2640 = vadd.f32 %v2639, %v2478
    %v2641 = vadd.f32 %v2640, %v2482
    %v2642 = vadd.f32 %v2641, %v2486
    %v2643 = vadd.f32 %v2642, %v2490
    %v2644 = vadd.f32 %v2643, %v2494
    %v2645 = vadd.f32 %v2644, %v2498
    %v2646 = vadd.f32 %v2645, %v2502
    %v2647 = vadd.f32 %v2646, %v2506
    %v2648 = vadd.f32 %v2647, %v2510
    %v2649 = vadd.f32 %v2648, %v2514
    %v2650 = vadd.f32 %v2649, %v2518
    %v2651 = vrot.slane %v2650, 4
    %v2652 = vadd.f32 %v2650, %v2651
    %v2653 = vrot.slane %v2652, 2
    %v2654 = vadd.f32 %v2652, %v2653
    %v2655 = vrot.slane %v2654, 1
    %v2656 = vadd.f32 %v2654, %v2655
    %v2659 = vcombine.low %v2587, %v2656
    %v2661 = vunpack.c.l.s4 1966171168
    %v2662 = vunpack.c.0.s8 %v2661
    %v2663 = vlaneseq
    %v2664 = vshrl.u32 %v2663, 7
    %v2665 = vsub.s32 %v2662, %v2664
    %v2666 = vrot.slane %v2659, %v2665
    %v2668 = vunpack.c.l.s4 1966171168
    %v2669 = vunpack.c.0.s8 %v2668
    %v2670 = vlaneseq
    %v2671 = vshrl.u32 %v2670, 7
    %v2672 = vsub.s32 %v2669, %v2671
    %v2673 = vrot.slane %v2666, %v2672
    %v2675 = vadd.f32 %v2123, %v2673
    %2676 = vst.msk [vmem:[#allocation4] sm:$0x3] %vm1959, %v2675
    %2677 = vst.msk [vmem:[#allocation3] sm:$0x3] %vm1959, %v2118
    // Predicated region
    $region30: #{forward.4} parent=24 // pred_check
      %p2678 = pneg %p92
    $region31: #{forward.4} parent=24 // pred_check_branch
      %2680 = sbr.rel (%p2678) target = $region33
    $region32: #{forward.4} parent=24 // pred_region
      %v2681 = vld [vmem:[#allocation5] sm:$0x3]
      %v2682 = vld [vmem:[#allocation3] sm:$0x3]
      %v2683 = vld [vmem:[#allocation4] sm:$0x3]
      %v2684 = vlog2.pop %v2683
      %v2685 = vmul.f32 %v2684, 0.6931472
      %v2686 = vadd.f32 %v2682, %v2685
      %v2687 = vsub.f32 %v2681, %v2686
      %2688 = vst.msk [vmem:[%s6] sm:$0x3] %vm1959, %v2687
    $region33: #{forward.4} parent=24 // pred_fallthru
      _
  $region25: #{forward.4} parent=0 // pred_fallthru
    _
  %p2689 = scmp.le.s32.totalorder %s87, 0
  %p2690 = scmp.eq.s32.totalorder 0, 0
  %p2691 = pnand %p2689, %p2690
  %p2692 = pneg %p2691
  // Predicated region
  $region34: #{forward.4} parent=0 // pred_check
    _
  $region35: #{forward.4} parent=0 // pred_check_branch
    %2694 = sbr.rel (%p2691) target = $region37
  $region36: #{forward.4} parent=0 // pred_region
    %v2695 = vlaneseq
    %vm2696 = vcmp.ge.s32.totalorder %v2695, 0
    %vm2697 = vcmp.lt.s32.totalorder %v2695, 256
    %vm2698 = vmand %vm2696, %vm2697
    %2699 = vst.msk [vmem:[%s6] sm:$0x3] %vm2698, 0.0
  $region37: #{forward.4} parent=0 // pred_fallthru
    _
  // Predicated region
  $region38: #{forward.4} parent=0 // pred_check
    _
  $region39: #{forward.4} parent=0 // pred_check_branch
    %2701 = sbr.rel (0) target = $region41
  $region40: #{forward.4} parent=0 // pred_region
    _
  $region41: #{forward.4} parent=0 // pred_fallthru
    _
  // Predicated region
  $region42: #{forward.4} parent=0 // pred_check
    _
  $region43: #{forward.4} parent=0 // pred_check_branch
    %2703 = sbr.rel (0) target = $region45
  $region44: #{forward.4} parent=0 // pred_region
    _
  $region45: #{forward.4} parent=0 // pred_fallthru
    _

// kernel: forward.3
$region0: #{forward.3}
  #allocation0 [shape = 'u32[]', space=smem, size = 0x4, offset = 0x4, fixed_abs, tag = 'smem constant byte address 0x4 - core index']
  #allocation1 [shape = 'u32[144,128]{1,0:T(1,128)}', space=vmem, size = 0x12000, scoped, tag = 'internal scratch']
  #allocation2 [shape = 'f32[128,256]{1,0:T(8,128)}', space=vmem, size = 0x20000, scoped, tag = 'scratch operand']
  #allocation3 [shape = 'f32[1,256]{1,0:T(1,128)}', space=vmem, size = 0x400, scoped, tag = 'scratch operand']
  #allocation4 [shape = 'f32[1,256]{1,0:T(1,128)}', space=vmem, size = 0x400, scoped, tag = 'scratch operand']
  #allocation5 [shape = 'f32[1,256]{1,0:T(1,128)}', space=vmem, size = 0x400, scoped, tag = 'scratch operand']
  #allocation6 [shape = 's32[1]{0}', space=sflag, size = 0x4, scoped, tag = 'scoped memory for forward.3']
  #allocation7 [shape = 's32[1]{0:T(128)S(6)}', space=smem, size = 0x200, scoped, tag = 'prefetched SMEM operand 0']
  %s0 = inlined_call_operand.<no memory space> [shape: s32[1], index: 0, kind: input, shape index: {}]
  %s1 = inlined_call_operand.vmem [shape: bf16[128,256], index: 1, kind: input, shape index: {}]
  %s2 = inlined_call_operand.vmem [shape: bf16[128,128], index: 2, kind: input, shape index: {}]
  %s3 = inlined_call_operand.vmem [shape: bf16[1024,128], index: 3, kind: input, shape index: {}]
  %s4 = inlined_call_operand.vmem [shape: f32[1024,1], index: 4, kind: input, shape index: {}]
  %s5 = inlined_call_operand.vmem [shape: s32[1,256], index: 5, kind: input, shape index: {}]
  %s6 = inlined_call_operand.vmem [shape: f32[1,256], index: 6, kind: output, shape index: {}]
  %s7 = sld [smem:[#allocation0]]
  $region69: #{forward.3} parent=0
    _
  %s9 = ssub.s32 1, %s7
  %s10 = scalar_select 0, %s9, %s7
  %11 = sst [smem:[#allocation7]] %s0
  loop: start=0, step=1, limit=4
  $region2: #{forward.3} parent=0 // loop_pre_header
    _
  $region3: #{forward.3} parent=0 // loop_header
    %s13 = sphi 0, %s17
    %p14 = scmp.ge.s32.totalorder %s13, 4
    %s20 = sphi 0, %s32
    %s21 = sphi 0, %s28
    %s22 = sphi 0, %s20
    %s23 = sphi 0, %s21
    %s24 = sphi 0, %s22
    %s25 = sphi 0, %s23
    %s35 = sphi 0, %s37
    %s38 = sphi 0, %s35
    %s39 = sphi 0, %s38
    %s55 = sphi 0, %s39
    %s59 = sphi 0, %s59
    %s61 = sphi 0, %s59
    %s62 = sphi 0, %s61
    %s76 = sphi 0, %s62
    %s88 = sphi 0, %s90
    %s91 = sphi 0, %s88
    %s92 = sphi 0, %s91
    %s108 = sphi 0, %s92
    %s120 = sphi 0, %s122
    %s123 = sphi 0, %s120
    %s124 = sphi 0, %s123
    %s140 = sphi 0, %s124
    %s146 = sphi 0, %s148
    %s149 = sphi 0, %s146
    %s150 = sphi 0, %s149
    %s166 = sphi 0, %s150
    %s172 = sphi 0, %s174
    %s175 = sphi 0, %s172
    %s176 = sphi 0, %s175
    %s192 = sphi 0, %s176
  $region4: #{forward.3} parent=0 // loop_header_branch
    %16 = sbr.rel (%p14) target = $region8
  $region5: #{forward.3} parent=0 // loop_body
    %s18 = ssub.s32 %s13, 1
    %s19 = ssub.s32 %s13, 2
    %s26 = sadd.s32 1, %s21
    %p27 = scmp.ge.s32.totalorder %s26, 2
    %s28 = scalar_select %p27, 0, %s26
    %s29 = sadd.s32 1, %s20
    %s30 = scalar_select %p27, %s29, %s20
    %p31 = scmp.ge.s32.totalorder %s30, 1
    %s32 = scalar_select %p31, 0, %s30
    %s33 = ssub.s32 %s20, %s32
    %p34 = scmp.eq.s32.totalorder %s33, 0
    %s36 = sadd.s32 %s35, 1
    %s37 = scalar_select %p34, %s35, %s36
    %p40 = pneg %p34
    %p41 = scmp.eq.s32.totalorder %s13, 1
    %p42 = por %p40, %p41
    %p43 = scmp.ne.s32.totalorder %s35, %s38
    %p44 = scmp.eq.s32.totalorder %s13, 0
    %p45 = por %p43, %p44
    %p46 = scmp.ne.s32.totalorder %s35, %s38
    %p47 = scmp.eq.s32.totalorder %s18, 1
    %p48 = por %p46, %p47
    %p49 = scmp.ne.s32.totalorder %s38, %s39
    %p50 = scmp.eq.s32.totalorder %s18, 0
    %p51 = por %p49, %p50
    %p52 = scmp.ne.s32.totalorder %s38, %s39
    %p53 = scmp.eq.s32.totalorder %s19, 1
    %p54 = por %p52, %p53
    %p56 = scmp.ne.s32.totalorder %s39, %s55
    %p57 = scmp.eq.s32.totalorder %s19, 0
    %p58 = por %p56, %p57
    %s60 = sadd.s32 %s59, 1
    %p63 = scmp.eq.s32.totalorder %s13, 1
    %p64 = scmp.ne.s32.totalorder %s59, %s61
    %p65 = scmp.eq.s32.totalorder %s13, 0
    %p66 = por %p64, %p65
    %p67 = scmp.ne.s32.totalorder %s59, %s61
    %p68 = scmp.eq.s32.totalorder %s18, 1
    %p69 = por %p67, %p68
    %p70 = scmp.ne.s32.totalorder %s61, %s62
    %p71 = scmp.eq.s32.totalorder %s18, 0
    %p72 = por %p70, %p71
    %p73 = scmp.ne.s32.totalorder %s61, %s62
    %p74 = scmp.eq.s32.totalorder %s19, 1
    %p75 = por %p73, %p74
    %p77 = scmp.ne.s32.totalorder %s62, %s76
    %p78 = scmp.eq.s32.totalorder %s19, 0
    %p79 = por %p77, %p78
    %s80 = sld [smem:[#allocation7 + %s20]]
    %p81 = scmp.gt.s32.totalorder %s80, 0
    %s82 = scalar_select %p81, %s21, 0
    %s83 = sld [smem:[#allocation7 + %s32]]
    %p84 = scmp.gt.s32.totalorder %s83, 0
    %s85 = scalar_select %p84, %s28, 0
    %s86 = ssub.s32 %s82, %s85
    %p87 = scmp.eq.s32.totalorder %s86, 0
    %s89 = sadd.s32 %s88, 1
    %s90 = scalar_select %p87, %s88, %s89
    %p93 = pneg %p87
    %p94 = scmp.eq.s32.totalorder %s13, 1
    %p95 = por %p93, %p94
    %p96 = scmp.ne.s32.totalorder %s88, %s91
    %p97 = scmp.eq.s32.totalorder %s13, 0
    %p98 = por %p96, %p97
    %p99 = scmp.ne.s32.totalorder %s88, %s91
    %p100 = scmp.eq.s32.totalorder %s18, 1
    %p101 = por %p99, %p100
    %p102 = scmp.ne.s32.totalorder %s91, %s92
    %p103 = scmp.eq.s32.totalorder %s18, 0
    %p104 = por %p102, %p103
    %p105 = scmp.ne.s32.totalorder %s91, %s92
    %p106 = scmp.eq.s32.totalorder %s19, 1
    %p107 = por %p105, %p106
    %p109 = scmp.ne.s32.totalorder %s92, %s108
    %p110 = scmp.eq.s32.totalorder %s19, 0
    %p111 = por %p109, %p110
    %s112 = sld [smem:[#allocation7 + %s20]]
    %p113 = scmp.gt.s32.totalorder %s112, 0
    %s114 = scalar_select %p113, %s21, 0
    %s115 = sld [smem:[#allocation7 + %s32]]
    %p116 = scmp.gt.s32.totalorder %s115, 0
    %s117 = scalar_select %p116, %s28, 0
    %s118 = ssub.s32 %s114, %s117
    %p119 = scmp.eq.s32.totalorder %s118, 0
    %s121 = sadd.s32 %s120, 1
    %s122 = scalar_select %p119, %s120, %s121
    %p125 = pneg %p119
    %p126 = scmp.eq.s32.totalorder %s13, 1
    %p127 = por %p125, %p126
    %p128 = scmp.ne.s32.totalorder %s120, %s123
    %p129 = scmp.eq.s32.totalorder %s13, 0
    %p130 = por %p128, %p129
    %p131 = scmp.ne.s32.totalorder %s120, %s123
    %p132 = scmp.eq.s32.totalorder %s18, 1
    %p133 = por %p131, %p132
    %p134 = scmp.ne.s32.totalorder %s123, %s124
    %p135 = scmp.eq.s32.totalorder %s18, 0
    %p136 = por %p134, %p135
    %p137 = scmp.ne.s32.totalorder %s123, %s124
    %p138 = scmp.eq.s32.totalorder %s19, 1
    %p139 = por %p137, %p138
    %p141 = scmp.ne.s32.totalorder %s124, %s140
    %p142 = scmp.eq.s32.totalorder %s19, 0
    %p143 = por %p141, %p142
    %s144 = ssub.s32 %s20, %s32
    %p145 = scmp.eq.s32.totalorder %s144, 0
    %s147 = sadd.s32 %s146, 1
    %s148 = scalar_select %p145, %s146, %s147
    %p151 = pneg %p145
    %p152 = scmp.eq.s32.totalorder %s13, 1
    %p153 = por %p151, %p152
    %p154 = scmp.ne.s32.totalorder %s146, %s149
    %p155 = scmp.eq.s32.totalorder %s13, 0
    %p156 = por %p154, %p155
    %p157 = scmp.ne.s32.totalorder %s146, %s149
    %p158 = scmp.eq.s32.totalorder %s18, 1
    %p159 = por %p157, %p158
    %p160 = scmp.ne.s32.totalorder %s149, %s150
    %p161 = scmp.eq.s32.totalorder %s18, 0
    %p162 = por %p160, %p161
    %p163 = scmp.ne.s32.totalorder %s149, %s150
    %p164 = scmp.eq.s32.totalorder %s19, 1
    %p165 = por %p163, %p164
    %p167 = scmp.ne.s32.totalorder %s150, %s166
    %p168 = scmp.eq.s32.totalorder %s19, 0
    %p169 = por %p167, %p168
    %s170 = ssub.s32 %s20, %s32
    %p171 = scmp.eq.s32.totalorder %s170, 0
    %s173 = sadd.s32 %s172, 1
    %s174 = scalar_select %p171, %s172, %s173
    %p177 = pneg %p171
    %p178 = scmp.eq.s32.totalorder %s13, 1
    %p179 = por %p177, %p178
    %p180 = scmp.ne.s32.totalorder %s172, %s175
    %p181 = scmp.eq.s32.totalorder %s13, 0
    %p182 = por %p180, %p181
    %p183 = scmp.ne.s32.totalorder %s172, %s175
    %p184 = scmp.eq.s32.totalorder %s18, 1
    %p185 = por %p183, %p184
    %p186 = scmp.ne.s32.totalorder %s175, %s176
    %p187 = scmp.eq.s32.totalorder %s18, 0
    %p188 = por %p186, %p187
    %p189 = scmp.ne.s32.totalorder %s175, %s176
    %p190 = scmp.eq.s32.totalorder %s19, 1
    %p191 = por %p189, %p190
    %p193 = scmp.ne.s32.totalorder %s176, %s192
    %p194 = scmp.eq.s32.totalorder %s19, 0
    %p195 = por %p193, %p194
    %p196 = scmp.le.s32.totalorder 1, %s13
    %p197 = scmp.lt.s32.totalorder %s13, 3
    %p198 = pnand %p196, %p197
    %p199 = pneg %p198
    // Predicated region
    $region9: #{forward.3} parent=5 // pred_check
      _
    $region10: #{forward.3} parent=5 // pred_check_branch
      %201 = sbr.rel (%p198) target = $region12
    $region11: #{forward.3} parent=5 // pred_region
      %s202 = ssub.s32 %s13, 1
      // Predicated region
      $region13: #{forward.3} parent=11 // pred_check
        %p203 = pneg %p51
      $region14: #{forward.3} parent=11 // pred_check_branch
        %205 = sbr.rel (%p203) target = $region16
      $region15: #{forward.3} parent=11 // pred_region
        %s206 = smul.u32 2, %s22
        %p207 = scmp.lt.s32.totalorder %s206, 1
        %s208 = scalar_select %p207, %s206, 1
        %s209 = smul.addr %s208, 4
        %s210 = scalar_lea.vmem %s1, %s209
        %s211 = smul.u32 2, %s22
      $region16: #{forward.3} parent=11 // pred_fallthru
        _
      // Predicated region
      $region17: #{forward.3} parent=11 // pred_check
        %p212 = pneg %p72
      $region18: #{forward.3} parent=11 // pred_check_branch
        %214 = sbr.rel (%p212) target = $region20
      $region19: #{forward.3} parent=11 // pred_region
        _
      $region20: #{forward.3} parent=11 // pred_fallthru
        _
      // Predicated region
      $region21: #{forward.3} parent=11 // pred_check
        %p215 = pneg %p162
      $region22: #{forward.3} parent=11 // pred_check_branch
        %217 = sbr.rel (%p215) target = $region24
      $region23: #{forward.3} parent=11 // pred_region
        %s218 = smul.u32 2, %s22
        %p219 = scmp.lt.s32.totalorder %s218, 1
        %s220 = scalar_select %p219, %s218, 1
        %s221 = scalar_lea.vmem %s5, %s220
        %s222 = smul.u32 2, %s22
      $region24: #{forward.3} parent=11 // pred_fallthru
        _
    $region12: #{forward.3} parent=5 // pred_fallthru
      _
    %p223 = scmp.lt.s32.totalorder %s13, 2
    // Predicated region
    $region25: #{forward.3} parent=5 // pred_check
      %p224 = pneg %p223
    $region26: #{forward.3} parent=5 // pred_check_branch
      %226 = sbr.rel (%p224) target = $region28
    $region27: #{forward.3} parent=5 // pred_region
      // Predicated region
      $region29: #{forward.3} parent=27 // pred_check
        %p227 = pneg %p98
      $region30: #{forward.3} parent=27 // pred_check_branch
        %229 = sbr.rel (%p227) target = $region32
      $region31: #{forward.3} parent=27 // pred_region
        %s230 = sld [smem:[#allocation7 + %s20]]
        %p231 = scmp.gt.s32.totalorder %s230, 0
        %s232 = scalar_select %p231, %s21, 0
        %s233 = smul.u32 64, %s232
        %p234 = scmp.lt.s32.totalorder %s233, 127
        %s235 = scalar_select %p234, %s233, 127
        %s236 = smul.addr %s235, 4
        %s237 = scalar_lea.vmem %s3, %s236
        %s238 = sld [smem:[#allocation7 + %s20]]
        %p239 = scmp.gt.s32.totalorder %s238, 0
        %s240 = scalar_select %p239, %s21, 0
        %s241 = smul.u32 64, %s240
      $region32: #{forward.3} parent=27 // pred_fallthru
        _
      // Predicated region
      $region33: #{forward.3} parent=27 // pred_check
        %p242 = pneg %p130
      $region34: #{forward.3} parent=27 // pred_check_branch
        %244 = sbr.rel (%p242) target = $region36
      $region35: #{forward.3} parent=27 // pred_region
        %s245 = sld [smem:[#allocation7 + %s20]]
        %p246 = scmp.gt.s32.totalorder %s245, 0
        %s247 = scalar_select %p246, %s21, 0
        %s248 = smul.u32 64, %s247
        %p249 = scmp.lt.s32.totalorder %s248, 127
        %s250 = scalar_select %p249, %s248, 127
        %s251 = smul.addr %s250, 8
        %s252 = scalar_lea.vmem %s4, %s251
        %s253 = sld [smem:[#allocation7 + %s20]]
        %p254 = scmp.gt.s32.totalorder %s253, 0
        %s255 = scalar_select %p254, %s21, 0
        %s256 = smul.u32 64, %s255
      $region36: #{forward.3} parent=27 // pred_fallthru
        _
    $region28: #{forward.3} parent=5 // pred_fallthru
      _
    %p257 = scmp.le.s32.totalorder 1, %s13
    %p258 = scmp.lt.s32.totalorder %s13, 3
    %p259 = pnand %p257, %p258
    %p260 = pneg %p259
    // Predicated region
    $region37: #{forward.3} parent=5 // pred_check
      _
    $region38: #{forward.3} parent=5 // pred_check_branch
      %262 = sbr.rel (%p259) target = $region40
    $region39: #{forward.3} parent=5 // pred_region
      %s263 = ssub.s32 %s13, 1
      %s264 = smul.u32 2, %s22
      %p265 = scmp.lt.s32.totalorder %s264, 1
      %s266 = scalar_select %p265, %s264, 1
      %s267 = smul.addr %s266, 4
      %s268 = scalar_lea.vmem %s1, %s267
      %p269 = pneg %p51
      %p270 = pneg %p48
      %p271 = pneg %p72
      %p272 = pneg %p69
      %s273 = sld [smem:[#allocation7 + %s22]]
      %p274 = scmp.gt.s32.totalorder %s273, 0
      %s275 = scalar_select %p274, %s23, 0
      %s276 = smul.u32 64, %s275
      %p277 = scmp.lt.s32.totalorder %s276, 127
      %s278 = scalar_select %p277, %s276, 127
      %s279 = smul.addr %s278, 4
      %s280 = scalar_lea.vmem %s3, %s279
      %p281 = pneg %p104
      %p282 = pneg %p101
      %s283 = sld [smem:[#allocation7 + %s22]]
      %p284 = scmp.gt.s32.totalorder %s283, 0
      %s285 = scalar_select %p284, %s23, 0
      %s286 = smul.u32 64, %s285
      %p287 = scmp.lt.s32.totalorder %s286, 127
      %s288 = scalar_select %p287, %s286, 127
      %s289 = smul.addr %s288, 8
      %s290 = scalar_lea.vmem %s4, %s289
      %p291 = pneg %p136
      %p292 = pneg %p133
      %s293 = smul.u32 2, %s22
      %p294 = scmp.lt.s32.totalorder %s293, 1
      %s295 = scalar_select %p294, %s293, 1
      %s296 = scalar_lea.vmem %s5, %s295
      %p297 = pneg %p162
      %p298 = pneg %p159
      %p299 = pneg %p188
      %p300 = pneg %p185
      %s301 = smul.u32 2, %s22
      %p302 = scmp.lt.s32.totalorder %s301, 1
      %s303 = scalar_select %p302, %s301, 1
      %s304 = scalar_lea.vmem %s6, %s303
      %s305 = smul.u32 2, %s22
      %p306 = scmp.lt.s32.totalorder %s305, 1
      %s307 = scalar_select %p306, %s305, 1
      %s308 = smul.addr %s307, 4
      %s309 = scalar_lea.vmem %s1, %s308
      %s310 = smul.u32 2, %s22
      %s311 = sld [smem:[#allocation7 + %s22]]
      %p312 = scmp.gt.s32.totalorder %s311, 0
      %s313 = scalar_select %p312, %s23, 0
      %s314 = smul.u32 64, %s313
      %p315 = scmp.lt.s32.totalorder %s314, 127
      %s316 = scalar_select %p315, %s314, 127
      %s317 = smul.addr %s316, 4
      %s318 = scalar_lea.vmem %s3, %s317
      %s319 = sld [smem:[#allocation7 + %s22]]
      %p320 = scmp.gt.s32.totalorder %s319, 0
      %s321 = scalar_select %p320, %s23, 0
      %s322 = smul.u32 64, %s321
      %s323 = sld [smem:[#allocation7 + %s22]]
      %p324 = scmp.gt.s32.totalorder %s323, 0
      %s325 = scalar_select %p324, %s23, 0
      %s326 = smul.u32 64, %s325
      %p327 = scmp.lt.s32.totalorder %s326, 127
      %s328 = scalar_select %p327, %s326, 127
      %s329 = smul.addr %s328, 8
      %s330 = scalar_lea.vmem %s4, %s329
      %s331 = sld [smem:[#allocation7 + %s22]]
      %p332 = scmp.gt.s32.totalorder %s331, 0
      %s333 = scalar_select %p332, %s23, 0
      %s334 = smul.u32 64, %s333
      %s335 = smul.u32 2, %s22
      %p336 = scmp.lt.s32.totalorder %s335, 1
      %s337 = scalar_select %p336, %s335, 1
      %s338 = scalar_lea.vmem %s5, %s337
      %s339 = smul.u32 2, %s22
      %s340 = smul.u32 2, %s22
      %p341 = scmp.lt.s32.totalorder %s340, 1
      %s342 = scalar_select %p341, %s340, 1
      %s343 = scalar_lea.vmem %s6, %s342
      %s344 = smul.u32 2, %s22
      %s346 = sld [smem:[#allocation7 + %s22]]
      %p347 = scmp.gt.s32.totalorder %s346, 0
      // Predicated region
      $region41: #{forward.3} parent=39 // pred_check
        %p348 = pneg %p347
      $region42: #{forward.3} parent=39 // pred_check_branch
        %350 = sbr.rel (%p348) target = $region44
      $region43: #{forward.3} parent=39 // pred_region
        %p351 = scmp.eq.s32.totalorder %s23, 0
        // Predicated region
        $region45: #{forward.3} parent=43 // pred_check
          %p352 = pneg %p351
        $region46: #{forward.3} parent=43 // pred_check_branch
          %354 = sbr.rel (%p352) target = $region48
        $region47: #{forward.3} parent=43 // pred_region
          %v355 = vld [vmem:[%s2] sm:$0xf]
          %v356 = vld [vmem:[%s2 + $0x4] sm:$0xf]
          %v357 = vld [vmem:[%s2 + $0x8] sm:$0xf]
          %v358 = vld [vmem:[%s2 + $0xc] sm:$0xf]
          %v359 = vld [vmem:[%s2 + $0x10] sm:$0xf]
          %v360 = vld [vmem:[%s2 + $0x14] sm:$0xf]
          %v361 = vld [vmem:[%s2 + $0x18] sm:$0xf]
          %v362 = vld [vmem:[%s2 + $0x1c] sm:$0xf]
          %v363 = vld [vmem:[%s2 + $0x20] sm:$0xf]
          %v364 = vld [vmem:[%s2 + $0x24] sm:$0xf]
          %v365 = vld [vmem:[%s2 + $0x28] sm:$0xf]
          %v366 = vld [vmem:[%s2 + $0x2c] sm:$0xf]
          %v367 = vld [vmem:[%s2 + $0x30] sm:$0xf]
          %v368 = vld [vmem:[%s2 + $0x34] sm:$0xf]
          %v369 = vld [vmem:[%s2 + $0x38] sm:$0xf]
          %v370 = vld [vmem:[%s2 + $0x3c] sm:$0xf]
          %v371 = vld [vmem:[%s309] sm:$0xff]
          %v372 = vld [vmem:[%s309 + $0x8] sm:$0xff]
          %v373 = vld [vmem:[%s309 + $0x10] sm:$0xff]
          %v374 = vld [vmem:[%s309 + $0x18] sm:$0xff]
          %v375 = vld [vmem:[%s309 + $0x20] sm:$0xff]
          %v376 = vld [vmem:[%s309 + $0x28] sm:$0xff]
          %v377 = vld [vmem:[%s309 + $0x30] sm:$0xff]
          %v378 = vld [vmem:[%s309 + $0x38] sm:$0xff]
          %v379 = vld [vmem:[%s309 + $0x40] sm:$0xff]
          %v380 = vld [vmem:[%s309 + $0x48] sm:$0xff]
          %v381 = vld [vmem:[%s309 + $0x50] sm:$0xff]
          %v382 = vld [vmem:[%s309 + $0x58] sm:$0xff]
          %v383 = vld [vmem:[%s309 + $0x60] sm:$0xff]
          %v384 = vld [vmem:[%s309 + $0x68] sm:$0xff]
          %v385 = vld [vmem:[%s309 + $0x70] sm:$0xff]
          %v386 = vld [vmem:[%s309 + $0x78] sm:$0xff]
          %v403 = vunpack.c.l.b16 %v355
          %v404 = vunpack.c.l.b16 %v356
          %v405 = vunpack.c.l.b16 %v357
          %v406 = vunpack.c.l.b16 %v358
          %v407 = vunpack.c.l.b16 %v359
          %v408 = vunpack.c.l.b16 %v360
          %v409 = vunpack.c.l.b16 %v361
          %v410 = vunpack.c.l.b16 %v362
          %v411 = vunpack.c.l.b16 %v363
          %v412 = vunpack.c.l.b16 %v364
          %v413 = vunpack.c.l.b16 %v365
          %v414 = vunpack.c.l.b16 %v366
          %v415 = vunpack.c.l.b16 %v367
          %v416 = vunpack.c.l.b16 %v368
          %v417 = vunpack.c.l.b16 %v369
          %v418 = vunpack.c.l.b16 %v370
          %v419 = vpack.c.b16 %v404, %v403
          %v420 = vpack.c.b16 %v406, %v405
          %v421 = vpack.c.b16 %v408, %v407
          %v422 = vpack.c.b16 %v410, %v409
          %v423 = vpack.c.b16 %v412, %v411
          %v424 = vpack.c.b16 %v414, %v413
          %v425 = vpack.c.b16 %v416, %v415
          %v426 = vpack.c.b16 %v418, %v417
          %v451 = vunpack.c.l.b16 %v371
          %v452 = vunpack.c.h.b16 %v371
          %v453 = vunpack.c.l.b16 %v372
          %v454 = vunpack.c.h.b16 %v372
          %v455 = vunpack.c.l.b16 %v373
          %v456 = vunpack.c.h.b16 %v373
          %v457 = vunpack.c.l.b16 %v374
          %v458 = vunpack.c.h.b16 %v374
          %v459 = vunpack.c.l.b16 %v375
          %v460 = vunpack.c.h.b16 %v375
          %v461 = vunpack.c.l.b16 %v376
          %v462 = vunpack.c.h.b16 %v376
          %v463 = vunpack.c.l.b16 %v377
          %v464 = vunpack.c.h.b16 %v377
          %v465 = vunpack.c.l.b16 %v378
          %v466 = vunpack.c.h.b16 %v378
          %v467 = vunpack.c.l.b16 %v379
          %v468 = vunpack.c.h.b16 %v379
          %v469 = vunpack.c.l.b16 %v380
          %v470 = vunpack.c.h.b16 %v380
          %v471 = vunpack.c.l.b16 %v381
          %v472 = vunpack.c.h.b16 %v381
          %v473 = vunpack.c.l.b16 %v382
          %v474 = vunpack.c.h.b16 %v382
          %v475 = vunpack.c.l.b16 %v383
          %v476 = vunpack.c.h.b16 %v383
          %v477 = vunpack.c.l.b16 %v384
          %v478 = vunpack.c.h.b16 %v384
          %v479 = vunpack.c.l.b16 %v385
          %v480 = vunpack.c.h.b16 %v385
          %v481 = vunpack.c.l.b16 %v386
          %v482 = vunpack.c.h.b16 %v386
          %v483 = vpack.c.b16 %v453, %v451
          %v484 = vpack.c.b16 %v454, %v452
          %v485 = vpack.c.b16 %v457, %v455
          %v486 = vpack.c.b16 %v458, %v456
          %v487 = vpack.c.b16 %v461, %v459
          %v488 = vpack.c.b16 %v462, %v460
          %v489 = vpack.c.b16 %v465, %v463
          %v490 = vpack.c.b16 %v466, %v464
          %v491 = vpack.c.b16 %v469, %v467
          %v492 = vpack.c.b16 %v470, %v468
          %v493 = vpack.c.b16 %v473, %v471
          %v494 = vpack.c.b16 %v474, %v472
          %v495 = vpack.c.b16 %v477, %v475
          %v496 = vpack.c.b16 %v478, %v476
          %v497 = vpack.c.b16 %v481, %v479
          %v498 = vpack.c.b16 %v482, %v480
          %515 = vmatprep.subr.bf16.mxu0 %v498
          %516 = vmatpush1.bf16.msra.mxu0 %v497
          %517 = vmatprep.subr.bf16.mxu0 %v496
          %518 = vmatpush1.bf16.msra.mxu0 %v495
          %519 = vmatprep.subr.bf16.mxu0 %v494
          %520 = vmatpush1.bf16.msra.mxu0 %v493
          %521 = vmatprep.subr.bf16.mxu0 %v492
          %522 = vmatpush1.bf16.msra.mxu0 %v491
          %523 = vmatprep.subr.bf16.mxu0 %v490
          %524 = vmatpush1.bf16.msra.mxu0 %v489
          %525 = vmatprep.subr.bf16.mxu0 %v488
          %526 = vmatpush1.bf16.msra.mxu0 %v487
          %527 = vmatprep.subr.bf16.mxu0 %v486
          %528 = vmatpush1.bf16.msra.mxu0 %v485
          %529 = vmatprep.subr.bf16.mxu0 %v484
          %530 = vmatpush1.bf16.msra.mxu0 %v483
          %531 = vmatprep.subr.bf16.mxu0 0
          %532 = vmatpush2.bf16.msra.mxu0 0
          %533 = vmatprep.subr.bf16.mxu0 0
          %534 = vmatpush2.bf16.msra.mxu0 0
          %535 = vmatprep.subr.bf16.mxu0 0
          %536 = vmatpush2.bf16.msra.mxu0 0
          %537 = vmatprep.subr.bf16.mxu0 0
          %538 = vmatpush2.bf16.msra.mxu0 0
          %539 = vmatprep.subr.bf16.mxu0 0
          %540 = vmatpush2.bf16.msra.mxu0 0
          %541 = vmatprep.subr.bf16.mxu0 0
          %542 = vmatpush2.bf16.msra.mxu0 0
          %543 = vmatprep.subr.bf16.mxu0 0
          %544 = vmatpush2.bf16.msra.mxu0 0
          %545 = vmatprep.subr.bf16.mxu0 0
          %546 = vmatpush2.bf16.msra.mxu0 0
          %547 = vmatprep.mubr.bf16.mxu0 0
          %548 = vmatmul.mubr.bf16.gmra.mxu0 %v419
          %v549 = vpop.f32.mrf.mxu0
          %v550 = vadd.f32 0.0, %v549
          %v551 = vpop.f32.mrf.mxu0
          %v552 = vadd.f32 0.0, %v551
          %v553 = vpop.f32.mrf.mxu0
          %v554 = vadd.f32 0.0, %v553
          %v555 = vpop.f32.mrf.mxu0
          %v556 = vadd.f32 0.0, %v555
          %557 = vmatprep.mubr.bf16.mxu0 0
          %558 = vmatmul.mubr.bf16.gmra.mxu0 %v420
          %v559 = vpop.f32.mrf.mxu0
          %v560 = vadd.f32 0.0, %v559
          %v561 = vpop.f32.mrf.mxu0
          %v562 = vadd.f32 0.0, %v561
          %v563 = vpop.f32.mrf.mxu0
          %v564 = vadd.f32 0.0, %v563
          %v565 = vpop.f32.mrf.mxu0
          %v566 = vadd.f32 0.0, %v565
          %567 = vmatprep.mubr.bf16.mxu0 0
          %568 = vmatmul.mubr.bf16.gmra.mxu0 %v421
          %v569 = vpop.f32.mrf.mxu0
          %v570 = vadd.f32 0.0, %v569
          %v571 = vpop.f32.mrf.mxu0
          %v572 = vadd.f32 0.0, %v571
          %v573 = vpop.f32.mrf.mxu0
          %v574 = vadd.f32 0.0, %v573
          %v575 = vpop.f32.mrf.mxu0
          %v576 = vadd.f32 0.0, %v575
          %577 = vmatprep.mubr.bf16.mxu0 0
          %578 = vmatmul.mubr.bf16.gmra.mxu0 %v422
          %v579 = vpop.f32.mrf.mxu0
          %v580 = vadd.f32 0.0, %v579
          %v581 = vpop.f32.mrf.mxu0
          %v582 = vadd.f32 0.0, %v581
          %v583 = vpop.f32.mrf.mxu0
          %v584 = vadd.f32 0.0, %v583
          %v585 = vpop.f32.mrf.mxu0
          %v586 = vadd.f32 0.0, %v585
          %587 = vmatprep.mubr.bf16.mxu0 0
          %588 = vmatmul.mubr.bf16.gmra.mxu0 %v423
          %v589 = vpop.f32.mrf.mxu0
          %v590 = vadd.f32 0.0, %v589
          %v591 = vpop.f32.mrf.mxu0
          %v592 = vadd.f32 0.0, %v591
          %v593 = vpop.f32.mrf.mxu0
          %v594 = vadd.f32 0.0, %v593
          %v595 = vpop.f32.mrf.mxu0
          %v596 = vadd.f32 0.0, %v595
          %597 = vmatprep.mubr.bf16.mxu0 0
          %598 = vmatmul.mubr.bf16.gmra.mxu0 %v424
          %v599 = vpop.f32.mrf.mxu0
          %v600 = vadd.f32 0.0, %v599
          %v601 = vpop.f32.mrf.mxu0
          %v602 = vadd.f32 0.0, %v601
          %v603 = vpop.f32.mrf.mxu0
          %v604 = vadd.f32 0.0, %v603
          %v605 = vpop.f32.mrf.mxu0
          %v606 = vadd.f32 0.0, %v605
          %607 = vmatprep.mubr.bf16.mxu0 0
          %608 = vmatmul.mubr.bf16.gmra.mxu0 %v425
          %v609 = vpop.f32.mrf.mxu0
          %v610 = vadd.f32 0.0, %v609
          %v611 = vpop.f32.mrf.mxu0
          %v612 = vadd.f32 0.0, %v611
          %v613 = vpop.f32.mrf.mxu0
          %v614 = vadd.f32 0.0, %v613
          %v615 = vpop.f32.mrf.mxu0
          %v616 = vadd.f32 0.0, %v615
          %617 = vmatprep.mubr.bf16.mxu0 0
          %618 = vmatmul.mubr.bf16.gmra.mxu0 %v426
          %v619 = vpop.f32.mrf.mxu0
          %v620 = vadd.f32 0.0, %v619
          %v621 = vpop.f32.mrf.mxu0
          %v622 = vadd.f32 0.0, %v621
          %v623 = vpop.f32.mrf.mxu0
          %v624 = vadd.f32 0.0, %v623
          %v625 = vpop.f32.mrf.mxu0
          %v626 = vadd.f32 0.0, %v625
          %627 = vdwg.mxu0
          %628 = vst [vmem:[#allocation2] sm:$0xff] %v550
          %629 = vst [vmem:[#allocation2 + $0x8] sm:$0xff] %v552
          %630 = vst [vmem:[#allocation2 + $0x10] sm:$0xff] %v554
          %631 = vst [vmem:[#allocation2 + $0x18] sm:$0xff] %v556
          %632 = vst [vmem:[#allocation2 + $0x20] sm:$0xff] %v560
          %633 = vst [vmem:[#allocation2 + $0x28] sm:$0xff] %v562
          %634 = vst [vmem:[#allocation2 + $0x30] sm:$0xff] %v564
          %635 = vst [vmem:[#allocation2 + $0x38] sm:$0xff] %v566
          %636 = vst [vmem:[#allocation2 + $0x40] sm:$0xff] %v570
          %637 = vst [vmem:[#allocation2 + $0x48] sm:$0xff] %v572
          %638 = vst [vmem:[#allocation2 + $0x50] sm:$0xff] %v574
          %639 = vst [vmem:[#allocation2 + $0x58] sm:$0xff] %v576
          %640 = vst [vmem:[#allocation2 + $0x60] sm:$0xff] %v580
          %641 = vst [vmem:[#allocation2 + $0x68] sm:$0xff] %v582
          %642 = vst [vmem:[#allocation2 + $0x70] sm:$0xff] %v584
          %643 = vst [vmem:[#allocation2 + $0x78] sm:$0xff] %v586
          %644 = vst [vmem:[#allocation2 + $0x80] sm:$0xff] %v590
          %645 = vst [vmem:[#allocation2 + $0x88] sm:$0xff] %v592
          %646 = vst [vmem:[#allocation2 + $0x90] sm:$0xff] %v594
          %647 = vst [vmem:[#allocation2 + $0x98] sm:$0xff] %v596
          %648 = vst [vmem:[#allocation2 + $0xa0] sm:$0xff] %v600
          %649 = vst [vmem:[#allocation2 + $0xa8] sm:$0xff] %v602
          %650 = vst [vmem:[#allocation2 + $0xb0] sm:$0xff] %v604
          %651 = vst [vmem:[#allocation2 + $0xb8] sm:$0xff] %v606
          %652 = vst [vmem:[#allocation2 + $0xc0] sm:$0xff] %v610
          %653 = vst [vmem:[#allocation2 + $0xc8] sm:$0xff] %v612
          %654 = vst [vmem:[#allocation2 + $0xd0] sm:$0xff] %v614
          %655 = vst [vmem:[#allocation2 + $0xd8] sm:$0xff] %v616
          %656 = vst [vmem:[#allocation2 + $0xe0] sm:$0xff] %v620
          %657 = vst [vmem:[#allocation2 + $0xe8] sm:$0xff] %v622
          %658 = vst [vmem:[#allocation2 + $0xf0] sm:$0xff] %v624
          %659 = vst [vmem:[#allocation2 + $0xf8] sm:$0xff] %v626
          %v660 = vlaneseq
          %vm661 = vcmp.ge.s32.totalorder %v660, 0
          %vm662 = vcmp.lt.s32.totalorder %v660, 256
          %vm663 = vmand %vm661, %vm662
          %664 = vst.msk [vmem:[#allocation3] sm:$0x3] %vm663, -inf
          %665 = vst.msk [vmem:[#allocation4] sm:$0x3] %vm663, 0.0
          %666 = vst.msk [vmem:[#allocation5] sm:$0x3] %vm663, 0.0
        $region48: #{forward.3} parent=43 // pred_fallthru
          _
        %v667 = vld [vmem:[%s318] sm:$0xf]
        %v668 = vld [vmem:[%s318 + $0x4] sm:$0xf]
        %v669 = vld [vmem:[%s318 + $0x8] sm:$0xf]
        %v670 = vld [vmem:[%s318 + $0xc] sm:$0xf]
        %v671 = vld [vmem:[%s318 + $0x10] sm:$0xf]
        %v672 = vld [vmem:[%s318 + $0x14] sm:$0xf]
        %v673 = vld [vmem:[%s318 + $0x18] sm:$0xf]
        %v674 = vld [vmem:[%s318 + $0x1c] sm:$0xf]
        %v675 = vld [vmem:[%s318 + $0x20] sm:$0xf]
        %v676 = vld [vmem:[%s318 + $0x24] sm:$0xf]
        %v677 = vld [vmem:[%s318 + $0x28] sm:$0xf]
        %v678 = vld [vmem:[%s318 + $0x2c] sm:$0xf]
        %v679 = vld [vmem:[%s318 + $0x30] sm:$0xf]
        %v680 = vld [vmem:[%s318 + $0x34] sm:$0xf]
        %v681 = vld [vmem:[%s318 + $0x38] sm:$0xf]
        %v682 = vld [vmem:[%s318 + $0x3c] sm:$0xf]
        %v683 = vld [vmem:[%s318 + $0x40] sm:$0xf]
        %v684 = vld [vmem:[%s318 + $0x44] sm:$0xf]
        %v685 = vld [vmem:[%s318 + $0x48] sm:$0xf]
        %v686 = vld [vmem:[%s318 + $0x4c] sm:$0xf]
        %v687 = vld [vmem:[%s318 + $0x50] sm:$0xf]
        %v688 = vld [vmem:[%s318 + $0x54] sm:$0xf]
        %v689 = vld [vmem:[%s318 + $0x58] sm:$0xf]
        %v690 = vld [vmem:[%s318 + $0x5c] sm:$0xf]
        %v691 = vld [vmem:[%s318 + $0x60] sm:$0xf]
        %v692 = vld [vmem:[%s318 + $0x64] sm:$0xf]
        %v693 = vld [vmem:[%s318 + $0x68] sm:$0xf]
        %v694 = vld [vmem:[%s318 + $0x6c] sm:$0xf]
        %v695 = vld [vmem:[%s318 + $0x70] sm:$0xf]
        %v696 = vld [vmem:[%s318 + $0x74] sm:$0xf]
        %v697 = vld [vmem:[%s318 + $0x78] sm:$0xf]
        %v698 = vld [vmem:[%s318 + $0x7c] sm:$0xf]
        %v699 = vld [vmem:[%s318 + $0x80] sm:$0xf]
        %v700 = vld [vmem:[%s318 + $0x84] sm:$0xf]
        %v701 = vld [vmem:[%s318 + $0x88] sm:$0xf]
        %v702 = vld [vmem:[%s318 + $0x8c] sm:$0xf]
        %v703 = vld [vmem:[%s318 + $0x90] sm:$0xf]
        %v704 = vld [vmem:[%s318 + $0x94] sm:$0xf]
        %v705 = vld [vmem:[%s318 + $0x98] sm:$0xf]
        %v706 = vld [vmem:[%s318 + $0x9c] sm:$0xf]
        %v707 = vld [vmem:[%s318 + $0xa0] sm:$0xf]
        %v708 = vld [vmem:[%s318 + $0xa4] sm:$0xf]
        %v709 = vld [vmem:[%s318 + $0xa8] sm:$0xf]
        %v710 = vld [vmem:[%s318 + $0xac] sm:$0xf]
        %v711 = vld [vmem:[%s318 + $0xb0] sm:$0xf]
        %v712 = vld [vmem:[%s318 + $0xb4] sm:$0xf]
        %v713 = vld [vmem:[%s318 + $0xb8] sm:$0xf]
        %v714 = vld [vmem:[%s318 + $0xbc] sm:$0xf]
        %v715 = vld [vmem:[%s318 + $0xc0] sm:$0xf]
        %v716 = vld [vmem:[%s318 + $0xc4] sm:$0xf]
        %v717 = vld [vmem:[%s318 + $0xc8] sm:$0xf]
        %v718 = vld [vmem:[%s318 + $0xcc] sm:$0xf]
        %v719 = vld [vmem:[%s318 + $0xd0] sm:$0xf]
        %v720 = vld [vmem:[%s318 + $0xd4] sm:$0xf]
        %v721 = vld [vmem:[%s318 + $0xd8] sm:$0xf]
        %v722 = vld [vmem:[%s318 + $0xdc] sm:$0xf]
        %v723 = vld [vmem:[%s318 + $0xe0] sm:$0xf]
        %v724 = vld [vmem:[%s318 + $0xe4] sm:$0xf]
        %v725 = vld [vmem:[%s318 + $0xe8] sm:$0xf]
        %v726 = vld [vmem:[%s318 + $0xec] sm:$0xf]
        %v727 = vld [vmem:[%s318 + $0xf0] sm:$0xf]
        %v728 = vld [vmem:[%s318 + $0xf4] sm:$0xf]
        %v729 = vld [vmem:[%s318 + $0xf8] sm:$0xf]
        %v730 = vld [vmem:[%s318 + $0xfc] sm:$0xf]
        %v731 = vld [vmem:[#allocation2] sm:$0xff]
        %v732 = vld [vmem:[#allocation2 + $0x8] sm:$0xff]
        %v733 = vld [vmem:[#allocation2 + $0x10] sm:$0xff]
        %v734 = vld [vmem:[#allocation2 + $0x18] sm:$0xff]
        %v735 = vld [vmem:[#allocation2 + $0x20] sm:$0xff]
        %v736 = vld [vmem:[#allocation2 + $0x28] sm:$0xff]
        %v737 = vld [vmem:[#allocation2 + $0x30] sm:$0xff]
        %v738 = vld [vmem:[#allocation2 + $0x38] sm:$0xff]
        %v739 = vld [vmem:[#allocation2 + $0x40] sm:$0xff]
        %v740 = vld [vmem:[#allocation2 + $0x48] sm:$0xff]
        %v741 = vld [vmem:[#allocation2 + $0x50] sm:$0xff]
        %v742 = vld [vmem:[#allocation2 + $0x58] sm:$0xff]
        %v743 = vld [vmem:[#allocation2 + $0x60] sm:$0xff]
        %v744 = vld [vmem:[#allocation2 + $0x68] sm:$0xff]
        %v745 = vld [vmem:[#allocation2 + $0x70] sm:$0xff]
        %v746 = vld [vmem:[#allocation2 + $0x78] sm:$0xff]
        %v747 = vld [vmem:[#allocation2 + $0x80] sm:$0xff]
        %v748 = vld [vmem:[#allocation2 + $0x88] sm:$0xff]
        %v749 = vld [vmem:[#allocation2 + $0x90] sm:$0xff]
        %v750 = vld [vmem:[#allocation2 + $0x98] sm:$0xff]
        %v751 = vld [vmem:[#allocation2 + $0xa0] sm:$0xff]
        %v752 = vld [vmem:[#allocation2 + $0xa8] sm:$0xff]
        %v753 = vld [vmem:[#allocation2 + $0xb0] sm:$0xff]
        %v754 = vld [vmem:[#allocation2 + $0xb8] sm:$0xff]
        %v755 = vld [vmem:[#allocation2 + $0xc0] sm:$0xff]
        %v756 = vld [vmem:[#allocation2 + $0xc8] sm:$0xff]
        %v757 = vld [vmem:[#allocation2 + $0xd0] sm:$0xff]
        %v758 = vld [vmem:[#allocation2 + $0xd8] sm:$0xff]
        %v759 = vld [vmem:[#allocation2 + $0xe0] sm:$0xff]
        %v760 = vld [vmem:[#allocation2 + $0xe8] sm:$0xff]
        %v761 = vld [vmem:[#allocation2 + $0xf0] sm:$0xff]
        %v762 = vld [vmem:[#allocation2 + $0xf8] sm:$0xff]
        %v763 = vpack.c.bf16 %v733, %v731
        %v764 = vpack.c.bf16 %v734, %v732
        %v765 = vpack.c.bf16 %v737, %v735
        %v766 = vpack.c.bf16 %v738, %v736
        %v767 = vpack.c.bf16 %v741, %v739
        %v768 = vpack.c.bf16 %v742, %v740
        %v769 = vpack.c.bf16 %v745, %v743
        %v770 = vpack.c.bf16 %v746, %v744
        %v771 = vpack.c.bf16 %v749, %v747
        %v772 = vpack.c.bf16 %v750, %v748
        %v773 = vpack.c.bf16 %v753, %v751
        %v774 = vpack.c.bf16 %v754, %v752
        %v775 = vpack.c.bf16 %v757, %v755
        %v776 = vpack.c.bf16 %v758, %v756
        %v777 = vpack.c.bf16 %v761, %v759
        %v778 = vpack.c.bf16 %v762, %v760
        %v779 = vld [vmem:[%s330] sm:$0xff]
        %v780 = vld [vmem:[%s330 + $0x8] sm:$0xff]
        %v781 = vld [vmem:[%s330 + $0x10] sm:$0xff]
        %v782 = vld [vmem:[%s330 + $0x18] sm:$0xff]
        %v783 = vld [vmem:[%s330 + $0x20] sm:$0xff]
        %v784 = vld [vmem:[%s330 + $0x28] sm:$0xff]
        %v785 = vld [vmem:[%s330 + $0x30] sm:$0xff]
        %v786 = vld [vmem:[%s330 + $0x38] sm:$0xff]
        %v787 = vld [vmem:[%s330 + $0x40] sm:$0xff]
        %v788 = vld [vmem:[%s330 + $0x48] sm:$0xff]
        %v789 = vld [vmem:[%s330 + $0x50] sm:$0xff]
        %v790 = vld [vmem:[%s330 + $0x58] sm:$0xff]
        %v791 = vld [vmem:[%s330 + $0x60] sm:$0xff]
        %v792 = vld [vmem:[%s330 + $0x68] sm:$0xff]
        %v793 = vld [vmem:[%s330 + $0x70] sm:$0xff]
        %v794 = vld [vmem:[%s330 + $0x78] sm:$0xff]
        %v795 = vld [vmem:[%s330 + $0x80] sm:$0xff]
        %v796 = vld [vmem:[%s330 + $0x88] sm:$0xff]
        %v797 = vld [vmem:[%s330 + $0x90] sm:$0xff]
        %v798 = vld [vmem:[%s330 + $0x98] sm:$0xff]
        %v799 = vld [vmem:[%s330 + $0xa0] sm:$0xff]
        %v800 = vld [vmem:[%s330 + $0xa8] sm:$0xff]
        %v801 = vld [vmem:[%s330 + $0xb0] sm:$0xff]
        %v802 = vld [vmem:[%s330 + $0xb8] sm:$0xff]
        %v803 = vld [vmem:[%s330 + $0xc0] sm:$0xff]
        %v804 = vld [vmem:[%s330 + $0xc8] sm:$0xff]
        %v805 = vld [vmem:[%s330 + $0xd0] sm:$0xff]
        %v806 = vld [vmem:[%s330 + $0xd8] sm:$0xff]
        %v807 = vld [vmem:[%s330 + $0xe0] sm:$0xff]
        %v808 = vld [vmem:[%s330 + $0xe8] sm:$0xff]
        %v809 = vld [vmem:[%s330 + $0xf0] sm:$0xff]
        %v810 = vld [vmem:[%s330 + $0xf8] sm:$0xff]
        %v811 = vld [vmem:[%s330 + $0x100] sm:$0xff]
        %v812 = vld [vmem:[%s330 + $0x108] sm:$0xff]
        %v813 = vld [vmem:[%s330 + $0x110] sm:$0xff]
        %v814 = vld [vmem:[%s330 + $0x118] sm:$0xff]
        %v815 = vld [vmem:[%s330 + $0x120] sm:$0xff]
        %v816 = vld [vmem:[%s330 + $0x128] sm:$0xff]
        %v817 = vld [vmem:[%s330 + $0x130] sm:$0xff]
        %v818 = vld [vmem:[%s330 + $0x138] sm:$0xff]
        %v819 = vld [vmem:[%s330 + $0x140] sm:$0xff]
        %v820 = vld [vmem:[%s330 + $0x148] sm:$0xff]
        %v821 = vld [vmem:[%s330 + $0x150] sm:$0xff]
        %v822 = vld [vmem:[%s330 + $0x158] sm:$0xff]
        %v823 = vld [vmem:[%s330 + $0x160] sm:$0xff]
        %v824 = vld [vmem:[%s330 + $0x168] sm:$0xff]
        %v825 = vld [vmem:[%s330 + $0x170] sm:$0xff]
        %v826 = vld [vmem:[%s330 + $0x178] sm:$0xff]
        %v827 = vld [vmem:[%s330 + $0x180] sm:$0xff]
        %v828 = vld [vmem:[%s330 + $0x188] sm:$0xff]
        %v829 = vld [vmem:[%s330 + $0x190] sm:$0xff]
        %v830 = vld [vmem:[%s330 + $0x198] sm:$0xff]
        %v831 = vld [vmem:[%s330 + $0x1a0] sm:$0xff]
        %v832 = vld [vmem:[%s330 + $0x1a8] sm:$0xff]
        %v833 = vld [vmem:[%s330 + $0x1b0] sm:$0xff]
        %v834 = vld [vmem:[%s330 + $0x1b8] sm:$0xff]
        %v835 = vld [vmem:[%s330 + $0x1c0] sm:$0xff]
        %v836 = vld [vmem:[%s330 + $0x1c8] sm:$0xff]
        %v837 = vld [vmem:[%s330 + $0x1d0] sm:$0xff]
        %v838 = vld [vmem:[%s330 + $0x1d8] sm:$0xff]
        %v839 = vld [vmem:[%s330 + $0x1e0] sm:$0xff]
        %v840 = vld [vmem:[%s330 + $0x1e8] sm:$0xff]
        %v841 = vld [vmem:[%s330 + $0x1f0] sm:$0xff]
        %v842 = vld [vmem:[%s330 + $0x1f8] sm:$0xff]
        %844 = vset.pattern.permute.xlu0 0
        %845 = vperm.xlu0 %844, %v779
        %v846 = vpop.permute.xlu0 %845
        %849 = vset.pattern.permute.xlu0 0
        %850 = vperm.xlu0 %849, %v780
        %v851 = vpop.permute.xlu0 %850
        %854 = vset.pattern.permute.xlu0 0
        %855 = vperm.xlu0 %854, %v781
        %v856 = vpop.permute.xlu0 %855
        %859 = vset.pattern.permute.xlu0 0
        %860 = vperm.xlu0 %859, %v782
        %v861 = vpop.permute.xlu0 %860
        %864 = vset.pattern.permute.xlu0 0
        %865 = vperm.xlu0 %864, %v783
        %v866 = vpop.permute.xlu0 %865
        %869 = vset.pattern.permute.xlu0 0
        %870 = vperm.xlu0 %869, %v784
        %v871 = vpop.permute.xlu0 %870
        %874 = vset.pattern.permute.xlu0 0
        %875 = vperm.xlu0 %874, %v785
        %v876 = vpop.permute.xlu0 %875
        %879 = vset.pattern.permute.xlu0 0
        %880 = vperm.xlu0 %879, %v786
        %v881 = vpop.permute.xlu0 %880
        %884 = vset.pattern.permute.xlu0 0
        %885 = vperm.xlu0 %884, %v787
        %v886 = vpop.permute.xlu0 %885
        %889 = vset.pattern.permute.xlu0 0
        %890 = vperm.xlu0 %889, %v788
        %v891 = vpop.permute.xlu0 %890
        %894 = vset.pattern.permute.xlu0 0
        %895 = vperm.xlu0 %894, %v789
        %v896 = vpop.permute.xlu0 %895
        %899 = vset.pattern.permute.xlu0 0
        %900 = vperm.xlu0 %899, %v790
        %v901 = vpop.permute.xlu0 %900
        %904 = vset.pattern.permute.xlu0 0
        %905 = vperm.xlu0 %904, %v791
        %v906 = vpop.permute.xlu0 %905
        %909 = vset.pattern.permute.xlu0 0
        %910 = vperm.xlu0 %909, %v792
        %v911 = vpop.permute.xlu0 %910
        %914 = vset.pattern.permute.xlu0 0
        %915 = vperm.xlu0 %914, %v793
        %v916 = vpop.permute.xlu0 %915
        %919 = vset.pattern.permute.xlu0 0
        %920 = vperm.xlu0 %919, %v794
        %v921 = vpop.permute.xlu0 %920
        %924 = vset.pattern.permute.xlu0 0
        %925 = vperm.xlu0 %924, %v795
        %v926 = vpop.permute.xlu0 %925
        %929 = vset.pattern.permute.xlu0 0
        %930 = vperm.xlu0 %929, %v796
        %v931 = vpop.permute.xlu0 %930
        %934 = vset.pattern.permute.xlu0 0
        %935 = vperm.xlu0 %934, %v797
        %v936 = vpop.permute.xlu0 %935
        %939 = vset.pattern.permute.xlu0 0
        %940 = vperm.xlu0 %939, %v798
        %v941 = vpop.permute.xlu0 %940
        %944 = vset.pattern.permute.xlu0 0
        %945 = vperm.xlu0 %944, %v799
        %v946 = vpop.permute.xlu0 %945
        %949 = vset.pattern.permute.xlu0 0
        %950 = vperm.xlu0 %949, %v800
        %v951 = vpop.permute.xlu0 %950
        %954 = vset.pattern.permute.xlu0 0
        %955 = vperm.xlu0 %954, %v801
        %v956 = vpop.permute.xlu0 %955
        %959 = vset.pattern.permute.xlu0 0
        %960 = vperm.xlu0 %959, %v802
        %v961 = vpop.permute.xlu0 %960
        %964 = vset.pattern.permute.xlu0 0
        %965 = vperm.xlu0 %964, %v803
        %v966 = vpop.permute.xlu0 %965
        %969 = vset.pattern.permute.xlu0 0
        %970 = vperm.xlu0 %969, %v804
        %v971 = vpop.permute.xlu0 %970
        %974 = vset.pattern.permute.xlu0 0
        %975 = vperm.xlu0 %974, %v805
        %v976 = vpop.permute.xlu0 %975
        %979 = vset.pattern.permute.xlu0 0
        %980 = vperm.xlu0 %979, %v806
        %v981 = vpop.permute.xlu0 %980
        %984 = vset.pattern.permute.xlu0 0
        %985 = vperm.xlu0 %984, %v807
        %v986 = vpop.permute.xlu0 %985
        %989 = vset.pattern.permute.xlu0 0
        %990 = vperm.xlu0 %989, %v808
        %v991 = vpop.permute.xlu0 %990
        %994 = vset.pattern.permute.xlu0 0
        %995 = vperm.xlu0 %994, %v809
        %v996 = vpop.permute.xlu0 %995
        %999 = vset.pattern.permute.xlu0 0
        %1000 = vperm.xlu0 %999, %v810
        %v1001 = vpop.permute.xlu0 %1000
        %1004 = vset.pattern.permute.xlu0 0
        %1005 = vperm.xlu0 %1004, %v811
        %v1006 = vpop.permute.xlu0 %1005
        %1009 = vset.pattern.permute.xlu0 0
        %1010 = vperm.xlu0 %1009, %v812
        %v1011 = vpop.permute.xlu0 %1010
        %1014 = vset.pattern.permute.xlu0 0
        %1015 = vperm.xlu0 %1014, %v813
        %v1016 = vpop.permute.xlu0 %1015
        %1019 = vset.pattern.permute.xlu0 0
        %1020 = vperm.xlu0 %1019, %v814
        %v1021 = vpop.permute.xlu0 %1020
        %1024 = vset.pattern.permute.xlu0 0
        %1025 = vperm.xlu0 %1024, %v815
        %v1026 = vpop.permute.xlu0 %1025
        %1029 = vset.pattern.permute.xlu0 0
        %1030 = vperm.xlu0 %1029, %v816
        %v1031 = vpop.permute.xlu0 %1030
        %1034 = vset.pattern.permute.xlu0 0
        %1035 = vperm.xlu0 %1034, %v817
        %v1036 = vpop.permute.xlu0 %1035
        %1039 = vset.pattern.permute.xlu0 0
        %1040 = vperm.xlu0 %1039, %v818
        %v1041 = vpop.permute.xlu0 %1040
        %1044 = vset.pattern.permute.xlu0 0
        %1045 = vperm.xlu0 %1044, %v819
        %v1046 = vpop.permute.xlu0 %1045
        %1049 = vset.pattern.permute.xlu0 0
        %1050 = vperm.xlu0 %1049, %v820
        %v1051 = vpop.permute.xlu0 %1050
        %1054 = vset.pattern.permute.xlu0 0
        %1055 = vperm.xlu0 %1054, %v821
        %v1056 = vpop.permute.xlu0 %1055
        %1059 = vset.pattern.permute.xlu0 0
        %1060 = vperm.xlu0 %1059, %v822
        %v1061 = vpop.permute.xlu0 %1060
        %1064 = vset.pattern.permute.xlu0 0
        %1065 = vperm.xlu0 %1064, %v823
        %v1066 = vpop.permute.xlu0 %1065
        %1069 = vset.pattern.permute.xlu0 0
        %1070 = vperm.xlu0 %1069, %v824
        %v1071 = vpop.permute.xlu0 %1070
        %1074 = vset.pattern.permute.xlu0 0
        %1075 = vperm.xlu0 %1074, %v825
        %v1076 = vpop.permute.xlu0 %1075
        %1079 = vset.pattern.permute.xlu0 0
        %1080 = vperm.xlu0 %1079, %v826
        %v1081 = vpop.permute.xlu0 %1080
        %1084 = vset.pattern.permute.xlu0 0
        %1085 = vperm.xlu0 %1084, %v827
        %v1086 = vpop.permute.xlu0 %1085
        %1089 = vset.pattern.permute.xlu0 0
        %1090 = vperm.xlu0 %1089, %v828
        %v1091 = vpop.permute.xlu0 %1090
        %1094 = vset.pattern.permute.xlu0 0
        %1095 = vperm.xlu0 %1094, %v829
        %v1096 = vpop.permute.xlu0 %1095
        %1099 = vset.pattern.permute.xlu0 0
        %1100 = vperm.xlu0 %1099, %v830
        %v1101 = vpop.permute.xlu0 %1100
        %1104 = vset.pattern.permute.xlu0 0
        %1105 = vperm.xlu0 %1104, %v831
        %v1106 = vpop.permute.xlu0 %1105
        %1109 = vset.pattern.permute.xlu0 0
        %1110 = vperm.xlu0 %1109, %v832
        %v1111 = vpop.permute.xlu0 %1110
        %1114 = vset.pattern.permute.xlu0 0
        %1115 = vperm.xlu0 %1114, %v833
        %v1116 = vpop.permute.xlu0 %1115
        %1119 = vset.pattern.permute.xlu0 0
        %1120 = vperm.xlu0 %1119, %v834
        %v1121 = vpop.permute.xlu0 %1120
        %1124 = vset.pattern.permute.xlu0 0
        %1125 = vperm.xlu0 %1124, %v835
        %v1126 = vpop.permute.xlu0 %1125
        %1129 = vset.pattern.permute.xlu0 0
        %1130 = vperm.xlu0 %1129, %v836
        %v1131 = vpop.permute.xlu0 %1130
        %1134 = vset.pattern.permute.xlu0 0
        %1135 = vperm.xlu0 %1134, %v837
        %v1136 = vpop.permute.xlu0 %1135
        %1139 = vset.pattern.permute.xlu0 0
        %1140 = vperm.xlu0 %1139, %v838
        %v1141 = vpop.permute.xlu0 %1140
        %1144 = vset.pattern.permute.xlu0 0
        %1145 = vperm.xlu0 %1144, %v839
        %v1146 = vpop.permute.xlu0 %1145
        %1149 = vset.pattern.permute.xlu0 0
        %1150 = vperm.xlu0 %1149, %v840
        %v1151 = vpop.permute.xlu0 %1150
        %1154 = vset.pattern.permute.xlu0 0
        %1155 = vperm.xlu0 %1154, %v841
        %v1156 = vpop.permute.xlu0 %1155
        %1159 = vset.pattern.permute.xlu0 0
        %1160 = vperm.xlu0 %1159, %v842
        %v1161 = vpop.permute.xlu0 %1160
        %v1227 = vunpack.c.l.b16 %v667
        %v1228 = vunpack.c.l.b16 %v668
        %v1229 = vunpack.c.l.b16 %v669
        %v1230 = vunpack.c.l.b16 %v670
        %v1231 = vunpack.c.l.b16 %v671
        %v1232 = vunpack.c.l.b16 %v672
        %v1233 = vunpack.c.l.b16 %v673
        %v1234 = vunpack.c.l.b16 %v674
        %v1235 = vunpack.c.l.b16 %v675
        %v1236 = vunpack.c.l.b16 %v676
        %v1237 = vunpack.c.l.b16 %v677
        %v1238 = vunpack.c.l.b16 %v678
        %v1239 = vunpack.c.l.b16 %v679
        %v1240 = vunpack.c.l.b16 %v680
        %v1241 = vunpack.c.l.b16 %v681
        %v1242 = vunpack.c.l.b16 %v682
        %v1243 = vunpack.c.l.b16 %v683
        %v1244 = vunpack.c.l.b16 %v684
        %v1245 = vunpack.c.l.b16 %v685
        %v1246 = vunpack.c.l.b16 %v686
        %v1247 = vunpack.c.l.b16 %v687
        %v1248 = vunpack.c.l.b16 %v688
        %v1249 = vunpack.c.l.b16 %v689
        %v1250 = vunpack.c.l.b16 %v690
        %v1251 = vunpack.c.l.b16 %v691
        %v1252 = vunpack.c.l.b16 %v692
        %v1253 = vunpack.c.l.b16 %v693
        %v1254 = vunpack.c.l.b16 %v694
        %v1255 = vunpack.c.l.b16 %v695
        %v1256 = vunpack.c.l.b16 %v696
        %v1257 = vunpack.c.l.b16 %v697
        %v1258 = vunpack.c.l.b16 %v698
        %v1259 = vunpack.c.l.b16 %v699
        %v1260 = vunpack.c.l.b16 %v700
        %v1261 = vunpack.c.l.b16 %v701
        %v1262 = vunpack.c.l.b16 %v702
        %v1263 = vunpack.c.l.b16 %v703
        %v1264 = vunpack.c.l.b16 %v704
        %v1265 = vunpack.c.l.b16 %v705
        %v1266 = vunpack.c.l.b16 %v706
        %v1267 = vunpack.c.l.b16 %v707
        %v1268 = vunpack.c.l.b16 %v708
        %v1269 = vunpack.c.l.b16 %v709
        %v1270 = vunpack.c.l.b16 %v710
        %v1271 = vunpack.c.l.b16 %v711
        %v1272 = vunpack.c.l.b16 %v712
        %v1273 = vunpack.c.l.b16 %v713
        %v1274 = vunpack.c.l.b16 %v714
        %v1275 = vunpack.c.l.b16 %v715
        %v1276 = vunpack.c.l.b16 %v716
        %v1277 = vunpack.c.l.b16 %v717
        %v1278 = vunpack.c.l.b16 %v718
        %v1279 = vunpack.c.l.b16 %v719
        %v1280 = vunpack.c.l.b16 %v720
        %v1281 = vunpack.c.l.b16 %v721
        %v1282 = vunpack.c.l.b16 %v722
        %v1283 = vunpack.c.l.b16 %v723
        %v1284 = vunpack.c.l.b16 %v724
        %v1285 = vunpack.c.l.b16 %v725
        %v1286 = vunpack.c.l.b16 %v726
        %v1287 = vunpack.c.l.b16 %v727
        %v1288 = vunpack.c.l.b16 %v728
        %v1289 = vunpack.c.l.b16 %v729
        %v1290 = vunpack.c.l.b16 %v730
        %v1291 = vpack.c.b16 %v1228, %v1227
        %v1292 = vpack.c.b16 %v1230, %v1229
        %v1293 = vpack.c.b16 %v1232, %v1231
        %v1294 = vpack.c.b16 %v1234, %v1233
        %v1295 = vpack.c.b16 %v1236, %v1235
        %v1296 = vpack.c.b16 %v1238, %v1237
        %v1297 = vpack.c.b16 %v1240, %v1239
        %v1298 = vpack.c.b16 %v1242, %v1241
        %v1299 = vpack.c.b16 %v1244, %v1243
        %v1300 = vpack.c.b16 %v1246, %v1245
        %v1301 = vpack.c.b16 %v1248, %v1247
        %v1302 = vpack.c.b16 %v1250, %v1249
        %v1303 = vpack.c.b16 %v1252, %v1251
        %v1304 = vpack.c.b16 %v1254, %v1253
        %v1305 = vpack.c.b16 %v1256, %v1255
        %v1306 = vpack.c.b16 %v1258, %v1257
        %v1307 = vpack.c.b16 %v1260, %v1259
        %v1308 = vpack.c.b16 %v1262, %v1261
        %v1309 = vpack.c.b16 %v1264, %v1263
        %v1310 = vpack.c.b16 %v1266, %v1265
        %v1311 = vpack.c.b16 %v1268, %v1267
        %v1312 = vpack.c.b16 %v1270, %v1269
        %v1313 = vpack.c.b16 %v1272, %v1271
        %v1314 = vpack.c.b16 %v1274, %v1273
        %v1315 = vpack.c.b16 %v1276, %v1275
        %v1316 = vpack.c.b16 %v1278, %v1277
        %v1317 = vpack.c.b16 %v1280, %v1279
        %v1318 = vpack.c.b16 %v1282, %v1281
        %v1319 = vpack.c.b16 %v1284, %v1283
        %v1320 = vpack.c.b16 %v1286, %v1285
        %v1321 = vpack.c.b16 %v1288, %v1287
        %v1322 = vpack.c.b16 %v1290, %v1289
        %1355 = vmatprep.subr.bf16.mxu0 %v778
        %1356 = vmatpush1.bf16.msra.mxu0 %v777
        %1357 = vmatprep.subr.bf16.mxu0 %v776
        %1358 = vmatpush1.bf16.msra.mxu0 %v775
        %1359 = vmatprep.subr.bf16.mxu0 %v774
        %1360 = vmatpush1.bf16.msra.mxu0 %v773
        %1361 = vmatprep.subr.bf16.mxu0 %v772
        %1362 = vmatpush1.bf16.msra.mxu0 %v771
        %1363 = vmatprep.subr.bf16.mxu0 %v770
        %1364 = vmatpush1.bf16.msra.mxu0 %v769
        %1365 = vmatprep.subr.bf16.mxu0 %v768
        %1366 = vmatpush1.bf16.msra.mxu0 %v767
        %1367 = vmatprep.subr.bf16.mxu0 %v766
        %1368 = vmatpush1.bf16.msra.mxu0 %v765
        %1369 = vmatprep.subr.bf16.mxu0 %v764
        %1370 = vmatpush1.bf16.msra.mxu0 %v763
        %1371 = vmatprep.subr.bf16.mxu0 0
        %1372 = vmatpush2.bf16.msra.mxu0 0
        %1373 = vmatprep.subr.bf16.mxu0 0
        %1374 = vmatpush2.bf16.msra.mxu0 0
        %1375 = vmatprep.subr.bf16.mxu0 0
        %1376 = vmatpush2.bf16.msra.mxu0 0
        %1377 = vmatprep.subr.bf16.mxu0 0
        %1378 = vmatpush2.bf16.msra.mxu0 0
        %1379 = vmatprep.subr.bf16.mxu0 0
        %1380 = vmatpush2.bf16.msra.mxu0 0
        %1381 = vmatprep.subr.bf16.mxu0 0
        %1382 = vmatpush2.bf16.msra.mxu0 0
        %1383 = vmatprep.subr.bf16.mxu0 0
        %1384 = vmatpush2.bf16.msra.mxu0 0
        %1385 = vmatprep.subr.bf16.mxu0 0
        %1386 = vmatpush2.bf16.msra.mxu0 0
        %1387 = vmatprep.mubr.bf16.mxu0 0
        %1388 = vmatmul.mubr.bf16.gmra.mxu0 %v1291
        %v1389 = vpop.f32.mrf.mxu0
        %v1390 = vadd.f32 %v846, %v1389
        %v1391 = vpop.f32.mrf.mxu0
        %v1392 = vadd.f32 %v846, %v1391
        %v1393 = vpop.f32.mrf.mxu0
        %v1394 = vadd.f32 %v851, %v1393
        %v1395 = vpop.f32.mrf.mxu0
        %v1396 = vadd.f32 %v851, %v1395
        %1397 = vmatprep.mubr.bf16.mxu0 0
        %1398 = vmatmul.mubr.bf16.gmra.mxu0 %v1292
        %v1399 = vpop.f32.mrf.mxu0
        %v1400 = vadd.f32 %v856, %v1399
        %v1401 = vpop.f32.mrf.mxu0
        %v1402 = vadd.f32 %v856, %v1401
        %v1403 = vpop.f32.mrf.mxu0
        %v1404 = vadd.f32 %v861, %v1403
        %v1405 = vpop.f32.mrf.mxu0
        %v1406 = vadd.f32 %v861, %v1405
        %1407 = vmatprep.mubr.bf16.mxu0 0
        %1408 = vmatmul.mubr.bf16.gmra.mxu0 %v1293
        %v1409 = vpop.f32.mrf.mxu0
        %v1410 = vadd.f32 %v866, %v1409
        %v1411 = vpop.f32.mrf.mxu0
        %v1412 = vadd.f32 %v866, %v1411
        %v1413 = vpop.f32.mrf.mxu0
        %v1414 = vadd.f32 %v871, %v1413
        %v1415 = vpop.f32.mrf.mxu0
        %v1416 = vadd.f32 %v871, %v1415
        %1417 = vmatprep.mubr.bf16.mxu0 0
        %1418 = vmatmul.mubr.bf16.gmra.mxu0 %v1294
        %v1419 = vpop.f32.mrf.mxu0
        %v1420 = vadd.f32 %v876, %v1419
        %v1421 = vpop.f32.mrf.mxu0
        %v1422 = vadd.f32 %v876, %v1421
        %v1423 = vpop.f32.mrf.mxu0
        %v1424 = vadd.f32 %v881, %v1423
        %v1425 = vpop.f32.mrf.mxu0
        %v1426 = vadd.f32 %v881, %v1425
        %1427 = vmatprep.mubr.bf16.mxu0 0
        %1428 = vmatmul.mubr.bf16.gmra.mxu0 %v1295
        %v1429 = vpop.f32.mrf.mxu0
        %v1430 = vadd.f32 %v886, %v1429
        %v1431 = vpop.f32.mrf.mxu0
        %v1432 = vadd.f32 %v886, %v1431
        %v1433 = vpop.f32.mrf.mxu0
        %v1434 = vadd.f32 %v891, %v1433
        %v1435 = vpop.f32.mrf.mxu0
        %v1436 = vadd.f32 %v891, %v1435
        %1437 = vmatprep.mubr.bf16.mxu0 0
        %1438 = vmatmul.mubr.bf16.gmra.mxu0 %v1296
        %v1439 = vpop.f32.mrf.mxu0
        %v1440 = vadd.f32 %v896, %v1439
        %v1441 = vpop.f32.mrf.mxu0
        %v1442 = vadd.f32 %v896, %v1441
        %v1443 = vpop.f32.mrf.mxu0
        %v1444 = vadd.f32 %v901, %v1443
        %v1445 = vpop.f32.mrf.mxu0
        %v1446 = vadd.f32 %v901, %v1445
        %1447 = vmatprep.mubr.bf16.mxu0 0
        %1448 = vmatmul.mubr.bf16.gmra.mxu0 %v1297
        %v1449 = vpop.f32.mrf.mxu0
        %v1450 = vadd.f32 %v906, %v1449
        %v1451 = vpop.f32.mrf.mxu0
        %v1452 = vadd.f32 %v906, %v1451
        %v1453 = vpop.f32.mrf.mxu0
        %v1454 = vadd.f32 %v911, %v1453
        %v1455 = vpop.f32.mrf.mxu0
        %v1456 = vadd.f32 %v911, %v1455
        %1457 = vmatprep.mubr.bf16.mxu0 0
        %1458 = vmatmul.mubr.bf16.gmra.mxu0 %v1298
        %v1459 = vpop.f32.mrf.mxu0
        %v1460 = vadd.f32 %v916, %v1459
        %v1461 = vpop.f32.mrf.mxu0
        %v1462 = vadd.f32 %v916, %v1461
        %v1463 = vpop.f32.mrf.mxu0
        %v1464 = vadd.f32 %v921, %v1463
        %v1465 = vpop.f32.mrf.mxu0
        %v1466 = vadd.f32 %v921, %v1465
        %1467 = vmatprep.mubr.bf16.mxu0 0
        %1468 = vmatmul.mubr.bf16.gmra.mxu0 %v1299
        %v1469 = vpop.f32.mrf.mxu0
        %v1470 = vadd.f32 %v926, %v1469
        %v1471 = vpop.f32.mrf.mxu0
        %v1472 = vadd.f32 %v926, %v1471
        %v1473 = vpop.f32.mrf.mxu0
        %v1474 = vadd.f32 %v931, %v1473
        %v1475 = vpop.f32.mrf.mxu0
        %v1476 = vadd.f32 %v931, %v1475
        %1477 = vmatprep.mubr.bf16.mxu0 0
        %1478 = vmatmul.mubr.bf16.gmra.mxu0 %v1300
        %v1479 = vpop.f32.mrf.mxu0
        %v1480 = vadd.f32 %v936, %v1479
        %v1481 = vpop.f32.mrf.mxu0
        %v1482 = vadd.f32 %v936, %v1481
        %v1483 = vpop.f32.mrf.mxu0
        %v1484 = vadd.f32 %v941, %v1483
        %v1485 = vpop.f32.mrf.mxu0
        %v1486 = vadd.f32 %v941, %v1485
        %1487 = vmatprep.mubr.bf16.mxu0 0
        %1488 = vmatmul.mubr.bf16.gmra.mxu0 %v1301
        %v1489 = vpop.f32.mrf.mxu0
        %v1490 = vadd.f32 %v946, %v1489
        %v1491 = vpop.f32.mrf.mxu0
        %v1492 = vadd.f32 %v946, %v1491
        %v1493 = vpop.f32.mrf.mxu0
        %v1494 = vadd.f32 %v951, %v1493
        %v1495 = vpop.f32.mrf.mxu0
        %v1496 = vadd.f32 %v951, %v1495
        %1497 = vmatprep.mubr.bf16.mxu0 0
        %1498 = vmatmul.mubr.bf16.gmra.mxu0 %v1302
        %v1499 = vpop.f32.mrf.mxu0
        %v1500 = vadd.f32 %v956, %v1499
        %v1501 = vpop.f32.mrf.mxu0
        %v1502 = vadd.f32 %v956, %v1501
        %v1503 = vpop.f32.mrf.mxu0
        %v1504 = vadd.f32 %v961, %v1503
        %v1505 = vpop.f32.mrf.mxu0
        %v1506 = vadd.f32 %v961, %v1505
        %1507 = vmatprep.mubr.bf16.mxu0 0
        %1508 = vmatmul.mubr.bf16.gmra.mxu0 %v1303
        %v1509 = vpop.f32.mrf.mxu0
        %v1510 = vadd.f32 %v966, %v1509
        %v1511 = vpop.f32.mrf.mxu0
        %v1512 = vadd.f32 %v966, %v1511
        %v1513 = vpop.f32.mrf.mxu0
        %v1514 = vadd.f32 %v971, %v1513
        %v1515 = vpop.f32.mrf.mxu0
        %v1516 = vadd.f32 %v971, %v1515
        %1517 = vmatprep.mubr.bf16.mxu0 0
        %1518 = vmatmul.mubr.bf16.gmra.mxu0 %v1304
        %v1519 = vpop.f32.mrf.mxu0
        %v1520 = vadd.f32 %v976, %v1519
        %v1521 = vpop.f32.mrf.mxu0
        %v1522 = vadd.f32 %v976, %v1521
        %v1523 = vpop.f32.mrf.mxu0
        %v1524 = vadd.f32 %v981, %v1523
        %v1525 = vpop.f32.mrf.mxu0
        %v1526 = vadd.f32 %v981, %v1525
        %1527 = vmatprep.mubr.bf16.mxu0 0
        %1528 = vmatmul.mubr.bf16.gmra.mxu0 %v1305
        %v1529 = vpop.f32.mrf.mxu0
        %v1530 = vadd.f32 %v986, %v1529
        %v1531 = vpop.f32.mrf.mxu0
        %v1532 = vadd.f32 %v986, %v1531
        %v1533 = vpop.f32.mrf.mxu0
        %v1534 = vadd.f32 %v991, %v1533
        %v1535 = vpop.f32.mrf.mxu0
        %v1536 = vadd.f32 %v991, %v1535
        %1537 = vmatprep.mubr.bf16.mxu0 0
        %1538 = vmatmul.mubr.bf16.gmra.mxu0 %v1306
        %v1539 = vpop.f32.mrf.mxu0
        %v1540 = vadd.f32 %v996, %v1539
        %v1541 = vpop.f32.mrf.mxu0
        %v1542 = vadd.f32 %v996, %v1541
        %v1543 = vpop.f32.mrf.mxu0
        %v1544 = vadd.f32 %v1001, %v1543
        %v1545 = vpop.f32.mrf.mxu0
        %v1546 = vadd.f32 %v1001, %v1545
        %1547 = vmatprep.mubr.bf16.mxu0 0
        %1548 = vmatmul.mubr.bf16.gmra.mxu0 %v1307
        %v1549 = vpop.f32.mrf.mxu0
        %v1550 = vadd.f32 %v1006, %v1549
        %v1551 = vpop.f32.mrf.mxu0
        %v1552 = vadd.f32 %v1006, %v1551
        %v1553 = vpop.f32.mrf.mxu0
        %v1554 = vadd.f32 %v1011, %v1553
        %v1555 = vpop.f32.mrf.mxu0
        %v1556 = vadd.f32 %v1011, %v1555
        %1557 = vmatprep.mubr.bf16.mxu0 0
        %1558 = vmatmul.mubr.bf16.gmra.mxu0 %v1308
        %v1559 = vpop.f32.mrf.mxu0
        %v1560 = vadd.f32 %v1016, %v1559
        %v1561 = vpop.f32.mrf.mxu0
        %v1562 = vadd.f32 %v1016, %v1561
        %v1563 = vpop.f32.mrf.mxu0
        %v1564 = vadd.f32 %v1021, %v1563
        %v1565 = vpop.f32.mrf.mxu0
        %v1566 = vadd.f32 %v1021, %v1565
        %1567 = vmatprep.mubr.bf16.mxu0 0
        %1568 = vmatmul.mubr.bf16.gmra.mxu0 %v1309
        %v1569 = vpop.f32.mrf.mxu0
        %v1570 = vadd.f32 %v1026, %v1569
        %v1571 = vpop.f32.mrf.mxu0
        %v1572 = vadd.f32 %v1026, %v1571
        %v1573 = vpop.f32.mrf.mxu0
        %v1574 = vadd.f32 %v1031, %v1573
        %v1575 = vpop.f32.mrf.mxu0
        %v1576 = vadd.f32 %v1031, %v1575
        %1577 = vmatprep.mubr.bf16.mxu0 0
        %1578 = vmatmul.mubr.bf16.gmra.mxu0 %v1310
        %v1579 = vpop.f32.mrf.mxu0
        %v1580 = vadd.f32 %v1036, %v1579
        %v1581 = vpop.f32.mrf.mxu0
        %v1582 = vadd.f32 %v1036, %v1581
        %v1583 = vpop.f32.mrf.mxu0
        %v1584 = vadd.f32 %v1041, %v1583
        %v1585 = vpop.f32.mrf.mxu0
        %v1586 = vadd.f32 %v1041, %v1585
        %1587 = vmatprep.mubr.bf16.mxu0 0
        %1588 = vmatmul.mubr.bf16.gmra.mxu0 %v1311
        %v1589 = vpop.f32.mrf.mxu0
        %v1590 = vadd.f32 %v1046, %v1589
        %v1591 = vpop.f32.mrf.mxu0
        %v1592 = vadd.f32 %v1046, %v1591
        %v1593 = vpop.f32.mrf.mxu0
        %v1594 = vadd.f32 %v1051, %v1593
        %v1595 = vpop.f32.mrf.mxu0
        %v1596 = vadd.f32 %v1051, %v1595
        %1597 = vmatprep.mubr.bf16.mxu0 0
        %1598 = vmatmul.mubr.bf16.gmra.mxu0 %v1312
        %v1599 = vpop.f32.mrf.mxu0
        %v1600 = vadd.f32 %v1056, %v1599
        %v1601 = vpop.f32.mrf.mxu0
        %v1602 = vadd.f32 %v1056, %v1601
        %v1603 = vpop.f32.mrf.mxu0
        %v1604 = vadd.f32 %v1061, %v1603
        %v1605 = vpop.f32.mrf.mxu0
        %v1606 = vadd.f32 %v1061, %v1605
        %1607 = vmatprep.mubr.bf16.mxu0 0
        %1608 = vmatmul.mubr.bf16.gmra.mxu0 %v1313
        %v1609 = vpop.f32.mrf.mxu0
        %v1610 = vadd.f32 %v1066, %v1609
        %v1611 = vpop.f32.mrf.mxu0
        %v1612 = vadd.f32 %v1066, %v1611
        %v1613 = vpop.f32.mrf.mxu0
        %v1614 = vadd.f32 %v1071, %v1613
        %v1615 = vpop.f32.mrf.mxu0
        %v1616 = vadd.f32 %v1071, %v1615
        %1617 = vmatprep.mubr.bf16.mxu0 0
        %1618 = vmatmul.mubr.bf16.gmra.mxu0 %v1314
        %v1619 = vpop.f32.mrf.mxu0
        %v1620 = vadd.f32 %v1076, %v1619
        %v1621 = vpop.f32.mrf.mxu0
        %v1622 = vadd.f32 %v1076, %v1621
        %v1623 = vpop.f32.mrf.mxu0
        %v1624 = vadd.f32 %v1081, %v1623
        %v1625 = vpop.f32.mrf.mxu0
        %v1626 = vadd.f32 %v1081, %v1625
        %1627 = vmatprep.mubr.bf16.mxu0 0
        %1628 = vmatmul.mubr.bf16.gmra.mxu0 %v1315
        %v1629 = vpop.f32.mrf.mxu0
        %v1630 = vadd.f32 %v1086, %v1629
        %v1631 = vpop.f32.mrf.mxu0
        %v1632 = vadd.f32 %v1086, %v1631
        %v1633 = vpop.f32.mrf.mxu0
        %v1634 = vadd.f32 %v1091, %v1633
        %v1635 = vpop.f32.mrf.mxu0
        %v1636 = vadd.f32 %v1091, %v1635
        %1637 = vmatprep.mubr.bf16.mxu0 0
        %1638 = vmatmul.mubr.bf16.gmra.mxu0 %v1316
        %v1639 = vpop.f32.mrf.mxu0
        %v1640 = vadd.f32 %v1096, %v1639
        %v1641 = vpop.f32.mrf.mxu0
        %v1642 = vadd.f32 %v1096, %v1641
        %v1643 = vpop.f32.mrf.mxu0
        %v1644 = vadd.f32 %v1101, %v1643
        %v1645 = vpop.f32.mrf.mxu0
        %v1646 = vadd.f32 %v1101, %v1645
        %1647 = vmatprep.mubr.bf16.mxu0 0
        %1648 = vmatmul.mubr.bf16.gmra.mxu0 %v1317
        %v1649 = vpop.f32.mrf.mxu0
        %v1650 = vadd.f32 %v1106, %v1649
        %v1651 = vpop.f32.mrf.mxu0
        %v1652 = vadd.f32 %v1106, %v1651
        %v1653 = vpop.f32.mrf.mxu0
        %v1654 = vadd.f32 %v1111, %v1653
        %v1655 = vpop.f32.mrf.mxu0
        %v1656 = vadd.f32 %v1111, %v1655
        %1657 = vmatprep.mubr.bf16.mxu0 0
        %1658 = vmatmul.mubr.bf16.gmra.mxu0 %v1318
        %v1659 = vpop.f32.mrf.mxu0
        %v1660 = vadd.f32 %v1116, %v1659
        %v1661 = vpop.f32.mrf.mxu0
        %v1662 = vadd.f32 %v1116, %v1661
        %v1663 = vpop.f32.mrf.mxu0
        %v1664 = vadd.f32 %v1121, %v1663
        %v1665 = vpop.f32.mrf.mxu0
        %v1666 = vadd.f32 %v1121, %v1665
        %1667 = vmatprep.mubr.bf16.mxu0 0
        %1668 = vmatmul.mubr.bf16.gmra.mxu0 %v1319
        %v1669 = vpop.f32.mrf.mxu0
        %v1670 = vadd.f32 %v1126, %v1669
        %v1671 = vpop.f32.mrf.mxu0
        %v1672 = vadd.f32 %v1126, %v1671
        %v1673 = vpop.f32.mrf.mxu0
        %v1674 = vadd.f32 %v1131, %v1673
        %v1675 = vpop.f32.mrf.mxu0
        %v1676 = vadd.f32 %v1131, %v1675
        %1677 = vmatprep.mubr.bf16.mxu0 0
        %1678 = vmatmul.mubr.bf16.gmra.mxu0 %v1320
        %v1679 = vpop.f32.mrf.mxu0
        %v1680 = vadd.f32 %v1136, %v1679
        %v1681 = vpop.f32.mrf.mxu0
        %v1682 = vadd.f32 %v1136, %v1681
        %v1683 = vpop.f32.mrf.mxu0
        %v1684 = vadd.f32 %v1141, %v1683
        %v1685 = vpop.f32.mrf.mxu0
        %v1686 = vadd.f32 %v1141, %v1685
        %1687 = vmatprep.mubr.bf16.mxu0 0
        %1688 = vmatmul.mubr.bf16.gmra.mxu0 %v1321
        %v1689 = vpop.f32.mrf.mxu0
        %v1690 = vadd.f32 %v1146, %v1689
        %v1691 = vpop.f32.mrf.mxu0
        %v1692 = vadd.f32 %v1146, %v1691
        %v1693 = vpop.f32.mrf.mxu0
        %v1694 = vadd.f32 %v1151, %v1693
        %v1695 = vpop.f32.mrf.mxu0
        %v1696 = vadd.f32 %v1151, %v1695
        %1697 = vmatprep.mubr.bf16.mxu0 0
        %1698 = vmatmul.mubr.bf16.gmra.mxu0 %v1322
        %v1699 = vpop.f32.mrf.mxu0
        %v1700 = vadd.f32 %v1156, %v1699
        %v1701 = vpop.f32.mrf.mxu0
        %v1702 = vadd.f32 %v1156, %v1701
        %v1703 = vpop.f32.mrf.mxu0
        %v1704 = vadd.f32 %v1161, %v1703
        %v1705 = vpop.f32.mrf.mxu0
        %v1706 = vadd.f32 %v1161, %v1705
        %1707 = vdwg.mxu0
        %v1708 = vlaneseq
        %v1709 = vshrl.u32 %v1708, 7
        %v1710 = vadd.s32 %v1709, 8
        %v1711 = vadd.s32 %v1709, 16
        %v1712 = vadd.s32 %v1709, 24
        %v1713 = vadd.s32 %v1709, 32
        %v1714 = vadd.s32 %v1709, 40
        %v1715 = vadd.s32 %v1709, 48
        %v1716 = vadd.s32 %v1709, 56
        %v1717 = vadd.s32 %v1709, 64
        %v1718 = vadd.s32 %v1709, 72
        %v1719 = vadd.s32 %v1709, 80
        %v1720 = vadd.s32 %v1709, 88
        %v1721 = vadd.s32 %v1709, 96
        %v1722 = vadd.s32 %v1709, 104
        %v1723 = vadd.s32 %v1709, 112
        %v1724 = vadd.s32 %v1709, 120
        %v1725 = vadd.s32 %v1709, 128
        %v1726 = vadd.s32 %v1709, 136
        %v1727 = vadd.s32 %v1709, 144
        %v1728 = vadd.s32 %v1709, 152
        %v1729 = vadd.s32 %v1709, 160
        %v1730 = vadd.s32 %v1709, 168
        %v1731 = vadd.s32 %v1709, 176
        %v1732 = vadd.s32 %v1709, 184
        %v1733 = vadd.s32 %v1709, 192
        %v1734 = vadd.s32 %v1709, 200
        %v1735 = vadd.s32 %v1709, 208
        %v1736 = vadd.s32 %v1709, 216
        %v1737 = vadd.s32 %v1709, 224
        %v1738 = vadd.s32 %v1709, 232
        %v1739 = vadd.s32 %v1709, 240
        %v1740 = vadd.s32 %v1709, 248
        %v1741 = vadd.s32 %v1709, 256
        %v1742 = vadd.s32 %v1709, 264
        %v1743 = vadd.s32 %v1709, 272
        %v1744 = vadd.s32 %v1709, 280
        %v1745 = vadd.s32 %v1709, 288
        %v1746 = vadd.s32 %v1709, 296
        %v1747 = vadd.s32 %v1709, 304
        %v1748 = vadd.s32 %v1709, 312
        %v1749 = vadd.s32 %v1709, 320
        %v1750 = vadd.s32 %v1709, 328
        %v1751 = vadd.s32 %v1709, 336
        %v1752 = vadd.s32 %v1709, 344
        %v1753 = vadd.s32 %v1709, 352
        %v1754 = vadd.s32 %v1709, 360
        %v1755 = vadd.s32 %v1709, 368
        %v1756 = vadd.s32 %v1709, 376
        %v1757 = vadd.s32 %v1709, 384
        %v1758 = vadd.s32 %v1709, 392
        %v1759 = vadd.s32 %v1709, 400
        %v1760 = vadd.s32 %v1709, 408
        %v1761 = vadd.s32 %v1709, 416
        %v1762 = vadd.s32 %v1709, 424
        %v1763 = vadd.s32 %v1709, 432
        %v1764 = vadd.s32 %v1709, 440
        %v1765 = vadd.s32 %v1709, 448
        %v1766 = vadd.s32 %v1709, 456
        %v1767 = vadd.s32 %v1709, 464
        %v1768 = vadd.s32 %v1709, 472
        %v1769 = vadd.s32 %v1709, 480
        %v1770 = vadd.s32 %v1709, 488
        %v1771 = vadd.s32 %v1709, 496
        %v1772 = vadd.s32 %v1709, 504
        %s1773 = smul.u32 %s23, 512
        %v1774 = vstv %s1773
        %v1775 = vadd.s32 %v1709, %v1774
        %v1776 = vadd.s32 %v1710, %v1774
        %v1777 = vadd.s32 %v1711, %v1774
        %v1778 = vadd.s32 %v1712, %v1774
        %v1779 = vadd.s32 %v1713, %v1774
        %v1780 = vadd.s32 %v1714, %v1774
        %v1781 = vadd.s32 %v1715, %v1774
        %v1782 = vadd.s32 %v1716, %v1774
        %v1783 = vadd.s32 %v1717, %v1774
        %v1784 = vadd.s32 %v1718, %v1774
        %v1785 = vadd.s32 %v1719, %v1774
        %v1786 = vadd.s32 %v1720, %v1774
        %v1787 = vadd.s32 %v1721, %v1774
        %v1788 = vadd.s32 %v1722, %v1774
        %v1789 = vadd.s32 %v1723, %v1774
        %v1790 = vadd.s32 %v1724, %v1774
        %v1791 = vadd.s32 %v1725, %v1774
        %v1792 = vadd.s32 %v1726, %v1774
        %v1793 = vadd.s32 %v1727, %v1774
        %v1794 = vadd.s32 %v1728, %v1774
        %v1795 = vadd.s32 %v1729, %v1774
        %v1796 = vadd.s32 %v1730, %v1774
        %v1797 = vadd.s32 %v1731, %v1774
        %v1798 = vadd.s32 %v1732, %v1774
        %v1799 = vadd.s32 %v1733, %v1774
        %v1800 = vadd.s32 %v1734, %v1774
        %v1801 = vadd.s32 %v1735, %v1774
        %v1802 = vadd.s32 %v1736, %v1774
        %v1803 = vadd.s32 %v1737, %v1774
        %v1804 = vadd.s32 %v1738, %v1774
        %v1805 = vadd.s32 %v1739, %v1774
        %v1806 = vadd.s32 %v1740, %v1774
        %v1807 = vadd.s32 %v1741, %v1774
        %v1808 = vadd.s32 %v1742, %v1774
        %v1809 = vadd.s32 %v1743, %v1774
        %v1810 = vadd.s32 %v1744, %v1774
        %v1811 = vadd.s32 %v1745, %v1774
        %v1812 = vadd.s32 %v1746, %v1774
        %v1813 = vadd.s32 %v1747, %v1774
        %v1814 = vadd.s32 %v1748, %v1774
        %v1815 = vadd.s32 %v1749, %v1774
        %v1816 = vadd.s32 %v1750, %v1774
        %v1817 = vadd.s32 %v1751, %v1774
        %v1818 = vadd.s32 %v1752, %v1774
        %v1819 = vadd.s32 %v1753, %v1774
        %v1820 = vadd.s32 %v1754, %v1774
        %v1821 = vadd.s32 %v1755, %v1774
        %v1822 = vadd.s32 %v1756, %v1774
        %v1823 = vadd.s32 %v1757, %v1774
        %v1824 = vadd.s32 %v1758, %v1774
        %v1825 = vadd.s32 %v1759, %v1774
        %v1826 = vadd.s32 %v1760, %v1774
        %v1827 = vadd.s32 %v1761, %v1774
        %v1828 = vadd.s32 %v1762, %v1774
        %v1829 = vadd.s32 %v1763, %v1774
        %v1830 = vadd.s32 %v1764, %v1774
        %v1831 = vadd.s32 %v1765, %v1774
        %v1832 = vadd.s32 %v1766, %v1774
        %v1833 = vadd.s32 %v1767, %v1774
        %v1834 = vadd.s32 %v1768, %v1774
        %v1835 = vadd.s32 %v1769, %v1774
        %v1836 = vadd.s32 %v1770, %v1774
        %v1837 = vadd.s32 %v1771, %v1774
        %v1838 = vadd.s32 %v1772, %v1774
        %v1839 = vld [vmem:[%s338] sm:$0x3]
        %v1840 = vlaneseq
        %v1841 = vshrl.u32 %v1840, 7
        %v1842 = vsub.s32 0, %v1841
        %v1843 = vrot.slane %v1839, %v1842
        %v1844 = vlaneseq
        %v1845 = vshrl.u32 %v1844, 7
        %v1846 = vsub.s32 1, %v1845
        %v1847 = vrot.slane %v1839, %v1846
        %vm1848 = vcmp.eq.s32.totalorder %v1775, %v1843
        %vm1849 = vcmp.eq.s32.totalorder %v1775, %v1847
        %vm1850 = vcmp.eq.s32.totalorder %v1776, %v1843
        %vm1851 = vcmp.eq.s32.totalorder %v1776, %v1847
        %vm1852 = vcmp.eq.s32.totalorder %v1777, %v1843
        %vm1853 = vcmp.eq.s32.totalorder %v1777, %v1847
        %vm1854 = vcmp.eq.s32.totalorder %v1778, %v1843
        %vm1855 = vcmp.eq.s32.totalorder %v1778, %v1847
        %vm1856 = vcmp.eq.s32.totalorder %v1779, %v1843
        %vm1857 = vcmp.eq.s32.totalorder %v1779, %v1847
        %vm1858 = vcmp.eq.s32.totalorder %v1780, %v1843
        %vm1859 = vcmp.eq.s32.totalorder %v1780, %v1847
        %vm1860 = vcmp.eq.s32.totalorder %v1781, %v1843
        %vm1861 = vcmp.eq.s32.totalorder %v1781, %v1847
        %vm1862 = vcmp.eq.s32.totalorder %v1782, %v1843
        %vm1863 = vcmp.eq.s32.totalorder %v1782, %v1847
        %vm1864 = vcmp.eq.s32.totalorder %v1783, %v1843
        %vm1865 = vcmp.eq.s32.totalorder %v1783, %v1847
        %vm1866 = vcmp.eq.s32.totalorder %v1784, %v1843
        %vm1867 = vcmp.eq.s32.totalorder %v1784, %v1847
        %vm1868 = vcmp.eq.s32.totalorder %v1785, %v1843
        %vm1869 = vcmp.eq.s32.totalorder %v1785, %v1847
        %vm1870 = vcmp.eq.s32.totalorder %v1786, %v1843
        %vm1871 = vcmp.eq.s32.totalorder %v1786, %v1847
        %vm1872 = vcmp.eq.s32.totalorder %v1787, %v1843
        %vm1873 = vcmp.eq.s32.totalorder %v1787, %v1847
        %vm1874 = vcmp.eq.s32.totalorder %v1788, %v1843
        %vm1875 = vcmp.eq.s32.totalorder %v1788, %v1847
        %vm1876 = vcmp.eq.s32.totalorder %v1789, %v1843
        %vm1877 = vcmp.eq.s32.totalorder %v1789, %v1847
        %vm1878 = vcmp.eq.s32.totalorder %v1790, %v1843
        %vm1879 = vcmp.eq.s32.totalorder %v1790, %v1847
        %vm1880 = vcmp.eq.s32.totalorder %v1791, %v1843
        %vm1881 = vcmp.eq.s32.totalorder %v1791, %v1847
        %vm1882 = vcmp.eq.s32.totalorder %v1792, %v1843
        %vm1883 = vcmp.eq.s32.totalorder %v1792, %v1847
        %vm1884 = vcmp.eq.s32.totalorder %v1793, %v1843
        %vm1885 = vcmp.eq.s32.totalorder %v1793, %v1847
        %vm1886 = vcmp.eq.s32.totalorder %v1794, %v1843
        %vm1887 = vcmp.eq.s32.totalorder %v1794, %v1847
        %vm1888 = vcmp.eq.s32.totalorder %v1795, %v1843
        %vm1889 = vcmp.eq.s32.totalorder %v1795, %v1847
        %vm1890 = vcmp.eq.s32.totalorder %v1796, %v1843
        %vm1891 = vcmp.eq.s32.totalorder %v1796, %v1847
        %vm1892 = vcmp.eq.s32.totalorder %v1797, %v1843
        %vm1893 = vcmp.eq.s32.totalorder %v1797, %v1847
        %vm1894 = vcmp.eq.s32.totalorder %v1798, %v1843
        %vm1895 = vcmp.eq.s32.totalorder %v1798, %v1847
        %vm1896 = vcmp.eq.s32.totalorder %v1799, %v1843
        %vm1897 = vcmp.eq.s32.totalorder %v1799, %v1847
        %vm1898 = vcmp.eq.s32.totalorder %v1800, %v1843
        %vm1899 = vcmp.eq.s32.totalorder %v1800, %v1847
        %vm1900 = vcmp.eq.s32.totalorder %v1801, %v1843
        %vm1901 = vcmp.eq.s32.totalorder %v1801, %v1847
        %vm1902 = vcmp.eq.s32.totalorder %v1802, %v1843
        %vm1903 = vcmp.eq.s32.totalorder %v1802, %v1847
        %vm1904 = vcmp.eq.s32.totalorder %v1803, %v1843
        %vm1905 = vcmp.eq.s32.totalorder %v1803, %v1847
        %vm1906 = vcmp.eq.s32.totalorder %v1804, %v1843
        %vm1907 = vcmp.eq.s32.totalorder %v1804, %v1847
        %vm1908 = vcmp.eq.s32.totalorder %v1805, %v1843
        %vm1909 = vcmp.eq.s32.totalorder %v1805, %v1847
        %vm1910 = vcmp.eq.s32.totalorder %v1806, %v1843
        %vm1911 = vcmp.eq.s32.totalorder %v1806, %v1847
        %vm1912 = vcmp.eq.s32.totalorder %v1807, %v1843
        %vm1913 = vcmp.eq.s32.totalorder %v1807, %v1847
        %vm1914 = vcmp.eq.s32.totalorder %v1808, %v1843
        %vm1915 = vcmp.eq.s32.totalorder %v1808, %v1847
        %vm1916 = vcmp.eq.s32.totalorder %v1809, %v1843
        %vm1917 = vcmp.eq.s32.totalorder %v1809, %v1847
        %vm1918 = vcmp.eq.s32.totalorder %v1810, %v1843
        %vm1919 = vcmp.eq.s32.totalorder %v1810, %v1847
        %vm1920 = vcmp.eq.s32.totalorder %v1811, %v1843
        %vm1921 = vcmp.eq.s32.totalorder %v1811, %v1847
        %vm1922 = vcmp.eq.s32.totalorder %v1812, %v1843
        %vm1923 = vcmp.eq.s32.totalorder %v1812, %v1847
        %vm1924 = vcmp.eq.s32.totalorder %v1813, %v1843
        %vm1925 = vcmp.eq.s32.totalorder %v1813, %v1847
        %vm1926 = vcmp.eq.s32.totalorder %v1814, %v1843
        %vm1927 = vcmp.eq.s32.totalorder %v1814, %v1847
        %vm1928 = vcmp.eq.s32.totalorder %v1815, %v1843
        %vm1929 = vcmp.eq.s32.totalorder %v1815, %v1847
        %vm1930 = vcmp.eq.s32.totalorder %v1816, %v1843
        %vm1931 = vcmp.eq.s32.totalorder %v1816, %v1847
        %vm1932 = vcmp.eq.s32.totalorder %v1817, %v1843
        %vm1933 = vcmp.eq.s32.totalorder %v1817, %v1847
        %vm1934 = vcmp.eq.s32.totalorder %v1818, %v1843
        %vm1935 = vcmp.eq.s32.totalorder %v1818, %v1847
        %vm1936 = vcmp.eq.s32.totalorder %v1819, %v1843
        %vm1937 = vcmp.eq.s32.totalorder %v1819, %v1847
        %vm1938 = vcmp.eq.s32.totalorder %v1820, %v1843
        %vm1939 = vcmp.eq.s32.totalorder %v1820, %v1847
        %vm1940 = vcmp.eq.s32.totalorder %v1821, %v1843
        %vm1941 = vcmp.eq.s32.totalorder %v1821, %v1847
        %vm1942 = vcmp.eq.s32.totalorder %v1822, %v1843
        %vm1943 = vcmp.eq.s32.totalorder %v1822, %v1847
        %vm1944 = vcmp.eq.s32.totalorder %v1823, %v1843
        %vm1945 = vcmp.eq.s32.totalorder %v1823, %v1847
        %vm1946 = vcmp.eq.s32.totalorder %v1824, %v1843
        %vm1947 = vcmp.eq.s32.totalorder %v1824, %v1847
        %vm1948 = vcmp.eq.s32.totalorder %v1825, %v1843
        %vm1949 = vcmp.eq.s32.totalorder %v1825, %v1847
        %vm1950 = vcmp.eq.s32.totalorder %v1826, %v1843
        %vm1951 = vcmp.eq.s32.totalorder %v1826, %v1847
        %vm1952 = vcmp.eq.s32.totalorder %v1827, %v1843
        %vm1953 = vcmp.eq.s32.totalorder %v1827, %v1847
        %vm1954 = vcmp.eq.s32.totalorder %v1828, %v1843
        %vm1955 = vcmp.eq.s32.totalorder %v1828, %v1847
        %vm1956 = vcmp.eq.s32.totalorder %v1829, %v1843
        %vm1957 = vcmp.eq.s32.totalorder %v1829, %v1847
        %vm1958 = vcmp.eq.s32.totalorder %v1830, %v1843
        %vm1959 = vcmp.eq.s32.totalorder %v1830, %v1847
        %vm1960 = vcmp.eq.s32.totalorder %v1831, %v1843
        %vm1961 = vcmp.eq.s32.totalorder %v1831, %v1847
        %vm1962 = vcmp.eq.s32.totalorder %v1832, %v1843
        %vm1963 = vcmp.eq.s32.totalorder %v1832, %v1847
        %vm1964 = vcmp.eq.s32.totalorder %v1833, %v1843
        %vm1965 = vcmp.eq.s32.totalorder %v1833, %v1847
        %vm1966 = vcmp.eq.s32.totalorder %v1834, %v1843
        %vm1967 = vcmp.eq.s32.totalorder %v1834, %v1847
        %vm1968 = vcmp.eq.s32.totalorder %v1835, %v1843
        %vm1969 = vcmp.eq.s32.totalorder %v1835, %v1847
        %vm1970 = vcmp.eq.s32.totalorder %v1836, %v1843
        %vm1971 = vcmp.eq.s32.totalorder %v1836, %v1847
        %vm1972 = vcmp.eq.s32.totalorder %v1837, %v1843
        %vm1973 = vcmp.eq.s32.totalorder %v1837, %v1847
        %vm1974 = vcmp.eq.s32.totalorder %v1838, %v1843
        %vm1975 = vcmp.eq.s32.totalorder %v1838, %v1847
        %v1976 = vld [vmem:[#allocation5] sm:$0x3]
        %v1977 = vsel %vm1848, %v1390, 0.0
        %v1978 = vsel %vm1849, %v1392, 0.0
        %v1979 = vsel %vm1850, %v1394, 0.0
        %v1980 = vsel %vm1851, %v1396, 0.0
        %v1981 = vsel %vm1852, %v1400, 0.0
        %v1982 = vsel %vm1853, %v1402, 0.0
        %v1983 = vsel %vm1854, %v1404, 0.0
        %v1984 = vsel %vm1855, %v1406, 0.0
        %v1985 = vsel %vm1856, %v1410, 0.0
        %v1986 = vsel %vm1857, %v1412, 0.0
        %v1987 = vsel %vm1858, %v1414, 0.0
        %v1988 = vsel %vm1859, %v1416, 0.0
        %v1989 = vsel %vm1860, %v1420, 0.0
        %v1990 = vsel %vm1861, %v1422, 0.0
        %v1991 = vsel %vm1862, %v1424, 0.0
        %v1992 = vsel %vm1863, %v1426, 0.0
        %v1993 = vsel %vm1864, %v1430, 0.0
        %v1994 = vsel %vm1865, %v1432, 0.0
        %v1995 = vsel %vm1866, %v1434, 0.0
        %v1996 = vsel %vm1867, %v1436, 0.0
        %v1997 = vsel %vm1868, %v1440, 0.0
        %v1998 = vsel %vm1869, %v1442, 0.0
        %v1999 = vsel %vm1870, %v1444, 0.0
        %v2000 = vsel %vm1871, %v1446, 0.0
        %v2001 = vsel %vm1872, %v1450, 0.0
        %v2002 = vsel %vm1873, %v1452, 0.0
        %v2003 = vsel %vm1874, %v1454, 0.0
        %v2004 = vsel %vm1875, %v1456, 0.0
        %v2005 = vsel %vm1876, %v1460, 0.0
        %v2006 = vsel %vm1877, %v1462, 0.0
        %v2007 = vsel %vm1878, %v1464, 0.0
        %v2008 = vsel %vm1879, %v1466, 0.0
        %v2009 = vsel %vm1880, %v1470, 0.0
        %v2010 = vsel %vm1881, %v1472, 0.0
        %v2011 = vsel %vm1882, %v1474, 0.0
        %v2012 = vsel %vm1883, %v1476, 0.0
        %v2013 = vsel %vm1884, %v1480, 0.0
        %v2014 = vsel %vm1885, %v1482, 0.0
        %v2015 = vsel %vm1886, %v1484, 0.0
        %v2016 = vsel %vm1887, %v1486, 0.0
        %v2017 = vsel %vm1888, %v1490, 0.0
        %v2018 = vsel %vm1889, %v1492, 0.0
        %v2019 = vsel %vm1890, %v1494, 0.0
        %v2020 = vsel %vm1891, %v1496, 0.0
        %v2021 = vsel %vm1892, %v1500, 0.0
        %v2022 = vsel %vm1893, %v1502, 0.0
        %v2023 = vsel %vm1894, %v1504, 0.0
        %v2024 = vsel %vm1895, %v1506, 0.0
        %v2025 = vsel %vm1896, %v1510, 0.0
        %v2026 = vsel %vm1897, %v1512, 0.0
        %v2027 = vsel %vm1898, %v1514, 0.0
        %v2028 = vsel %vm1899, %v1516, 0.0
        %v2029 = vsel %vm1900, %v1520, 0.0
        %v2030 = vsel %vm1901, %v1522, 0.0
        %v2031 = vsel %vm1902, %v1524, 0.0
        %v2032 = vsel %vm1903, %v1526, 0.0
        %v2033 = vsel %vm1904, %v1530, 0.0
        %v2034 = vsel %vm1905, %v1532, 0.0
        %v2035 = vsel %vm1906, %v1534, 0.0
        %v2036 = vsel %vm1907, %v1536, 0.0
        %v2037 = vsel %vm1908, %v1540, 0.0
        %v2038 = vsel %vm1909, %v1542, 0.0
        %v2039 = vsel %vm1910, %v1544, 0.0
        %v2040 = vsel %vm1911, %v1546, 0.0
        %v2041 = vsel %vm1912, %v1550, 0.0
        %v2042 = vsel %vm1913, %v1552, 0.0
        %v2043 = vsel %vm1914, %v1554, 0.0
        %v2044 = vsel %vm1915, %v1556, 0.0
        %v2045 = vsel %vm1916, %v1560, 0.0
        %v2046 = vsel %vm1917, %v1562, 0.0
        %v2047 = vsel %vm1918, %v1564, 0.0
        %v2048 = vsel %vm1919, %v1566, 0.0
        %v2049 = vsel %vm1920, %v1570, 0.0
        %v2050 = vsel %vm1921, %v1572, 0.0
        %v2051 = vsel %vm1922, %v1574, 0.0
        %v2052 = vsel %vm1923, %v1576, 0.0
        %v2053 = vsel %vm1924, %v1580, 0.0
        %v2054 = vsel %vm1925, %v1582, 0.0
        %v2055 = vsel %vm1926, %v1584, 0.0
        %v2056 = vsel %vm1927, %v1586, 0.0
        %v2057 = vsel %vm1928, %v1590, 0.0
        %v2058 = vsel %vm1929, %v1592, 0.0
        %v2059 = vsel %vm1930, %v1594, 0.0
        %v2060 = vsel %vm1931, %v1596, 0.0
        %v2061 = vsel %vm1932, %v1600, 0.0
        %v2062 = vsel %vm1933, %v1602, 0.0
        %v2063 = vsel %vm1934, %v1604, 0.0
        %v2064 = vsel %vm1935, %v1606, 0.0
        %v2065 = vsel %vm1936, %v1610, 0.0
        %v2066 = vsel %vm1937, %v1612, 0.0
        %v2067 = vsel %vm1938, %v1614, 0.0
        %v2068 = vsel %vm1939, %v1616, 0.0
        %v2069 = vsel %vm1940, %v1620, 0.0
        %v2070 = vsel %vm1941, %v1622, 0.0
        %v2071 = vsel %vm1942, %v1624, 0.0
        %v2072 = vsel %vm1943, %v1626, 0.0
        %v2073 = vsel %vm1944, %v1630, 0.0
        %v2074 = vsel %vm1945, %v1632, 0.0
        %v2075 = vsel %vm1946, %v1634, 0.0
        %v2076 = vsel %vm1947, %v1636, 0.0
        %v2077 = vsel %vm1948, %v1640, 0.0
        %v2078 = vsel %vm1949, %v1642, 0.0
        %v2079 = vsel %vm1950, %v1644, 0.0
        %v2080 = vsel %vm1951, %v1646, 0.0
        %v2081 = vsel %vm1952, %v1650, 0.0
        %v2082 = vsel %vm1953, %v1652, 0.0
        %v2083 = vsel %vm1954, %v1654, 0.0
        %v2084 = vsel %vm1955, %v1656, 0.0
        %v2085 = vsel %vm1956, %v1660, 0.0
        %v2086 = vsel %vm1957, %v1662, 0.0
        %v2087 = vsel %vm1958, %v1664, 0.0
        %v2088 = vsel %vm1959, %v1666, 0.0
        %v2089 = vsel %vm1960, %v1670, 0.0
        %v2090 = vsel %vm1961, %v1672, 0.0
        %v2091 = vsel %vm1962, %v1674, 0.0
        %v2092 = vsel %vm1963, %v1676, 0.0
        %v2093 = vsel %vm1964, %v1680, 0.0
        %v2094 = vsel %vm1965, %v1682, 0.0
        %v2095 = vsel %vm1966, %v1684, 0.0
        %v2096 = vsel %vm1967, %v1686, 0.0
        %v2097 = vsel %vm1968, %v1690, 0.0
        %v2098 = vsel %vm1969, %v1692, 0.0
        %v2099 = vsel %vm1970, %v1694, 0.0
        %v2100 = vsel %vm1971, %v1696, 0.0
        %v2101 = vsel %vm1972, %v1700, 0.0
        %v2102 = vsel %vm1973, %v1702, 0.0
        %v2103 = vsel %vm1974, %v1704, 0.0
        %v2104 = vsel %vm1975, %v1706, 0.0
        %v2105 = vadd.f32 %v1977, %v1979
        %v2106 = vadd.f32 %v2105, %v1981
        %v2107 = vadd.f32 %v2106, %v1983
        %v2108 = vadd.f32 %v2107, %v1985
        %v2109 = vadd.f32 %v2108, %v1987
        %v2110 = vadd.f32 %v2109, %v1989
        %v2111 = vadd.f32 %v2110, %v1991
        %v2112 = vadd.f32 %v2111, %v1993
        %v2113 = vadd.f32 %v2112, %v1995
        %v2114 = vadd.f32 %v2113, %v1997
        %v2115 = vadd.f32 %v2114, %v1999
        %v2116 = vadd.f32 %v2115, %v2001
        %v2117 = vadd.f32 %v2116, %v2003
        %v2118 = vadd.f32 %v2117, %v2005
        %v2119 = vadd.f32 %v2118, %v2007
        %v2120 = vadd.f32 %v2119, %v2009
        %v2121 = vadd.f32 %v2120, %v2011
        %v2122 = vadd.f32 %v2121, %v2013
        %v2123 = vadd.f32 %v2122, %v2015
        %v2124 = vadd.f32 %v2123, %v2017
        %v2125 = vadd.f32 %v2124, %v2019
        %v2126 = vadd.f32 %v2125, %v2021
        %v2127 = vadd.f32 %v2126, %v2023
        %v2128 = vadd.f32 %v2127, %v2025
        %v2129 = vadd.f32 %v2128, %v2027
        %v2130 = vadd.f32 %v2129, %v2029
        %v2131 = vadd.f32 %v2130, %v2031
        %v2132 = vadd.f32 %v2131, %v2033
        %v2133 = vadd.f32 %v2132, %v2035
        %v2134 = vadd.f32 %v2133, %v2037
        %v2135 = vadd.f32 %v2134, %v2039
        %v2136 = vadd.f32 %v2135, %v2041
        %v2137 = vadd.f32 %v2136, %v2043
        %v2138 = vadd.f32 %v2137, %v2045
        %v2139 = vadd.f32 %v2138, %v2047
        %v2140 = vadd.f32 %v2139, %v2049
        %v2141 = vadd.f32 %v2140, %v2051
        %v2142 = vadd.f32 %v2141, %v2053
        %v2143 = vadd.f32 %v2142, %v2055
        %v2144 = vadd.f32 %v2143, %v2057
        %v2145 = vadd.f32 %v2144, %v2059
        %v2146 = vadd.f32 %v2145, %v2061
        %v2147 = vadd.f32 %v2146, %v2063
        %v2148 = vadd.f32 %v2147, %v2065
        %v2149 = vadd.f32 %v2148, %v2067
        %v2150 = vadd.f32 %v2149, %v2069
        %v2151 = vadd.f32 %v2150, %v2071
        %v2152 = vadd.f32 %v2151, %v2073
        %v2153 = vadd.f32 %v2152, %v2075
        %v2154 = vadd.f32 %v2153, %v2077
        %v2155 = vadd.f32 %v2154, %v2079
        %v2156 = vadd.f32 %v2155, %v2081
        %v2157 = vadd.f32 %v2156, %v2083
        %v2158 = vadd.f32 %v2157, %v2085
        %v2159 = vadd.f32 %v2158, %v2087
        %v2160 = vadd.f32 %v2159, %v2089
        %v2161 = vadd.f32 %v2160, %v2091
        %v2162 = vadd.f32 %v2161, %v2093
        %v2163 = vadd.f32 %v2162, %v2095
        %v2164 = vadd.f32 %v2163, %v2097
        %v2165 = vadd.f32 %v2164, %v2099
        %v2166 = vadd.f32 %v2165, %v2101
        %v2167 = vadd.f32 %v2166, %v2103
        %v2168 = vrot.slane %v2167, 4
        %v2169 = vadd.f32 %v2167, %v2168
        %v2170 = vrot.slane %v2169, 2
        %v2171 = vadd.f32 %v2169, %v2170
        %v2172 = vrot.slane %v2171, 1
        %v2173 = vadd.f32 %v2171, %v2172
        %v2174 = vadd.f32 %v1978, %v1980
        %v2175 = vadd.f32 %v2174, %v1982
        %v2176 = vadd.f32 %v2175, %v1984
        %v2177 = vadd.f32 %v2176, %v1986
        %v2178 = vadd.f32 %v2177, %v1988
        %v2179 = vadd.f32 %v2178, %v1990
        %v2180 = vadd.f32 %v2179, %v1992
        %v2181 = vadd.f32 %v2180, %v1994
        %v2182 = vadd.f32 %v2181, %v1996
        %v2183 = vadd.f32 %v2182, %v1998
        %v2184 = vadd.f32 %v2183, %v2000
        %v2185 = vadd.f32 %v2184, %v2002
        %v2186 = vadd.f32 %v2185, %v2004
        %v2187 = vadd.f32 %v2186, %v2006
        %v2188 = vadd.f32 %v2187, %v2008
        %v2189 = vadd.f32 %v2188, %v2010
        %v2190 = vadd.f32 %v2189, %v2012
        %v2191 = vadd.f32 %v2190, %v2014
        %v2192 = vadd.f32 %v2191, %v2016
        %v2193 = vadd.f32 %v2192, %v2018
        %v2194 = vadd.f32 %v2193, %v2020
        %v2195 = vadd.f32 %v2194, %v2022
        %v2196 = vadd.f32 %v2195, %v2024
        %v2197 = vadd.f32 %v2196, %v2026
        %v2198 = vadd.f32 %v2197, %v2028
        %v2199 = vadd.f32 %v2198, %v2030
        %v2200 = vadd.f32 %v2199, %v2032
        %v2201 = vadd.f32 %v2200, %v2034
        %v2202 = vadd.f32 %v2201, %v2036
        %v2203 = vadd.f32 %v2202, %v2038
        %v2204 = vadd.f32 %v2203, %v2040
        %v2205 = vadd.f32 %v2204, %v2042
        %v2206 = vadd.f32 %v2205, %v2044
        %v2207 = vadd.f32 %v2206, %v2046
        %v2208 = vadd.f32 %v2207, %v2048
        %v2209 = vadd.f32 %v2208, %v2050
        %v2210 = vadd.f32 %v2209, %v2052
        %v2211 = vadd.f32 %v2210, %v2054
        %v2212 = vadd.f32 %v2211, %v2056
        %v2213 = vadd.f32 %v2212, %v2058
        %v2214 = vadd.f32 %v2213, %v2060
        %v2215 = vadd.f32 %v2214, %v2062
        %v2216 = vadd.f32 %v2215, %v2064
        %v2217 = vadd.f32 %v2216, %v2066
        %v2218 = vadd.f32 %v2217, %v2068
        %v2219 = vadd.f32 %v2218, %v2070
        %v2220 = vadd.f32 %v2219, %v2072
        %v2221 = vadd.f32 %v2220, %v2074
        %v2222 = vadd.f32 %v2221, %v2076
        %v2223 = vadd.f32 %v2222, %v2078
        %v2224 = vadd.f32 %v2223, %v2080
        %v2225 = vadd.f32 %v2224, %v2082
        %v2226 = vadd.f32 %v2225, %v2084
        %v2227 = vadd.f32 %v2226, %v2086
        %v2228 = vadd.f32 %v2227, %v2088
        %v2229 = vadd.f32 %v2228, %v2090
        %v2230 = vadd.f32 %v2229, %v2092
        %v2231 = vadd.f32 %v2230, %v2094
        %v2232 = vadd.f32 %v2231, %v2096
        %v2233 = vadd.f32 %v2232, %v2098
        %v2234 = vadd.f32 %v2233, %v2100
        %v2235 = vadd.f32 %v2234, %v2102
        %v2236 = vadd.f32 %v2235, %v2104
        %v2237 = vrot.slane %v2236, 4
        %v2238 = vadd.f32 %v2236, %v2237
        %v2239 = vrot.slane %v2238, 2
        %v2240 = vadd.f32 %v2238, %v2239
        %v2241 = vrot.slane %v2240, 1
        %v2242 = vadd.f32 %v2240, %v2241
        %v2245 = vcombine.low %v2173, %v2242
        %v2247 = vunpack.c.l.s4 1966171168
        %v2248 = vunpack.c.0.s8 %v2247
        %v2249 = vlaneseq
        %v2250 = vshrl.u32 %v2249, 7
        %v2251 = vsub.s32 %v2248, %v2250
        %v2252 = vrot.slane %v2245, %v2251
        %v2254 = vunpack.c.l.s4 1966171168
        %v2255 = vunpack.c.0.s8 %v2254
        %v2256 = vlaneseq
        %v2257 = vshrl.u32 %v2256, 7
        %v2258 = vsub.s32 %v2255, %v2257
        %v2259 = vrot.slane %v2252, %v2258
        %v2261 = vadd.f32 %v1976, %v2259
        %v2262 = vlaneseq
        %vm2263 = vcmp.ge.s32.totalorder %v2262, 0
        %vm2264 = vcmp.lt.s32.totalorder %v2262, 256
        %vm2265 = vmand %vm2263, %vm2264
        %2266 = vst.msk [vmem:[#allocation5] sm:$0x3] %vm2265, %v2261
        %v2267 = vld [vmem:[#allocation3] sm:$0x3]
        %v2268 = vmax.f32 %v1390, %v1400
        %v2269 = vmax.f32 %v1394, %v1404
        %v2270 = vmax.f32 %v2268, %v1410
        %v2271 = vmax.f32 %v2269, %v1414
        %v2272 = vmax.f32 %v2270, %v1420
        %v2273 = vmax.f32 %v2271, %v1424
        %v2274 = vmax.f32 %v2272, %v1430
        %v2275 = vmax.f32 %v2273, %v1434
        %v2276 = vmax.f32 %v2274, %v1440
        %v2277 = vmax.f32 %v2275, %v1444
        %v2278 = vmax.f32 %v2276, %v1450
        %v2279 = vmax.f32 %v2277, %v1454
        %v2280 = vmax.f32 %v2278, %v1460
        %v2281 = vmax.f32 %v2279, %v1464
        %v2282 = vmax.f32 %v2280, %v1470
        %v2283 = vmax.f32 %v2281, %v1474
        %v2284 = vmax.f32 %v2282, %v1480
        %v2285 = vmax.f32 %v2283, %v1484
        %v2286 = vmax.f32 %v2284, %v1490
        %v2287 = vmax.f32 %v2285, %v1494
        %v2288 = vmax.f32 %v2286, %v1500
        %v2289 = vmax.f32 %v2287, %v1504
        %v2290 = vmax.f32 %v2288, %v1510
        %v2291 = vmax.f32 %v2289, %v1514
        %v2292 = vmax.f32 %v2290, %v1520
        %v2293 = vmax.f32 %v2291, %v1524
        %v2294 = vmax.f32 %v2292, %v1530
        %v2295 = vmax.f32 %v2293, %v1534
        %v2296 = vmax.f32 %v2294, %v1540
        %v2297 = vmax.f32 %v2295, %v1544
        %v2298 = vmax.f32 %v2296, %v1550
        %v2299 = vmax.f32 %v2297, %v1554
        %v2300 = vmax.f32 %v2298, %v1560
        %v2301 = vmax.f32 %v2299, %v1564
        %v2302 = vmax.f32 %v2300, %v1570
        %v2303 = vmax.f32 %v2301, %v1574
        %v2304 = vmax.f32 %v2302, %v1580
        %v2305 = vmax.f32 %v2303, %v1584
        %v2306 = vmax.f32 %v2304, %v1590
        %v2307 = vmax.f32 %v2305, %v1594
        %v2308 = vmax.f32 %v2306, %v1600
        %v2309 = vmax.f32 %v2307, %v1604
        %v2310 = vmax.f32 %v2308, %v1610
        %v2311 = vmax.f32 %v2309, %v1614
        %v2312 = vmax.f32 %v2310, %v1620
        %v2313 = vmax.f32 %v2311, %v1624
        %v2314 = vmax.f32 %v2312, %v1630
        %v2315 = vmax.f32 %v2313, %v1634
        %v2316 = vmax.f32 %v2314, %v1640
        %v2317 = vmax.f32 %v2315, %v1644
        %v2318 = vmax.f32 %v2316, %v1650
        %v2319 = vmax.f32 %v2317, %v1654
        %v2320 = vmax.f32 %v2318, %v1660
        %v2321 = vmax.f32 %v2319, %v1664
        %v2322 = vmax.f32 %v2320, %v1670
        %v2323 = vmax.f32 %v2321, %v1674
        %v2324 = vmax.f32 %v2322, %v1680
        %v2325 = vmax.f32 %v2323, %v1684
        %v2326 = vmax.f32 %v2324, %v1690
        %v2327 = vmax.f32 %v2325, %v1694
        %v2328 = vmax.f32 %v2326, %v1700
        %v2329 = vmax.f32 %v2327, %v1704
        %v2330 = vmax.f32 %v2328, %v2329
        %v2331 = vrot.slane %v2330, 4
        %v2332 = vmax.f32 %v2330, %v2331
        %v2333 = vrot.slane %v2332, 2
        %v2334 = vmax.f32 %v2332, %v2333
        %v2335 = vrot.slane %v2334, 1
        %v2336 = vmax.f32 %v2334, %v2335
        %v2337 = vmax.f32 %v1392, %v1402
        %v2338 = vmax.f32 %v1396, %v1406
        %v2339 = vmax.f32 %v2337, %v1412
        %v2340 = vmax.f32 %v2338, %v1416
        %v2341 = vmax.f32 %v2339, %v1422
        %v2342 = vmax.f32 %v2340, %v1426
        %v2343 = vmax.f32 %v2341, %v1432
        %v2344 = vmax.f32 %v2342, %v1436
        %v2345 = vmax.f32 %v2343, %v1442
        %v2346 = vmax.f32 %v2344, %v1446
        %v2347 = vmax.f32 %v2345, %v1452
        %v2348 = vmax.f32 %v2346, %v1456
        %v2349 = vmax.f32 %v2347, %v1462
        %v2350 = vmax.f32 %v2348, %v1466
        %v2351 = vmax.f32 %v2349, %v1472
        %v2352 = vmax.f32 %v2350, %v1476
        %v2353 = vmax.f32 %v2351, %v1482
        %v2354 = vmax.f32 %v2352, %v1486
        %v2355 = vmax.f32 %v2353, %v1492
        %v2356 = vmax.f32 %v2354, %v1496
        %v2357 = vmax.f32 %v2355, %v1502
        %v2358 = vmax.f32 %v2356, %v1506
        %v2359 = vmax.f32 %v2357, %v1512
        %v2360 = vmax.f32 %v2358, %v1516
        %v2361 = vmax.f32 %v2359, %v1522
        %v2362 = vmax.f32 %v2360, %v1526
        %v2363 = vmax.f32 %v2361, %v1532
        %v2364 = vmax.f32 %v2362, %v1536
        %v2365 = vmax.f32 %v2363, %v1542
        %v2366 = vmax.f32 %v2364, %v1546
        %v2367 = vmax.f32 %v2365, %v1552
        %v2368 = vmax.f32 %v2366, %v1556
        %v2369 = vmax.f32 %v2367, %v1562
        %v2370 = vmax.f32 %v2368, %v1566
        %v2371 = vmax.f32 %v2369, %v1572
        %v2372 = vmax.f32 %v2370, %v1576
        %v2373 = vmax.f32 %v2371, %v1582
        %v2374 = vmax.f32 %v2372, %v1586
        %v2375 = vmax.f32 %v2373, %v1592
        %v2376 = vmax.f32 %v2374, %v1596
        %v2377 = vmax.f32 %v2375, %v1602
        %v2378 = vmax.f32 %v2376, %v1606
        %v2379 = vmax.f32 %v2377, %v1612
        %v2380 = vmax.f32 %v2378, %v1616
        %v2381 = vmax.f32 %v2379, %v1622
        %v2382 = vmax.f32 %v2380, %v1626
        %v2383 = vmax.f32 %v2381, %v1632
        %v2384 = vmax.f32 %v2382, %v1636
        %v2385 = vmax.f32 %v2383, %v1642
        %v2386 = vmax.f32 %v2384, %v1646
        %v2387 = vmax.f32 %v2385, %v1652
        %v2388 = vmax.f32 %v2386, %v1656
        %v2389 = vmax.f32 %v2387, %v1662
        %v2390 = vmax.f32 %v2388, %v1666
        %v2391 = vmax.f32 %v2389, %v1672
        %v2392 = vmax.f32 %v2390, %v1676
        %v2393 = vmax.f32 %v2391, %v1682
        %v2394 = vmax.f32 %v2392, %v1686
        %v2395 = vmax.f32 %v2393, %v1692
        %v2396 = vmax.f32 %v2394, %v1696
        %v2397 = vmax.f32 %v2395, %v1702
        %v2398 = vmax.f32 %v2396, %v1706
        %v2399 = vmax.f32 %v2397, %v2398
        %v2400 = vrot.slane %v2399, 4
        %v2401 = vmax.f32 %v2399, %v2400
        %v2402 = vrot.slane %v2401, 2
        %v2403 = vmax.f32 %v2401, %v2402
        %v2404 = vrot.slane %v2403, 1
        %v2405 = vmax.f32 %v2403, %v2404
        %v2408 = vcombine.low %v2336, %v2405
        %v2410 = vunpack.c.l.s4 1966171168
        %v2411 = vunpack.c.0.s8 %v2410
        %v2412 = vlaneseq
        %v2413 = vshrl.u32 %v2412, 7
        %v2414 = vsub.s32 %v2411, %v2413
        %v2415 = vrot.slane %v2408, %v2414
        %v2417 = vunpack.c.l.s4 1966171168
        %v2418 = vunpack.c.0.s8 %v2417
        %v2419 = vlaneseq
        %v2420 = vshrl.u32 %v2419, 7
        %v2421 = vsub.s32 %v2418, %v2420
        %v2422 = vrot.slane %v2415, %v2421
        %v2424 = vmax.f32 %v2267, %v2422
        %v2425 = vld [vmem:[#allocation4] sm:$0x3]
        %v2426 = vsub.f32 %v2267, %v2424
        %v2427 = vmul.f32 %v2426, 1.442695
        %v2428 = vpow.pop %v2427
        %v2429 = vmul.f32 %v2425, %v2428
        %v2431 = vlaneseq
        %v2432 = vshrl.u32 %v2431, 7
        %v2433 = vsub.s32 0, %v2432
        %v2434 = vrot.slane %v2424, %v2433
        %v2435 = vlaneseq
        %v2436 = vshrl.u32 %v2435, 7
        %v2437 = vsub.s32 1, %v2436
        %v2438 = vrot.slane %v2424, %v2437
        %v2441 = vsub.f32 %v1390, %v2434
        %v2442 = vsub.f32 %v1392, %v2438
        %v2443 = vsub.f32 %v1394, %v2434
        %v2444 = vsub.f32 %v1396, %v2438
        %v2445 = vsub.f32 %v1400, %v2434
        %v2446 = vsub.f32 %v1402, %v2438
        %v2447 = vsub.f32 %v1404, %v2434
        %v2448 = vsub.f32 %v1406, %v2438
        %v2449 = vsub.f32 %v1410, %v2434
        %v2450 = vsub.f32 %v1412, %v2438
        %v2451 = vsub.f32 %v1414, %v2434
        %v2452 = vsub.f32 %v1416, %v2438
        %v2453 = vsub.f32 %v1420, %v2434
        %v2454 = vsub.f32 %v1422, %v2438
        %v2455 = vsub.f32 %v1424, %v2434
        %v2456 = vsub.f32 %v1426, %v2438
        %v2457 = vsub.f32 %v1430, %v2434
        %v2458 = vsub.f32 %v1432, %v2438
        %v2459 = vsub.f32 %v1434, %v2434
        %v2460 = vsub.f32 %v1436, %v2438
        %v2461 = vsub.f32 %v1440, %v2434
        %v2462 = vsub.f32 %v1442, %v2438
        %v2463 = vsub.f32 %v1444, %v2434
        %v2464 = vsub.f32 %v1446, %v2438
        %v2465 = vsub.f32 %v1450, %v2434
        %v2466 = vsub.f32 %v1452, %v2438
        %v2467 = vsub.f32 %v1454, %v2434
        %v2468 = vsub.f32 %v1456, %v2438
        %v2469 = vsub.f32 %v1460, %v2434
        %v2470 = vsub.f32 %v1462, %v2438
        %v2471 = vsub.f32 %v1464, %v2434
        %v2472 = vsub.f32 %v1466, %v2438
        %v2473 = vsub.f32 %v1470, %v2434
        %v2474 = vsub.f32 %v1472, %v2438
        %v2475 = vsub.f32 %v1474, %v2434
        %v2476 = vsub.f32 %v1476, %v2438
        %v2477 = vsub.f32 %v1480, %v2434
        %v2478 = vsub.f32 %v1482, %v2438
        %v2479 = vsub.f32 %v1484, %v2434
        %v2480 = vsub.f32 %v1486, %v2438
        %v2481 = vsub.f32 %v1490, %v2434
        %v2482 = vsub.f32 %v1492, %v2438
        %v2483 = vsub.f32 %v1494, %v2434
        %v2484 = vsub.f32 %v1496, %v2438
        %v2485 = vsub.f32 %v1500, %v2434
        %v2486 = vsub.f32 %v1502, %v2438
        %v2487 = vsub.f32 %v1504, %v2434
        %v2488 = vsub.f32 %v1506, %v2438
        %v2489 = vsub.f32 %v1510, %v2434
        %v2490 = vsub.f32 %v1512, %v2438
        %v2491 = vsub.f32 %v1514, %v2434
        %v2492 = vsub.f32 %v1516, %v2438
        %v2493 = vsub.f32 %v1520, %v2434
        %v2494 = vsub.f32 %v1522, %v2438
        %v2495 = vsub.f32 %v1524, %v2434
        %v2496 = vsub.f32 %v1526, %v2438
        %v2497 = vsub.f32 %v1530, %v2434
        %v2498 = vsub.f32 %v1532, %v2438
        %v2499 = vsub.f32 %v1534, %v2434
        %v2500 = vsub.f32 %v1536, %v2438
        %v2501 = vsub.f32 %v1540, %v2434
        %v2502 = vsub.f32 %v1542, %v2438
        %v2503 = vsub.f32 %v1544, %v2434
        %v2504 = vsub.f32 %v1546, %v2438
        %v2505 = vsub.f32 %v1550, %v2434
        %v2506 = vsub.f32 %v1552, %v2438
        %v2507 = vsub.f32 %v1554, %v2434
        %v2508 = vsub.f32 %v1556, %v2438
        %v2509 = vsub.f32 %v1560, %v2434
        %v2510 = vsub.f32 %v1562, %v2438
        %v2511 = vsub.f32 %v1564, %v2434
        %v2512 = vsub.f32 %v1566, %v2438
        %v2513 = vsub.f32 %v1570, %v2434
        %v2514 = vsub.f32 %v1572, %v2438
        %v2515 = vsub.f32 %v1574, %v2434
        %v2516 = vsub.f32 %v1576, %v2438
        %v2517 = vsub.f32 %v1580, %v2434
        %v2518 = vsub.f32 %v1582, %v2438
        %v2519 = vsub.f32 %v1584, %v2434
        %v2520 = vsub.f32 %v1586, %v2438
        %v2521 = vsub.f32 %v1590, %v2434
        %v2522 = vsub.f32 %v1592, %v2438
        %v2523 = vsub.f32 %v1594, %v2434
        %v2524 = vsub.f32 %v1596, %v2438
        %v2525 = vsub.f32 %v1600, %v2434
        %v2526 = vsub.f32 %v1602, %v2438
        %v2527 = vsub.f32 %v1604, %v2434
        %v2528 = vsub.f32 %v1606, %v2438
        %v2529 = vsub.f32 %v1610, %v2434
        %v2530 = vsub.f32 %v1612, %v2438
        %v2531 = vsub.f32 %v1614, %v2434
        %v2532 = vsub.f32 %v1616, %v2438
        %v2533 = vsub.f32 %v1620, %v2434
        %v2534 = vsub.f32 %v1622, %v2438
        %v2535 = vsub.f32 %v1624, %v2434
        %v2536 = vsub.f32 %v1626, %v2438
        %v2537 = vsub.f32 %v1630, %v2434
        %v2538 = vsub.f32 %v1632, %v2438
        %v2539 = vsub.f32 %v1634, %v2434
        %v2540 = vsub.f32 %v1636, %v2438
        %v2541 = vsub.f32 %v1640, %v2434
        %v2542 = vsub.f32 %v1642, %v2438
        %v2543 = vsub.f32 %v1644, %v2434
        %v2544 = vsub.f32 %v1646, %v2438
        %v2545 = vsub.f32 %v1650, %v2434
        %v2546 = vsub.f32 %v1652, %v2438
        %v2547 = vsub.f32 %v1654, %v2434
        %v2548 = vsub.f32 %v1656, %v2438
        %v2549 = vsub.f32 %v1660, %v2434
        %v2550 = vsub.f32 %v1662, %v2438
        %v2551 = vsub.f32 %v1664, %v2434
        %v2552 = vsub.f32 %v1666, %v2438
        %v2553 = vsub.f32 %v1670, %v2434
        %v2554 = vsub.f32 %v1672, %v2438
        %v2555 = vsub.f32 %v1674, %v2434
        %v2556 = vsub.f32 %v1676, %v2438
        %v2557 = vsub.f32 %v1680, %v2434
        %v2558 = vsub.f32 %v1682, %v2438
        %v2559 = vsub.f32 %v1684, %v2434
        %v2560 = vsub.f32 %v1686, %v2438
        %v2561 = vsub.f32 %v1690, %v2434
        %v2562 = vsub.f32 %v1692, %v2438
        %v2563 = vsub.f32 %v1694, %v2434
        %v2564 = vsub.f32 %v1696, %v2438
        %v2565 = vsub.f32 %v1700, %v2434
        %v2566 = vsub.f32 %v1702, %v2438
        %v2567 = vsub.f32 %v1704, %v2434
        %v2568 = vsub.f32 %v1706, %v2438
        %v2569 = vmul.f32 %v2441, 1.442695
        %v2570 = vpow.pop %v2569
        %v2571 = vmul.f32 %v2442, 1.442695
        %v2572 = vpow.pop %v2571
        %v2573 = vmul.f32 %v2443, 1.442695
        %v2574 = vpow.pop %v2573
        %v2575 = vmul.f32 %v2444, 1.442695
        %v2576 = vpow.pop %v2575
        %v2577 = vmul.f32 %v2445, 1.442695
        %v2578 = vpow.pop %v2577
        %v2579 = vmul.f32 %v2446, 1.442695
        %v2580 = vpow.pop %v2579
        %v2581 = vmul.f32 %v2447, 1.442695
        %v2582 = vpow.pop %v2581
        %v2583 = vmul.f32 %v2448, 1.442695
        %v2584 = vpow.pop %v2583
        %v2585 = vmul.f32 %v2449, 1.442695
        %v2586 = vpow.pop %v2585
        %v2587 = vmul.f32 %v2450, 1.442695
        %v2588 = vpow.pop %v2587
        %v2589 = vmul.f32 %v2451, 1.442695
        %v2590 = vpow.pop %v2589
        %v2591 = vmul.f32 %v2452, 1.442695
        %v2592 = vpow.pop %v2591
        %v2593 = vmul.f32 %v2453, 1.442695
        %v2594 = vpow.pop %v2593
        %v2595 = vmul.f32 %v2454, 1.442695
        %v2596 = vpow.pop %v2595
        %v2597 = vmul.f32 %v2455, 1.442695
        %v2598 = vpow.pop %v2597
        %v2599 = vmul.f32 %v2456, 1.442695
        %v2600 = vpow.pop %v2599
        %v2601 = vmul.f32 %v2457, 1.442695
        %v2602 = vpow.pop %v2601
        %v2603 = vmul.f32 %v2458, 1.442695
        %v2604 = vpow.pop %v2603
        %v2605 = vmul.f32 %v2459, 1.442695
        %v2606 = vpow.pop %v2605
        %v2607 = vmul.f32 %v2460, 1.442695
        %v2608 = vpow.pop %v2607
        %v2609 = vmul.f32 %v2461, 1.442695
        %v2610 = vpow.pop %v2609
        %v2611 = vmul.f32 %v2462, 1.442695
        %v2612 = vpow.pop %v2611
        %v2613 = vmul.f32 %v2463, 1.442695
        %v2614 = vpow.pop %v2613
        %v2615 = vmul.f32 %v2464, 1.442695
        %v2616 = vpow.pop %v2615
        %v2617 = vmul.f32 %v2465, 1.442695
        %v2618 = vpow.pop %v2617
        %v2619 = vmul.f32 %v2466, 1.442695
        %v2620 = vpow.pop %v2619
        %v2621 = vmul.f32 %v2467, 1.442695
        %v2622 = vpow.pop %v2621
        %v2623 = vmul.f32 %v2468, 1.442695
        %v2624 = vpow.pop %v2623
        %v2625 = vmul.f32 %v2469, 1.442695
        %v2626 = vpow.pop %v2625
        %v2627 = vmul.f32 %v2470, 1.442695
        %v2628 = vpow.pop %v2627
        %v2629 = vmul.f32 %v2471, 1.442695
        %v2630 = vpow.pop %v2629
        %v2631 = vmul.f32 %v2472, 1.442695
        %v2632 = vpow.pop %v2631
        %v2633 = vmul.f32 %v2473, 1.442695
        %v2634 = vpow.pop %v2633
        %v2635 = vmul.f32 %v2474, 1.442695
        %v2636 = vpow.pop %v2635
        %v2637 = vmul.f32 %v2475, 1.442695
        %v2638 = vpow.pop %v2637
        %v2639 = vmul.f32 %v2476, 1.442695
        %v2640 = vpow.pop %v2639
        %v2641 = vmul.f32 %v2477, 1.442695
        %v2642 = vpow.pop %v2641
        %v2643 = vmul.f32 %v2478, 1.442695
        %v2644 = vpow.pop %v2643
        %v2645 = vmul.f32 %v2479, 1.442695
        %v2646 = vpow.pop %v2645
        %v2647 = vmul.f32 %v2480, 1.442695
        %v2648 = vpow.pop %v2647
        %v2649 = vmul.f32 %v2481, 1.442695
        %v2650 = vpow.pop %v2649
        %v2651 = vmul.f32 %v2482, 1.442695
        %v2652 = vpow.pop %v2651
        %v2653 = vmul.f32 %v2483, 1.442695
        %v2654 = vpow.pop %v2653
        %v2655 = vmul.f32 %v2484, 1.442695
        %v2656 = vpow.pop %v2655
        %v2657 = vmul.f32 %v2485, 1.442695
        %v2658 = vpow.pop %v2657
        %v2659 = vmul.f32 %v2486, 1.442695
        %v2660 = vpow.pop %v2659
        %v2661 = vmul.f32 %v2487, 1.442695
        %v2662 = vpow.pop %v2661
        %v2663 = vmul.f32 %v2488, 1.442695
        %v2664 = vpow.pop %v2663
        %v2665 = vmul.f32 %v2489, 1.442695
        %v2666 = vpow.pop %v2665
        %v2667 = vmul.f32 %v2490, 1.442695
        %v2668 = vpow.pop %v2667
        %v2669 = vmul.f32 %v2491, 1.442695
        %v2670 = vpow.pop %v2669
        %v2671 = vmul.f32 %v2492, 1.442695
        %v2672 = vpow.pop %v2671
        %v2673 = vmul.f32 %v2493, 1.442695
        %v2674 = vpow.pop %v2673
        %v2675 = vmul.f32 %v2494, 1.442695
        %v2676 = vpow.pop %v2675
        %v2677 = vmul.f32 %v2495, 1.442695
        %v2678 = vpow.pop %v2677
        %v2679 = vmul.f32 %v2496, 1.442695
        %v2680 = vpow.pop %v2679
        %v2681 = vmul.f32 %v2497, 1.442695
        %v2682 = vpow.pop %v2681
        %v2683 = vmul.f32 %v2498, 1.442695
        %v2684 = vpow.pop %v2683
        %v2685 = vmul.f32 %v2499, 1.442695
        %v2686 = vpow.pop %v2685
        %v2687 = vmul.f32 %v2500, 1.442695
        %v2688 = vpow.pop %v2687
        %v2689 = vmul.f32 %v2501, 1.442695
        %v2690 = vpow.pop %v2689
        %v2691 = vmul.f32 %v2502, 1.442695
        %v2692 = vpow.pop %v2691
        %v2693 = vmul.f32 %v2503, 1.442695
        %v2694 = vpow.pop %v2693
        %v2695 = vmul.f32 %v2504, 1.442695
        %v2696 = vpow.pop %v2695
        %v2697 = vmul.f32 %v2505, 1.442695
        %v2698 = vpow.pop %v2697
        %v2699 = vmul.f32 %v2506, 1.442695
        %v2700 = vpow.pop %v2699
        %v2701 = vmul.f32 %v2507, 1.442695
        %v2702 = vpow.pop %v2701
        %v2703 = vmul.f32 %v2508, 1.442695
        %v2704 = vpow.pop %v2703
        %v2705 = vmul.f32 %v2509, 1.442695
        %v2706 = vpow.pop %v2705
        %v2707 = vmul.f32 %v2510, 1.442695
        %v2708 = vpow.pop %v2707
        %v2709 = vmul.f32 %v2511, 1.442695
        %v2710 = vpow.pop %v2709
        %v2711 = vmul.f32 %v2512, 1.442695
        %v2712 = vpow.pop %v2711
        %v2713 = vmul.f32 %v2513, 1.442695
        %v2714 = vpow.pop %v2713
        %v2715 = vmul.f32 %v2514, 1.442695
        %v2716 = vpow.pop %v2715
        %v2717 = vmul.f32 %v2515, 1.442695
        %v2718 = vpow.pop %v2717
        %v2719 = vmul.f32 %v2516, 1.442695
        %v2720 = vpow.pop %v2719
        %v2721 = vmul.f32 %v2517, 1.442695
        %v2722 = vpow.pop %v2721
        %v2723 = vmul.f32 %v2518, 1.442695
        %v2724 = vpow.pop %v2723
        %v2725 = vmul.f32 %v2519, 1.442695
        %v2726 = vpow.pop %v2725
        %v2727 = vmul.f32 %v2520, 1.442695
        %v2728 = vpow.pop %v2727
        %v2729 = vmul.f32 %v2521, 1.442695
        %v2730 = vpow.pop %v2729
        %v2731 = vmul.f32 %v2522, 1.442695
        %v2732 = vpow.pop %v2731
        %v2733 = vmul.f32 %v2523, 1.442695
        %v2734 = vpow.pop %v2733
        %v2735 = vmul.f32 %v2524, 1.442695
        %v2736 = vpow.pop %v2735
        %v2737 = vmul.f32 %v2525, 1.442695
        %v2738 = vpow.pop %v2737
        %v2739 = vmul.f32 %v2526, 1.442695
        %v2740 = vpow.pop %v2739
        %v2741 = vmul.f32 %v2527, 1.442695
        %v2742 = vpow.pop %v2741
        %v2743 = vmul.f32 %v2528, 1.442695
        %v2744 = vpow.pop %v2743
        %v2745 = vmul.f32 %v2529, 1.442695
        %v2746 = vpow.pop %v2745
        %v2747 = vmul.f32 %v2530, 1.442695
        %v2748 = vpow.pop %v2747
        %v2749 = vmul.f32 %v2531, 1.442695
        %v2750 = vpow.pop %v2749
        %v2751 = vmul.f32 %v2532, 1.442695
        %v2752 = vpow.pop %v2751
        %v2753 = vmul.f32 %v2533, 1.442695
        %v2754 = vpow.pop %v2753
        %v2755 = vmul.f32 %v2534, 1.442695
        %v2756 = vpow.pop %v2755
        %v2757 = vmul.f32 %v2535, 1.442695
        %v2758 = vpow.pop %v2757
        %v2759 = vmul.f32 %v2536, 1.442695
        %v2760 = vpow.pop %v2759
        %v2761 = vmul.f32 %v2537, 1.442695
        %v2762 = vpow.pop %v2761
        %v2763 = vmul.f32 %v2538, 1.442695
        %v2764 = vpow.pop %v2763
        %v2765 = vmul.f32 %v2539, 1.442695
        %v2766 = vpow.pop %v2765
        %v2767 = vmul.f32 %v2540, 1.442695
        %v2768 = vpow.pop %v2767
        %v2769 = vmul.f32 %v2541, 1.442695
        %v2770 = vpow.pop %v2769
        %v2771 = vmul.f32 %v2542, 1.442695
        %v2772 = vpow.pop %v2771
        %v2773 = vmul.f32 %v2543, 1.442695
        %v2774 = vpow.pop %v2773
        %v2775 = vmul.f32 %v2544, 1.442695
        %v2776 = vpow.pop %v2775
        %v2777 = vmul.f32 %v2545, 1.442695
        %v2778 = vpow.pop %v2777
        %v2779 = vmul.f32 %v2546, 1.442695
        %v2780 = vpow.pop %v2779
        %v2781 = vmul.f32 %v2547, 1.442695
        %v2782 = vpow.pop %v2781
        %v2783 = vmul.f32 %v2548, 1.442695
        %v2784 = vpow.pop %v2783
        %v2785 = vmul.f32 %v2549, 1.442695
        %v2786 = vpow.pop %v2785
        %v2787 = vmul.f32 %v2550, 1.442695
        %v2788 = vpow.pop %v2787
        %v2789 = vmul.f32 %v2551, 1.442695
        %v2790 = vpow.pop %v2789
        %v2791 = vmul.f32 %v2552, 1.442695
        %v2792 = vpow.pop %v2791
        %v2793 = vmul.f32 %v2553, 1.442695
        %v2794 = vpow.pop %v2793
        %v2795 = vmul.f32 %v2554, 1.442695
        %v2796 = vpow.pop %v2795
        %v2797 = vmul.f32 %v2555, 1.442695
        %v2798 = vpow.pop %v2797
        %v2799 = vmul.f32 %v2556, 1.442695
        %v2800 = vpow.pop %v2799
        %v2801 = vmul.f32 %v2557, 1.442695
        %v2802 = vpow.pop %v2801
        %v2803 = vmul.f32 %v2558, 1.442695
        %v2804 = vpow.pop %v2803
        %v2805 = vmul.f32 %v2559, 1.442695
        %v2806 = vpow.pop %v2805
        %v2807 = vmul.f32 %v2560, 1.442695
        %v2808 = vpow.pop %v2807
        %v2809 = vmul.f32 %v2561, 1.442695
        %v2810 = vpow.pop %v2809
        %v2811 = vmul.f32 %v2562, 1.442695
        %v2812 = vpow.pop %v2811
        %v2813 = vmul.f32 %v2563, 1.442695
        %v2814 = vpow.pop %v2813
        %v2815 = vmul.f32 %v2564, 1.442695
        %v2816 = vpow.pop %v2815
        %v2817 = vmul.f32 %v2565, 1.442695
        %v2818 = vpow.pop %v2817
        %v2819 = vmul.f32 %v2566, 1.442695
        %v2820 = vpow.pop %v2819
        %v2821 = vmul.f32 %v2567, 1.442695
        %v2822 = vpow.pop %v2821
        %v2823 = vmul.f32 %v2568, 1.442695
        %v2824 = vpow.pop %v2823
        %v2825 = vadd.f32 %v2570, %v2574
        %v2826 = vadd.f32 %v2825, %v2578
        %v2827 = vadd.f32 %v2826, %v2582
        %v2828 = vadd.f32 %v2827, %v2586
        %v2829 = vadd.f32 %v2828, %v2590
        %v2830 = vadd.f32 %v2829, %v2594
        %v2831 = vadd.f32 %v2830, %v2598
        %v2832 = vadd.f32 %v2831, %v2602
        %v2833 = vadd.f32 %v2832, %v2606
        %v2834 = vadd.f32 %v2833, %v2610
        %v2835 = vadd.f32 %v2834, %v2614
        %v2836 = vadd.f32 %v2835, %v2618
        %v2837 = vadd.f32 %v2836, %v2622
        %v2838 = vadd.f32 %v2837, %v2626
        %v2839 = vadd.f32 %v2838, %v2630
        %v2840 = vadd.f32 %v2839, %v2634
        %v2841 = vadd.f32 %v2840, %v2638
        %v2842 = vadd.f32 %v2841, %v2642
        %v2843 = vadd.f32 %v2842, %v2646
        %v2844 = vadd.f32 %v2843, %v2650
        %v2845 = vadd.f32 %v2844, %v2654
        %v2846 = vadd.f32 %v2845, %v2658
        %v2847 = vadd.f32 %v2846, %v2662
        %v2848 = vadd.f32 %v2847, %v2666
        %v2849 = vadd.f32 %v2848, %v2670
        %v2850 = vadd.f32 %v2849, %v2674
        %v2851 = vadd.f32 %v2850, %v2678
        %v2852 = vadd.f32 %v2851, %v2682
        %v2853 = vadd.f32 %v2852, %v2686
        %v2854 = vadd.f32 %v2853, %v2690
        %v2855 = vadd.f32 %v2854, %v2694
        %v2856 = vadd.f32 %v2855, %v2698
        %v2857 = vadd.f32 %v2856, %v2702
        %v2858 = vadd.f32 %v2857, %v2706
        %v2859 = vadd.f32 %v2858, %v2710
        %v2860 = vadd.f32 %v2859, %v2714
        %v2861 = vadd.f32 %v2860, %v2718
        %v2862 = vadd.f32 %v2861, %v2722
        %v2863 = vadd.f32 %v2862, %v2726
        %v2864 = vadd.f32 %v2863, %v2730
        %v2865 = vadd.f32 %v2864, %v2734
        %v2866 = vadd.f32 %v2865, %v2738
        %v2867 = vadd.f32 %v2866, %v2742
        %v2868 = vadd.f32 %v2867, %v2746
        %v2869 = vadd.f32 %v2868, %v2750
        %v2870 = vadd.f32 %v2869, %v2754
        %v2871 = vadd.f32 %v2870, %v2758
        %v2872 = vadd.f32 %v2871, %v2762
        %v2873 = vadd.f32 %v2872, %v2766
        %v2874 = vadd.f32 %v2873, %v2770
        %v2875 = vadd.f32 %v2874, %v2774
        %v2876 = vadd.f32 %v2875, %v2778
        %v2877 = vadd.f32 %v2876, %v2782
        %v2878 = vadd.f32 %v2877, %v2786
        %v2879 = vadd.f32 %v2878, %v2790
        %v2880 = vadd.f32 %v2879, %v2794
        %v2881 = vadd.f32 %v2880, %v2798
        %v2882 = vadd.f32 %v2881, %v2802
        %v2883 = vadd.f32 %v2882, %v2806
        %v2884 = vadd.f32 %v2883, %v2810
        %v2885 = vadd.f32 %v2884, %v2814
        %v2886 = vadd.f32 %v2885, %v2818
        %v2887 = vadd.f32 %v2886, %v2822
        %v2888 = vrot.slane %v2887, 4
        %v2889 = vadd.f32 %v2887, %v2888
        %v2890 = vrot.slane %v2889, 2
        %v2891 = vadd.f32 %v2889, %v2890
        %v2892 = vrot.slane %v2891, 1
        %v2893 = vadd.f32 %v2891, %v2892
        %v2894 = vadd.f32 %v2572, %v2576
        %v2895 = vadd.f32 %v2894, %v2580
        %v2896 = vadd.f32 %v2895, %v2584
        %v2897 = vadd.f32 %v2896, %v2588
        %v2898 = vadd.f32 %v2897, %v2592
        %v2899 = vadd.f32 %v2898, %v2596
        %v2900 = vadd.f32 %v2899, %v2600
        %v2901 = vadd.f32 %v2900, %v2604
        %v2902 = vadd.f32 %v2901, %v2608
        %v2903 = vadd.f32 %v2902, %v2612
        %v2904 = vadd.f32 %v2903, %v2616
        %v2905 = vadd.f32 %v2904, %v2620
        %v2906 = vadd.f32 %v2905, %v2624
        %v2907 = vadd.f32 %v2906, %v2628
        %v2908 = vadd.f32 %v2907, %v2632
        %v2909 = vadd.f32 %v2908, %v2636
        %v2910 = vadd.f32 %v2909, %v2640
        %v2911 = vadd.f32 %v2910, %v2644
        %v2912 = vadd.f32 %v2911, %v2648
        %v2913 = vadd.f32 %v2912, %v2652
        %v2914 = vadd.f32 %v2913, %v2656
        %v2915 = vadd.f32 %v2914, %v2660
        %v2916 = vadd.f32 %v2915, %v2664
        %v2917 = vadd.f32 %v2916, %v2668
        %v2918 = vadd.f32 %v2917, %v2672
        %v2919 = vadd.f32 %v2918, %v2676
        %v2920 = vadd.f32 %v2919, %v2680
        %v2921 = vadd.f32 %v2920, %v2684
        %v2922 = vadd.f32 %v2921, %v2688
        %v2923 = vadd.f32 %v2922, %v2692
        %v2924 = vadd.f32 %v2923, %v2696
        %v2925 = vadd.f32 %v2924, %v2700
        %v2926 = vadd.f32 %v2925, %v2704
        %v2927 = vadd.f32 %v2926, %v2708
        %v2928 = vadd.f32 %v2927, %v2712
        %v2929 = vadd.f32 %v2928, %v2716
        %v2930 = vadd.f32 %v2929, %v2720
        %v2931 = vadd.f32 %v2930, %v2724
        %v2932 = vadd.f32 %v2931, %v2728
        %v2933 = vadd.f32 %v2932, %v2732
        %v2934 = vadd.f32 %v2933, %v2736
        %v2935 = vadd.f32 %v2934, %v2740
        %v2936 = vadd.f32 %v2935, %v2744
        %v2937 = vadd.f32 %v2936, %v2748
        %v2938 = vadd.f32 %v2937, %v2752
        %v2939 = vadd.f32 %v2938, %v2756
        %v2940 = vadd.f32 %v2939, %v2760
        %v2941 = vadd.f32 %v2940, %v2764
        %v2942 = vadd.f32 %v2941, %v2768
        %v2943 = vadd.f32 %v2942, %v2772
        %v2944 = vadd.f32 %v2943, %v2776
        %v2945 = vadd.f32 %v2944, %v2780
        %v2946 = vadd.f32 %v2945, %v2784
        %v2947 = vadd.f32 %v2946, %v2788
        %v2948 = vadd.f32 %v2947, %v2792
        %v2949 = vadd.f32 %v2948, %v2796
        %v2950 = vadd.f32 %v2949, %v2800
        %v2951 = vadd.f32 %v2950, %v2804
        %v2952 = vadd.f32 %v2951, %v2808
        %v2953 = vadd.f32 %v2952, %v2812
        %v2954 = vadd.f32 %v2953, %v2816
        %v2955 = vadd.f32 %v2954, %v2820
        %v2956 = vadd.f32 %v2955, %v2824
        %v2957 = vrot.slane %v2956, 4
        %v2958 = vadd.f32 %v2956, %v2957
        %v2959 = vrot.slane %v2958, 2
        %v2960 = vadd.f32 %v2958, %v2959
        %v2961 = vrot.slane %v2960, 1
        %v2962 = vadd.f32 %v2960, %v2961
        %v2965 = vcombine.low %v2893, %v2962
        %v2967 = vunpack.c.l.s4 1966171168
        %v2968 = vunpack.c.0.s8 %v2967
        %v2969 = vlaneseq
        %v2970 = vshrl.u32 %v2969, 7
        %v2971 = vsub.s32 %v2968, %v2970
        %v2972 = vrot.slane %v2965, %v2971
        %v2974 = vunpack.c.l.s4 1966171168
        %v2975 = vunpack.c.0.s8 %v2974
        %v2976 = vlaneseq
        %v2977 = vshrl.u32 %v2976, 7
        %v2978 = vsub.s32 %v2975, %v2977
        %v2979 = vrot.slane %v2972, %v2978
        %v2981 = vadd.f32 %v2429, %v2979
        %2982 = vst.msk [vmem:[#allocation4] sm:$0x3] %vm2265, %v2981
        %2983 = vst.msk [vmem:[#allocation3] sm:$0x3] %vm2265, %v2424
        %p2984 = scmp.eq.s32.totalorder %s23, 1
        // Predicated region
        $region49: #{forward.3} parent=43 // pred_check
          %p2985 = pneg %p2984
        $region50: #{forward.3} parent=43 // pred_check_branch
          %2987 = sbr.rel (%p2985) target = $region52
        $region51: #{forward.3} parent=43 // pred_region
          %v2988 = vld [vmem:[#allocation5] sm:$0x3]
          %v2989 = vld [vmem:[#allocation3] sm:$0x3]
          %v2990 = vld [vmem:[#allocation4] sm:$0x3]
          %v2991 = vlog2.pop %v2990
          %v2992 = vmul.f32 %v2991, 0.6931472
          %v2993 = vadd.f32 %v2989, %v2992
          %v2994 = vsub.f32 %v2988, %v2993
          %2995 = vst.msk [vmem:[%s343] sm:$0x3] %vm2265, %v2994
        $region52: #{forward.3} parent=43 // pred_fallthru
          _
      $region44: #{forward.3} parent=39 // pred_fallthru
        _
      %p2996 = scmp.le.s32.totalorder %s346, 0
      %p2997 = scmp.eq.s32.totalorder %s23, 1
      %p2998 = pnand %p2996, %p2997
      %p2999 = pneg %p2998
      // Predicated region
      $region53: #{forward.3} parent=39 // pred_check
        _
      $region54: #{forward.3} parent=39 // pred_check_branch
        %3001 = sbr.rel (%p2998) target = $region56
      $region55: #{forward.3} parent=39 // pred_region
        %v3002 = vlaneseq
        %vm3003 = vcmp.ge.s32.totalorder %v3002, 0
        %vm3004 = vcmp.lt.s32.totalorder %v3002, 256
        %vm3005 = vmand %vm3003, %vm3004
        %3006 = vst.msk [vmem:[%s343] sm:$0x3] %vm3005, 0.0
      $region56: #{forward.3} parent=39 // pred_fallthru
        _
      %s3007 = smul.u32 2, %s22
      %p3008 = scmp.lt.s32.totalorder %s3007, 1
      %s3009 = scalar_select %p3008, %s3007, 1
      %s3010 = scalar_lea.vmem %s6, %s3009
      // Predicated region
      $region57: #{forward.3} parent=39 // pred_check
        %p3011 = pneg %p185
      $region58: #{forward.3} parent=39 // pred_check_branch
        %3013 = sbr.rel (%p3011) target = $region60
      $region59: #{forward.3} parent=39 // pred_region
        %s3014 = smul.u32 2, %s22
      $region60: #{forward.3} parent=39 // pred_fallthru
        _
      // Predicated region
      $region61: #{forward.3} parent=39 // pred_check
        %p3015 = pneg %p185
      $region62: #{forward.3} parent=39 // pred_check_branch
        %3017 = sbr.rel (%p3015) target = $region64
      $region63: #{forward.3} parent=39 // pred_region
        %s3018 = smul.u32 2, %s22
        %p3019 = scmp.lt.s32.totalorder %s3018, 1
        %s3020 = scalar_select %p3019, %s3018, 1
        %s3021 = scalar_lea.vmem %s6, %s3020
      $region64: #{forward.3} parent=39 // pred_fallthru
        _
    $region40: #{forward.3} parent=5 // pred_fallthru
      _
    %p3022 = scmp.le.s32.totalorder 2, %s13
    // Predicated region
    $region65: #{forward.3} parent=5 // pred_check
      %p3023 = pneg %p3022
    $region66: #{forward.3} parent=5 // pred_check_branch
      %3025 = sbr.rel (%p3023) target = $region68
    $region67: #{forward.3} parent=5 // pred_region
      %s3026 = ssub.s32 %s13, 2
    $region68: #{forward.3} parent=5 // pred_fallthru
      _
  $region6: #{forward.3} parent=0 // loop_footer
    %s17 = sadd.s32 1, %s13
  $region7: #{forward.3} parent=0 // loop_footer_branch
    %12 = sbr.rel target = $region3
  $region8: #{forward.3} parent=0 // loop_exit
    _

</llo_original>
